<compile_context>
chip_gen: v7x
topology: tpu7x:2x2x1
jax: 0.10.0
libtpu: 0.0.40
codegen_flags: <defaults>
</compile_context>

<pallas_src>
import functools

import jax
import jax.numpy as jnp
from jax.experimental import pallas as pl
from jax.experimental.pallas import tpu as pltpu

LEAKY_SLOPE = 0.01      # nn.LeakyReLU default
BN_EPS = 1e-5           # nn.BatchNorm2d default
TILE_M_CAP = 2048       # never exceed this many rows per grid step


def _round_up(x, m):
    return (x + m - 1) // m * m


def _vmem_budgets():
    """Generation-aware scoped-VMEM limit and A-block size target.

    v5e/v6e (128 MiB VMEM): 64 MiB scoped limit, ~8 MiB A-blocks (tile_m=1024 on
    K=4096 layers).  v7x (64 MiB VMEM) or unknown: 32 MiB limit, ~4 MiB A-blocks
    (tile_m=512 on K=4096), which also fits v5e's small default scoped budget.
    """
    try:
        info = pltpu.get_tpu_info()
        cap = getattr(info, "vmem_capacity_bytes", 0) or 0
    except Exception:
        cap = 0
    big = cap >= 100 * 1024 * 1024
    limit = (64 if big else 32) * 1024 * 1024
    a_target = (8 if big else 4) * 1024 * 1024
    return limit, a_target


VMEM_LIMIT, A_BLOCK_TARGET = _vmem_budgets()


def _apply_act(x, act):
    if act == "none":
        return x
    if act == "leaky_relu":
        return jnp.where(x >= 0, x, LEAKY_SLOPE * x)
    if act == "relu":
        return jnp.maximum(x, 0.0)
    if act == "sigmoid":
        return jax.nn.sigmoid(x)
    raise ValueError(act)


# ----------------------------- Pallas kernels ------------------------------

def _matmul_bias_act_kernel(a_ref, w_ref, b_ref, o_ref, *, act):
    # a: (TM, K) bf16   w: (K, N) bf16   b: (1, N) f32   o: (TM, N) bf16/f32
    acc = jnp.dot(a_ref[...], w_ref[...], preferred_element_type=jnp.float32)
    o_ref[...] = _apply_act(acc + b_ref[...], act).astype(o_ref.dtype)


def _matmul_stats_kernel(a_ref, w_ref, pre_ref, sum_ref, ssq_ref):
    # Conv matmul for BN layers: writes pre-BN activations (bf16) and accumulates
    # per-channel sum / sum-of-squares (f32) across the "arbitrary" m grid axis.
    # The leading grid axis is "parallel"; each core owns its own (c, 1, N) stats
    # block, reduced outside the kernel (v7x megacore-safe).
    acc = jnp.dot(a_ref[...], w_ref[...], preferred_element_type=jnp.float32)
    pre_ref[...] = acc.astype(pre_ref.dtype)

    @pl.when(pl.program_id(1) == 0)
    def _():
        sum_ref[...] = jnp.zeros_like(sum_ref)
        ssq_ref[...] = jnp.zeros_like(ssq_ref)

    sum_ref[...] += jnp.sum(acc, axis=0)[None, None, :]
    ssq_ref[...] += jnp.sum(acc * acc, axis=0)[None, None, :]


def _affine_act_kernel(x_ref, s_ref, t_ref, o_ref, *, act):
    # x: (TM, C) bf16   s,t: (1, C) f32   ->   act(x * s + t) stored bf16
    x = x_ref[...].astype(jnp.float32)           # math in f32 (v5e-safe), store bf16
    o_ref[...] = _apply_act(x * s_ref[...] + t_ref[...], act).astype(o_ref.dtype)


# --------------------------- Pallas call wrappers ---------------------------

def _tile_and_pad_m(a):
    """K-aware M-tile selection + zero-pad rows so the grid is exact.

    Targets ~A_BLOCK_TARGET bytes of A per grid step (multiple of 256, capped at
    TILE_M_CAP for VMEM safety), caps at ~M/2 so the parallel axis has >=2 steps
    (v7x megacore), and keeps 16-row alignment for bf16 sublane packing.
    """
    M, K = a.shape
    ebytes = a.dtype.itemsize
    t = A_BLOCK_TARGET // max(K * ebytes, 1)
    t = min(max(t, 256), TILE_M_CAP)
    t = (t // 256) * 256                        # MXU-friendly multiple of 256
    half = _round_up(pl.cdiv(M, 2), 16)         # >=2 grid steps when M allows
    t = max(min(t, half), 16)                   # 16-row aligned small-M fallback
    Mp = _round_up(M, t)
    if Mp != M:
        a = jnp.pad(a, ((0, Mp - M), (0, 0)))
    return a, t, Mp


def matmul_bias_act(a, w, b, act, *, out_dtype=jnp.bfloat16):
    """act((M,K) @ (K,N) + b), tiled over M, bf16 MXU inputs, f32 accumulate."""
    M, K = a.shape
    _, N = w.shape
    a, tile_m, Mp = _tile_and_pad_m(a.astype(jnp.bfloat16))
    out = pl.pallas_call(
        functools.partial(_matmul_bias_act_kernel, act=act),
        out_shape=jax.ShapeDtypeStruct((Mp, N), out_dtype),
        grid=(Mp // tile_m,),
        in_specs=[pl.BlockSpec((tile_m, K), lambda m: (m, 0)),
                  pl.BlockSpec((K, N), lambda m: (0, 0)),
                  pl.BlockSpec((1, N), lambda m: (0, 0))],
        out_specs=pl.BlockSpec((tile_m, N), lambda m: (m, 0)),
        compiler_params=pltpu.CompilerParams(
            dimension_semantics=("parallel",),
            vmem_limit_bytes=VMEM_LIMIT),
    )(a, w.astype(jnp.bfloat16), b.reshape(1, N).astype(jnp.float32))
    return out[:M]


def matmul_stats(a, w, *, out_dtype=jnp.bfloat16):
    """(M,K) @ (K,N) (bf16 out) plus per-channel batch mean/var (training-mode BN)."""
    M, K = a.shape
    _, N = w.shape
    a, tile_m, Mp = _tile_and_pad_m(a.astype(jnp.bfloat16))
    cores = 2 if Mp // tile_m >= 2 else 1       # split stats across v7x cores
    Mp2 = _round_up(Mp, cores * tile_m)
    if Mp2 != Mp:
        a = jnp.pad(a, ((0, Mp2 - Mp), (0, 0)))
        Mp = Mp2
    m_per_core = Mp // (cores * tile_m)

    def a_map(c, m):
        return (c * m_per_core + m, 0)

    pre, s, ssq = pl.pallas_call(
        _matmul_stats_kernel,
        out_shape=(jax.ShapeDtypeStruct((Mp, N), out_dtype),
                   jax.ShapeDtypeStruct((cores, 1, N), jnp.float32),
                   jax.ShapeDtypeStruct((cores, 1, N), jnp.float32)),
        grid=(cores, m_per_core),
        in_specs=[pl.BlockSpec((tile_m, K), a_map),
                  pl.BlockSpec((K, N), lambda c, m: (0, 0))],
        out_specs=(pl.BlockSpec((tile_m, N), a_map),
                   pl.BlockSpec((1, 1, N), lambda c, m: (c, 0, 0)),
                   pl.BlockSpec((1, 1, N), lambda c, m: (c, 0, 0))),
        compiler_params=pltpu.CompilerParams(
            dimension_semantics=("parallel", "arbitrary"),
            vmem_limit_bytes=VMEM_LIMIT),
    )(a, w.astype(jnp.bfloat16))
    # Zero-padded rows contribute nothing to the sums; divide by the valid M.
    s_tot = jnp.sum(s, axis=(0, 1))
    ssq_tot = jnp.sum(ssq, axis=(0, 1))
    mean = s_tot / M
    var = jnp.maximum(ssq_tot / M - mean * mean, 0.0)
    return pre[:M], mean, var


def affine_act(x, scale, shift, act, *, out_dtype=jnp.bfloat16):
    """act(x * scale + shift) with per-channel scale/shift, tiled over M."""
    M, C = x.shape
    x, tile_m, Mp = _tile_and_pad_m(x.astype(jnp.bfloat16))
    out = pl.pallas_call(
        functools.partial(_affine_act_kernel, act=act),
        out_shape=jax.ShapeDtypeStruct((Mp, C), out_dtype),
        grid=(Mp // tile_m,),
        in_specs=[pl.BlockSpec((tile_m, C), lambda m: (m, 0)),
                  pl.BlockSpec((1, C), lambda m: (0, 0)),
                  pl.BlockSpec((1, C), lambda m: (0, 0))],
        out_specs=pl.BlockSpec((tile_m, C), lambda m: (m, 0)),
        compiler_params=pltpu.CompilerParams(
            dimension_semantics=("parallel",),
            vmem_limit_bytes=VMEM_LIMIT),
    )(x, scale.reshape(1, C).astype(jnp.float32),
      shift.reshape(1, C).astype(jnp.float32))
    return out[:M]


# ------------------------------ JAX glue ------------------------------------

def im2col(x_nhwc, k, stride, pad):
    """Extract k x k patches -> (N*Ho*Wo, k*k*Cin).  Pure data movement.

    # TODO(synk): fold this gather into the Pallas pipeline (implicit GEMM over the
    # 16 (kh,kw) taps with shifted/strided windows read straight from the activation)
    # so the k*k-expanded patches never hit HBM.
    """
    N, H, W, C = x_nhwc.shape
    xp = jnp.pad(x_nhwc, ((0, 0), (pad, pad), (pad, pad), (0, 0)))
    Ho = (H + 2 * pad - k) // stride + 1
    Wo = (W + 2 * pad - k) // stride + 1
    cols = [xp[:, di:di + stride * Ho:stride, dj:dj + stride * Wo:stride, :]
            for di in range(k) for dj in range(k)]
    patches = jnp.concatenate(cols, axis=-1)            # (N, Ho, Wo, k*k*C)
    return patches.reshape(N * Ho * Wo, k * k * C), Ho, Wo


def conv_block(x_nhwc, conv_params, *, stride, pad, act, bn=None, lane_pad=None,
               out_dtype=jnp.bfloat16):
    """Conv2d (+ optional training-mode BN) + activation; matmuls in Pallas."""
    w_oihw, b = conv_params
    Cout, Cin, KH, KW = w_oihw.shape
    N, _, _, Cin_x = x_nhwc.shape
    if Cin_x != Cin:               # input channels were zero-padded (d0: 6 -> 8)
        w_oihw = jnp.pad(w_oihw, ((0, 0), (0, Cin_x - Cin), (0, 0), (0, 0)))
        Cin = Cin_x
    patches, Ho, Wo = im2col(x_nhwc.astype(jnp.bfloat16), KH, stride, pad)
    # (Cout, Cin, KH, KW) -> (KH, KW, Cin, Cout) -> (KH*KW*Cin, Cout)
    wmat = jnp.transpose(w_oihw, (2, 3, 1, 0)).reshape(KH * KW * Cin, Cout)
    if bn is None:
        Nout = lane_pad if lane_pad is not None else Cout
        if Nout != Cout:           # lane-dense output store (d0: 64->128, p2: 1->128)
            wmat = jnp.pad(wmat, ((0, 0), (0, Nout - Cout)))
            b = jnp.pad(b, (0, Nout - Cout))
        out = matmul_bias_act(patches, wmat, b, act, out_dtype=out_dtype)[:, :Cout]
    else:
        # Training-mode BN subtracts the batch mean, which absorbs the conv bias
        # exactly, so the bias is skipped on BN layers (identical result).
        pre, mean, var = matmul_stats(patches, wmat)
        gamma, beta = bn
        scale = gamma * jax.lax.rsqrt(var + BN_EPS)
        shift = beta - mean * scale
        out = affine_act(pre, scale, shift, act, out_dtype=out_dtype)
    return out.reshape(N, Ho, Wo, Cout)


# --------------------------- parameters & forward ---------------------------

def init_params(key):
    def conv_init(k, cin, cout, ks=4):
        kw, kb = jax.random.split(k)
        w = 0.02 * jax.random.normal(kw, (cout, cin, ks, ks), jnp.float32)
        b = 0.01 * jax.random.normal(kb, (cout,), jnp.float32)
        return w, b

    def bn_init(c):  # PyTorch defaults: gamma=1, beta=0
        return jnp.ones((c,), jnp.float32), jnp.zeros((c,), jnp.float32)

    ks = jax.random.split(key, 5)
    return {
        "d0": conv_init(ks[0], 6, 64),
        "d1": conv_init(ks[1], 64, 128),
        "d2": conv_init(ks[2], 128, 256),
        "p1": conv_init(ks[3], 256, 256),
        "p2": conv_init(ks[4], 256, 1),
        "bn1": bn_init(128),
        "bn2": bn_init(256),
        "bnp1": bn_init(256),
    }


def discriminator_forward(params, x_nchw, y_nchw):
    x = jnp.concatenate([x_nchw, y_nchw], axis=1)      # dim=1 channel cat (NCHW)
    x = jnp.transpose(x, (0, 2, 3, 1))                 # NCHW -> NHWC
    x = jnp.pad(x, ((0, 0), (0, 0), (0, 0), (0, 2)))   # Cin 6 -> 8 so K = 4*4*8 = 128
    x = conv_block(x, params["d0"], stride=2, pad=1, act="leaky_relu", lane_pad=128)
    x = conv_block(x, params["d1"], stride=2, pad=1, act="leaky_relu", bn=params["bn1"])
    x = conv_block(x, params["d2"], stride=2, pad=1, act="leaky_relu", bn=params["bn2"])
    x = conv_block(x, params["p1"], stride=1, pad=1, act="relu", bn=params["bnp1"])
    x = conv_block(x, params["p2"], stride=1, pad=1, act="sigmoid", lane_pad=128,
                   out_dtype=jnp.float32)
    return jnp.transpose(x, (0, 3, 1, 2))              # NHWC -> NCHW


# --------------------------- pure-JAX reference ------------------------------

def _ref_conv(x_nhwc, w_oihw, b, stride, pad):
    w_hwio = jnp.transpose(w_oihw, (2, 3, 1, 0))
    out = jax.lax.conv_general_dilated(
        x_nhwc, w_hwio, window_strides=(stride, stride),
        padding=[(pad, pad), (pad, pad)],
        dimension_numbers=("NHWC", "HWIO", "NHWC"))
    return out + b


def _ref_bn(x_nhwc, gamma, beta):
    mean = jnp.mean(x_nhwc, axis=(0, 1, 2), keepdims=True)
    var = jnp.mean((x_nhwc - mean) ** 2, axis=(0, 1, 2), keepdims=True)
    return (x_nhwc - mean) * jax.lax.rsqrt(var + BN_EPS) * gamma + beta


def reference_forward(params, x_nchw, y_nchw):
    lrelu = lambda v: jnp.where(v >= 0, v, LEAKY_SLOPE * v)
    x = jnp.concatenate([x_nchw, y_nchw], axis=1)
    x = jnp.transpose(x, (0, 2, 3, 1))
    x = lrelu(_ref_conv(x, *params["d0"], 2, 1))
    x = lrelu(_ref_bn(_ref_conv(x, *params["d1"], 2, 1), *params["bn1"]))
    x = lrelu(_ref_bn(_ref_conv(x, *params["d2"], 2, 1), *params["bn2"]))
    x = jnp.maximum(_ref_bn(_ref_conv(x, *params["p1"], 1, 1), *params["bnp1"]), 0.0)
    x = jax.nn.sigmoid(_ref_conv(x, *params["p2"], 1, 1))
    return jnp.transpose(x, (0, 3, 1, 2))


# ------------------------------------ main -----------------------------------

if __name__ == "__main__":
    key = jax.random.PRNGKey(0)
    kp, kx, ky = jax.random.split(key, 3)
    params = init_params(kp)

    # Small shapes: batch=2, 3-channel images, 32x32 spatial (smallest that keeps
    # every stride-1 k=4 conv valid). Inputs are NCHW like the PyTorch module.
    x = jax.random.normal(kx, (2, 3, 32, 32), jnp.float32)
    y = jax.random.normal(ky, (2, 3, 32, 32), jnp.float32)

    fwd = jax.jit(discriminator_forward)
    out = fwd(params, x, y)
    jax.block_until_ready(out)

    assert out.shape == (2, 1, 2, 2), out.shape

    ref = jax.jit(reference_forward)(params, x, y)
    jax.block_until_ready(ref)
    # bf16 MXU inputs + bf16 intermediate stores -> allow ~1e-2-scale error at the
    # sigmoid output (f32 reference).
    assert jnp.allclose(out, ref, atol=3e-2, rtol=0), float(jnp.max(jnp.abs(out - ref)))

    print("KERNEL_OK")
</pallas_src>

<mosaic_0001>
module attributes {stable_mosaic.version = 11 : i64} {
  func.func @_matmul_bias_act_kernel(%arg0: i32, %arg1: memref<256x128xbf16, #tpu.memory_space<vmem>>, %arg2: memref<128x128xbf16, #tpu.memory_space<vmem>>, %arg3: memref<1x128xf32, #tpu.memory_space<vmem>>, %arg4: memref<256x128xbf16, #tpu.memory_space<vmem>>) attributes {dimension_semantics = [#tpu.dimension_semantics<parallel>], iteration_bounds = array<i64: 2>, scalar_prefetch = 0 : i64, scratch_operands = 0 : i64, tpu.core_type = #tpu.core_type<tc>, window_params = [{transform_indices = @transform_0, window_bounds = array<i64: 256, 128>}, {pipeline_mode = #tpu.pipeline_mode<synchronous>, transform_indices = @transform_1, window_bounds = array<i64: 128, 128>}, {pipeline_mode = #tpu.pipeline_mode<synchronous>, transform_indices = @transform_2, window_bounds = array<i64: 1, 128>}, {transform_indices = @transform_3, window_bounds = array<i64: 256, 128>}]} {
    %c0 = arith.constant 0 : index
    %c0_0 = arith.constant 0 : index
    %0 = vector.load %arg1[%c0, %c0_0] : memref<256x128xbf16, #tpu.memory_space<vmem>>, vector<256x128xbf16>
    %c0_1 = arith.constant 0 : index
    %c0_2 = arith.constant 0 : index
    %1 = vector.load %arg2[%c0_1, %c0_2] : memref<128x128xbf16, #tpu.memory_space<vmem>>, vector<128x128xbf16>
    %cst = arith.constant dense<0.000000e+00> : vector<256x128xf32>
    %2 = tpu.matmul %0, %1, %cst {dimension_numbers = #tpu.dot_dimension_numbers<[1], [0], [0], [1], [0, 0, 1, 1], [], []>} : vector<256x128xbf16>, vector<128x128xbf16>, vector<256x128xf32> -> vector<256x128xf32>
    %c0_3 = arith.constant 0 : index
    %c0_4 = arith.constant 0 : index
    %3 = vector.load %arg3[%c0_3, %c0_4] : memref<1x128xf32, #tpu.memory_space<vmem>>, vector<1x128xf32>
    %4 = vector.broadcast %3 : vector<1x128xf32> to vector<256x128xf32>
    %5 = arith.addf %2, %4 : vector<256x128xf32>
    %cst_5 = arith.constant 0.000000e+00 : f32
    %6 = vector.broadcast %cst_5 : f32 to vector<256x128xf32>
    %7 = arith.cmpf oge, %5, %6 : vector<256x128xf32>
    %cst_6 = arith.constant 0.00999999977 : f32
    %8 = vector.broadcast %cst_6 : f32 to vector<256x128xf32>
    %9 = arith.mulf %8, %5 : vector<256x128xf32>
    %10 = arith.select %7, %5, %9 : vector<256x128xi1>, vector<256x128xf32>
    %11 = arith.truncf %10 : vector<256x128xf32> to vector<256x128xbf16>
    %c0_7 = arith.constant 0 : index
    %c0_8 = arith.constant 0 : index
    %12 = vector.load %arg4[%c0_7, %c0_8] : memref<256x128xbf16, #tpu.memory_space<vmem>>, vector<256x128xbf16>
    tpu.vector_store %arg4[%c0_7, %c0_8], %11 {strides = array<i32>} : memref<256x128xbf16, #tpu.memory_space<vmem>>, vector<256x128xbf16>,
    return
  }
  func.func @transform_0(%arg0: i32) -> (i32, i32) {
    %c0_i32 = arith.constant 0 : i32
    %c0_i32_0 = arith.constant 0 : i32
    return %arg0, %c0_i32 : i32, i32
  }
  func.func @transform_1(%arg0: i32) -> (i32, i32) {
    %c0_i32 = arith.constant 0 : i32
    %c0_i32_0 = arith.constant 0 : i32
    %c0_i32_1 = arith.constant 0 : i32
    return %c0_i32, %c0_i32_0 : i32, i32
  }
  func.func @transform_2(%arg0: i32) -> (i32, i32) {
    %c0_i32 = arith.constant 0 : i32
    %c0_i32_0 = arith.constant 0 : i32
    %c0_i32_1 = arith.constant 0 : i32
    return %c0_i32, %c0_i32_0 : i32, i32
  }
  func.func @transform_3(%arg0: i32) -> (i32, i32) {
    %c0_i32 = arith.constant 0 : i32
    %c0_i32_0 = arith.constant 0 : i32
    return %arg0, %c0_i32 : i32, i32
  }
}

module attributes {stable_mosaic.version = 11 : i64} {
  func.func @_matmul_stats_kernel(%arg0: i32, %arg1: i32, %arg2: memref<64x1024xbf16, #tpu.memory_space<vmem>>, %arg3: memref<1024x128xbf16, #tpu.memory_space<vmem>>, %arg4: memref<64x128xbf16, #tpu.memory_space<vmem>>, %arg5: memref<1x1x128xf32, #tpu.memory_space<vmem>>, %arg6: memref<1x1x128xf32, #tpu.memory_space<vmem>>) attributes {dimension_semantics = [#tpu.dimension_semantics<parallel>, #tpu.dimension_semantics<arbitrary>], iteration_bounds = array<i64: 2, 1>, scalar_prefetch = 0 : i64, scratch_operands = 0 : i64, tpu.core_type = #tpu.core_type<tc>, window_params = [{transform_indices = @transform_0, window_bounds = array<i64: 64, 1024>}, {pipeline_mode = #tpu.pipeline_mode<synchronous>, transform_indices = @transform_1, window_bounds = array<i64: 1024, 128>}, {transform_indices = @transform_2, window_bounds = array<i64: 64, 128>}, {transform_indices = @transform_3, window_bounds = array<i64: 1, 1, 128>}, {transform_indices = @transform_4, window_bounds = array<i64: 1, 1, 128>}]} {
    %c0 = arith.constant 0 : index
    %c0_0 = arith.constant 0 : index
    %0 = vector.load %arg2[%c0, %c0_0] : memref<64x1024xbf16, #tpu.memory_space<vmem>>, vector<64x1024xbf16>
    %c0_1 = arith.constant 0 : index
    %c0_2 = arith.constant 0 : index
    %1 = vector.load %arg3[%c0_1, %c0_2] : memref<1024x128xbf16, #tpu.memory_space<vmem>>, vector<1024x128xbf16>
    %cst = arith.constant dense<0.000000e+00> : vector<64x128xf32>
    %2 = tpu.matmul %0, %1, %cst {dimension_numbers = #tpu.dot_dimension_numbers<[1], [0], [0], [1], [0, 0, 1, 1], [], []>} : vector<64x1024xbf16>, vector<1024x128xbf16>, vector<64x128xf32> -> vector<64x128xf32>
    %3 = arith.truncf %2 : vector<64x128xf32> to vector<64x128xbf16>
    %c0_3 = arith.constant 0 : index
    %c0_4 = arith.constant 0 : index
    %4 = vector.load %arg4[%c0_3, %c0_4] : memref<64x128xbf16, #tpu.memory_space<vmem>>, vector<64x128xbf16>
    tpu.vector_store %arg4[%c0_3, %c0_4], %3 {strides = array<i32>} : memref<64x128xbf16, #tpu.memory_space<vmem>>, vector<64x128xbf16>,
    %c0_i32 = arith.constant 0 : i32
    %5 = arith.cmpi eq, %arg1, %c0_i32 : i32
    %6 = arith.extui %5 : i1 to i32
    %c0_i32_5 = arith.constant 0 : i32
    %7 = arith.cmpi ne, %6, %c0_i32_5 : i32
    scf.if %7 {
      %cst_20 = arith.constant 0.000000e+00 : f32
      %19 = vector.broadcast %cst_20 : f32 to vector<1x1x128xf32>
      %c0_21 = arith.constant 0 : index
      %c0_22 = arith.constant 0 : index
      %c0_23 = arith.constant 0 : index
      %20 = vector.load %arg5[%c0_21, %c0_22, %c0_23] : memref<1x1x128xf32, #tpu.memory_space<vmem>>, vector<1x1x128xf32>
      tpu.vector_store %arg5[%c0_21, %c0_22, %c0_23], %19 {strides = array<i32>} : memref<1x1x128xf32, #tpu.memory_space<vmem>>, vector<1x1x128xf32>,
      %cst_24 = arith.constant 0.000000e+00 : f32
      %21 = vector.broadcast %cst_24 : f32 to vector<1x1x128xf32>
      %c0_25 = arith.constant 0 : index
      %c0_26 = arith.constant 0 : index
      %c0_27 = arith.constant 0 : index
      %22 = vector.load %arg6[%c0_25, %c0_26, %c0_27] : memref<1x1x128xf32, #tpu.memory_space<vmem>>, vector<1x1x128xf32>
      tpu.vector_store %arg6[%c0_25, %c0_26, %c0_27], %21 {strides = array<i32>} : memref<1x1x128xf32, #tpu.memory_space<vmem>>, vector<1x1x128xf32>,
    } else {
    }
    %c0_6 = arith.constant 0 : index
    %c0_7 = arith.constant 0 : index
    %c0_8 = arith.constant 0 : index
    %8 = vector.load %arg5[%c0_6, %c0_7, %c0_8] : memref<1x1x128xf32, #tpu.memory_space<vmem>>, vector<1x1x128xf32>
    %cst_9 = arith.constant dense<0.000000e+00> : vector<128xf32>
    %9 = vector.multi_reduction <add>, %2, %cst_9 [0] : vector<64x128xf32> to vector<128xf32>
    %10 = vector.shape_cast %9 : vector<128xf32> to vector<1x1x128xf32>
    %11 = arith.addf %8, %10 : vector<1x1x128xf32>
    %c0_10 = arith.constant 0 : index
    %c0_11 = arith.constant 0 : index
    %c0_12 = arith.constant 0 : index
    %12 = vector.load %arg5[%c0_10, %c0_11, %c0_12] : memref<1x1x128xf32, #tpu.memory_space<vmem>>, vector<1x1x128xf32>
    tpu.vector_store %arg5[%c0_10, %c0_11, %c0_12], %11 {strides = array<i32>} : memref<1x1x128xf32, #tpu.memory_space<vmem>>, vector<1x1x128xf32>,
    %c0_13 = arith.constant 0 : index
    %c0_14 = arith.constant 0 : index
    %c0_15 = arith.constant 0 : index
    %13 = vector.load %arg6[%c0_13, %c0_14, %c0_15] : memref<1x1x128xf32, #tpu.memory_space<vmem>>, vector<1x1x128xf32>
    %14 = arith.mulf %2, %2 : vector<64x128xf32>
    %cst_16 = arith.constant dense<0.000000e+00> : vector<128xf32>
    %15 = vector.multi_reduction <add>, %14, %cst_16 [0] : vector<64x128xf32> to vector<128xf32>
    %16 = vector.shape_cast %15 : vector<128xf32> to vector<1x1x128xf32>
    %17 = arith.addf %13, %16 : vector<1x1x128xf32>
    %c0_17 = arith.constant 0 : index
    %c0_18 = arith.constant 0 : index
    %c0_19 = arith.constant 0 : index
    %18 = vector.load %arg6[%c0_17, %c0_18, %c0_19] : memref<1x1x128xf32, #tpu.memory_space<vmem>>, vector<1x1x128xf32>
    tpu.vector_store %arg6[%c0_17, %c0_18, %c0_19], %17 {strides = array<i32>} : memref<1x1x128xf32, #tpu.memory_space<vmem>>, vector<1x1x128xf32>,
    return
  }
  func.func @transform_0(%arg0: i32, %arg1: i32) -> (i32, i32) {
    %c1_i32 = arith.constant 1 : i32
    %0 = arith.muli %arg0, %c1_i32 : i32
    %1 = arith.addi %0, %arg1 : i32
    %c0_i32 = arith.constant 0 : i32
    %c0_i32_0 = arith.constant 0 : i32
    return %1, %c0_i32 : i32, i32
  }
  func.func @transform_1(%arg0: i32, %arg1: i32) -> (i32, i32) {
    %c0_i32 = arith.constant 0 : i32
    %c0_i32_0 = arith.constant 0 : i32
    %c0_i32_1 = arith.constant 0 : i32
    return %c0_i32, %c0_i32_0 : i32, i32
  }
  func.func @transform_2(%arg0: i32, %arg1: i32) -> (i32, i32) {
    %c1_i32 = arith.constant 1 : i32
    %0 = arith.muli %arg0, %c1_i32 : i32
    %1 = arith.addi %0, %arg1 : i32
    %c0_i32 = arith.constant 0 : i32
    %c0_i32_0 = arith.constant 0 : i32
    return %1, %c0_i32 : i32, i32
  }
  func.func @transform_3(%arg0: i32, %arg1: i32) -> (i32, i32, i32) {
    %c0_i32 = arith.constant 0 : i32
    %c0_i32_0 = arith.constant 0 : i32
    %c0_i32_1 = arith.constant 0 : i32
    return %arg0, %c0_i32, %c0_i32_0 : i32, i32, i32
  }
  func.func @transform_4(%arg0: i32, %arg1: i32) -> (i32, i32, i32) {
    %c0_i32 = arith.constant 0 : i32
    %c0_i32_0 = arith.constant 0 : i32
    %c0_i32_1 = arith.constant 0 : i32
    return %arg0, %c0_i32, %c0_i32_0 : i32, i32, i32
  }
}

module attributes {stable_mosaic.version = 11 : i64} {
  func.func @_affine_act_kernel(%arg0: i32, %arg1: memref<64x128xbf16, #tpu.memory_space<vmem>>, %arg2: memref<1x128xf32, #tpu.memory_space<vmem>>, %arg3: memref<1x128xf32, #tpu.memory_space<vmem>>, %arg4: memref<64x128xbf16, #tpu.memory_space<vmem>>) attributes {dimension_semantics = [#tpu.dimension_semantics<parallel>], iteration_bounds = array<i64: 2>, scalar_prefetch = 0 : i64, scratch_operands = 0 : i64, tpu.core_type = #tpu.core_type<tc>, window_params = [{transform_indices = @transform_0, window_bounds = array<i64: 64, 128>}, {pipeline_mode = #tpu.pipeline_mode<synchronous>, transform_indices = @transform_1, window_bounds = array<i64: 1, 128>}, {pipeline_mode = #tpu.pipeline_mode<synchronous>, transform_indices = @transform_2, window_bounds = array<i64: 1, 128>}, {transform_indices = @transform_3, window_bounds = array<i64: 64, 128>}]} {
    %c0 = arith.constant 0 : index
    %c0_0 = arith.constant 0 : index
    %0 = vector.load %arg1[%c0, %c0_0] : memref<64x128xbf16, #tpu.memory_space<vmem>>, vector<64x128xbf16>
    %1 = arith.extf %0 : vector<64x128xbf16> to vector<64x128xf32>
    %c0_1 = arith.constant 0 : index
    %c0_2 = arith.constant 0 : index
    %2 = vector.load %arg2[%c0_1, %c0_2] : memref<1x128xf32, #tpu.memory_space<vmem>>, vector<1x128xf32>
    %3 = vector.broadcast %2 : vector<1x128xf32> to vector<64x128xf32>
    %4 = arith.mulf %1, %3 : vector<64x128xf32>
    %c0_3 = arith.constant 0 : index
    %c0_4 = arith.constant 0 : index
    %5 = vector.load %arg3[%c0_3, %c0_4] : memref<1x128xf32, #tpu.memory_space<vmem>>, vector<1x128xf32>
    %6 = vector.broadcast %5 : vector<1x128xf32> to vector<64x128xf32>
    %7 = arith.addf %4, %6 : vector<64x128xf32>
    %cst = arith.constant 0.000000e+00 : f32
    %8 = vector.broadcast %cst : f32 to vector<64x128xf32>
    %9 = arith.cmpf oge, %7, %8 : vector<64x128xf32>
    %cst_5 = arith.constant 0.00999999977 : f32
    %10 = vector.broadcast %cst_5 : f32 to vector<64x128xf32>
    %11 = arith.mulf %10, %7 : vector<64x128xf32>
    %12 = arith.select %9, %7, %11 : vector<64x128xi1>, vector<64x128xf32>
    %13 = arith.truncf %12 : vector<64x128xf32> to vector<64x128xbf16>
    %c0_6 = arith.constant 0 : index
    %c0_7 = arith.constant 0 : index
    %14 = vector.load %arg4[%c0_6, %c0_7] : memref<64x128xbf16, #tpu.memory_space<vmem>>, vector<64x128xbf16>
    tpu.vector_store %arg4[%c0_6, %c0_7], %13 {strides = array<i32>} : memref<64x128xbf16, #tpu.memory_space<vmem>>, vector<64x128xbf16>,
    return
  }
  func.func @transform_0(%arg0: i32) -> (i32, i32) {
    %c0_i32 = arith.constant 0 : i32
    %c0_i32_0 = arith.constant 0 : i32
    return %arg0, %c0_i32 : i32, i32
  }
  func.func @transform_1(%arg0: i32) -> (i32, i32) {
    %c0_i32 = arith.constant 0 : i32
    %c0_i32_0 = arith.constant 0 : i32
    %c0_i32_1 = arith.constant 0 : i32
    return %c0_i32, %c0_i32_0 : i32, i32
  }
  func.func @transform_2(%arg0: i32) -> (i32, i32) {
    %c0_i32 = arith.constant 0 : i32
    %c0_i32_0 = arith.constant 0 : i32
    %c0_i32_1 = arith.constant 0 : i32
    return %c0_i32, %c0_i32_0 : i32, i32
  }
  func.func @transform_3(%arg0: i32) -> (i32, i32) {
    %c0_i32 = arith.constant 0 : i32
    %c0_i32_0 = arith.constant 0 : i32
    return %arg0, %c0_i32 : i32, i32
  }
}

module attributes {stable_mosaic.version = 11 : i64} {
  func.func @_matmul_stats_kernel(%arg0: i32, %arg1: i32, %arg2: memref<16x2048xbf16, #tpu.memory_space<vmem>>, %arg3: memref<2048x256xbf16, #tpu.memory_space<vmem>>, %arg4: memref<16x256xbf16, #tpu.memory_space<vmem>>, %arg5: memref<1x1x256xf32, #tpu.memory_space<vmem>>, %arg6: memref<1x1x256xf32, #tpu.memory_space<vmem>>) attributes {dimension_semantics = [#tpu.dimension_semantics<parallel>, #tpu.dimension_semantics<arbitrary>], iteration_bounds = array<i64: 2, 1>, scalar_prefetch = 0 : i64, scratch_operands = 0 : i64, tpu.core_type = #tpu.core_type<tc>, window_params = [{transform_indices = @transform_0, window_bounds = array<i64: 16, 2048>}, {pipeline_mode = #tpu.pipeline_mode<synchronous>, transform_indices = @transform_1, window_bounds = array<i64: 2048, 256>}, {transform_indices = @transform_2, window_bounds = array<i64: 16, 256>}, {transform_indices = @transform_3, window_bounds = array<i64: 1, 1, 256>}, {transform_indices = @transform_4, window_bounds = array<i64: 1, 1, 256>}]} {
    %c0 = arith.constant 0 : index
    %c0_0 = arith.constant 0 : index
    %0 = vector.load %arg2[%c0, %c0_0] : memref<16x2048xbf16, #tpu.memory_space<vmem>>, vector<16x2048xbf16>
    %c0_1 = arith.constant 0 : index
    %c0_2 = arith.constant 0 : index
    %1 = vector.load %arg3[%c0_1, %c0_2] : memref<2048x256xbf16, #tpu.memory_space<vmem>>, vector<2048x256xbf16>
    %cst = arith.constant dense<0.000000e+00> : vector<16x256xf32>
    %2 = tpu.matmul %0, %1, %cst {dimension_numbers = #tpu.dot_dimension_numbers<[1], [0], [0], [1], [0, 0, 1, 1], [], []>} : vector<16x2048xbf16>, vector<2048x256xbf16>, vector<16x256xf32> -> vector<16x256xf32>
    %3 = arith.truncf %2 : vector<16x256xf32> to vector<16x256xbf16>
    %c0_3 = arith.constant 0 : index
    %c0_4 = arith.constant 0 : index
    %4 = vector.load %arg4[%c0_3, %c0_4] : memref<16x256xbf16, #tpu.memory_space<vmem>>, vector<16x256xbf16>
    tpu.vector_store %arg4[%c0_3, %c0_4], %3 {strides = array<i32>} : memref<16x256xbf16, #tpu.memory_space<vmem>>, vector<16x256xbf16>,
    %c0_i32 = arith.constant 0 : i32
    %5 = arith.cmpi eq, %arg1, %c0_i32 : i32
    %6 = arith.extui %5 : i1 to i32
    %c0_i32_5 = arith.constant 0 : i32
    %7 = arith.cmpi ne, %6, %c0_i32_5 : i32
    scf.if %7 {
      %cst_20 = arith.constant 0.000000e+00 : f32
      %19 = vector.broadcast %cst_20 : f32 to vector<1x1x256xf32>
      %c0_21 = arith.constant 0 : index
      %c0_22 = arith.constant 0 : index
      %c0_23 = arith.constant 0 : index
      %20 = vector.load %arg5[%c0_21, %c0_22, %c0_23] : memref<1x1x256xf32, #tpu.memory_space<vmem>>, vector<1x1x256xf32>
      tpu.vector_store %arg5[%c0_21, %c0_22, %c0_23], %19 {strides = array<i32>} : memref<1x1x256xf32, #tpu.memory_space<vmem>>, vector<1x1x256xf32>,
      %cst_24 = arith.constant 0.000000e+00 : f32
      %21 = vector.broadcast %cst_24 : f32 to vector<1x1x256xf32>
      %c0_25 = arith.constant 0 : index
      %c0_26 = arith.constant 0 : index
      %c0_27 = arith.constant 0 : index
      %22 = vector.load %arg6[%c0_25, %c0_26, %c0_27] : memref<1x1x256xf32, #tpu.memory_space<vmem>>, vector<1x1x256xf32>
      tpu.vector_store %arg6[%c0_25, %c0_26, %c0_27], %21 {strides = array<i32>} : memref<1x1x256xf32, #tpu.memory_space<vmem>>, vector<1x1x256xf32>,
    } else {
    }
    %c0_6 = arith.constant 0 : index
    %c0_7 = arith.constant 0 : index
    %c0_8 = arith.constant 0 : index
    %8 = vector.load %arg5[%c0_6, %c0_7, %c0_8] : memref<1x1x256xf32, #tpu.memory_space<vmem>>, vector<1x1x256xf32>
    %cst_9 = arith.constant dense<0.000000e+00> : vector<256xf32>
    %9 = vector.multi_reduction <add>, %2, %cst_9 [0] : vector<16x256xf32> to vector<256xf32>
    %10 = vector.shape_cast %9 : vector<256xf32> to vector<1x1x256xf32>
    %11 = arith.addf %8, %10 : vector<1x1x256xf32>
    %c0_10 = arith.constant 0 : index
    %c0_11 = arith.constant 0 : index
    %c0_12 = arith.constant 0 : index
    %12 = vector.load %arg5[%c0_10, %c0_11, %c0_12] : memref<1x1x256xf32, #tpu.memory_space<vmem>>, vector<1x1x256xf32>
    tpu.vector_store %arg5[%c0_10, %c0_11, %c0_12], %11 {strides = array<i32>} : memref<1x1x256xf32, #tpu.memory_space<vmem>>, vector<1x1x256xf32>,
    %c0_13 = arith.constant 0 : index
    %c0_14 = arith.constant 0 : index
    %c0_15 = arith.constant 0 : index
    %13 = vector.load %arg6[%c0_13, %c0_14, %c0_15] : memref<1x1x256xf32, #tpu.memory_space<vmem>>, vector<1x1x256xf32>
    %14 = arith.mulf %2, %2 : vector<16x256xf32>
    %cst_16 = arith.constant dense<0.000000e+00> : vector<256xf32>
    %15 = vector.multi_reduction <add>, %14, %cst_16 [0] : vector<16x256xf32> to vector<256xf32>
    %16 = vector.shape_cast %15 : vector<256xf32> to vector<1x1x256xf32>
    %17 = arith.addf %13, %16 : vector<1x1x256xf32>
    %c0_17 = arith.constant 0 : index
    %c0_18 = arith.constant 0 : index
    %c0_19 = arith.constant 0 : index
    %18 = vector.load %arg6[%c0_17, %c0_18, %c0_19] : memref<1x1x256xf32, #tpu.memory_space<vmem>>, vector<1x1x256xf32>
    tpu.vector_store %arg6[%c0_17, %c0_18, %c0_19], %17 {strides = array<i32>} : memref<1x1x256xf32, #tpu.memory_space<vmem>>, vector<1x1x256xf32>,
    return
  }
  func.func @transform_0(%arg0: i32, %arg1: i32) -> (i32, i32) {
    %c1_i32 = arith.constant 1 : i32
    %0 = arith.muli %arg0, %c1_i32 : i32
    %1 = arith.addi %0, %arg1 : i32
    %c0_i32 = arith.constant 0 : i32
    %c0_i32_0 = arith.constant 0 : i32
    return %1, %c0_i32 : i32, i32
  }
  func.func @transform_1(%arg0: i32, %arg1: i32) -> (i32, i32) {
    %c0_i32 = arith.constant 0 : i32
    %c0_i32_0 = arith.constant 0 : i32
    %c0_i32_1 = arith.constant 0 : i32
    return %c0_i32, %c0_i32_0 : i32, i32
  }
  func.func @transform_2(%arg0: i32, %arg1: i32) -> (i32, i32) {
    %c1_i32 = arith.constant 1 : i32
    %0 = arith.muli %arg0, %c1_i32 : i32
    %1 = arith.addi %0, %arg1 : i32
    %c0_i32 = arith.constant 0 : i32
    %c0_i32_0 = arith.constant 0 : i32
    return %1, %c0_i32 : i32, i32
  }
  func.func @transform_3(%arg0: i32, %arg1: i32) -> (i32, i32, i32) {
    %c0_i32 = arith.constant 0 : i32
    %c0_i32_0 = arith.constant 0 : i32
    %c0_i32_1 = arith.constant 0 : i32
    return %arg0, %c0_i32, %c0_i32_0 : i32, i32, i32
  }
  func.func @transform_4(%arg0: i32, %arg1: i32) -> (i32, i32, i32) {
    %c0_i32 = arith.constant 0 : i32
    %c0_i32_0 = arith.constant 0 : i32
    %c0_i32_1 = arith.constant 0 : i32
    return %arg0, %c0_i32, %c0_i32_0 : i32, i32, i32
  }
}

module attributes {stable_mosaic.version = 11 : i64} {
  func.func @_affine_act_kernel(%arg0: i32, %arg1: memref<16x256xbf16, #tpu.memory_space<vmem>>, %arg2: memref<1x256xf32, #tpu.memory_space<vmem>>, %arg3: memref<1x256xf32, #tpu.memory_space<vmem>>, %arg4: memref<16x256xbf16, #tpu.memory_space<vmem>>) attributes {dimension_semantics = [#tpu.dimension_semantics<parallel>], iteration_bounds = array<i64: 2>, scalar_prefetch = 0 : i64, scratch_operands = 0 : i64, tpu.core_type = #tpu.core_type<tc>, window_params = [{transform_indices = @transform_0, window_bounds = array<i64: 16, 256>}, {pipeline_mode = #tpu.pipeline_mode<synchronous>, transform_indices = @transform_1, window_bounds = array<i64: 1, 256>}, {pipeline_mode = #tpu.pipeline_mode<synchronous>, transform_indices = @transform_2, window_bounds = array<i64: 1, 256>}, {transform_indices = @transform_3, window_bounds = array<i64: 16, 256>}]} {
    %c0 = arith.constant 0 : index
    %c0_0 = arith.constant 0 : index
    %0 = vector.load %arg1[%c0, %c0_0] : memref<16x256xbf16, #tpu.memory_space<vmem>>, vector<16x256xbf16>
    %1 = arith.extf %0 : vector<16x256xbf16> to vector<16x256xf32>
    %c0_1 = arith.constant 0 : index
    %c0_2 = arith.constant 0 : index
    %2 = vector.load %arg2[%c0_1, %c0_2] : memref<1x256xf32, #tpu.memory_space<vmem>>, vector<1x256xf32>
    %3 = vector.broadcast %2 : vector<1x256xf32> to vector<16x256xf32>
    %4 = arith.mulf %1, %3 : vector<16x256xf32>
    %c0_3 = arith.constant 0 : index
    %c0_4 = arith.constant 0 : index
    %5 = vector.load %arg3[%c0_3, %c0_4] : memref<1x256xf32, #tpu.memory_space<vmem>>, vector<1x256xf32>
    %6 = vector.broadcast %5 : vector<1x256xf32> to vector<16x256xf32>
    %7 = arith.addf %4, %6 : vector<16x256xf32>
    %cst = arith.constant 0.000000e+00 : f32
    %8 = vector.broadcast %cst : f32 to vector<16x256xf32>
    %9 = arith.cmpf oge, %7, %8 : vector<16x256xf32>
    %cst_5 = arith.constant 0.00999999977 : f32
    %10 = vector.broadcast %cst_5 : f32 to vector<16x256xf32>
    %11 = arith.mulf %10, %7 : vector<16x256xf32>
    %12 = arith.select %9, %7, %11 : vector<16x256xi1>, vector<16x256xf32>
    %13 = arith.truncf %12 : vector<16x256xf32> to vector<16x256xbf16>
    %c0_6 = arith.constant 0 : index
    %c0_7 = arith.constant 0 : index
    %14 = vector.load %arg4[%c0_6, %c0_7] : memref<16x256xbf16, #tpu.memory_space<vmem>>, vector<16x256xbf16>
    tpu.vector_store %arg4[%c0_6, %c0_7], %13 {strides = array<i32>} : memref<16x256xbf16, #tpu.memory_space<vmem>>, vector<16x256xbf16>,
    return
  }
  func.func @transform_0(%arg0: i32) -> (i32, i32) {
    %c0_i32 = arith.constant 0 : i32
    %c0_i32_0 = arith.constant 0 : i32
    return %arg0, %c0_i32 : i32, i32
  }
  func.func @transform_1(%arg0: i32) -> (i32, i32) {
    %c0_i32 = arith.constant 0 : i32
    %c0_i32_0 = arith.constant 0 : i32
    %c0_i32_1 = arith.constant 0 : i32
    return %c0_i32, %c0_i32_0 : i32, i32
  }
  func.func @transform_2(%arg0: i32) -> (i32, i32) {
    %c0_i32 = arith.constant 0 : i32
    %c0_i32_0 = arith.constant 0 : i32
    %c0_i32_1 = arith.constant 0 : i32
    return %c0_i32, %c0_i32_0 : i32, i32
  }
  func.func @transform_3(%arg0: i32) -> (i32, i32) {
    %c0_i32 = arith.constant 0 : i32
    %c0_i32_0 = arith.constant 0 : i32
    return %arg0, %c0_i32 : i32, i32
  }
}

module attributes {stable_mosaic.version = 11 : i64} {
  func.func @_matmul_stats_kernel(%arg0: i32, %arg1: i32, %arg2: memref<16x4096xbf16, #tpu.memory_space<vmem>>, %arg3: memref<4096x256xbf16, #tpu.memory_space<vmem>>, %arg4: memref<16x256xbf16, #tpu.memory_space<vmem>>, %arg5: memref<1x1x256xf32, #tpu.memory_space<vmem>>, %arg6: memref<1x1x256xf32, #tpu.memory_space<vmem>>) attributes {dimension_semantics = [#tpu.dimension_semantics<parallel>, #tpu.dimension_semantics<arbitrary>], iteration_bounds = array<i64: 2, 1>, scalar_prefetch = 0 : i64, scratch_operands = 0 : i64, tpu.core_type = #tpu.core_type<tc>, window_params = [{transform_indices = @transform_0, window_bounds = array<i64: 16, 4096>}, {pipeline_mode = #tpu.pipeline_mode<synchronous>, transform_indices = @transform_1, window_bounds = array<i64: 4096, 256>}, {transform_indices = @transform_2, window_bounds = array<i64: 16, 256>}, {transform_indices = @transform_3, window_bounds = array<i64: 1, 1, 256>}, {transform_indices = @transform_4, window_bounds = array<i64: 1, 1, 256>}]} {
    %c0 = arith.constant 0 : index
    %c0_0 = arith.constant 0 : index
    %0 = vector.load %arg2[%c0, %c0_0] : memref<16x4096xbf16, #tpu.memory_space<vmem>>, vector<16x4096xbf16>
    %c0_1 = arith.constant 0 : index
    %c0_2 = arith.constant 0 : index
    %1 = vector.load %arg3[%c0_1, %c0_2] : memref<4096x256xbf16, #tpu.memory_space<vmem>>, vector<4096x256xbf16>
    %cst = arith.constant dense<0.000000e+00> : vector<16x256xf32>
    %2 = tpu.matmul %0, %1, %cst {dimension_numbers = #tpu.dot_dimension_numbers<[1], [0], [0], [1], [0, 0, 1, 1], [], []>} : vector<16x4096xbf16>, vector<4096x256xbf16>, vector<16x256xf32> -> vector<16x256xf32>
    %3 = arith.truncf %2 : vector<16x256xf32> to vector<16x256xbf16>
    %c0_3 = arith.constant 0 : index
    %c0_4 = arith.constant 0 : index
    %4 = vector.load %arg4[%c0_3, %c0_4] : memref<16x256xbf16, #tpu.memory_space<vmem>>, vector<16x256xbf16>
    tpu.vector_store %arg4[%c0_3, %c0_4], %3 {strides = array<i32>} : memref<16x256xbf16, #tpu.memory_space<vmem>>, vector<16x256xbf16>,
    %c0_i32 = arith.constant 0 : i32
    %5 = arith.cmpi eq, %arg1, %c0_i32 : i32
    %6 = arith.extui %5 : i1 to i32
    %c0_i32_5 = arith.constant 0 : i32
    %7 = arith.cmpi ne, %6, %c0_i32_5 : i32
    scf.if %7 {
      %cst_20 = arith.constant 0.000000e+00 : f32
      %19 = vector.broadcast %cst_20 : f32 to vector<1x1x256xf32>
      %c0_21 = arith.constant 0 : index
      %c0_22 = arith.constant 0 : index
      %c0_23 = arith.constant 0 : index
      %20 = vector.load %arg5[%c0_21, %c0_22, %c0_23] : memref<1x1x256xf32, #tpu.memory_space<vmem>>, vector<1x1x256xf32>
      tpu.vector_store %arg5[%c0_21, %c0_22, %c0_23], %19 {strides = array<i32>} : memref<1x1x256xf32, #tpu.memory_space<vmem>>, vector<1x1x256xf32>,
      %cst_24 = arith.constant 0.000000e+00 : f32
      %21 = vector.broadcast %cst_24 : f32 to vector<1x1x256xf32>
      %c0_25 = arith.constant 0 : index
      %c0_26 = arith.constant 0 : index
      %c0_27 = arith.constant 0 : index
      %22 = vector.load %arg6[%c0_25, %c0_26, %c0_27] : memref<1x1x256xf32, #tpu.memory_space<vmem>>, vector<1x1x256xf32>
      tpu.vector_store %arg6[%c0_25, %c0_26, %c0_27], %21 {strides = array<i32>} : memref<1x1x256xf32, #tpu.memory_space<vmem>>, vector<1x1x256xf32>,
    } else {
    }
    %c0_6 = arith.constant 0 : index
    %c0_7 = arith.constant 0 : index
    %c0_8 = arith.constant 0 : index
    %8 = vector.load %arg5[%c0_6, %c0_7, %c0_8] : memref<1x1x256xf32, #tpu.memory_space<vmem>>, vector<1x1x256xf32>
    %cst_9 = arith.constant dense<0.000000e+00> : vector<256xf32>
    %9 = vector.multi_reduction <add>, %2, %cst_9 [0] : vector<16x256xf32> to vector<256xf32>
    %10 = vector.shape_cast %9 : vector<256xf32> to vector<1x1x256xf32>
    %11 = arith.addf %8, %10 : vector<1x1x256xf32>
    %c0_10 = arith.constant 0 : index
    %c0_11 = arith.constant 0 : index
    %c0_12 = arith.constant 0 : index
    %12 = vector.load %arg5[%c0_10, %c0_11, %c0_12] : memref<1x1x256xf32, #tpu.memory_space<vmem>>, vector<1x1x256xf32>
    tpu.vector_store %arg5[%c0_10, %c0_11, %c0_12], %11 {strides = array<i32>} : memref<1x1x256xf32, #tpu.memory_space<vmem>>, vector<1x1x256xf32>,
    %c0_13 = arith.constant 0 : index
    %c0_14 = arith.constant 0 : index
    %c0_15 = arith.constant 0 : index
    %13 = vector.load %arg6[%c0_13, %c0_14, %c0_15] : memref<1x1x256xf32, #tpu.memory_space<vmem>>, vector<1x1x256xf32>
    %14 = arith.mulf %2, %2 : vector<16x256xf32>
    %cst_16 = arith.constant dense<0.000000e+00> : vector<256xf32>
    %15 = vector.multi_reduction <add>, %14, %cst_16 [0] : vector<16x256xf32> to vector<256xf32>
    %16 = vector.shape_cast %15 : vector<256xf32> to vector<1x1x256xf32>
    %17 = arith.addf %13, %16 : vector<1x1x256xf32>
    %c0_17 = arith.constant 0 : index
    %c0_18 = arith.constant 0 : index
    %c0_19 = arith.constant 0 : index
    %18 = vector.load %arg6[%c0_17, %c0_18, %c0_19] : memref<1x1x256xf32, #tpu.memory_space<vmem>>, vector<1x1x256xf32>
    tpu.vector_store %arg6[%c0_17, %c0_18, %c0_19], %17 {strides = array<i32>} : memref<1x1x256xf32, #tpu.memory_space<vmem>>, vector<1x1x256xf32>,
    return
  }
  func.func @transform_0(%arg0: i32, %arg1: i32) -> (i32, i32) {
    %c1_i32 = arith.constant 1 : i32
    %0 = arith.muli %arg0, %c1_i32 : i32
    %1 = arith.addi %0, %arg1 : i32
    %c0_i32 = arith.constant 0 : i32
    %c0_i32_0 = arith.constant 0 : i32
    return %1, %c0_i32 : i32, i32
  }
  func.func @transform_1(%arg0: i32, %arg1: i32) -> (i32, i32) {
    %c0_i32 = arith.constant 0 : i32
    %c0_i32_0 = arith.constant 0 : i32
    %c0_i32_1 = arith.constant 0 : i32
    return %c0_i32, %c0_i32_0 : i32, i32
  }
  func.func @transform_2(%arg0: i32, %arg1: i32) -> (i32, i32) {
    %c1_i32 = arith.constant 1 : i32
    %0 = arith.muli %arg0, %c1_i32 : i32
    %1 = arith.addi %0, %arg1 : i32
    %c0_i32 = arith.constant 0 : i32
    %c0_i32_0 = arith.constant 0 : i32
    return %1, %c0_i32 : i32, i32
  }
  func.func @transform_3(%arg0: i32, %arg1: i32) -> (i32, i32, i32) {
    %c0_i32 = arith.constant 0 : i32
    %c0_i32_0 = arith.constant 0 : i32
    %c0_i32_1 = arith.constant 0 : i32
    return %arg0, %c0_i32, %c0_i32_0 : i32, i32, i32
  }
  func.func @transform_4(%arg0: i32, %arg1: i32) -> (i32, i32, i32) {
    %c0_i32 = arith.constant 0 : i32
    %c0_i32_0 = arith.constant 0 : i32
    %c0_i32_1 = arith.constant 0 : i32
    return %arg0, %c0_i32, %c0_i32_0 : i32, i32, i32
  }
}

module attributes {stable_mosaic.version = 11 : i64} {
  func.func @_affine_act_kernel(%arg0: i32, %arg1: memref<16x256xbf16, #tpu.memory_space<vmem>>, %arg2: memref<1x256xf32, #tpu.memory_space<vmem>>, %arg3: memref<1x256xf32, #tpu.memory_space<vmem>>, %arg4: memref<16x256xbf16, #tpu.memory_space<vmem>>) attributes {dimension_semantics = [#tpu.dimension_semantics<parallel>], iteration_bounds = array<i64: 2>, scalar_prefetch = 0 : i64, scratch_operands = 0 : i64, tpu.core_type = #tpu.core_type<tc>, window_params = [{transform_indices = @transform_0, window_bounds = array<i64: 16, 256>}, {pipeline_mode = #tpu.pipeline_mode<synchronous>, transform_indices = @transform_1, window_bounds = array<i64: 1, 256>}, {pipeline_mode = #tpu.pipeline_mode<synchronous>, transform_indices = @transform_2, window_bounds = array<i64: 1, 256>}, {transform_indices = @transform_3, window_bounds = array<i64: 16, 256>}]} {
    %c0 = arith.constant 0 : index
    %c0_0 = arith.constant 0 : index
    %0 = vector.load %arg1[%c0, %c0_0] : memref<16x256xbf16, #tpu.memory_space<vmem>>, vector<16x256xbf16>
    %1 = arith.extf %0 : vector<16x256xbf16> to vector<16x256xf32>
    %c0_1 = arith.constant 0 : index
    %c0_2 = arith.constant 0 : index
    %2 = vector.load %arg2[%c0_1, %c0_2] : memref<1x256xf32, #tpu.memory_space<vmem>>, vector<1x256xf32>
    %3 = vector.broadcast %2 : vector<1x256xf32> to vector<16x256xf32>
    %4 = arith.mulf %1, %3 : vector<16x256xf32>
    %c0_3 = arith.constant 0 : index
    %c0_4 = arith.constant 0 : index
    %5 = vector.load %arg3[%c0_3, %c0_4] : memref<1x256xf32, #tpu.memory_space<vmem>>, vector<1x256xf32>
    %6 = vector.broadcast %5 : vector<1x256xf32> to vector<16x256xf32>
    %7 = arith.addf %4, %6 : vector<16x256xf32>
    %cst = arith.constant 0.000000e+00 : f32
    %8 = vector.broadcast %cst : f32 to vector<16x256xf32>
    %9 = arith.maximumf %7, %8 : vector<16x256xf32>
    %10 = arith.truncf %9 : vector<16x256xf32> to vector<16x256xbf16>
    %c0_5 = arith.constant 0 : index
    %c0_6 = arith.constant 0 : index
    %11 = vector.load %arg4[%c0_5, %c0_6] : memref<16x256xbf16, #tpu.memory_space<vmem>>, vector<16x256xbf16>
    tpu.vector_store %arg4[%c0_5, %c0_6], %10 {strides = array<i32>} : memref<16x256xbf16, #tpu.memory_space<vmem>>, vector<16x256xbf16>,
    return
  }
  func.func @transform_0(%arg0: i32) -> (i32, i32) {
    %c0_i32 = arith.constant 0 : i32
    %c0_i32_0 = arith.constant 0 : i32
    return %arg0, %c0_i32 : i32, i32
  }
  func.func @transform_1(%arg0: i32) -> (i32, i32) {
    %c0_i32 = arith.constant 0 : i32
    %c0_i32_0 = arith.constant 0 : i32
    %c0_i32_1 = arith.constant 0 : i32
    return %c0_i32, %c0_i32_0 : i32, i32
  }
  func.func @transform_2(%arg0: i32) -> (i32, i32) {
    %c0_i32 = arith.constant 0 : i32
    %c0_i32_0 = arith.constant 0 : i32
    %c0_i32_1 = arith.constant 0 : i32
    return %c0_i32, %c0_i32_0 : i32, i32
  }
  func.func @transform_3(%arg0: i32) -> (i32, i32) {
    %c0_i32 = arith.constant 0 : i32
    %c0_i32_0 = arith.constant 0 : i32
    return %arg0, %c0_i32 : i32, i32
  }
}

module attributes {stable_mosaic.version = 11 : i64} {
  func.func @_matmul_bias_act_kernel(%arg0: i32, %arg1: memref<16x4096xbf16, #tpu.memory_space<vmem>>, %arg2: memref<4096x128xbf16, #tpu.memory_space<vmem>>, %arg3: memref<1x128xf32, #tpu.memory_space<vmem>>, %arg4: memref<16x128xf32, #tpu.memory_space<vmem>>) attributes {dimension_semantics = [#tpu.dimension_semantics<parallel>], iteration_bounds = array<i64: 1>, scalar_prefetch = 0 : i64, scratch_operands = 0 : i64, tpu.core_type = #tpu.core_type<tc>, window_params = [{transform_indices = @transform_0, window_bounds = array<i64: 16, 4096>}, {pipeline_mode = #tpu.pipeline_mode<synchronous>, transform_indices = @transform_1, window_bounds = array<i64: 4096, 128>}, {pipeline_mode = #tpu.pipeline_mode<synchronous>, transform_indices = @transform_2, window_bounds = array<i64: 1, 128>}, {transform_indices = @transform_3, window_bounds = array<i64: 16, 128>}]} {
    %c0 = arith.constant 0 : index
    %c0_0 = arith.constant 0 : index
    %0 = vector.load %arg1[%c0, %c0_0] : memref<16x4096xbf16, #tpu.memory_space<vmem>>, vector<16x4096xbf16>
    %c0_1 = arith.constant 0 : index
    %c0_2 = arith.constant 0 : index
    %1 = vector.load %arg2[%c0_1, %c0_2] : memref<4096x128xbf16, #tpu.memory_space<vmem>>, vector<4096x128xbf16>
    %cst = arith.constant dense<0.000000e+00> : vector<16x128xf32>
    %2 = tpu.matmul %0, %1, %cst {dimension_numbers = #tpu.dot_dimension_numbers<[1], [0], [0], [1], [0, 0, 1, 1], [], []>} : vector<16x4096xbf16>, vector<4096x128xbf16>, vector<16x128xf32> -> vector<16x128xf32>
    %c0_3 = arith.constant 0 : index
    %c0_4 = arith.constant 0 : index
    %3 = vector.load %arg3[%c0_3, %c0_4] : memref<1x128xf32, #tpu.memory_space<vmem>>, vector<1x128xf32>
    %4 = vector.broadcast %3 : vector<1x128xf32> to vector<16x128xf32>
    %5 = arith.addf %2, %4 : vector<16x128xf32>
    %6 = arith.negf %5 : vector<16x128xf32>
    %7 = math.exp %6 : vector<16x128xf32>
    %cst_5 = arith.constant 1.000000e+00 : f32
    %8 = vector.broadcast %cst_5 : f32 to vector<16x128xf32>
    %9 = arith.addf %8, %7 : vector<16x128xf32>
    %10 = arith.divf %8, %9 : vector<16x128xf32>
    %c0_6 = arith.constant 0 : index
    %c0_7 = arith.constant 0 : index
    %11 = vector.load %arg4[%c0_6, %c0_7] : memref<16x128xf32, #tpu.memory_space<vmem>>, vector<16x128xf32>
    tpu.vector_store %arg4[%c0_6, %c0_7], %10 {strides = array<i32>} : memref<16x128xf32, #tpu.memory_space<vmem>>, vector<16x128xf32>,
    return
  }
  func.func @transform_0(%arg0: i32) -> (i32, i32) {
    %c0_i32 = arith.constant 0 : i32
    %c0_i32_0 = arith.constant 0 : i32
    return %arg0, %c0_i32 : i32, i32
  }
  func.func @transform_1(%arg0: i32) -> (i32, i32) {
    %c0_i32 = arith.constant 0 : i32
    %c0_i32_0 = arith.constant 0 : i32
    %c0_i32_1 = arith.constant 0 : i32
    return %c0_i32, %c0_i32_0 : i32, i32
  }
  func.func @transform_2(%arg0: i32) -> (i32, i32) {
    %c0_i32 = arith.constant 0 : i32
    %c0_i32_0 = arith.constant 0 : i32
    %c0_i32_1 = arith.constant 0 : i32
    return %c0_i32, %c0_i32_0 : i32, i32
  }
  func.func @transform_3(%arg0: i32) -> (i32, i32) {
    %c0_i32 = arith.constant 0 : i32
    %c0_i32_0 = arith.constant 0 : i32
    return %arg0, %c0_i32 : i32, i32
  }
}

</mosaic_0001>

<llo_original>
// kernel: discriminator_forward.8
$region0: #{discriminator_forward.8}
  #allocation0 [shape = 'u32[]', space=smem, size = 0x4, offset = 0x4, fixed_abs, tag = 'smem constant byte address 0x4 - core index']
  #allocation1 [shape = 'u32[144,128]{1,0:T(1,128)}', space=vmem, size = 0x12000, scoped, tag = 'internal scratch']
  %s0 = inlined_call_operand.vmem [shape: bf16[512,128], index: 0, kind: input, shape index: {}]
  %s1 = inlined_call_operand.vmem [shape: bf16[128,128], index: 1, kind: input, shape index: {}]
  %s2 = inlined_call_operand.vmem [shape: f32[1,128], index: 2, kind: input, shape index: {}]
  %s3 = inlined_call_operand.vmem [shape: bf16[512,128], index: 3, kind: output, shape index: {}]
  %s4 = sld [smem:[#allocation0]]
  $region45: #{discriminator_forward.8} parent=0
    _
  %s6 = ssub.s32 1, %s4
  %s7 = scalar_select 0, %s6, %s4
  loop: start=0, step=1, limit=4
  $region2: #{discriminator_forward.8} parent=0 // loop_pre_header
    _
  $region3: #{discriminator_forward.8} parent=0 // loop_header
    %s9 = sphi 0, %s13
    %p10 = scmp.ge.s32.totalorder %s9, 4
    %s19 = sphi 0, %s21
    %s22 = sphi 0, %s19
    %s23 = sphi 0, %s22
    %s39 = sphi 0, %s23
    %s43 = sphi 0, %s43
    %s45 = sphi 0, %s43
    %s46 = sphi 0, %s45
    %s60 = sphi 0, %s46
    %s64 = sphi 0, %s64
    %s66 = sphi 0, %s64
    %s67 = sphi 0, %s66
    %s81 = sphi 0, %s67
    %s87 = sphi 0, %s89
    %s90 = sphi 0, %s87
    %s91 = sphi 0, %s90
    %s107 = sphi 0, %s91
  $region4: #{discriminator_forward.8} parent=0 // loop_header_branch
    %12 = sbr.rel (%p10) target = $region8
  $region5: #{discriminator_forward.8} parent=0 // loop_body
    %s14 = ssub.s32 %s9, 1
    %s15 = ssub.s32 %s9, 2
    %s16 = sadd.s32 %s9, 1
    %s17 = ssub.s32 %s9, %s16
    %p18 = scmp.eq.s32.totalorder %s17, 0
    %s20 = sadd.s32 %s19, 1
    %s21 = scalar_select %p18, %s19, %s20
    %p24 = pneg %p18
    %p25 = scmp.eq.s32.totalorder %s9, 1
    %p26 = por %p24, %p25
    %p27 = scmp.ne.s32.totalorder %s19, %s22
    %p28 = scmp.eq.s32.totalorder %s9, 0
    %p29 = por %p27, %p28
    %p30 = scmp.ne.s32.totalorder %s19, %s22
    %p31 = scmp.eq.s32.totalorder %s14, 1
    %p32 = por %p30, %p31
    %p33 = scmp.ne.s32.totalorder %s22, %s23
    %p34 = scmp.eq.s32.totalorder %s14, 0
    %p35 = por %p33, %p34
    %p36 = scmp.ne.s32.totalorder %s22, %s23
    %p37 = scmp.eq.s32.totalorder %s15, 1
    %p38 = por %p36, %p37
    %p40 = scmp.ne.s32.totalorder %s23, %s39
    %p41 = scmp.eq.s32.totalorder %s15, 0
    %p42 = por %p40, %p41
    %s44 = sadd.s32 %s43, 1
    %p47 = scmp.eq.s32.totalorder %s9, 1
    %p48 = scmp.ne.s32.totalorder %s43, %s45
    %p49 = scmp.eq.s32.totalorder %s9, 0
    %p50 = por %p48, %p49
    %p51 = scmp.ne.s32.totalorder %s43, %s45
    %p52 = scmp.eq.s32.totalorder %s14, 1
    %p53 = por %p51, %p52
    %p54 = scmp.ne.s32.totalorder %s45, %s46
    %p55 = scmp.eq.s32.totalorder %s14, 0
    %p56 = por %p54, %p55
    %p57 = scmp.ne.s32.totalorder %s45, %s46
    %p58 = scmp.eq.s32.totalorder %s15, 1
    %p59 = por %p57, %p58
    %p61 = scmp.ne.s32.totalorder %s46, %s60
    %p62 = scmp.eq.s32.totalorder %s15, 0
    %p63 = por %p61, %p62
    %s65 = sadd.s32 %s64, 1
    %p68 = scmp.eq.s32.totalorder %s9, 1
    %p69 = scmp.ne.s32.totalorder %s64, %s66
    %p70 = scmp.eq.s32.totalorder %s9, 0
    %p71 = por %p69, %p70
    %p72 = scmp.ne.s32.totalorder %s64, %s66
    %p73 = scmp.eq.s32.totalorder %s14, 1
    %p74 = por %p72, %p73
    %p75 = scmp.ne.s32.totalorder %s66, %s67
    %p76 = scmp.eq.s32.totalorder %s14, 0
    %p77 = por %p75, %p76
    %p78 = scmp.ne.s32.totalorder %s66, %s67
    %p79 = scmp.eq.s32.totalorder %s15, 1
    %p80 = por %p78, %p79
    %p82 = scmp.ne.s32.totalorder %s67, %s81
    %p83 = scmp.eq.s32.totalorder %s15, 0
    %p84 = por %p82, %p83
    %s85 = ssub.s32 %s9, %s16
    %p86 = scmp.eq.s32.totalorder %s85, 0
    %s88 = sadd.s32 %s87, 1
    %s89 = scalar_select %p86, %s87, %s88
    %p92 = pneg %p86
    %p93 = scmp.eq.s32.totalorder %s9, 1
    %p94 = por %p92, %p93
    %p95 = scmp.ne.s32.totalorder %s87, %s90
    %p96 = scmp.eq.s32.totalorder %s9, 0
    %p97 = por %p95, %p96
    %p98 = scmp.ne.s32.totalorder %s87, %s90
    %p99 = scmp.eq.s32.totalorder %s14, 1
    %p100 = por %p98, %p99
    %p101 = scmp.ne.s32.totalorder %s90, %s91
    %p102 = scmp.eq.s32.totalorder %s14, 0
    %p103 = por %p101, %p102
    %p104 = scmp.ne.s32.totalorder %s90, %s91
    %p105 = scmp.eq.s32.totalorder %s15, 1
    %p106 = por %p104, %p105
    %p108 = scmp.ne.s32.totalorder %s91, %s107
    %p109 = scmp.eq.s32.totalorder %s15, 0
    %p110 = por %p108, %p109
    %p111 = scmp.le.s32.totalorder 1, %s9
    %p112 = scmp.lt.s32.totalorder %s9, 3
    %p113 = pnand %p111, %p112
    %p114 = pneg %p113
    // Predicated region
    $region9: #{discriminator_forward.8} parent=5 // pred_check
      _
    $region10: #{discriminator_forward.8} parent=5 // pred_check_branch
      %116 = sbr.rel (%p113) target = $region12
    $region11: #{discriminator_forward.8} parent=5 // pred_region
      %s117 = ssub.s32 %s9, 1
      // Predicated region
      $region13: #{discriminator_forward.8} parent=11 // pred_check
        %p118 = pneg %p56
      $region14: #{discriminator_forward.8} parent=11 // pred_check_branch
        %120 = sbr.rel (%p118) target = $region16
      $region15: #{discriminator_forward.8} parent=11 // pred_region
        _
      $region16: #{discriminator_forward.8} parent=11 // pred_fallthru
        _
      // Predicated region
      $region17: #{discriminator_forward.8} parent=11 // pred_check
        %p121 = pneg %p77
      $region18: #{discriminator_forward.8} parent=11 // pred_check_branch
        %123 = sbr.rel (%p121) target = $region20
      $region19: #{discriminator_forward.8} parent=11 // pred_region
        _
      $region20: #{discriminator_forward.8} parent=11 // pred_fallthru
        _
    $region12: #{discriminator_forward.8} parent=5 // pred_fallthru
      _
    %p124 = scmp.lt.s32.totalorder %s9, 2
    // Predicated region
    $region21: #{discriminator_forward.8} parent=5 // pred_check
      %p125 = pneg %p124
    $region22: #{discriminator_forward.8} parent=5 // pred_check_branch
      %127 = sbr.rel (%p125) target = $region24
    $region23: #{discriminator_forward.8} parent=5 // pred_region
      // Predicated region
      $region25: #{discriminator_forward.8} parent=23 // pred_check
        %p128 = pneg %p29
      $region26: #{discriminator_forward.8} parent=23 // pred_check_branch
        %130 = sbr.rel (%p128) target = $region28
      $region27: #{discriminator_forward.8} parent=23 // pred_region
        %s131 = smul.u32 32, %s9
        %p132 = scmp.lt.s32.totalorder %s131, 63
        %s133 = scalar_select %p132, %s131, 63
        %s134 = smul.addr %s133, 4
        %s135 = scalar_lea.vmem %s0, %s134
        %s136 = smul.u32 32, %s9
      $region28: #{discriminator_forward.8} parent=23 // pred_fallthru
        _
    $region24: #{discriminator_forward.8} parent=5 // pred_fallthru
      _
    %p137 = scmp.le.s32.totalorder 1, %s9
    %p138 = scmp.lt.s32.totalorder %s9, 3
    %p139 = pnand %p137, %p138
    %p140 = pneg %p139
    // Predicated region
    $region29: #{discriminator_forward.8} parent=5 // pred_check
      _
    $region30: #{discriminator_forward.8} parent=5 // pred_check_branch
      %142 = sbr.rel (%p139) target = $region32
    $region31: #{discriminator_forward.8} parent=5 // pred_region
      %s143 = ssub.s32 %s9, 1
      %s144 = smul.u32 32, %s14
      %p145 = scmp.lt.s32.totalorder %s144, 63
      %s146 = scalar_select %p145, %s144, 63
      %s147 = smul.addr %s146, 4
      %s148 = scalar_lea.vmem %s0, %s147
      %p149 = pneg %p35
      %p150 = pneg %p32
      %p151 = pneg %p56
      %p152 = pneg %p53
      %p153 = pneg %p77
      %p154 = pneg %p74
      %p155 = pneg %p103
      %p156 = pneg %p100
      %s157 = smul.u32 32, %s14
      %p158 = scmp.lt.s32.totalorder %s157, 63
      %s159 = scalar_select %p158, %s157, 63
      %s160 = smul.addr %s159, 4
      %s161 = scalar_lea.vmem %s3, %s160
      %s162 = smul.u32 32, %s14
      %p163 = scmp.lt.s32.totalorder %s162, 63
      %s164 = scalar_select %p163, %s162, 63
      %s165 = smul.addr %s164, 4
      %s166 = scalar_lea.vmem %s0, %s165
      %s167 = smul.u32 32, %s14
      %s168 = smul.u32 32, %s14
      %p169 = scmp.lt.s32.totalorder %s168, 63
      %s170 = scalar_select %p169, %s168, 63
      %s171 = smul.addr %s170, 4
      %s172 = scalar_lea.vmem %s3, %s171
      %s173 = smul.u32 32, %s14
      %v175 = vld [vmem:[%s166] sm:$0xf]
      %v176 = vld [vmem:[%s166 + $0x4] sm:$0xf]
      %v177 = vld [vmem:[%s166 + $0x8] sm:$0xf]
      %v178 = vld [vmem:[%s166 + $0xc] sm:$0xf]
      %v179 = vld [vmem:[%s166 + $0x10] sm:$0xf]
      %v180 = vld [vmem:[%s166 + $0x14] sm:$0xf]
      %v181 = vld [vmem:[%s166 + $0x18] sm:$0xf]
      %v182 = vld [vmem:[%s166 + $0x1c] sm:$0xf]
      %v183 = vld [vmem:[%s166 + $0x20] sm:$0xf]
      %v184 = vld [vmem:[%s166 + $0x24] sm:$0xf]
      %v185 = vld [vmem:[%s166 + $0x28] sm:$0xf]
      %v186 = vld [vmem:[%s166 + $0x2c] sm:$0xf]
      %v187 = vld [vmem:[%s166 + $0x30] sm:$0xf]
      %v188 = vld [vmem:[%s166 + $0x34] sm:$0xf]
      %v189 = vld [vmem:[%s166 + $0x38] sm:$0xf]
      %v190 = vld [vmem:[%s166 + $0x3c] sm:$0xf]
      %v191 = vld [vmem:[%s166 + $0x40] sm:$0xf]
      %v192 = vld [vmem:[%s166 + $0x44] sm:$0xf]
      %v193 = vld [vmem:[%s166 + $0x48] sm:$0xf]
      %v194 = vld [vmem:[%s166 + $0x4c] sm:$0xf]
      %v195 = vld [vmem:[%s166 + $0x50] sm:$0xf]
      %v196 = vld [vmem:[%s166 + $0x54] sm:$0xf]
      %v197 = vld [vmem:[%s166 + $0x58] sm:$0xf]
      %v198 = vld [vmem:[%s166 + $0x5c] sm:$0xf]
      %v199 = vld [vmem:[%s166 + $0x60] sm:$0xf]
      %v200 = vld [vmem:[%s166 + $0x64] sm:$0xf]
      %v201 = vld [vmem:[%s166 + $0x68] sm:$0xf]
      %v202 = vld [vmem:[%s166 + $0x6c] sm:$0xf]
      %v203 = vld [vmem:[%s166 + $0x70] sm:$0xf]
      %v204 = vld [vmem:[%s166 + $0x74] sm:$0xf]
      %v205 = vld [vmem:[%s166 + $0x78] sm:$0xf]
      %v206 = vld [vmem:[%s166 + $0x7c] sm:$0xf]
      %v207 = vld [vmem:[%s1] sm:$0xf]
      %v208 = vld [vmem:[%s1 + $0x4] sm:$0xf]
      %v209 = vld [vmem:[%s1 + $0x8] sm:$0xf]
      %v210 = vld [vmem:[%s1 + $0xc] sm:$0xf]
      %v211 = vld [vmem:[%s1 + $0x10] sm:$0xf]
      %v212 = vld [vmem:[%s1 + $0x14] sm:$0xf]
      %v213 = vld [vmem:[%s1 + $0x18] sm:$0xf]
      %v214 = vld [vmem:[%s1 + $0x1c] sm:$0xf]
      %v215 = vld [vmem:[%s1 + $0x20] sm:$0xf]
      %v216 = vld [vmem:[%s1 + $0x24] sm:$0xf]
      %v217 = vld [vmem:[%s1 + $0x28] sm:$0xf]
      %v218 = vld [vmem:[%s1 + $0x2c] sm:$0xf]
      %v219 = vld [vmem:[%s1 + $0x30] sm:$0xf]
      %v220 = vld [vmem:[%s1 + $0x34] sm:$0xf]
      %v221 = vld [vmem:[%s1 + $0x38] sm:$0xf]
      %v222 = vld [vmem:[%s1 + $0x3c] sm:$0xf]
      %v223 = vld [vmem:[%s2] sm:$0x1]
      %v225 = vlaneseq
      %v226 = vshrl.u32 %v225, 7
      %v227 = vsub.s32 0, %v226
      %v228 = vrot.slane %v223, %v227
      %v262 = vunpack.c.l.b16 %v175
      %v263 = vunpack.c.l.b16 %v176
      %v264 = vunpack.c.l.b16 %v177
      %v265 = vunpack.c.l.b16 %v178
      %v266 = vunpack.c.l.b16 %v179
      %v267 = vunpack.c.l.b16 %v180
      %v268 = vunpack.c.l.b16 %v181
      %v269 = vunpack.c.l.b16 %v182
      %v270 = vunpack.c.l.b16 %v183
      %v271 = vunpack.c.l.b16 %v184
      %v272 = vunpack.c.l.b16 %v185
      %v273 = vunpack.c.l.b16 %v186
      %v274 = vunpack.c.l.b16 %v187
      %v275 = vunpack.c.l.b16 %v188
      %v276 = vunpack.c.l.b16 %v189
      %v277 = vunpack.c.l.b16 %v190
      %v278 = vunpack.c.l.b16 %v191
      %v279 = vunpack.c.l.b16 %v192
      %v280 = vunpack.c.l.b16 %v193
      %v281 = vunpack.c.l.b16 %v194
      %v282 = vunpack.c.l.b16 %v195
      %v283 = vunpack.c.l.b16 %v196
      %v284 = vunpack.c.l.b16 %v197
      %v285 = vunpack.c.l.b16 %v198
      %v286 = vunpack.c.l.b16 %v199
      %v287 = vunpack.c.l.b16 %v200
      %v288 = vunpack.c.l.b16 %v201
      %v289 = vunpack.c.l.b16 %v202
      %v290 = vunpack.c.l.b16 %v203
      %v291 = vunpack.c.l.b16 %v204
      %v292 = vunpack.c.l.b16 %v205
      %v293 = vunpack.c.l.b16 %v206
      %v294 = vpack.c.b16 %v263, %v262
      %v295 = vpack.c.b16 %v265, %v264
      %v296 = vpack.c.b16 %v267, %v266
      %v297 = vpack.c.b16 %v269, %v268
      %v298 = vpack.c.b16 %v271, %v270
      %v299 = vpack.c.b16 %v273, %v272
      %v300 = vpack.c.b16 %v275, %v274
      %v301 = vpack.c.b16 %v277, %v276
      %v302 = vpack.c.b16 %v279, %v278
      %v303 = vpack.c.b16 %v281, %v280
      %v304 = vpack.c.b16 %v283, %v282
      %v305 = vpack.c.b16 %v285, %v284
      %v306 = vpack.c.b16 %v287, %v286
      %v307 = vpack.c.b16 %v289, %v288
      %v308 = vpack.c.b16 %v291, %v290
      %v309 = vpack.c.b16 %v293, %v292
      %v342 = vunpack.c.l.b16 %v207
      %v343 = vunpack.c.l.b16 %v208
      %v344 = vunpack.c.l.b16 %v209
      %v345 = vunpack.c.l.b16 %v210
      %v346 = vunpack.c.l.b16 %v211
      %v347 = vunpack.c.l.b16 %v212
      %v348 = vunpack.c.l.b16 %v213
      %v349 = vunpack.c.l.b16 %v214
      %v350 = vunpack.c.l.b16 %v215
      %v351 = vunpack.c.l.b16 %v216
      %v352 = vunpack.c.l.b16 %v217
      %v353 = vunpack.c.l.b16 %v218
      %v354 = vunpack.c.l.b16 %v219
      %v355 = vunpack.c.l.b16 %v220
      %v356 = vunpack.c.l.b16 %v221
      %v357 = vunpack.c.l.b16 %v222
      %v358 = vpack.c.b16 %v343, %v342
      %v359 = vpack.c.b16 %v345, %v344
      %v360 = vpack.c.b16 %v347, %v346
      %v361 = vpack.c.b16 %v349, %v348
      %v362 = vpack.c.b16 %v351, %v350
      %v363 = vpack.c.b16 %v353, %v352
      %v364 = vpack.c.b16 %v355, %v354
      %v365 = vpack.c.b16 %v357, %v356
      %374 = vmatprep.subr.bf16.mxu0 0
      %375 = vmatpush1.bf16.msra.mxu0 %v358
      %376 = vmatprep.subr.bf16.mxu0 0
      %377 = vmatpush1.bf16.msra.mxu0 %v359
      %378 = vmatprep.subr.bf16.mxu0 0
      %379 = vmatpush1.bf16.msra.mxu0 %v360
      %380 = vmatprep.subr.bf16.mxu0 0
      %381 = vmatpush1.bf16.msra.mxu0 %v361
      %382 = vmatprep.subr.bf16.mxu0 0
      %383 = vmatpush1.bf16.msra.mxu0 %v362
      %384 = vmatprep.subr.bf16.mxu0 0
      %385 = vmatpush1.bf16.msra.mxu0 %v363
      %386 = vmatprep.subr.bf16.mxu0 0
      %387 = vmatpush1.bf16.msra.mxu0 %v364
      %388 = vmatprep.subr.bf16.mxu0 0
      %389 = vmatpush1.bf16.msra.mxu0 %v365
      %390 = vmatprep.subr.bf16.mxu0 0
      %391 = vmatpush1.bf16.msra.mxu0 0
      %392 = vmatprep.subr.bf16.mxu0 0
      %393 = vmatpush1.bf16.msra.mxu0 0
      %394 = vmatprep.subr.bf16.mxu0 0
      %395 = vmatpush1.bf16.msra.mxu0 0
      %396 = vmatprep.subr.bf16.mxu0 0
      %397 = vmatpush1.bf16.msra.mxu0 0
      %398 = vmatprep.subr.bf16.mxu0 0
      %399 = vmatpush1.bf16.msra.mxu0 0
      %400 = vmatprep.subr.bf16.mxu0 0
      %401 = vmatpush1.bf16.msra.mxu0 0
      %402 = vmatprep.subr.bf16.mxu0 0
      %403 = vmatpush1.bf16.msra.mxu0 0
      %404 = vmatprep.subr.bf16.mxu0 0
      %405 = vmatpush1.bf16.msra.mxu0 0
      %406 = vmatprep.mubr.bf16.mxu0 0
      %407 = vmatmul.mubr.bf16.gmra.mrb[0].mxu0 %v294
      %v408 = vpop.f32.mrb[0].mxu0
      %v409 = vadd.f32 %v228, %v408
      %v410 = vpop.f32.mrb[0].mxu0
      %v411 = vpop.f32.mrb[0].mxu0
      %v412 = vadd.f32 %v228, %v411
      %v413 = vpop.f32.mrb[0].mxu0
      %414 = vmatprep.mubr.bf16.mxu0 0
      %415 = vmatmul.mubr.bf16.gmra.mrb[0].mxu0 %v295
      %v416 = vpop.f32.mrb[0].mxu0
      %v417 = vadd.f32 %v228, %v416
      %v418 = vpop.f32.mrb[0].mxu0
      %v419 = vpop.f32.mrb[0].mxu0
      %v420 = vadd.f32 %v228, %v419
      %v421 = vpop.f32.mrb[0].mxu0
      %422 = vmatprep.mubr.bf16.mxu0 0
      %423 = vmatmul.mubr.bf16.gmra.mrb[0].mxu0 %v296
      %v424 = vpop.f32.mrb[0].mxu0
      %v425 = vadd.f32 %v228, %v424
      %v426 = vpop.f32.mrb[0].mxu0
      %v427 = vpop.f32.mrb[0].mxu0
      %v428 = vadd.f32 %v228, %v427
      %v429 = vpop.f32.mrb[0].mxu0
      %430 = vmatprep.mubr.bf16.mxu0 0
      %431 = vmatmul.mubr.bf16.gmra.mrb[0].mxu0 %v297
      %v432 = vpop.f32.mrb[0].mxu0
      %v433 = vadd.f32 %v228, %v432
      %v434 = vpop.f32.mrb[0].mxu0
      %v435 = vpop.f32.mrb[0].mxu0
      %v436 = vadd.f32 %v228, %v435
      %v437 = vpop.f32.mrb[0].mxu0
      %438 = vmatprep.mubr.bf16.mxu0 0
      %439 = vmatmul.mubr.bf16.gmra.mrb[0].mxu0 %v298
      %v440 = vpop.f32.mrb[0].mxu0
      %v441 = vadd.f32 %v228, %v440
      %v442 = vpop.f32.mrb[0].mxu0
      %v443 = vpop.f32.mrb[0].mxu0
      %v444 = vadd.f32 %v228, %v443
      %v445 = vpop.f32.mrb[0].mxu0
      %446 = vmatprep.mubr.bf16.mxu0 0
      %447 = vmatmul.mubr.bf16.gmra.mrb[0].mxu0 %v299
      %v448 = vpop.f32.mrb[0].mxu0
      %v449 = vadd.f32 %v228, %v448
      %v450 = vpop.f32.mrb[0].mxu0
      %v451 = vpop.f32.mrb[0].mxu0
      %v452 = vadd.f32 %v228, %v451
      %v453 = vpop.f32.mrb[0].mxu0
      %454 = vmatprep.mubr.bf16.mxu0 0
      %455 = vmatmul.mubr.bf16.gmra.mrb[0].mxu0 %v300
      %v456 = vpop.f32.mrb[0].mxu0
      %v457 = vadd.f32 %v228, %v456
      %v458 = vpop.f32.mrb[0].mxu0
      %v459 = vpop.f32.mrb[0].mxu0
      %v460 = vadd.f32 %v228, %v459
      %v461 = vpop.f32.mrb[0].mxu0
      %462 = vmatprep.mubr.bf16.mxu0 0
      %463 = vmatmul.mubr.bf16.gmra.mrb[0].mxu0 %v301
      %v464 = vpop.f32.mrb[0].mxu0
      %v465 = vadd.f32 %v228, %v464
      %v466 = vpop.f32.mrb[0].mxu0
      %v467 = vpop.f32.mrb[0].mxu0
      %v468 = vadd.f32 %v228, %v467
      %v469 = vpop.f32.mrb[0].mxu0
      %470 = vmatprep.mubr.bf16.mxu0 0
      %471 = vmatmul.mubr.bf16.gmra.mrb[0].mxu0 %v302
      %v472 = vpop.f32.mrb[0].mxu0
      %v473 = vadd.f32 %v228, %v472
      %v474 = vpop.f32.mrb[0].mxu0
      %v475 = vpop.f32.mrb[0].mxu0
      %v476 = vadd.f32 %v228, %v475
      %v477 = vpop.f32.mrb[0].mxu0
      %478 = vmatprep.mubr.bf16.mxu0 0
      %479 = vmatmul.mubr.bf16.gmra.mrb[0].mxu0 %v303
      %v480 = vpop.f32.mrb[0].mxu0
      %v481 = vadd.f32 %v228, %v480
      %v482 = vpop.f32.mrb[0].mxu0
      %v483 = vpop.f32.mrb[0].mxu0
      %v484 = vadd.f32 %v228, %v483
      %v485 = vpop.f32.mrb[0].mxu0
      %486 = vmatprep.mubr.bf16.mxu0 0
      %487 = vmatmul.mubr.bf16.gmra.mrb[0].mxu0 %v304
      %v488 = vpop.f32.mrb[0].mxu0
      %v489 = vadd.f32 %v228, %v488
      %v490 = vpop.f32.mrb[0].mxu0
      %v491 = vpop.f32.mrb[0].mxu0
      %v492 = vadd.f32 %v228, %v491
      %v493 = vpop.f32.mrb[0].mxu0
      %494 = vmatprep.mubr.bf16.mxu0 0
      %495 = vmatmul.mubr.bf16.gmra.mrb[0].mxu0 %v305
      %v496 = vpop.f32.mrb[0].mxu0
      %v497 = vadd.f32 %v228, %v496
      %v498 = vpop.f32.mrb[0].mxu0
      %v499 = vpop.f32.mrb[0].mxu0
      %v500 = vadd.f32 %v228, %v499
      %v501 = vpop.f32.mrb[0].mxu0
      %502 = vmatprep.mubr.bf16.mxu0 0
      %503 = vmatmul.mubr.bf16.gmra.mrb[0].mxu0 %v306
      %v504 = vpop.f32.mrb[0].mxu0
      %v505 = vadd.f32 %v228, %v504
      %v506 = vpop.f32.mrb[0].mxu0
      %v507 = vpop.f32.mrb[0].mxu0
      %v508 = vadd.f32 %v228, %v507
      %v509 = vpop.f32.mrb[0].mxu0
      %510 = vmatprep.mubr.bf16.mxu0 0
      %511 = vmatmul.mubr.bf16.gmra.mrb[0].mxu0 %v307
      %v512 = vpop.f32.mrb[0].mxu0
      %v513 = vadd.f32 %v228, %v512
      %v514 = vpop.f32.mrb[0].mxu0
      %v515 = vpop.f32.mrb[0].mxu0
      %v516 = vadd.f32 %v228, %v515
      %v517 = vpop.f32.mrb[0].mxu0
      %518 = vmatprep.mubr.bf16.mxu0 0
      %519 = vmatmul.mubr.bf16.gmra.mrb[0].mxu0 %v308
      %v520 = vpop.f32.mrb[0].mxu0
      %v521 = vadd.f32 %v228, %v520
      %v522 = vpop.f32.mrb[0].mxu0
      %v523 = vpop.f32.mrb[0].mxu0
      %v524 = vadd.f32 %v228, %v523
      %v525 = vpop.f32.mrb[0].mxu0
      %526 = vmatprep.mubr.bf16.mxu0 0
      %527 = vmatmul.mubr.bf16.gmra.mrb[0].mxu0 %v309
      %v528 = vpop.f32.mrb[0].mxu0
      %v529 = vadd.f32 %v228, %v528
      %v530 = vpop.f32.mrb[0].mxu0
      %v531 = vpop.f32.mrb[0].mxu0
      %v532 = vadd.f32 %v228, %v531
      %v533 = vpop.f32.mrb[0].mxu0
      %534 = vdwg.mxu0
      %vm535 = vcmp.ge.f32.partialorder %v409, 0.0
      %vm536 = vcmp.ge.f32.partialorder %v412, 0.0
      %vm537 = vcmp.ge.f32.partialorder %v417, 0.0
      %vm538 = vcmp.ge.f32.partialorder %v420, 0.0
      %vm539 = vcmp.ge.f32.partialorder %v425, 0.0
      %vm540 = vcmp.ge.f32.partialorder %v428, 0.0
      %vm541 = vcmp.ge.f32.partialorder %v433, 0.0
      %vm542 = vcmp.ge.f32.partialorder %v436, 0.0
      %vm543 = vcmp.ge.f32.partialorder %v441, 0.0
      %vm544 = vcmp.ge.f32.partialorder %v444, 0.0
      %vm545 = vcmp.ge.f32.partialorder %v449, 0.0
      %vm546 = vcmp.ge.f32.partialorder %v452, 0.0
      %vm547 = vcmp.ge.f32.partialorder %v457, 0.0
      %vm548 = vcmp.ge.f32.partialorder %v460, 0.0
      %vm549 = vcmp.ge.f32.partialorder %v465, 0.0
      %vm550 = vcmp.ge.f32.partialorder %v468, 0.0
      %vm551 = vcmp.ge.f32.partialorder %v473, 0.0
      %vm552 = vcmp.ge.f32.partialorder %v476, 0.0
      %vm553 = vcmp.ge.f32.partialorder %v481, 0.0
      %vm554 = vcmp.ge.f32.partialorder %v484, 0.0
      %vm555 = vcmp.ge.f32.partialorder %v489, 0.0
      %vm556 = vcmp.ge.f32.partialorder %v492, 0.0
      %vm557 = vcmp.ge.f32.partialorder %v497, 0.0
      %vm558 = vcmp.ge.f32.partialorder %v500, 0.0
      %vm559 = vcmp.ge.f32.partialorder %v505, 0.0
      %vm560 = vcmp.ge.f32.partialorder %v508, 0.0
      %vm561 = vcmp.ge.f32.partialorder %v513, 0.0
      %vm562 = vcmp.ge.f32.partialorder %v516, 0.0
      %vm563 = vcmp.ge.f32.partialorder %v521, 0.0
      %vm564 = vcmp.ge.f32.partialorder %v524, 0.0
      %vm565 = vcmp.ge.f32.partialorder %v529, 0.0
      %vm566 = vcmp.ge.f32.partialorder %v532, 0.0
      %v567 = vmul.f32 %v409, 0.01
      %v568 = vmul.f32 %v412, 0.01
      %v569 = vmul.f32 %v417, 0.01
      %v570 = vmul.f32 %v420, 0.01
      %v571 = vmul.f32 %v425, 0.01
      %v572 = vmul.f32 %v428, 0.01
      %v573 = vmul.f32 %v433, 0.01
      %v574 = vmul.f32 %v436, 0.01
      %v575 = vmul.f32 %v441, 0.01
      %v576 = vmul.f32 %v444, 0.01
      %v577 = vmul.f32 %v449, 0.01
      %v578 = vmul.f32 %v452, 0.01
      %v579 = vmul.f32 %v457, 0.01
      %v580 = vmul.f32 %v460, 0.01
      %v581 = vmul.f32 %v465, 0.01
      %v582 = vmul.f32 %v468, 0.01
      %v583 = vmul.f32 %v473, 0.01
      %v584 = vmul.f32 %v476, 0.01
      %v585 = vmul.f32 %v481, 0.01
      %v586 = vmul.f32 %v484, 0.01
      %v587 = vmul.f32 %v489, 0.01
      %v588 = vmul.f32 %v492, 0.01
      %v589 = vmul.f32 %v497, 0.01
      %v590 = vmul.f32 %v500, 0.01
      %v591 = vmul.f32 %v505, 0.01
      %v592 = vmul.f32 %v508, 0.01
      %v593 = vmul.f32 %v513, 0.01
      %v594 = vmul.f32 %v516, 0.01
      %v595 = vmul.f32 %v521, 0.01
      %v596 = vmul.f32 %v524, 0.01
      %v597 = vmul.f32 %v529, 0.01
      %v598 = vmul.f32 %v532, 0.01
      %v599 = vsel %vm535, %v409, %v567
      %v600 = vsel %vm536, %v412, %v568
      %v601 = vsel %vm537, %v417, %v569
      %v602 = vsel %vm538, %v420, %v570
      %v603 = vsel %vm539, %v425, %v571
      %v604 = vsel %vm540, %v428, %v572
      %v605 = vsel %vm541, %v433, %v573
      %v606 = vsel %vm542, %v436, %v574
      %v607 = vsel %vm543, %v441, %v575
      %v608 = vsel %vm544, %v444, %v576
      %v609 = vsel %vm545, %v449, %v577
      %v610 = vsel %vm546, %v452, %v578
      %v611 = vsel %vm547, %v457, %v579
      %v612 = vsel %vm548, %v460, %v580
      %v613 = vsel %vm549, %v465, %v581
      %v614 = vsel %vm550, %v468, %v582
      %v615 = vsel %vm551, %v473, %v583
      %v616 = vsel %vm552, %v476, %v584
      %v617 = vsel %vm553, %v481, %v585
      %v618 = vsel %vm554, %v484, %v586
      %v619 = vsel %vm555, %v489, %v587
      %v620 = vsel %vm556, %v492, %v588
      %v621 = vsel %vm557, %v497, %v589
      %v622 = vsel %vm558, %v500, %v590
      %v623 = vsel %vm559, %v505, %v591
      %v624 = vsel %vm560, %v508, %v592
      %v625 = vsel %vm561, %v513, %v593
      %v626 = vsel %vm562, %v516, %v594
      %v627 = vsel %vm563, %v521, %v595
      %v628 = vsel %vm564, %v524, %v596
      %v629 = vsel %vm565, %v529, %v597
      %v630 = vsel %vm566, %v532, %v598
      %v631 = vpack.c.bf16 %v600, %v599
      %v632 = vpack.c.bf16 %v602, %v601
      %v633 = vpack.c.bf16 %v604, %v603
      %v634 = vpack.c.bf16 %v606, %v605
      %v635 = vpack.c.bf16 %v608, %v607
      %v636 = vpack.c.bf16 %v610, %v609
      %v637 = vpack.c.bf16 %v612, %v611
      %v638 = vpack.c.bf16 %v614, %v613
      %v639 = vpack.c.bf16 %v616, %v615
      %v640 = vpack.c.bf16 %v618, %v617
      %v641 = vpack.c.bf16 %v620, %v619
      %v642 = vpack.c.bf16 %v622, %v621
      %v643 = vpack.c.bf16 %v624, %v623
      %v644 = vpack.c.bf16 %v626, %v625
      %v645 = vpack.c.bf16 %v628, %v627
      %v646 = vpack.c.bf16 %v630, %v629
      %v663 = vunpack.c.l.b16 %v631
      %v664 = vunpack.c.h.b16 %v631
      %v665 = vunpack.c.l.b16 %v632
      %v666 = vunpack.c.h.b16 %v632
      %v667 = vunpack.c.l.b16 %v633
      %v668 = vunpack.c.h.b16 %v633
      %v669 = vunpack.c.l.b16 %v634
      %v670 = vunpack.c.h.b16 %v634
      %v671 = vunpack.c.l.b16 %v635
      %v672 = vunpack.c.h.b16 %v635
      %v673 = vunpack.c.l.b16 %v636
      %v674 = vunpack.c.h.b16 %v636
      %v675 = vunpack.c.l.b16 %v637
      %v676 = vunpack.c.h.b16 %v637
      %v677 = vunpack.c.l.b16 %v638
      %v678 = vunpack.c.h.b16 %v638
      %v679 = vunpack.c.l.b16 %v639
      %v680 = vunpack.c.h.b16 %v639
      %v681 = vunpack.c.l.b16 %v640
      %v682 = vunpack.c.h.b16 %v640
      %v683 = vunpack.c.l.b16 %v641
      %v684 = vunpack.c.h.b16 %v641
      %v685 = vunpack.c.l.b16 %v642
      %v686 = vunpack.c.h.b16 %v642
      %v687 = vunpack.c.l.b16 %v643
      %v688 = vunpack.c.h.b16 %v643
      %v689 = vunpack.c.l.b16 %v644
      %v690 = vunpack.c.h.b16 %v644
      %v691 = vunpack.c.l.b16 %v645
      %v692 = vunpack.c.h.b16 %v645
      %v693 = vunpack.c.l.b16 %v646
      %v694 = vunpack.c.h.b16 %v646
      %v695 = vpack.c.b16 %v663, %v663
      %v696 = vpack.c.b16 %v664, %v664
      %v697 = vpack.c.b16 %v665, %v665
      %v698 = vpack.c.b16 %v666, %v666
      %v699 = vpack.c.b16 %v667, %v667
      %v700 = vpack.c.b16 %v668, %v668
      %v701 = vpack.c.b16 %v669, %v669
      %v702 = vpack.c.b16 %v670, %v670
      %v703 = vpack.c.b16 %v671, %v671
      %v704 = vpack.c.b16 %v672, %v672
      %v705 = vpack.c.b16 %v673, %v673
      %v706 = vpack.c.b16 %v674, %v674
      %v707 = vpack.c.b16 %v675, %v675
      %v708 = vpack.c.b16 %v676, %v676
      %v709 = vpack.c.b16 %v677, %v677
      %v710 = vpack.c.b16 %v678, %v678
      %v711 = vpack.c.b16 %v679, %v679
      %v712 = vpack.c.b16 %v680, %v680
      %v713 = vpack.c.b16 %v681, %v681
      %v714 = vpack.c.b16 %v682, %v682
      %v715 = vpack.c.b16 %v683, %v683
      %v716 = vpack.c.b16 %v684, %v684
      %v717 = vpack.c.b16 %v685, %v685
      %v718 = vpack.c.b16 %v686, %v686
      %v719 = vpack.c.b16 %v687, %v687
      %v720 = vpack.c.b16 %v688, %v688
      %v721 = vpack.c.b16 %v689, %v689
      %v722 = vpack.c.b16 %v690, %v690
      %v723 = vpack.c.b16 %v691, %v691
      %v724 = vpack.c.b16 %v692, %v692
      %v725 = vpack.c.b16 %v693, %v693
      %v726 = vpack.c.b16 %v694, %v694
      %759 = vst [vmem:[%s172] sm:$0xf] %v695
      %760 = vst [vmem:[%s172 + $0x4] sm:$0xf] %v696
      %761 = vst [vmem:[%s172 + $0x8] sm:$0xf] %v697
      %762 = vst [vmem:[%s172 + $0xc] sm:$0xf] %v698
      %763 = vst [vmem:[%s172 + $0x10] sm:$0xf] %v699
      %764 = vst [vmem:[%s172 + $0x14] sm:$0xf] %v700
      %765 = vst [vmem:[%s172 + $0x18] sm:$0xf] %v701
      %766 = vst [vmem:[%s172 + $0x1c] sm:$0xf] %v702
      %767 = vst [vmem:[%s172 + $0x20] sm:$0xf] %v703
      %768 = vst [vmem:[%s172 + $0x24] sm:$0xf] %v704
      %769 = vst [vmem:[%s172 + $0x28] sm:$0xf] %v705
      %770 = vst [vmem:[%s172 + $0x2c] sm:$0xf] %v706
      %771 = vst [vmem:[%s172 + $0x30] sm:$0xf] %v707
      %772 = vst [vmem:[%s172 + $0x34] sm:$0xf] %v708
      %773 = vst [vmem:[%s172 + $0x38] sm:$0xf] %v709
      %774 = vst [vmem:[%s172 + $0x3c] sm:$0xf] %v710
      %775 = vst [vmem:[%s172 + $0x40] sm:$0xf] %v711
      %776 = vst [vmem:[%s172 + $0x44] sm:$0xf] %v712
      %777 = vst [vmem:[%s172 + $0x48] sm:$0xf] %v713
      %778 = vst [vmem:[%s172 + $0x4c] sm:$0xf] %v714
      %779 = vst [vmem:[%s172 + $0x50] sm:$0xf] %v715
      %780 = vst [vmem:[%s172 + $0x54] sm:$0xf] %v716
      %781 = vst [vmem:[%s172 + $0x58] sm:$0xf] %v717
      %782 = vst [vmem:[%s172 + $0x5c] sm:$0xf] %v718
      %783 = vst [vmem:[%s172 + $0x60] sm:$0xf] %v719
      %784 = vst [vmem:[%s172 + $0x64] sm:$0xf] %v720
      %785 = vst [vmem:[%s172 + $0x68] sm:$0xf] %v721
      %786 = vst [vmem:[%s172 + $0x6c] sm:$0xf] %v722
      %787 = vst [vmem:[%s172 + $0x70] sm:$0xf] %v723
      %788 = vst [vmem:[%s172 + $0x74] sm:$0xf] %v724
      %789 = vst [vmem:[%s172 + $0x78] sm:$0xf] %v725
      %790 = vst [vmem:[%s172 + $0x7c] sm:$0xf] %v726
      %s791 = smul.u32 32, %s14
      %p792 = scmp.lt.s32.totalorder %s791, 63
      %s793 = scalar_select %p792, %s791, 63
      %s794 = smul.addr %s793, 4
      %s795 = scalar_lea.vmem %s3, %s794
      // Predicated region
      $region33: #{discriminator_forward.8} parent=31 // pred_check
        %p796 = pneg %p100
      $region34: #{discriminator_forward.8} parent=31 // pred_check_branch
        %798 = sbr.rel (%p796) target = $region36
      $region35: #{discriminator_forward.8} parent=31 // pred_region
        %s799 = smul.u32 32, %s14
      $region36: #{discriminator_forward.8} parent=31 // pred_fallthru
        _
    $region32: #{discriminator_forward.8} parent=5 // pred_fallthru
      _
    %p800 = scmp.le.s32.totalorder 2, %s9
    // Predicated region
    $region37: #{discriminator_forward.8} parent=5 // pred_check
      %p801 = pneg %p800
    $region38: #{discriminator_forward.8} parent=5 // pred_check_branch
      %803 = sbr.rel (%p801) target = $region40
    $region39: #{discriminator_forward.8} parent=5 // pred_region
      %s804 = ssub.s32 %s9, 2
      // Predicated region
      $region41: #{discriminator_forward.8} parent=39 // pred_check
        %p805 = pneg %p106
      $region42: #{discriminator_forward.8} parent=39 // pred_check_branch
        %807 = sbr.rel (%p805) target = $region44
      $region43: #{discriminator_forward.8} parent=39 // pred_region
        %s808 = smul.u32 32, %s15
        %p809 = scmp.lt.s32.totalorder %s808, 63
        %s810 = scalar_select %p809, %s808, 63
        %s811 = smul.addr %s810, 4
        %s812 = scalar_lea.vmem %s3, %s811
      $region44: #{discriminator_forward.8} parent=39 // pred_fallthru
        _
    $region40: #{discriminator_forward.8} parent=5 // pred_fallthru
      _
  $region6: #{discriminator_forward.8} parent=0 // loop_footer
    %s13 = sadd.s32 1, %s9
  $region7: #{discriminator_forward.8} parent=0 // loop_footer_branch
    %8 = sbr.rel target = $region3
  $region8: #{discriminator_forward.8} parent=0 // loop_exit
    _

// kernel: discriminator_forward.10
$region0: #{discriminator_forward.10}
  #allocation0 [shape = 'u32[]', space=smem, size = 0x4, offset = 0x4, fixed_abs, tag = 'smem constant byte address 0x4 - core index']
  #allocation1 [shape = 'u32[144,128]{1,0:T(1,128)}', space=vmem, size = 0x12000, scoped, tag = 'internal scratch']
  %s0 = inlined_call_operand.vmem [shape: bf16[128,128], index: 0, kind: input, shape index: {}]
  %s1 = inlined_call_operand.vmem [shape: f32[1,128], index: 1, kind: input, shape index: {}]
  %s2 = inlined_call_operand.vmem [shape: f32[1,128], index: 2, kind: input, shape index: {}]
  %s3 = inlined_call_operand.vmem [shape: bf16[128,128], index: 3, kind: output, shape index: {}]
  %s4 = sld [smem:[#allocation0]]
  $region45: #{discriminator_forward.10} parent=0
    _
  %s6 = ssub.s32 1, %s4
  %s7 = scalar_select 0, %s6, %s4
  loop: start=0, step=1, limit=4
  $region2: #{discriminator_forward.10} parent=0 // loop_pre_header
    _
  $region3: #{discriminator_forward.10} parent=0 // loop_header
    %s9 = sphi 0, %s13
    %p10 = scmp.ge.s32.totalorder %s9, 4
    %s19 = sphi 0, %s21
    %s22 = sphi 0, %s19
    %s23 = sphi 0, %s22
    %s39 = sphi 0, %s23
    %s43 = sphi 0, %s43
    %s45 = sphi 0, %s43
    %s46 = sphi 0, %s45
    %s60 = sphi 0, %s46
    %s64 = sphi 0, %s64
    %s66 = sphi 0, %s64
    %s67 = sphi 0, %s66
    %s81 = sphi 0, %s67
    %s87 = sphi 0, %s89
    %s90 = sphi 0, %s87
    %s91 = sphi 0, %s90
    %s107 = sphi 0, %s91
  $region4: #{discriminator_forward.10} parent=0 // loop_header_branch
    %12 = sbr.rel (%p10) target = $region8
  $region5: #{discriminator_forward.10} parent=0 // loop_body
    %s14 = ssub.s32 %s9, 1
    %s15 = ssub.s32 %s9, 2
    %s16 = sadd.s32 %s9, 1
    %s17 = ssub.s32 %s9, %s16
    %p18 = scmp.eq.s32.totalorder %s17, 0
    %s20 = sadd.s32 %s19, 1
    %s21 = scalar_select %p18, %s19, %s20
    %p24 = pneg %p18
    %p25 = scmp.eq.s32.totalorder %s9, 1
    %p26 = por %p24, %p25
    %p27 = scmp.ne.s32.totalorder %s19, %s22
    %p28 = scmp.eq.s32.totalorder %s9, 0
    %p29 = por %p27, %p28
    %p30 = scmp.ne.s32.totalorder %s19, %s22
    %p31 = scmp.eq.s32.totalorder %s14, 1
    %p32 = por %p30, %p31
    %p33 = scmp.ne.s32.totalorder %s22, %s23
    %p34 = scmp.eq.s32.totalorder %s14, 0
    %p35 = por %p33, %p34
    %p36 = scmp.ne.s32.totalorder %s22, %s23
    %p37 = scmp.eq.s32.totalorder %s15, 1
    %p38 = por %p36, %p37
    %p40 = scmp.ne.s32.totalorder %s23, %s39
    %p41 = scmp.eq.s32.totalorder %s15, 0
    %p42 = por %p40, %p41
    %s44 = sadd.s32 %s43, 1
    %p47 = scmp.eq.s32.totalorder %s9, 1
    %p48 = scmp.ne.s32.totalorder %s43, %s45
    %p49 = scmp.eq.s32.totalorder %s9, 0
    %p50 = por %p48, %p49
    %p51 = scmp.ne.s32.totalorder %s43, %s45
    %p52 = scmp.eq.s32.totalorder %s14, 1
    %p53 = por %p51, %p52
    %p54 = scmp.ne.s32.totalorder %s45, %s46
    %p55 = scmp.eq.s32.totalorder %s14, 0
    %p56 = por %p54, %p55
    %p57 = scmp.ne.s32.totalorder %s45, %s46
    %p58 = scmp.eq.s32.totalorder %s15, 1
    %p59 = por %p57, %p58
    %p61 = scmp.ne.s32.totalorder %s46, %s60
    %p62 = scmp.eq.s32.totalorder %s15, 0
    %p63 = por %p61, %p62
    %s65 = sadd.s32 %s64, 1
    %p68 = scmp.eq.s32.totalorder %s9, 1
    %p69 = scmp.ne.s32.totalorder %s64, %s66
    %p70 = scmp.eq.s32.totalorder %s9, 0
    %p71 = por %p69, %p70
    %p72 = scmp.ne.s32.totalorder %s64, %s66
    %p73 = scmp.eq.s32.totalorder %s14, 1
    %p74 = por %p72, %p73
    %p75 = scmp.ne.s32.totalorder %s66, %s67
    %p76 = scmp.eq.s32.totalorder %s14, 0
    %p77 = por %p75, %p76
    %p78 = scmp.ne.s32.totalorder %s66, %s67
    %p79 = scmp.eq.s32.totalorder %s15, 1
    %p80 = por %p78, %p79
    %p82 = scmp.ne.s32.totalorder %s67, %s81
    %p83 = scmp.eq.s32.totalorder %s15, 0
    %p84 = por %p82, %p83
    %s85 = ssub.s32 %s9, %s16
    %p86 = scmp.eq.s32.totalorder %s85, 0
    %s88 = sadd.s32 %s87, 1
    %s89 = scalar_select %p86, %s87, %s88
    %p92 = pneg %p86
    %p93 = scmp.eq.s32.totalorder %s9, 1
    %p94 = por %p92, %p93
    %p95 = scmp.ne.s32.totalorder %s87, %s90
    %p96 = scmp.eq.s32.totalorder %s9, 0
    %p97 = por %p95, %p96
    %p98 = scmp.ne.s32.totalorder %s87, %s90
    %p99 = scmp.eq.s32.totalorder %s14, 1
    %p100 = por %p98, %p99
    %p101 = scmp.ne.s32.totalorder %s90, %s91
    %p102 = scmp.eq.s32.totalorder %s14, 0
    %p103 = por %p101, %p102
    %p104 = scmp.ne.s32.totalorder %s90, %s91
    %p105 = scmp.eq.s32.totalorder %s15, 1
    %p106 = por %p104, %p105
    %p108 = scmp.ne.s32.totalorder %s91, %s107
    %p109 = scmp.eq.s32.totalorder %s15, 0
    %p110 = por %p108, %p109
    %p111 = scmp.le.s32.totalorder 1, %s9
    %p112 = scmp.lt.s32.totalorder %s9, 3
    %p113 = pnand %p111, %p112
    %p114 = pneg %p113
    // Predicated region
    $region9: #{discriminator_forward.10} parent=5 // pred_check
      _
    $region10: #{discriminator_forward.10} parent=5 // pred_check_branch
      %116 = sbr.rel (%p113) target = $region12
    $region11: #{discriminator_forward.10} parent=5 // pred_region
      %s117 = ssub.s32 %s9, 1
      // Predicated region
      $region13: #{discriminator_forward.10} parent=11 // pred_check
        %p118 = pneg %p56
      $region14: #{discriminator_forward.10} parent=11 // pred_check_branch
        %120 = sbr.rel (%p118) target = $region16
      $region15: #{discriminator_forward.10} parent=11 // pred_region
        _
      $region16: #{discriminator_forward.10} parent=11 // pred_fallthru
        _
      // Predicated region
      $region17: #{discriminator_forward.10} parent=11 // pred_check
        %p121 = pneg %p77
      $region18: #{discriminator_forward.10} parent=11 // pred_check_branch
        %123 = sbr.rel (%p121) target = $region20
      $region19: #{discriminator_forward.10} parent=11 // pred_region
        _
      $region20: #{discriminator_forward.10} parent=11 // pred_fallthru
        _
    $region12: #{discriminator_forward.10} parent=5 // pred_fallthru
      _
    %p124 = scmp.lt.s32.totalorder %s9, 2
    // Predicated region
    $region21: #{discriminator_forward.10} parent=5 // pred_check
      %p125 = pneg %p124
    $region22: #{discriminator_forward.10} parent=5 // pred_check_branch
      %127 = sbr.rel (%p125) target = $region24
    $region23: #{discriminator_forward.10} parent=5 // pred_region
      // Predicated region
      $region25: #{discriminator_forward.10} parent=23 // pred_check
        %p128 = pneg %p29
      $region26: #{discriminator_forward.10} parent=23 // pred_check_branch
        %130 = sbr.rel (%p128) target = $region28
      $region27: #{discriminator_forward.10} parent=23 // pred_region
        %s131 = smul.u32 8, %s9
        %p132 = scmp.lt.s32.totalorder %s131, 15
        %s133 = scalar_select %p132, %s131, 15
        %s134 = smul.addr %s133, 4
        %s135 = scalar_lea.vmem %s0, %s134
        %s136 = smul.u32 8, %s9
      $region28: #{discriminator_forward.10} parent=23 // pred_fallthru
        _
    $region24: #{discriminator_forward.10} parent=5 // pred_fallthru
      _
    %p137 = scmp.le.s32.totalorder 1, %s9
    %p138 = scmp.lt.s32.totalorder %s9, 3
    %p139 = pnand %p137, %p138
    %p140 = pneg %p139
    // Predicated region
    $region29: #{discriminator_forward.10} parent=5 // pred_check
      _
    $region30: #{discriminator_forward.10} parent=5 // pred_check_branch
      %142 = sbr.rel (%p139) target = $region32
    $region31: #{discriminator_forward.10} parent=5 // pred_region
      %s143 = ssub.s32 %s9, 1
      %s144 = smul.u32 8, %s14
      %p145 = scmp.lt.s32.totalorder %s144, 15
      %s146 = scalar_select %p145, %s144, 15
      %s147 = smul.addr %s146, 4
      %s148 = scalar_lea.vmem %s0, %s147
      %p149 = pneg %p35
      %p150 = pneg %p32
      %p151 = pneg %p56
      %p152 = pneg %p53
      %p153 = pneg %p77
      %p154 = pneg %p74
      %p155 = pneg %p103
      %p156 = pneg %p100
      %s157 = smul.u32 8, %s14
      %p158 = scmp.lt.s32.totalorder %s157, 15
      %s159 = scalar_select %p158, %s157, 15
      %s160 = smul.addr %s159, 4
      %s161 = scalar_lea.vmem %s3, %s160
      %s162 = smul.u32 8, %s14
      %p163 = scmp.lt.s32.totalorder %s162, 15
      %s164 = scalar_select %p163, %s162, 15
      %s165 = smul.addr %s164, 4
      %s166 = scalar_lea.vmem %s0, %s165
      %s167 = smul.u32 8, %s14
      %s168 = smul.u32 8, %s14
      %p169 = scmp.lt.s32.totalorder %s168, 15
      %s170 = scalar_select %p169, %s168, 15
      %s171 = smul.addr %s170, 4
      %s172 = scalar_lea.vmem %s3, %s171
      %s173 = smul.u32 8, %s14
      %v174 = vld [vmem:[%s166] sm:$0xf]
      %v175 = vld [vmem:[%s166 + $0x4] sm:$0xf]
      %v176 = vld [vmem:[%s166 + $0x8] sm:$0xf]
      %v177 = vld [vmem:[%s166 + $0xc] sm:$0xf]
      %v178 = vld [vmem:[%s166 + $0x10] sm:$0xf]
      %v179 = vld [vmem:[%s166 + $0x14] sm:$0xf]
      %v180 = vld [vmem:[%s166 + $0x18] sm:$0xf]
      %v181 = vld [vmem:[%s166 + $0x1c] sm:$0xf]
      %v182 = vunpack.c.l.bf16 %v174
      %v183 = vunpack.c.l.bf16 %v175
      %v184 = vunpack.c.l.bf16 %v176
      %v185 = vunpack.c.l.bf16 %v177
      %v186 = vunpack.c.l.bf16 %v178
      %v187 = vunpack.c.l.bf16 %v179
      %v188 = vunpack.c.l.bf16 %v180
      %v189 = vunpack.c.l.bf16 %v181
      %v190 = vld [vmem:[%s1] sm:$0x1]
      %v192 = vlaneseq
      %v193 = vshrl.u32 %v192, 7
      %v194 = vsub.s32 0, %v193
      %v195 = vrot.slane %v190, %v194
      %v197 = vmul.f32 %v182, %v195
      %v198 = vmul.f32 %v183, %v195
      %v199 = vmul.f32 %v184, %v195
      %v200 = vmul.f32 %v185, %v195
      %v201 = vmul.f32 %v186, %v195
      %v202 = vmul.f32 %v187, %v195
      %v203 = vmul.f32 %v188, %v195
      %v204 = vmul.f32 %v189, %v195
      %v205 = vld [vmem:[%s2] sm:$0x1]
      %v207 = vlaneseq
      %v208 = vshrl.u32 %v207, 7
      %v209 = vsub.s32 0, %v208
      %v210 = vrot.slane %v205, %v209
      %v212 = vadd.f32 %v197, %v210
      %v213 = vadd.f32 %v198, %v210
      %v214 = vadd.f32 %v199, %v210
      %v215 = vadd.f32 %v200, %v210
      %v216 = vadd.f32 %v201, %v210
      %v217 = vadd.f32 %v202, %v210
      %v218 = vadd.f32 %v203, %v210
      %v219 = vadd.f32 %v204, %v210
      %vm220 = vcmp.ge.f32.partialorder %v212, 0.0
      %vm221 = vcmp.ge.f32.partialorder %v213, 0.0
      %vm222 = vcmp.ge.f32.partialorder %v214, 0.0
      %vm223 = vcmp.ge.f32.partialorder %v215, 0.0
      %vm224 = vcmp.ge.f32.partialorder %v216, 0.0
      %vm225 = vcmp.ge.f32.partialorder %v217, 0.0
      %vm226 = vcmp.ge.f32.partialorder %v218, 0.0
      %vm227 = vcmp.ge.f32.partialorder %v219, 0.0
      %v228 = vmul.f32 %v212, 0.01
      %v229 = vmul.f32 %v213, 0.01
      %v230 = vmul.f32 %v214, 0.01
      %v231 = vmul.f32 %v215, 0.01
      %v232 = vmul.f32 %v216, 0.01
      %v233 = vmul.f32 %v217, 0.01
      %v234 = vmul.f32 %v218, 0.01
      %v235 = vmul.f32 %v219, 0.01
      %v236 = vsel %vm220, %v212, %v228
      %v237 = vsel %vm221, %v213, %v229
      %v238 = vsel %vm222, %v214, %v230
      %v239 = vsel %vm223, %v215, %v231
      %v240 = vsel %vm224, %v216, %v232
      %v241 = vsel %vm225, %v217, %v233
      %v242 = vsel %vm226, %v218, %v234
      %v243 = vsel %vm227, %v219, %v235
      %v244 = vpack.c.bf16 %v237, %v236
      %v245 = vpack.c.bf16 %v239, %v238
      %v246 = vpack.c.bf16 %v241, %v240
      %v247 = vpack.c.bf16 %v243, %v242
      %v252 = vunpack.c.l.b16 %v244
      %v253 = vunpack.c.h.b16 %v244
      %v254 = vunpack.c.l.b16 %v245
      %v255 = vunpack.c.h.b16 %v245
      %v256 = vunpack.c.l.b16 %v246
      %v257 = vunpack.c.h.b16 %v246
      %v258 = vunpack.c.l.b16 %v247
      %v259 = vunpack.c.h.b16 %v247
      %v260 = vpack.c.b16 %v252, %v252
      %v261 = vpack.c.b16 %v253, %v253
      %v262 = vpack.c.b16 %v254, %v254
      %v263 = vpack.c.b16 %v255, %v255
      %v264 = vpack.c.b16 %v256, %v256
      %v265 = vpack.c.b16 %v257, %v257
      %v266 = vpack.c.b16 %v258, %v258
      %v267 = vpack.c.b16 %v259, %v259
      %276 = vst [vmem:[%s172] sm:$0xf] %v260
      %277 = vst [vmem:[%s172 + $0x4] sm:$0xf] %v261
      %278 = vst [vmem:[%s172 + $0x8] sm:$0xf] %v262
      %279 = vst [vmem:[%s172 + $0xc] sm:$0xf] %v263
      %280 = vst [vmem:[%s172 + $0x10] sm:$0xf] %v264
      %281 = vst [vmem:[%s172 + $0x14] sm:$0xf] %v265
      %282 = vst [vmem:[%s172 + $0x18] sm:$0xf] %v266
      %283 = vst [vmem:[%s172 + $0x1c] sm:$0xf] %v267
      %s284 = smul.u32 8, %s14
      %p285 = scmp.lt.s32.totalorder %s284, 15
      %s286 = scalar_select %p285, %s284, 15
      %s287 = smul.addr %s286, 4
      %s288 = scalar_lea.vmem %s3, %s287
      // Predicated region
      $region33: #{discriminator_forward.10} parent=31 // pred_check
        %p289 = pneg %p100
      $region34: #{discriminator_forward.10} parent=31 // pred_check_branch
        %291 = sbr.rel (%p289) target = $region36
      $region35: #{discriminator_forward.10} parent=31 // pred_region
        %s292 = smul.u32 8, %s14
      $region36: #{discriminator_forward.10} parent=31 // pred_fallthru
        _
    $region32: #{discriminator_forward.10} parent=5 // pred_fallthru
      _
    %p293 = scmp.le.s32.totalorder 2, %s9
    // Predicated region
    $region37: #{discriminator_forward.10} parent=5 // pred_check
      %p294 = pneg %p293
    $region38: #{discriminator_forward.10} parent=5 // pred_check_branch
      %296 = sbr.rel (%p294) target = $region40
    $region39: #{discriminator_forward.10} parent=5 // pred_region
      %s297 = ssub.s32 %s9, 2
      // Predicated region
      $region41: #{discriminator_forward.10} parent=39 // pred_check
        %p298 = pneg %p106
      $region42: #{discriminator_forward.10} parent=39 // pred_check_branch
        %300 = sbr.rel (%p298) target = $region44
      $region43: #{discriminator_forward.10} parent=39 // pred_region
        %s301 = smul.u32 8, %s15
        %p302 = scmp.lt.s32.totalorder %s301, 15
        %s303 = scalar_select %p302, %s301, 15
        %s304 = smul.addr %s303, 4
        %s305 = scalar_lea.vmem %s3, %s304
      $region44: #{discriminator_forward.10} parent=39 // pred_fallthru
        _
    $region40: #{discriminator_forward.10} parent=5 // pred_fallthru
      _
  $region6: #{discriminator_forward.10} parent=0 // loop_footer
    %s13 = sadd.s32 1, %s9
  $region7: #{discriminator_forward.10} parent=0 // loop_footer_branch
    %8 = sbr.rel target = $region3
  $region8: #{discriminator_forward.10} parent=0 // loop_exit
    _

// kernel: discriminator_forward.9
$region0: #{discriminator_forward.9}
  #allocation0 [shape = 'u32[]', space=smem, size = 0x4, offset = 0x4, fixed_abs, tag = 'smem constant byte address 0x4 - core index']
  #allocation1 [shape = 'u32[144,128]{1,0:T(1,128)}', space=vmem, size = 0x12000, scoped, tag = 'internal scratch']
  %s0 = inlined_call_operand.vmem [shape: bf16[128,1024], index: 0, kind: input, shape index: {}]
  %s1 = inlined_call_operand.vmem [shape: bf16[1024,128], index: 1, kind: input, shape index: {}]
  %s2 = inlined_call_operand.vmem [shape: bf16[128,128], index: 2, kind: output, shape index: {0}]
  %s3 = inlined_call_operand.vmem [shape: f32[2,1,128], index: 3, kind: output, shape index: {1}]
  %s4 = inlined_call_operand.vmem [shape: f32[2,1,128], index: 4, kind: output, shape index: {2}]
  %5 = xla_tuple %s2, %s3, %s4
  %s6 = sld [smem:[#allocation0]]
  $region61: #{discriminator_forward.9} parent=0
    _
  %s8 = ssub.s32 1, %s6
  %s9 = scalar_select 0, %s8, %s6
  loop: start=0, step=1, limit=4
  $region2: #{discriminator_forward.9} parent=0 // loop_pre_header
    _
  $region3: #{discriminator_forward.9} parent=0 // loop_header
    %s11 = sphi 0, %s15
    %p12 = scmp.ge.s32.totalorder %s11, 4
    %s18 = sphi 0, %s30
    %s19 = sphi 0, %s26
    %s20 = sphi 0, %s18
    %s21 = sphi 0, %s19
    %s22 = sphi 0, %s20
    %s23 = sphi 0, %s21
    %s35 = sphi 0, %s37
    %s38 = sphi 0, %s35
    %s39 = sphi 0, %s38
    %s55 = sphi 0, %s39
    %s59 = sphi 0, %s59
    %s61 = sphi 0, %s59
    %s62 = sphi 0, %s61
    %s76 = sphi 0, %s62
    %s84 = sphi 0, %s86
    %s87 = sphi 0, %s84
    %s88 = sphi 0, %s87
    %s104 = sphi 0, %s88
    %s110 = sphi 0, %s112
    %s113 = sphi 0, %s110
    %s114 = sphi 0, %s113
    %s130 = sphi 0, %s114
    %s136 = sphi 0, %s138
    %s139 = sphi 0, %s136
    %s140 = sphi 0, %s139
    %s156 = sphi 0, %s140
  $region4: #{discriminator_forward.9} parent=0 // loop_header_branch
    %14 = sbr.rel (%p12) target = $region8
  $region5: #{discriminator_forward.9} parent=0 // loop_body
    %s16 = ssub.s32 %s11, 1
    %s17 = ssub.s32 %s11, 2
    %s24 = sadd.s32 1, %s19
    %p25 = scmp.ge.s32.totalorder %s24, 1
    %s26 = scalar_select %p25, 0, %s24
    %s27 = sadd.s32 1, %s18
    %s28 = scalar_select %p25, %s27, %s18
    %p29 = scmp.ge.s32.totalorder %s28, 2
    %s30 = scalar_select %p29, 0, %s28
    %s31 = sadd.s32 %s18, %s19
    %s32 = sadd.s32 %s30, %s26
    %s33 = ssub.s32 %s31, %s32
    %p34 = scmp.eq.s32.totalorder %s33, 0
    %s36 = sadd.s32 %s35, 1
    %s37 = scalar_select %p34, %s35, %s36
    %p40 = pneg %p34
    %p41 = scmp.eq.s32.totalorder %s11, 1
    %p42 = por %p40, %p41
    %p43 = scmp.ne.s32.totalorder %s35, %s38
    %p44 = scmp.eq.s32.totalorder %s11, 0
    %p45 = por %p43, %p44
    %p46 = scmp.ne.s32.totalorder %s35, %s38
    %p47 = scmp.eq.s32.totalorder %s16, 1
    %p48 = por %p46, %p47
    %p49 = scmp.ne.s32.totalorder %s38, %s39
    %p50 = scmp.eq.s32.totalorder %s16, 0
    %p51 = por %p49, %p50
    %p52 = scmp.ne.s32.totalorder %s38, %s39
    %p53 = scmp.eq.s32.totalorder %s17, 1
    %p54 = por %p52, %p53
    %p56 = scmp.ne.s32.totalorder %s39, %s55
    %p57 = scmp.eq.s32.totalorder %s17, 0
    %p58 = por %p56, %p57
    %s60 = sadd.s32 %s59, 1
    %p63 = scmp.eq.s32.totalorder %s11, 1
    %p64 = scmp.ne.s32.totalorder %s59, %s61
    %p65 = scmp.eq.s32.totalorder %s11, 0
    %p66 = por %p64, %p65
    %p67 = scmp.ne.s32.totalorder %s59, %s61
    %p68 = scmp.eq.s32.totalorder %s16, 1
    %p69 = por %p67, %p68
    %p70 = scmp.ne.s32.totalorder %s61, %s62
    %p71 = scmp.eq.s32.totalorder %s16, 0
    %p72 = por %p70, %p71
    %p73 = scmp.ne.s32.totalorder %s61, %s62
    %p74 = scmp.eq.s32.totalorder %s17, 1
    %p75 = por %p73, %p74
    %p77 = scmp.ne.s32.totalorder %s62, %s76
    %p78 = scmp.eq.s32.totalorder %s17, 0
    %p79 = por %p77, %p78
    %s80 = sadd.s32 %s18, %s19
    %s81 = sadd.s32 %s30, %s26
    %s82 = ssub.s32 %s80, %s81
    %p83 = scmp.eq.s32.totalorder %s82, 0
    %s85 = sadd.s32 %s84, 1
    %s86 = scalar_select %p83, %s84, %s85
    %p89 = pneg %p83
    %p90 = scmp.eq.s32.totalorder %s11, 1
    %p91 = por %p89, %p90
    %p92 = scmp.ne.s32.totalorder %s84, %s87
    %p93 = scmp.eq.s32.totalorder %s11, 0
    %p94 = por %p92, %p93
    %p95 = scmp.ne.s32.totalorder %s84, %s87
    %p96 = scmp.eq.s32.totalorder %s16, 1
    %p97 = por %p95, %p96
    %p98 = scmp.ne.s32.totalorder %s87, %s88
    %p99 = scmp.eq.s32.totalorder %s16, 0
    %p100 = por %p98, %p99
    %p101 = scmp.ne.s32.totalorder %s87, %s88
    %p102 = scmp.eq.s32.totalorder %s17, 1
    %p103 = por %p101, %p102
    %p105 = scmp.ne.s32.totalorder %s88, %s104
    %p106 = scmp.eq.s32.totalorder %s17, 0
    %p107 = por %p105, %p106
    %s108 = ssub.s32 %s18, %s30
    %p109 = scmp.eq.s32.totalorder %s108, 0
    %s111 = sadd.s32 %s110, 1
    %s112 = scalar_select %p109, %s110, %s111
    %p115 = pneg %p109
    %p116 = scmp.eq.s32.totalorder %s11, 1
    %p117 = por %p115, %p116
    %p118 = scmp.ne.s32.totalorder %s110, %s113
    %p119 = scmp.eq.s32.totalorder %s11, 0
    %p120 = por %p118, %p119
    %p121 = scmp.ne.s32.totalorder %s110, %s113
    %p122 = scmp.eq.s32.totalorder %s16, 1
    %p123 = por %p121, %p122
    %p124 = scmp.ne.s32.totalorder %s113, %s114
    %p125 = scmp.eq.s32.totalorder %s16, 0
    %p126 = por %p124, %p125
    %p127 = scmp.ne.s32.totalorder %s113, %s114
    %p128 = scmp.eq.s32.totalorder %s17, 1
    %p129 = por %p127, %p128
    %p131 = scmp.ne.s32.totalorder %s114, %s130
    %p132 = scmp.eq.s32.totalorder %s17, 0
    %p133 = por %p131, %p132
    %s134 = ssub.s32 %s18, %s30
    %p135 = scmp.eq.s32.totalorder %s134, 0
    %s137 = sadd.s32 %s136, 1
    %s138 = scalar_select %p135, %s136, %s137
    %p141 = pneg %p135
    %p142 = scmp.eq.s32.totalorder %s11, 1
    %p143 = por %p141, %p142
    %p144 = scmp.ne.s32.totalorder %s136, %s139
    %p145 = scmp.eq.s32.totalorder %s11, 0
    %p146 = por %p144, %p145
    %p147 = scmp.ne.s32.totalorder %s136, %s139
    %p148 = scmp.eq.s32.totalorder %s16, 1
    %p149 = por %p147, %p148
    %p150 = scmp.ne.s32.totalorder %s139, %s140
    %p151 = scmp.eq.s32.totalorder %s16, 0
    %p152 = por %p150, %p151
    %p153 = scmp.ne.s32.totalorder %s139, %s140
    %p154 = scmp.eq.s32.totalorder %s17, 1
    %p155 = por %p153, %p154
    %p157 = scmp.ne.s32.totalorder %s140, %s156
    %p158 = scmp.eq.s32.totalorder %s17, 0
    %p159 = por %p157, %p158
    %p160 = scmp.le.s32.totalorder 1, %s11
    %p161 = scmp.lt.s32.totalorder %s11, 3
    %p162 = pnand %p160, %p161
    %p163 = pneg %p162
    // Predicated region
    $region9: #{discriminator_forward.9} parent=5 // pred_check
      _
    $region10: #{discriminator_forward.9} parent=5 // pred_check_branch
      %165 = sbr.rel (%p162) target = $region12
    $region11: #{discriminator_forward.9} parent=5 // pred_region
      %s166 = ssub.s32 %s11, 1
      // Predicated region
      $region13: #{discriminator_forward.9} parent=11 // pred_check
        %p167 = pneg %p72
      $region14: #{discriminator_forward.9} parent=11 // pred_check_branch
        %169 = sbr.rel (%p167) target = $region16
      $region15: #{discriminator_forward.9} parent=11 // pred_region
        _
      $region16: #{discriminator_forward.9} parent=11 // pred_fallthru
        _
    $region12: #{discriminator_forward.9} parent=5 // pred_fallthru
      _
    %p170 = scmp.lt.s32.totalorder %s11, 2
    // Predicated region
    $region17: #{discriminator_forward.9} parent=5 // pred_check
      %p171 = pneg %p170
    $region18: #{discriminator_forward.9} parent=5 // pred_check_branch
      %173 = sbr.rel (%p171) target = $region20
    $region19: #{discriminator_forward.9} parent=5 // pred_region
      // Predicated region
      $region21: #{discriminator_forward.9} parent=19 // pred_check
        %p174 = pneg %p45
      $region22: #{discriminator_forward.9} parent=19 // pred_check_branch
        %176 = sbr.rel (%p174) target = $region24
      $region23: #{discriminator_forward.9} parent=19 // pred_region
        %s177 = sadd.s32 %s18, %s19
        %s178 = smul.u32 8, %s177
        %p179 = scmp.lt.s32.totalorder %s178, 15
        %s180 = scalar_select %p179, %s178, 15
        %s181 = smul.addr %s180, 8
        %s182 = smul.addr %s181, 4
        %s183 = scalar_lea.vmem %s0, %s182
        %s184 = sadd.s32 %s18, %s19
        %s185 = smul.u32 8, %s184
      $region24: #{discriminator_forward.9} parent=19 // pred_fallthru
        _
    $region20: #{discriminator_forward.9} parent=5 // pred_fallthru
      _
    %p186 = scmp.le.s32.totalorder 1, %s11
    %p187 = scmp.lt.s32.totalorder %s11, 3
    %p188 = pnand %p186, %p187
    %p189 = pneg %p188
    // Predicated region
    $region25: #{discriminator_forward.9} parent=5 // pred_check
      _
    $region26: #{discriminator_forward.9} parent=5 // pred_check_branch
      %191 = sbr.rel (%p188) target = $region28
    $region27: #{discriminator_forward.9} parent=5 // pred_region
      %s192 = ssub.s32 %s11, 1
      %s193 = sadd.s32 %s20, %s21
      %s194 = smul.u32 8, %s193
      %p195 = scmp.lt.s32.totalorder %s194, 15
      %s196 = scalar_select %p195, %s194, 15
      %s197 = smul.addr %s196, 8
      %s198 = smul.addr %s197, 4
      %s199 = scalar_lea.vmem %s0, %s198
      %p200 = pneg %p51
      %p201 = pneg %p48
      %p202 = pneg %p72
      %p203 = pneg %p69
      %p204 = pneg %p100
      %p205 = pneg %p97
      %s206 = sadd.s32 %s20, %s21
      %s207 = smul.u32 8, %s206
      %p208 = scmp.lt.s32.totalorder %s207, 15
      %s209 = scalar_select %p208, %s207, 15
      %s210 = smul.addr %s209, 4
      %s211 = scalar_lea.vmem %s2, %s210
      %p212 = pneg %p126
      %p213 = pneg %p123
      %p214 = scmp.lt.s32.totalorder %s20, 1
      %s215 = scalar_select %p214, %s20, 1
      %s216 = scalar_lea.vmem %s3, %s215
      %p217 = pneg %p152
      %p218 = pneg %p149
      %p219 = scmp.lt.s32.totalorder %s20, 1
      %s220 = scalar_select %p219, %s20, 1
      %s221 = scalar_lea.vmem %s4, %s220
      %s222 = sadd.s32 %s20, %s21
      %s223 = smul.u32 8, %s222
      %p224 = scmp.lt.s32.totalorder %s223, 15
      %s225 = scalar_select %p224, %s223, 15
      %s226 = smul.addr %s225, 8
      %s227 = smul.addr %s226, 4
      %s228 = scalar_lea.vmem %s0, %s227
      %s229 = sadd.s32 %s20, %s21
      %s230 = smul.u32 8, %s229
      %s231 = sadd.s32 %s20, %s21
      %s232 = smul.u32 8, %s231
      %p233 = scmp.lt.s32.totalorder %s232, 15
      %s234 = scalar_select %p233, %s232, 15
      %s235 = smul.addr %s234, 4
      %s236 = scalar_lea.vmem %s2, %s235
      %s237 = sadd.s32 %s20, %s21
      %s238 = smul.u32 8, %s237
      %p239 = scmp.lt.s32.totalorder %s20, 1
      %s240 = scalar_select %p239, %s20, 1
      %s241 = scalar_lea.vmem %s3, %s240
      %p242 = scmp.lt.s32.totalorder %s20, 1
      %s243 = scalar_select %p242, %s20, 1
      %s244 = scalar_lea.vmem %s4, %s243
      %v246 = vld [vmem:[%s228] sm:$0xff]
      %v247 = vld [vmem:[%s228 + $0x8] sm:$0xff]
      %v248 = vld [vmem:[%s228 + $0x10] sm:$0xff]
      %v249 = vld [vmem:[%s228 + $0x18] sm:$0xff]
      %v250 = vld [vmem:[%s228 + $0x20] sm:$0xff]
      %v251 = vld [vmem:[%s228 + $0x28] sm:$0xff]
      %v252 = vld [vmem:[%s228 + $0x30] sm:$0xff]
      %v253 = vld [vmem:[%s228 + $0x38] sm:$0xff]
      %v254 = vld [vmem:[%s228 + $0x40] sm:$0xff]
      %v255 = vld [vmem:[%s228 + $0x48] sm:$0xff]
      %v256 = vld [vmem:[%s228 + $0x50] sm:$0xff]
      %v257 = vld [vmem:[%s228 + $0x58] sm:$0xff]
      %v258 = vld [vmem:[%s228 + $0x60] sm:$0xff]
      %v259 = vld [vmem:[%s228 + $0x68] sm:$0xff]
      %v260 = vld [vmem:[%s228 + $0x70] sm:$0xff]
      %v261 = vld [vmem:[%s228 + $0x78] sm:$0xff]
      %v262 = vld [vmem:[%s228 + $0x80] sm:$0xff]
      %v263 = vld [vmem:[%s228 + $0x88] sm:$0xff]
      %v264 = vld [vmem:[%s228 + $0x90] sm:$0xff]
      %v265 = vld [vmem:[%s228 + $0x98] sm:$0xff]
      %v266 = vld [vmem:[%s228 + $0xa0] sm:$0xff]
      %v267 = vld [vmem:[%s228 + $0xa8] sm:$0xff]
      %v268 = vld [vmem:[%s228 + $0xb0] sm:$0xff]
      %v269 = vld [vmem:[%s228 + $0xb8] sm:$0xff]
      %v270 = vld [vmem:[%s228 + $0xc0] sm:$0xff]
      %v271 = vld [vmem:[%s228 + $0xc8] sm:$0xff]
      %v272 = vld [vmem:[%s228 + $0xd0] sm:$0xff]
      %v273 = vld [vmem:[%s228 + $0xd8] sm:$0xff]
      %v274 = vld [vmem:[%s228 + $0xe0] sm:$0xff]
      %v275 = vld [vmem:[%s228 + $0xe8] sm:$0xff]
      %v276 = vld [vmem:[%s228 + $0xf0] sm:$0xff]
      %v277 = vld [vmem:[%s228 + $0xf8] sm:$0xff]
      %v278 = vld [vmem:[%s1] sm:$0xf]
      %v279 = vld [vmem:[%s1 + $0x4] sm:$0xf]
      %v280 = vld [vmem:[%s1 + $0x8] sm:$0xf]
      %v281 = vld [vmem:[%s1 + $0xc] sm:$0xf]
      %v282 = vld [vmem:[%s1 + $0x10] sm:$0xf]
      %v283 = vld [vmem:[%s1 + $0x14] sm:$0xf]
      %v284 = vld [vmem:[%s1 + $0x18] sm:$0xf]
      %v285 = vld [vmem:[%s1 + $0x1c] sm:$0xf]
      %v286 = vld [vmem:[%s1 + $0x20] sm:$0xf]
      %v287 = vld [vmem:[%s1 + $0x24] sm:$0xf]
      %v288 = vld [vmem:[%s1 + $0x28] sm:$0xf]
      %v289 = vld [vmem:[%s1 + $0x2c] sm:$0xf]
      %v290 = vld [vmem:[%s1 + $0x30] sm:$0xf]
      %v291 = vld [vmem:[%s1 + $0x34] sm:$0xf]
      %v292 = vld [vmem:[%s1 + $0x38] sm:$0xf]
      %v293 = vld [vmem:[%s1 + $0x3c] sm:$0xf]
      %v294 = vld [vmem:[%s1 + $0x40] sm:$0xf]
      %v295 = vld [vmem:[%s1 + $0x44] sm:$0xf]
      %v296 = vld [vmem:[%s1 + $0x48] sm:$0xf]
      %v297 = vld [vmem:[%s1 + $0x4c] sm:$0xf]
      %v298 = vld [vmem:[%s1 + $0x50] sm:$0xf]
      %v299 = vld [vmem:[%s1 + $0x54] sm:$0xf]
      %v300 = vld [vmem:[%s1 + $0x58] sm:$0xf]
      %v301 = vld [vmem:[%s1 + $0x5c] sm:$0xf]
      %v302 = vld [vmem:[%s1 + $0x60] sm:$0xf]
      %v303 = vld [vmem:[%s1 + $0x64] sm:$0xf]
      %v304 = vld [vmem:[%s1 + $0x68] sm:$0xf]
      %v305 = vld [vmem:[%s1 + $0x6c] sm:$0xf]
      %v306 = vld [vmem:[%s1 + $0x70] sm:$0xf]
      %v307 = vld [vmem:[%s1 + $0x74] sm:$0xf]
      %v308 = vld [vmem:[%s1 + $0x78] sm:$0xf]
      %v309 = vld [vmem:[%s1 + $0x7c] sm:$0xf]
      %v310 = vld [vmem:[%s1 + $0x80] sm:$0xf]
      %v311 = vld [vmem:[%s1 + $0x84] sm:$0xf]
      %v312 = vld [vmem:[%s1 + $0x88] sm:$0xf]
      %v313 = vld [vmem:[%s1 + $0x8c] sm:$0xf]
      %v314 = vld [vmem:[%s1 + $0x90] sm:$0xf]
      %v315 = vld [vmem:[%s1 + $0x94] sm:$0xf]
      %v316 = vld [vmem:[%s1 + $0x98] sm:$0xf]
      %v317 = vld [vmem:[%s1 + $0x9c] sm:$0xf]
      %v318 = vld [vmem:[%s1 + $0xa0] sm:$0xf]
      %v319 = vld [vmem:[%s1 + $0xa4] sm:$0xf]
      %v320 = vld [vmem:[%s1 + $0xa8] sm:$0xf]
      %v321 = vld [vmem:[%s1 + $0xac] sm:$0xf]
      %v322 = vld [vmem:[%s1 + $0xb0] sm:$0xf]
      %v323 = vld [vmem:[%s1 + $0xb4] sm:$0xf]
      %v324 = vld [vmem:[%s1 + $0xb8] sm:$0xf]
      %v325 = vld [vmem:[%s1 + $0xbc] sm:$0xf]
      %v326 = vld [vmem:[%s1 + $0xc0] sm:$0xf]
      %v327 = vld [vmem:[%s1 + $0xc4] sm:$0xf]
      %v328 = vld [vmem:[%s1 + $0xc8] sm:$0xf]
      %v329 = vld [vmem:[%s1 + $0xcc] sm:$0xf]
      %v330 = vld [vmem:[%s1 + $0xd0] sm:$0xf]
      %v331 = vld [vmem:[%s1 + $0xd4] sm:$0xf]
      %v332 = vld [vmem:[%s1 + $0xd8] sm:$0xf]
      %v333 = vld [vmem:[%s1 + $0xdc] sm:$0xf]
      %v334 = vld [vmem:[%s1 + $0xe0] sm:$0xf]
      %v335 = vld [vmem:[%s1 + $0xe4] sm:$0xf]
      %v336 = vld [vmem:[%s1 + $0xe8] sm:$0xf]
      %v337 = vld [vmem:[%s1 + $0xec] sm:$0xf]
      %v338 = vld [vmem:[%s1 + $0xf0] sm:$0xf]
      %v339 = vld [vmem:[%s1 + $0xf4] sm:$0xf]
      %v340 = vld [vmem:[%s1 + $0xf8] sm:$0xf]
      %v341 = vld [vmem:[%s1 + $0xfc] sm:$0xf]
      %v342 = vld [vmem:[%s1 + $0x100] sm:$0xf]
      %v343 = vld [vmem:[%s1 + $0x104] sm:$0xf]
      %v344 = vld [vmem:[%s1 + $0x108] sm:$0xf]
      %v345 = vld [vmem:[%s1 + $0x10c] sm:$0xf]
      %v346 = vld [vmem:[%s1 + $0x110] sm:$0xf]
      %v347 = vld [vmem:[%s1 + $0x114] sm:$0xf]
      %v348 = vld [vmem:[%s1 + $0x118] sm:$0xf]
      %v349 = vld [vmem:[%s1 + $0x11c] sm:$0xf]
      %v350 = vld [vmem:[%s1 + $0x120] sm:$0xf]
      %v351 = vld [vmem:[%s1 + $0x124] sm:$0xf]
      %v352 = vld [vmem:[%s1 + $0x128] sm:$0xf]
      %v353 = vld [vmem:[%s1 + $0x12c] sm:$0xf]
      %v354 = vld [vmem:[%s1 + $0x130] sm:$0xf]
      %v355 = vld [vmem:[%s1 + $0x134] sm:$0xf]
      %v356 = vld [vmem:[%s1 + $0x138] sm:$0xf]
      %v357 = vld [vmem:[%s1 + $0x13c] sm:$0xf]
      %v358 = vld [vmem:[%s1 + $0x140] sm:$0xf]
      %v359 = vld [vmem:[%s1 + $0x144] sm:$0xf]
      %v360 = vld [vmem:[%s1 + $0x148] sm:$0xf]
      %v361 = vld [vmem:[%s1 + $0x14c] sm:$0xf]
      %v362 = vld [vmem:[%s1 + $0x150] sm:$0xf]
      %v363 = vld [vmem:[%s1 + $0x154] sm:$0xf]
      %v364 = vld [vmem:[%s1 + $0x158] sm:$0xf]
      %v365 = vld [vmem:[%s1 + $0x15c] sm:$0xf]
      %v366 = vld [vmem:[%s1 + $0x160] sm:$0xf]
      %v367 = vld [vmem:[%s1 + $0x164] sm:$0xf]
      %v368 = vld [vmem:[%s1 + $0x168] sm:$0xf]
      %v369 = vld [vmem:[%s1 + $0x16c] sm:$0xf]
      %v370 = vld [vmem:[%s1 + $0x170] sm:$0xf]
      %v371 = vld [vmem:[%s1 + $0x174] sm:$0xf]
      %v372 = vld [vmem:[%s1 + $0x178] sm:$0xf]
      %v373 = vld [vmem:[%s1 + $0x17c] sm:$0xf]
      %v374 = vld [vmem:[%s1 + $0x180] sm:$0xf]
      %v375 = vld [vmem:[%s1 + $0x184] sm:$0xf]
      %v376 = vld [vmem:[%s1 + $0x188] sm:$0xf]
      %v377 = vld [vmem:[%s1 + $0x18c] sm:$0xf]
      %v378 = vld [vmem:[%s1 + $0x190] sm:$0xf]
      %v379 = vld [vmem:[%s1 + $0x194] sm:$0xf]
      %v380 = vld [vmem:[%s1 + $0x198] sm:$0xf]
      %v381 = vld [vmem:[%s1 + $0x19c] sm:$0xf]
      %v382 = vld [vmem:[%s1 + $0x1a0] sm:$0xf]
      %v383 = vld [vmem:[%s1 + $0x1a4] sm:$0xf]
      %v384 = vld [vmem:[%s1 + $0x1a8] sm:$0xf]
      %v385 = vld [vmem:[%s1 + $0x1ac] sm:$0xf]
      %v386 = vld [vmem:[%s1 + $0x1b0] sm:$0xf]
      %v387 = vld [vmem:[%s1 + $0x1b4] sm:$0xf]
      %v388 = vld [vmem:[%s1 + $0x1b8] sm:$0xf]
      %v389 = vld [vmem:[%s1 + $0x1bc] sm:$0xf]
      %v390 = vld [vmem:[%s1 + $0x1c0] sm:$0xf]
      %v391 = vld [vmem:[%s1 + $0x1c4] sm:$0xf]
      %v392 = vld [vmem:[%s1 + $0x1c8] sm:$0xf]
      %v393 = vld [vmem:[%s1 + $0x1cc] sm:$0xf]
      %v394 = vld [vmem:[%s1 + $0x1d0] sm:$0xf]
      %v395 = vld [vmem:[%s1 + $0x1d4] sm:$0xf]
      %v396 = vld [vmem:[%s1 + $0x1d8] sm:$0xf]
      %v397 = vld [vmem:[%s1 + $0x1dc] sm:$0xf]
      %v398 = vld [vmem:[%s1 + $0x1e0] sm:$0xf]
      %v399 = vld [vmem:[%s1 + $0x1e4] sm:$0xf]
      %v400 = vld [vmem:[%s1 + $0x1e8] sm:$0xf]
      %v401 = vld [vmem:[%s1 + $0x1ec] sm:$0xf]
      %v402 = vld [vmem:[%s1 + $0x1f0] sm:$0xf]
      %v403 = vld [vmem:[%s1 + $0x1f4] sm:$0xf]
      %v404 = vld [vmem:[%s1 + $0x1f8] sm:$0xf]
      %v405 = vld [vmem:[%s1 + $0x1fc] sm:$0xf]
      %v438 = vunpack.c.l.b16 %v246
      %v439 = vunpack.c.h.b16 %v246
      %v440 = vunpack.c.l.b16 %v247
      %v441 = vunpack.c.h.b16 %v247
      %v442 = vunpack.c.l.b16 %v248
      %v443 = vunpack.c.h.b16 %v248
      %v444 = vunpack.c.l.b16 %v249
      %v445 = vunpack.c.h.b16 %v249
      %v446 = vunpack.c.l.b16 %v250
      %v447 = vunpack.c.h.b16 %v250
      %v448 = vunpack.c.l.b16 %v251
      %v449 = vunpack.c.h.b16 %v251
      %v450 = vunpack.c.l.b16 %v252
      %v451 = vunpack.c.h.b16 %v252
      %v452 = vunpack.c.l.b16 %v253
      %v453 = vunpack.c.h.b16 %v253
      %v454 = vunpack.c.l.b16 %v254
      %v455 = vunpack.c.h.b16 %v254
      %v456 = vunpack.c.l.b16 %v255
      %v457 = vunpack.c.h.b16 %v255
      %v458 = vunpack.c.l.b16 %v256
      %v459 = vunpack.c.h.b16 %v256
      %v460 = vunpack.c.l.b16 %v257
      %v461 = vunpack.c.h.b16 %v257
      %v462 = vunpack.c.l.b16 %v258
      %v463 = vunpack.c.h.b16 %v258
      %v464 = vunpack.c.l.b16 %v259
      %v465 = vunpack.c.h.b16 %v259
      %v466 = vunpack.c.l.b16 %v260
      %v467 = vunpack.c.h.b16 %v260
      %v468 = vunpack.c.l.b16 %v261
      %v469 = vunpack.c.h.b16 %v261
      %v470 = vunpack.c.l.b16 %v262
      %v471 = vunpack.c.h.b16 %v262
      %v472 = vunpack.c.l.b16 %v263
      %v473 = vunpack.c.h.b16 %v263
      %v474 = vunpack.c.l.b16 %v264
      %v475 = vunpack.c.h.b16 %v264
      %v476 = vunpack.c.l.b16 %v265
      %v477 = vunpack.c.h.b16 %v265
      %v478 = vunpack.c.l.b16 %v266
      %v479 = vunpack.c.h.b16 %v266
      %v480 = vunpack.c.l.b16 %v267
      %v481 = vunpack.c.h.b16 %v267
      %v482 = vunpack.c.l.b16 %v268
      %v483 = vunpack.c.h.b16 %v268
      %v484 = vunpack.c.l.b16 %v269
      %v485 = vunpack.c.h.b16 %v269
      %v486 = vunpack.c.l.b16 %v270
      %v487 = vunpack.c.h.b16 %v270
      %v488 = vunpack.c.l.b16 %v271
      %v489 = vunpack.c.h.b16 %v271
      %v490 = vunpack.c.l.b16 %v272
      %v491 = vunpack.c.h.b16 %v272
      %v492 = vunpack.c.l.b16 %v273
      %v493 = vunpack.c.h.b16 %v273
      %v494 = vunpack.c.l.b16 %v274
      %v495 = vunpack.c.h.b16 %v274
      %v496 = vunpack.c.l.b16 %v275
      %v497 = vunpack.c.h.b16 %v275
      %v498 = vunpack.c.l.b16 %v276
      %v499 = vunpack.c.h.b16 %v276
      %v500 = vunpack.c.l.b16 %v277
      %v501 = vunpack.c.h.b16 %v277
      %v502 = vpack.c.b16 %v446, %v438
      %v503 = vpack.c.b16 %v447, %v439
      %v504 = vpack.c.b16 %v448, %v440
      %v505 = vpack.c.b16 %v449, %v441
      %v506 = vpack.c.b16 %v450, %v442
      %v507 = vpack.c.b16 %v451, %v443
      %v508 = vpack.c.b16 %v452, %v444
      %v509 = vpack.c.b16 %v453, %v445
      %v510 = vpack.c.b16 %v462, %v454
      %v511 = vpack.c.b16 %v463, %v455
      %v512 = vpack.c.b16 %v464, %v456
      %v513 = vpack.c.b16 %v465, %v457
      %v514 = vpack.c.b16 %v466, %v458
      %v515 = vpack.c.b16 %v467, %v459
      %v516 = vpack.c.b16 %v468, %v460
      %v517 = vpack.c.b16 %v469, %v461
      %v518 = vpack.c.b16 %v478, %v470
      %v519 = vpack.c.b16 %v479, %v471
      %v520 = vpack.c.b16 %v480, %v472
      %v521 = vpack.c.b16 %v481, %v473
      %v522 = vpack.c.b16 %v482, %v474
      %v523 = vpack.c.b16 %v483, %v475
      %v524 = vpack.c.b16 %v484, %v476
      %v525 = vpack.c.b16 %v485, %v477
      %v526 = vpack.c.b16 %v494, %v486
      %v527 = vpack.c.b16 %v495, %v487
      %v528 = vpack.c.b16 %v496, %v488
      %v529 = vpack.c.b16 %v497, %v489
      %v530 = vpack.c.b16 %v498, %v490
      %v531 = vpack.c.b16 %v499, %v491
      %v532 = vpack.c.b16 %v500, %v492
      %v533 = vpack.c.b16 %v501, %v493
      %v694 = vunpack.c.l.b16 %v278
      %v695 = vunpack.c.l.b16 %v279
      %v696 = vunpack.c.l.b16 %v280
      %v697 = vunpack.c.l.b16 %v281
      %v698 = vunpack.c.l.b16 %v282
      %v699 = vunpack.c.l.b16 %v283
      %v700 = vunpack.c.l.b16 %v284
      %v701 = vunpack.c.l.b16 %v285
      %v702 = vunpack.c.l.b16 %v286
      %v703 = vunpack.c.l.b16 %v287
      %v704 = vunpack.c.l.b16 %v288
      %v705 = vunpack.c.l.b16 %v289
      %v706 = vunpack.c.l.b16 %v290
      %v707 = vunpack.c.l.b16 %v291
      %v708 = vunpack.c.l.b16 %v292
      %v709 = vunpack.c.l.b16 %v293
      %v710 = vunpack.c.l.b16 %v294
      %v711 = vunpack.c.l.b16 %v295
      %v712 = vunpack.c.l.b16 %v296
      %v713 = vunpack.c.l.b16 %v297
      %v714 = vunpack.c.l.b16 %v298
      %v715 = vunpack.c.l.b16 %v299
      %v716 = vunpack.c.l.b16 %v300
      %v717 = vunpack.c.l.b16 %v301
      %v718 = vunpack.c.l.b16 %v302
      %v719 = vunpack.c.l.b16 %v303
      %v720 = vunpack.c.l.b16 %v304
      %v721 = vunpack.c.l.b16 %v305
      %v722 = vunpack.c.l.b16 %v306
      %v723 = vunpack.c.l.b16 %v307
      %v724 = vunpack.c.l.b16 %v308
      %v725 = vunpack.c.l.b16 %v309
      %v726 = vunpack.c.l.b16 %v310
      %v727 = vunpack.c.l.b16 %v311
      %v728 = vunpack.c.l.b16 %v312
      %v729 = vunpack.c.l.b16 %v313
      %v730 = vunpack.c.l.b16 %v314
      %v731 = vunpack.c.l.b16 %v315
      %v732 = vunpack.c.l.b16 %v316
      %v733 = vunpack.c.l.b16 %v317
      %v734 = vunpack.c.l.b16 %v318
      %v735 = vunpack.c.l.b16 %v319
      %v736 = vunpack.c.l.b16 %v320
      %v737 = vunpack.c.l.b16 %v321
      %v738 = vunpack.c.l.b16 %v322
      %v739 = vunpack.c.l.b16 %v323
      %v740 = vunpack.c.l.b16 %v324
      %v741 = vunpack.c.l.b16 %v325
      %v742 = vunpack.c.l.b16 %v326
      %v743 = vunpack.c.l.b16 %v327
      %v744 = vunpack.c.l.b16 %v328
      %v745 = vunpack.c.l.b16 %v329
      %v746 = vunpack.c.l.b16 %v330
      %v747 = vunpack.c.l.b16 %v331
      %v748 = vunpack.c.l.b16 %v332
      %v749 = vunpack.c.l.b16 %v333
      %v750 = vunpack.c.l.b16 %v334
      %v751 = vunpack.c.l.b16 %v335
      %v752 = vunpack.c.l.b16 %v336
      %v753 = vunpack.c.l.b16 %v337
      %v754 = vunpack.c.l.b16 %v338
      %v755 = vunpack.c.l.b16 %v339
      %v756 = vunpack.c.l.b16 %v340
      %v757 = vunpack.c.l.b16 %v341
      %v758 = vunpack.c.l.b16 %v342
      %v759 = vunpack.c.l.b16 %v343
      %v760 = vunpack.c.l.b16 %v344
      %v761 = vunpack.c.l.b16 %v345
      %v762 = vunpack.c.l.b16 %v346
      %v763 = vunpack.c.l.b16 %v347
      %v764 = vunpack.c.l.b16 %v348
      %v765 = vunpack.c.l.b16 %v349
      %v766 = vunpack.c.l.b16 %v350
      %v767 = vunpack.c.l.b16 %v351
      %v768 = vunpack.c.l.b16 %v352
      %v769 = vunpack.c.l.b16 %v353
      %v770 = vunpack.c.l.b16 %v354
      %v771 = vunpack.c.l.b16 %v355
      %v772 = vunpack.c.l.b16 %v356
      %v773 = vunpack.c.l.b16 %v357
      %v774 = vunpack.c.l.b16 %v358
      %v775 = vunpack.c.l.b16 %v359
      %v776 = vunpack.c.l.b16 %v360
      %v777 = vunpack.c.l.b16 %v361
      %v778 = vunpack.c.l.b16 %v362
      %v779 = vunpack.c.l.b16 %v363
      %v780 = vunpack.c.l.b16 %v364
      %v781 = vunpack.c.l.b16 %v365
      %v782 = vunpack.c.l.b16 %v366
      %v783 = vunpack.c.l.b16 %v367
      %v784 = vunpack.c.l.b16 %v368
      %v785 = vunpack.c.l.b16 %v369
      %v786 = vunpack.c.l.b16 %v370
      %v787 = vunpack.c.l.b16 %v371
      %v788 = vunpack.c.l.b16 %v372
      %v789 = vunpack.c.l.b16 %v373
      %v790 = vunpack.c.l.b16 %v374
      %v791 = vunpack.c.l.b16 %v375
      %v792 = vunpack.c.l.b16 %v376
      %v793 = vunpack.c.l.b16 %v377
      %v794 = vunpack.c.l.b16 %v378
      %v795 = vunpack.c.l.b16 %v379
      %v796 = vunpack.c.l.b16 %v380
      %v797 = vunpack.c.l.b16 %v381
      %v798 = vunpack.c.l.b16 %v382
      %v799 = vunpack.c.l.b16 %v383
      %v800 = vunpack.c.l.b16 %v384
      %v801 = vunpack.c.l.b16 %v385
      %v802 = vunpack.c.l.b16 %v386
      %v803 = vunpack.c.l.b16 %v387
      %v804 = vunpack.c.l.b16 %v388
      %v805 = vunpack.c.l.b16 %v389
      %v806 = vunpack.c.l.b16 %v390
      %v807 = vunpack.c.l.b16 %v391
      %v808 = vunpack.c.l.b16 %v392
      %v809 = vunpack.c.l.b16 %v393
      %v810 = vunpack.c.l.b16 %v394
      %v811 = vunpack.c.l.b16 %v395
      %v812 = vunpack.c.l.b16 %v396
      %v813 = vunpack.c.l.b16 %v397
      %v814 = vunpack.c.l.b16 %v398
      %v815 = vunpack.c.l.b16 %v399
      %v816 = vunpack.c.l.b16 %v400
      %v817 = vunpack.c.l.b16 %v401
      %v818 = vunpack.c.l.b16 %v402
      %v819 = vunpack.c.l.b16 %v403
      %v820 = vunpack.c.l.b16 %v404
      %v821 = vunpack.c.l.b16 %v405
      %v822 = vpack.c.b16 %v695, %v694
      %v823 = vpack.c.b16 %v697, %v696
      %v824 = vpack.c.b16 %v699, %v698
      %v825 = vpack.c.b16 %v701, %v700
      %v826 = vpack.c.b16 %v703, %v702
      %v827 = vpack.c.b16 %v705, %v704
      %v828 = vpack.c.b16 %v707, %v706
      %v829 = vpack.c.b16 %v709, %v708
      %v830 = vpack.c.b16 %v711, %v710
      %v831 = vpack.c.b16 %v713, %v712
      %v832 = vpack.c.b16 %v715, %v714
      %v833 = vpack.c.b16 %v717, %v716
      %v834 = vpack.c.b16 %v719, %v718
      %v835 = vpack.c.b16 %v721, %v720
      %v836 = vpack.c.b16 %v723, %v722
      %v837 = vpack.c.b16 %v725, %v724
      %v838 = vpack.c.b16 %v727, %v726
      %v839 = vpack.c.b16 %v729, %v728
      %v840 = vpack.c.b16 %v731, %v730
      %v841 = vpack.c.b16 %v733, %v732
      %v842 = vpack.c.b16 %v735, %v734
      %v843 = vpack.c.b16 %v737, %v736
      %v844 = vpack.c.b16 %v739, %v738
      %v845 = vpack.c.b16 %v741, %v740
      %v846 = vpack.c.b16 %v743, %v742
      %v847 = vpack.c.b16 %v745, %v744
      %v848 = vpack.c.b16 %v747, %v746
      %v849 = vpack.c.b16 %v749, %v748
      %v850 = vpack.c.b16 %v751, %v750
      %v851 = vpack.c.b16 %v753, %v752
      %v852 = vpack.c.b16 %v755, %v754
      %v853 = vpack.c.b16 %v757, %v756
      %v854 = vpack.c.b16 %v759, %v758
      %v855 = vpack.c.b16 %v761, %v760
      %v856 = vpack.c.b16 %v763, %v762
      %v857 = vpack.c.b16 %v765, %v764
      %v858 = vpack.c.b16 %v767, %v766
      %v859 = vpack.c.b16 %v769, %v768
      %v860 = vpack.c.b16 %v771, %v770
      %v861 = vpack.c.b16 %v773, %v772
      %v862 = vpack.c.b16 %v775, %v774
      %v863 = vpack.c.b16 %v777, %v776
      %v864 = vpack.c.b16 %v779, %v778
      %v865 = vpack.c.b16 %v781, %v780
      %v866 = vpack.c.b16 %v783, %v782
      %v867 = vpack.c.b16 %v785, %v784
      %v868 = vpack.c.b16 %v787, %v786
      %v869 = vpack.c.b16 %v789, %v788
      %v870 = vpack.c.b16 %v791, %v790
      %v871 = vpack.c.b16 %v793, %v792
      %v872 = vpack.c.b16 %v795, %v794
      %v873 = vpack.c.b16 %v797, %v796
      %v874 = vpack.c.b16 %v799, %v798
      %v875 = vpack.c.b16 %v801, %v800
      %v876 = vpack.c.b16 %v803, %v802
      %v877 = vpack.c.b16 %v805, %v804
      %v878 = vpack.c.b16 %v807, %v806
      %v879 = vpack.c.b16 %v809, %v808
      %v880 = vpack.c.b16 %v811, %v810
      %v881 = vpack.c.b16 %v813, %v812
      %v882 = vpack.c.b16 %v815, %v814
      %v883 = vpack.c.b16 %v817, %v816
      %v884 = vpack.c.b16 %v819, %v818
      %v885 = vpack.c.b16 %v821, %v820
      %950 = vmatprep.subr.bf16.mxu0 0
      %951 = vmatpush1.bf16.msra.mxu0 %v822
      %952 = vmatprep.subr.bf16.mxu0 0
      %953 = vmatpush1.bf16.msra.mxu0 %v823
      %954 = vmatprep.subr.bf16.mxu0 0
      %955 = vmatpush1.bf16.msra.mxu0 %v824
      %956 = vmatprep.subr.bf16.mxu0 0
      %957 = vmatpush1.bf16.msra.mxu0 %v825
      %958 = vmatprep.subr.bf16.mxu0 0
      %959 = vmatpush1.bf16.msra.mxu0 %v826
      %960 = vmatprep.subr.bf16.mxu0 0
      %961 = vmatpush1.bf16.msra.mxu0 %v827
      %962 = vmatprep.subr.bf16.mxu0 0
      %963 = vmatpush1.bf16.msra.mxu0 %v828
      %964 = vmatprep.subr.bf16.mxu0 0
      %965 = vmatpush1.bf16.msra.mxu0 %v829
      %966 = vmatprep.subr.bf16.mxu0 0
      %967 = vmatpush1.bf16.msra.mxu0 %v830
      %968 = vmatprep.subr.bf16.mxu0 0
      %969 = vmatpush1.bf16.msra.mxu0 %v831
      %970 = vmatprep.subr.bf16.mxu0 0
      %971 = vmatpush1.bf16.msra.mxu0 %v832
      %972 = vmatprep.subr.bf16.mxu0 0
      %973 = vmatpush1.bf16.msra.mxu0 %v833
      %974 = vmatprep.subr.bf16.mxu0 0
      %975 = vmatpush1.bf16.msra.mxu0 %v834
      %976 = vmatprep.subr.bf16.mxu0 0
      %977 = vmatpush1.bf16.msra.mxu0 %v835
      %978 = vmatprep.subr.bf16.mxu0 0
      %979 = vmatpush1.bf16.msra.mxu0 %v836
      %980 = vmatprep.subr.bf16.mxu0 0
      %981 = vmatpush1.bf16.msra.mxu0 %v837
      %982 = vmatprep.mubr.bf16.mxu0 %v503
      %983 = vmatmul.mubr.bf16.gmra.mrb[0].mxu0 %v502
      %v984 = vpop.f32.mrb[0].mxu0
      %v985 = vadd.f32 0.0, %v984
      %v986 = vpop.f32.mrb[0].mxu0
      %v987 = vpop.f32.mrb[0].mxu0
      %v988 = vadd.f32 0.0, %v987
      %v989 = vpop.f32.mrb[0].mxu0
      %990 = vmatprep.mubr.bf16.mxu0 %v511
      %991 = vmatmul.mubr.bf16.gmra.mrb[0].mxu0 %v510
      %v992 = vpop.f32.mrb[0].mxu0
      %v993 = vadd.f32 0.0, %v992
      %v994 = vpop.f32.mrb[0].mxu0
      %v995 = vpop.f32.mrb[0].mxu0
      %v996 = vadd.f32 0.0, %v995
      %v997 = vpop.f32.mrb[0].mxu0
      %998 = vmatprep.mubr.bf16.mxu0 %v519
      %999 = vmatmul.mubr.bf16.gmra.mrb[0].mxu0 %v518
      %v1000 = vpop.f32.mrb[0].mxu0
      %v1001 = vadd.f32 0.0, %v1000
      %v1002 = vpop.f32.mrb[0].mxu0
      %v1003 = vpop.f32.mrb[0].mxu0
      %v1004 = vadd.f32 0.0, %v1003
      %v1005 = vpop.f32.mrb[0].mxu0
      %1006 = vmatprep.mubr.bf16.mxu0 %v527
      %1007 = vmatmul.mubr.bf16.gmra.mrb[0].mxu0 %v526
      %v1008 = vpop.f32.mrb[0].mxu0
      %v1009 = vadd.f32 0.0, %v1008
      %v1010 = vpop.f32.mrb[0].mxu0
      %v1011 = vpop.f32.mrb[0].mxu0
      %v1012 = vadd.f32 0.0, %v1011
      %v1013 = vpop.f32.mrb[0].mxu0
      %1014 = vdwg.mxu0
      %1015 = vmatprep.subr.bf16.mxu0 0
      %1016 = vmatpush1.bf16.msra.mxu0 %v838
      %1017 = vmatprep.subr.bf16.mxu0 0
      %1018 = vmatpush1.bf16.msra.mxu0 %v839
      %1019 = vmatprep.subr.bf16.mxu0 0
      %1020 = vmatpush1.bf16.msra.mxu0 %v840
      %1021 = vmatprep.subr.bf16.mxu0 0
      %1022 = vmatpush1.bf16.msra.mxu0 %v841
      %1023 = vmatprep.subr.bf16.mxu0 0
      %1024 = vmatpush1.bf16.msra.mxu0 %v842
      %1025 = vmatprep.subr.bf16.mxu0 0
      %1026 = vmatpush1.bf16.msra.mxu0 %v843
      %1027 = vmatprep.subr.bf16.mxu0 0
      %1028 = vmatpush1.bf16.msra.mxu0 %v844
      %1029 = vmatprep.subr.bf16.mxu0 0
      %1030 = vmatpush1.bf16.msra.mxu0 %v845
      %1031 = vmatprep.subr.bf16.mxu0 0
      %1032 = vmatpush1.bf16.msra.mxu0 %v846
      %1033 = vmatprep.subr.bf16.mxu0 0
      %1034 = vmatpush1.bf16.msra.mxu0 %v847
      %1035 = vmatprep.subr.bf16.mxu0 0
      %1036 = vmatpush1.bf16.msra.mxu0 %v848
      %1037 = vmatprep.subr.bf16.mxu0 0
      %1038 = vmatpush1.bf16.msra.mxu0 %v849
      %1039 = vmatprep.subr.bf16.mxu0 0
      %1040 = vmatpush1.bf16.msra.mxu0 %v850
      %1041 = vmatprep.subr.bf16.mxu0 0
      %1042 = vmatpush1.bf16.msra.mxu0 %v851
      %1043 = vmatprep.subr.bf16.mxu0 0
      %1044 = vmatpush1.bf16.msra.mxu0 %v852
      %1045 = vmatprep.subr.bf16.mxu0 0
      %1046 = vmatpush1.bf16.msra.mxu0 %v853
      %1047 = vmatprep.mubr.bf16.mxu0 %v505
      %1048 = vmatmul.mubr.bf16.gmra.mrb[0].mxu0 %v504
      %v1049 = vpop.f32.mrb[0].mxu0
      %v1050 = vadd.f32 %v985, %v1049
      %v1051 = vpop.f32.mrb[0].mxu0
      %v1052 = vpop.f32.mrb[0].mxu0
      %v1053 = vadd.f32 %v988, %v1052
      %v1054 = vpop.f32.mrb[0].mxu0
      %1055 = vmatprep.mubr.bf16.mxu0 %v513
      %1056 = vmatmul.mubr.bf16.gmra.mrb[0].mxu0 %v512
      %v1057 = vpop.f32.mrb[0].mxu0
      %v1058 = vadd.f32 %v993, %v1057
      %v1059 = vpop.f32.mrb[0].mxu0
      %v1060 = vpop.f32.mrb[0].mxu0
      %v1061 = vadd.f32 %v996, %v1060
      %v1062 = vpop.f32.mrb[0].mxu0
      %1063 = vmatprep.mubr.bf16.mxu0 %v521
      %1064 = vmatmul.mubr.bf16.gmra.mrb[0].mxu0 %v520
      %v1065 = vpop.f32.mrb[0].mxu0
      %v1066 = vadd.f32 %v1001, %v1065
      %v1067 = vpop.f32.mrb[0].mxu0
      %v1068 = vpop.f32.mrb[0].mxu0
      %v1069 = vadd.f32 %v1004, %v1068
      %v1070 = vpop.f32.mrb[0].mxu0
      %1071 = vmatprep.mubr.bf16.mxu0 %v529
      %1072 = vmatmul.mubr.bf16.gmra.mrb[0].mxu0 %v528
      %v1073 = vpop.f32.mrb[0].mxu0
      %v1074 = vadd.f32 %v1009, %v1073
      %v1075 = vpop.f32.mrb[0].mxu0
      %v1076 = vpop.f32.mrb[0].mxu0
      %v1077 = vadd.f32 %v1012, %v1076
      %v1078 = vpop.f32.mrb[0].mxu0
      %1079 = vdwg.mxu0
      %1080 = vmatprep.subr.bf16.mxu0 0
      %1081 = vmatpush1.bf16.msra.mxu0 %v854
      %1082 = vmatprep.subr.bf16.mxu0 0
      %1083 = vmatpush1.bf16.msra.mxu0 %v855
      %1084 = vmatprep.subr.bf16.mxu0 0
      %1085 = vmatpush1.bf16.msra.mxu0 %v856
      %1086 = vmatprep.subr.bf16.mxu0 0
      %1087 = vmatpush1.bf16.msra.mxu0 %v857
      %1088 = vmatprep.subr.bf16.mxu0 0
      %1089 = vmatpush1.bf16.msra.mxu0 %v858
      %1090 = vmatprep.subr.bf16.mxu0 0
      %1091 = vmatpush1.bf16.msra.mxu0 %v859
      %1092 = vmatprep.subr.bf16.mxu0 0
      %1093 = vmatpush1.bf16.msra.mxu0 %v860
      %1094 = vmatprep.subr.bf16.mxu0 0
      %1095 = vmatpush1.bf16.msra.mxu0 %v861
      %1096 = vmatprep.subr.bf16.mxu0 0
      %1097 = vmatpush1.bf16.msra.mxu0 %v862
      %1098 = vmatprep.subr.bf16.mxu0 0
      %1099 = vmatpush1.bf16.msra.mxu0 %v863
      %1100 = vmatprep.subr.bf16.mxu0 0
      %1101 = vmatpush1.bf16.msra.mxu0 %v864
      %1102 = vmatprep.subr.bf16.mxu0 0
      %1103 = vmatpush1.bf16.msra.mxu0 %v865
      %1104 = vmatprep.subr.bf16.mxu0 0
      %1105 = vmatpush1.bf16.msra.mxu0 %v866
      %1106 = vmatprep.subr.bf16.mxu0 0
      %1107 = vmatpush1.bf16.msra.mxu0 %v867
      %1108 = vmatprep.subr.bf16.mxu0 0
      %1109 = vmatpush1.bf16.msra.mxu0 %v868
      %1110 = vmatprep.subr.bf16.mxu0 0
      %1111 = vmatpush1.bf16.msra.mxu0 %v869
      %1112 = vmatprep.mubr.bf16.mxu0 %v507
      %1113 = vmatmul.mubr.bf16.gmra.mrb[0].mxu0 %v506
      %v1114 = vpop.f32.mrb[0].mxu0
      %v1115 = vadd.f32 %v1050, %v1114
      %v1116 = vpop.f32.mrb[0].mxu0
      %v1117 = vpop.f32.mrb[0].mxu0
      %v1118 = vadd.f32 %v1053, %v1117
      %v1119 = vpop.f32.mrb[0].mxu0
      %1120 = vmatprep.mubr.bf16.mxu0 %v515
      %1121 = vmatmul.mubr.bf16.gmra.mrb[0].mxu0 %v514
      %v1122 = vpop.f32.mrb[0].mxu0
      %v1123 = vadd.f32 %v1058, %v1122
      %v1124 = vpop.f32.mrb[0].mxu0
      %v1125 = vpop.f32.mrb[0].mxu0
      %v1126 = vadd.f32 %v1061, %v1125
      %v1127 = vpop.f32.mrb[0].mxu0
      %1128 = vmatprep.mubr.bf16.mxu0 %v523
      %1129 = vmatmul.mubr.bf16.gmra.mrb[0].mxu0 %v522
      %v1130 = vpop.f32.mrb[0].mxu0
      %v1131 = vadd.f32 %v1066, %v1130
      %v1132 = vpop.f32.mrb[0].mxu0
      %v1133 = vpop.f32.mrb[0].mxu0
      %v1134 = vadd.f32 %v1069, %v1133
      %v1135 = vpop.f32.mrb[0].mxu0
      %1136 = vmatprep.mubr.bf16.mxu0 %v531
      %1137 = vmatmul.mubr.bf16.gmra.mrb[0].mxu0 %v530
      %v1138 = vpop.f32.mrb[0].mxu0
      %v1139 = vadd.f32 %v1074, %v1138
      %v1140 = vpop.f32.mrb[0].mxu0
      %v1141 = vpop.f32.mrb[0].mxu0
      %v1142 = vadd.f32 %v1077, %v1141
      %v1143 = vpop.f32.mrb[0].mxu0
      %1144 = vdwg.mxu0
      %1145 = vmatprep.subr.bf16.mxu0 0
      %1146 = vmatpush1.bf16.msra.mxu0 %v870
      %1147 = vmatprep.subr.bf16.mxu0 0
      %1148 = vmatpush1.bf16.msra.mxu0 %v871
      %1149 = vmatprep.subr.bf16.mxu0 0
      %1150 = vmatpush1.bf16.msra.mxu0 %v872
      %1151 = vmatprep.subr.bf16.mxu0 0
      %1152 = vmatpush1.bf16.msra.mxu0 %v873
      %1153 = vmatprep.subr.bf16.mxu0 0
      %1154 = vmatpush1.bf16.msra.mxu0 %v874
      %1155 = vmatprep.subr.bf16.mxu0 0
      %1156 = vmatpush1.bf16.msra.mxu0 %v875
      %1157 = vmatprep.subr.bf16.mxu0 0
      %1158 = vmatpush1.bf16.msra.mxu0 %v876
      %1159 = vmatprep.subr.bf16.mxu0 0
      %1160 = vmatpush1.bf16.msra.mxu0 %v877
      %1161 = vmatprep.subr.bf16.mxu0 0
      %1162 = vmatpush1.bf16.msra.mxu0 %v878
      %1163 = vmatprep.subr.bf16.mxu0 0
      %1164 = vmatpush1.bf16.msra.mxu0 %v879
      %1165 = vmatprep.subr.bf16.mxu0 0
      %1166 = vmatpush1.bf16.msra.mxu0 %v880
      %1167 = vmatprep.subr.bf16.mxu0 0
      %1168 = vmatpush1.bf16.msra.mxu0 %v881
      %1169 = vmatprep.subr.bf16.mxu0 0
      %1170 = vmatpush1.bf16.msra.mxu0 %v882
      %1171 = vmatprep.subr.bf16.mxu0 0
      %1172 = vmatpush1.bf16.msra.mxu0 %v883
      %1173 = vmatprep.subr.bf16.mxu0 0
      %1174 = vmatpush1.bf16.msra.mxu0 %v884
      %1175 = vmatprep.subr.bf16.mxu0 0
      %1176 = vmatpush1.bf16.msra.mxu0 %v885
      %1177 = vmatprep.mubr.bf16.mxu0 %v509
      %1178 = vmatmul.mubr.bf16.gmra.mrb[0].mxu0 %v508
      %v1179 = vpop.f32.mrb[0].mxu0
      %v1180 = vadd.f32 %v1115, %v1179
      %v1181 = vpop.f32.mrb[0].mxu0
      %v1182 = vpop.f32.mrb[0].mxu0
      %v1183 = vadd.f32 %v1118, %v1182
      %v1184 = vpop.f32.mrb[0].mxu0
      %1185 = vmatprep.mubr.bf16.mxu0 %v517
      %1186 = vmatmul.mubr.bf16.gmra.mrb[0].mxu0 %v516
      %v1187 = vpop.f32.mrb[0].mxu0
      %v1188 = vadd.f32 %v1123, %v1187
      %v1189 = vpop.f32.mrb[0].mxu0
      %v1190 = vpop.f32.mrb[0].mxu0
      %v1191 = vadd.f32 %v1126, %v1190
      %v1192 = vpop.f32.mrb[0].mxu0
      %1193 = vmatprep.mubr.bf16.mxu0 %v525
      %1194 = vmatmul.mubr.bf16.gmra.mrb[0].mxu0 %v524
      %v1195 = vpop.f32.mrb[0].mxu0
      %v1196 = vadd.f32 %v1131, %v1195
      %v1197 = vpop.f32.mrb[0].mxu0
      %v1198 = vpop.f32.mrb[0].mxu0
      %v1199 = vadd.f32 %v1134, %v1198
      %v1200 = vpop.f32.mrb[0].mxu0
      %1201 = vmatprep.mubr.bf16.mxu0 %v533
      %1202 = vmatmul.mubr.bf16.gmra.mrb[0].mxu0 %v532
      %v1203 = vpop.f32.mrb[0].mxu0
      %v1204 = vadd.f32 %v1139, %v1203
      %v1205 = vpop.f32.mrb[0].mxu0
      %v1206 = vpop.f32.mrb[0].mxu0
      %v1207 = vadd.f32 %v1142, %v1206
      %v1208 = vpop.f32.mrb[0].mxu0
      %1209 = vdwg.mxu0
      %v1210 = vpack.c.bf16 %v1183, %v1180
      %v1211 = vpack.c.bf16 %v1191, %v1188
      %v1212 = vpack.c.bf16 %v1199, %v1196
      %v1213 = vpack.c.bf16 %v1207, %v1204
      %v1218 = vunpack.c.l.b16 %v1210
      %v1219 = vunpack.c.h.b16 %v1210
      %v1220 = vunpack.c.l.b16 %v1211
      %v1221 = vunpack.c.h.b16 %v1211
      %v1222 = vunpack.c.l.b16 %v1212
      %v1223 = vunpack.c.h.b16 %v1212
      %v1224 = vunpack.c.l.b16 %v1213
      %v1225 = vunpack.c.h.b16 %v1213
      %v1226 = vpack.c.b16 %v1218, %v1218
      %v1227 = vpack.c.b16 %v1219, %v1219
      %v1228 = vpack.c.b16 %v1220, %v1220
      %v1229 = vpack.c.b16 %v1221, %v1221
      %v1230 = vpack.c.b16 %v1222, %v1222
      %v1231 = vpack.c.b16 %v1223, %v1223
      %v1232 = vpack.c.b16 %v1224, %v1224
      %v1233 = vpack.c.b16 %v1225, %v1225
      %1242 = vst [vmem:[%s236] sm:$0xf] %v1226
      %1243 = vst [vmem:[%s236 + $0x4] sm:$0xf] %v1227
      %1244 = vst [vmem:[%s236 + $0x8] sm:$0xf] %v1228
      %1245 = vst [vmem:[%s236 + $0xc] sm:$0xf] %v1229
      %1246 = vst [vmem:[%s236 + $0x10] sm:$0xf] %v1230
      %1247 = vst [vmem:[%s236 + $0x14] sm:$0xf] %v1231
      %1248 = vst [vmem:[%s236 + $0x18] sm:$0xf] %v1232
      %1249 = vst [vmem:[%s236 + $0x1c] sm:$0xf] %v1233
      %p1250 = scmp.eq.s32.totalorder %s21, 0
      // Predicated region
      $region29: #{discriminator_forward.9} parent=27 // pred_check
        %p1251 = pneg %p1250
      $region30: #{discriminator_forward.9} parent=27 // pred_check_branch
        %1253 = sbr.rel (%p1251) target = $region32
      $region31: #{discriminator_forward.9} parent=27 // pred_region
        %1254 = vst [vmem:[%s241] sm:$0x1] 0.0
        %1255 = vst [vmem:[%s244] sm:$0x1] 0.0
      $region32: #{discriminator_forward.9} parent=27 // pred_fallthru
        _
      %v1256 = vld [vmem:[%s241] sm:$0x1]
      %v1257 = vadd.f32 %v1180, %v1183
      %v1258 = vadd.f32 %v1257, %v1188
      %v1259 = vadd.f32 %v1258, %v1191
      %v1260 = vadd.f32 %v1259, %v1196
      %v1261 = vadd.f32 %v1260, %v1199
      %v1262 = vadd.f32 %v1261, %v1204
      %v1263 = vadd.f32 %v1262, %v1207
      %v1264 = vrot.slane %v1263, 4
      %v1265 = vadd.f32 %v1263, %v1264
      %v1266 = vrot.slane %v1265, 2
      %v1267 = vadd.f32 %v1265, %v1266
      %v1268 = vrot.slane %v1267, 1
      %v1269 = vadd.f32 %v1267, %v1268
      %v1270 = vadd.f32 %v1256, %v1269
      %1271 = vst [vmem:[%s241] sm:$0x1] %v1270
      %v1272 = vld [vmem:[%s244] sm:$0x1]
      %v1273 = vmul.f32 %v1180, %v1180
      %v1274 = vmul.f32 %v1183, %v1183
      %v1275 = vmul.f32 %v1188, %v1188
      %v1276 = vmul.f32 %v1191, %v1191
      %v1277 = vmul.f32 %v1196, %v1196
      %v1278 = vmul.f32 %v1199, %v1199
      %v1279 = vmul.f32 %v1204, %v1204
      %v1280 = vmul.f32 %v1207, %v1207
      %v1281 = vadd.f32 %v1273, %v1274
      %v1282 = vadd.f32 %v1281, %v1275
      %v1283 = vadd.f32 %v1282, %v1276
      %v1284 = vadd.f32 %v1283, %v1277
      %v1285 = vadd.f32 %v1284, %v1278
      %v1286 = vadd.f32 %v1285, %v1279
      %v1287 = vadd.f32 %v1286, %v1280
      %v1288 = vrot.slane %v1287, 4
      %v1289 = vadd.f32 %v1287, %v1288
      %v1290 = vrot.slane %v1289, 2
      %v1291 = vadd.f32 %v1289, %v1290
      %v1292 = vrot.slane %v1291, 1
      %v1293 = vadd.f32 %v1291, %v1292
      %v1294 = vadd.f32 %v1272, %v1293
      %1295 = vst [vmem:[%s244] sm:$0x1] %v1294
      %s1296 = sadd.s32 %s20, %s21
      %s1297 = smul.u32 8, %s1296
      %p1298 = scmp.lt.s32.totalorder %s1297, 15
      %s1299 = scalar_select %p1298, %s1297, 15
      %s1300 = smul.addr %s1299, 4
      %s1301 = scalar_lea.vmem %s2, %s1300
      %p1302 = scmp.lt.s32.totalorder %s20, 1
      %s1303 = scalar_select %p1302, %s20, 1
      %s1304 = scalar_lea.vmem %s3, %s1303
      %p1305 = scmp.lt.s32.totalorder %s20, 1
      %s1306 = scalar_select %p1305, %s20, 1
      %s1307 = scalar_lea.vmem %s4, %s1306
      // Predicated region
      $region33: #{discriminator_forward.9} parent=27 // pred_check
        %p1308 = pneg %p97
      $region34: #{discriminator_forward.9} parent=27 // pred_check_branch
        %1310 = sbr.rel (%p1308) target = $region36
      $region35: #{discriminator_forward.9} parent=27 // pred_region
        %s1311 = sadd.s32 %s20, %s21
        %s1312 = smul.u32 8, %s1311
      $region36: #{discriminator_forward.9} parent=27 // pred_fallthru
        _
      // Predicated region
      $region37: #{discriminator_forward.9} parent=27 // pred_check
        %p1313 = pneg %p123
      $region38: #{discriminator_forward.9} parent=27 // pred_check_branch
        %1315 = sbr.rel (%p1313) target = $region40
      $region39: #{discriminator_forward.9} parent=27 // pred_region
        _
      $region40: #{discriminator_forward.9} parent=27 // pred_fallthru
        _
      // Predicated region
      $region41: #{discriminator_forward.9} parent=27 // pred_check
        %p1316 = pneg %p149
      $region42: #{discriminator_forward.9} parent=27 // pred_check_branch
        %1318 = sbr.rel (%p1316) target = $region44
      $region43: #{discriminator_forward.9} parent=27 // pred_region
        _
      $region44: #{discriminator_forward.9} parent=27 // pred_fallthru
        _
    $region28: #{discriminator_forward.9} parent=5 // pred_fallthru
      _
    %p1319 = scmp.le.s32.totalorder 2, %s11
    // Predicated region
    $region45: #{discriminator_forward.9} parent=5 // pred_check
      %p1320 = pneg %p1319
    $region46: #{discriminator_forward.9} parent=5 // pred_check_branch
      %1322 = sbr.rel (%p1320) target = $region48
    $region47: #{discriminator_forward.9} parent=5 // pred_region
      %s1323 = ssub.s32 %s11, 2
      // Predicated region
      $region49: #{discriminator_forward.9} parent=47 // pred_check
        %p1324 = pneg %p103
      $region50: #{discriminator_forward.9} parent=47 // pred_check_branch
        %1326 = sbr.rel (%p1324) target = $region52
      $region51: #{discriminator_forward.9} parent=47 // pred_region
        %s1327 = sadd.s32 %s22, %s23
        %s1328 = smul.u32 8, %s1327
        %p1329 = scmp.lt.s32.totalorder %s1328, 15
        %s1330 = scalar_select %p1329, %s1328, 15
        %s1331 = smul.addr %s1330, 4
        %s1332 = scalar_lea.vmem %s2, %s1331
      $region52: #{discriminator_forward.9} parent=47 // pred_fallthru
        _
      // Predicated region
      $region53: #{discriminator_forward.9} parent=47 // pred_check
        %p1333 = pneg %p129
      $region54: #{discriminator_forward.9} parent=47 // pred_check_branch
        %1335 = sbr.rel (%p1333) target = $region56
      $region55: #{discriminator_forward.9} parent=47 // pred_region
        %p1336 = scmp.lt.s32.totalorder %s22, 1
        %s1337 = scalar_select %p1336, %s22, 1
        %s1338 = scalar_lea.vmem %s3, %s1337
      $region56: #{discriminator_forward.9} parent=47 // pred_fallthru
        _
      // Predicated region
      $region57: #{discriminator_forward.9} parent=47 // pred_check
        %p1339 = pneg %p155
      $region58: #{discriminator_forward.9} parent=47 // pred_check_branch
        %1341 = sbr.rel (%p1339) target = $region60
      $region59: #{discriminator_forward.9} parent=47 // pred_region
        %p1342 = scmp.lt.s32.totalorder %s22, 1
        %s1343 = scalar_select %p1342, %s22, 1
        %s1344 = scalar_lea.vmem %s4, %s1343
      $region60: #{discriminator_forward.9} parent=47 // pred_fallthru
        _
    $region48: #{discriminator_forward.9} parent=5 // pred_fallthru
      _
  $region6: #{discriminator_forward.9} parent=0 // loop_footer
    %s15 = sadd.s32 1, %s11
  $region7: #{discriminator_forward.9} parent=0 // loop_footer_branch
    %10 = sbr.rel target = $region3
  $region8: #{discriminator_forward.9} parent=0 // loop_exit
    _

// kernel: discriminator_forward.12
$region0: #{discriminator_forward.12}
  #allocation0 [shape = 'u32[]', space=smem, size = 0x4, offset = 0x4, fixed_abs, tag = 'smem constant byte address 0x4 - core index']
  #allocation1 [shape = 'u32[144,128]{1,0:T(1,128)}', space=vmem, size = 0x12000, scoped, tag = 'internal scratch']
  %s0 = inlined_call_operand.vmem [shape: bf16[32,256], index: 0, kind: input, shape index: {}]
  %s1 = inlined_call_operand.vmem [shape: f32[1,256], index: 1, kind: input, shape index: {}]
  %s2 = inlined_call_operand.vmem [shape: f32[1,256], index: 2, kind: input, shape index: {}]
  %s3 = inlined_call_operand.vmem [shape: bf16[32,256], index: 3, kind: output, shape index: {}]
  %s4 = sld [smem:[#allocation0]]
  $region45: #{discriminator_forward.12} parent=0
    _
  %s6 = ssub.s32 1, %s4
  %s7 = scalar_select 0, %s6, %s4
  loop: start=0, step=1, limit=4
  $region2: #{discriminator_forward.12} parent=0 // loop_pre_header
    _
  $region3: #{discriminator_forward.12} parent=0 // loop_header
    %s9 = sphi 0, %s13
    %p10 = scmp.ge.s32.totalorder %s9, 4
    %s19 = sphi 0, %s21
    %s22 = sphi 0, %s19
    %s23 = sphi 0, %s22
    %s39 = sphi 0, %s23
    %s43 = sphi 0, %s43
    %s45 = sphi 0, %s43
    %s46 = sphi 0, %s45
    %s60 = sphi 0, %s46
    %s64 = sphi 0, %s64
    %s66 = sphi 0, %s64
    %s67 = sphi 0, %s66
    %s81 = sphi 0, %s67
    %s87 = sphi 0, %s89
    %s90 = sphi 0, %s87
    %s91 = sphi 0, %s90
    %s107 = sphi 0, %s91
  $region4: #{discriminator_forward.12} parent=0 // loop_header_branch
    %12 = sbr.rel (%p10) target = $region8
  $region5: #{discriminator_forward.12} parent=0 // loop_body
    %s14 = ssub.s32 %s9, 1
    %s15 = ssub.s32 %s9, 2
    %s16 = sadd.s32 %s9, 1
    %s17 = ssub.s32 %s9, %s16
    %p18 = scmp.eq.s32.totalorder %s17, 0
    %s20 = sadd.s32 %s19, 1
    %s21 = scalar_select %p18, %s19, %s20
    %p24 = pneg %p18
    %p25 = scmp.eq.s32.totalorder %s9, 1
    %p26 = por %p24, %p25
    %p27 = scmp.ne.s32.totalorder %s19, %s22
    %p28 = scmp.eq.s32.totalorder %s9, 0
    %p29 = por %p27, %p28
    %p30 = scmp.ne.s32.totalorder %s19, %s22
    %p31 = scmp.eq.s32.totalorder %s14, 1
    %p32 = por %p30, %p31
    %p33 = scmp.ne.s32.totalorder %s22, %s23
    %p34 = scmp.eq.s32.totalorder %s14, 0
    %p35 = por %p33, %p34
    %p36 = scmp.ne.s32.totalorder %s22, %s23
    %p37 = scmp.eq.s32.totalorder %s15, 1
    %p38 = por %p36, %p37
    %p40 = scmp.ne.s32.totalorder %s23, %s39
    %p41 = scmp.eq.s32.totalorder %s15, 0
    %p42 = por %p40, %p41
    %s44 = sadd.s32 %s43, 1
    %p47 = scmp.eq.s32.totalorder %s9, 1
    %p48 = scmp.ne.s32.totalorder %s43, %s45
    %p49 = scmp.eq.s32.totalorder %s9, 0
    %p50 = por %p48, %p49
    %p51 = scmp.ne.s32.totalorder %s43, %s45
    %p52 = scmp.eq.s32.totalorder %s14, 1
    %p53 = por %p51, %p52
    %p54 = scmp.ne.s32.totalorder %s45, %s46
    %p55 = scmp.eq.s32.totalorder %s14, 0
    %p56 = por %p54, %p55
    %p57 = scmp.ne.s32.totalorder %s45, %s46
    %p58 = scmp.eq.s32.totalorder %s15, 1
    %p59 = por %p57, %p58
    %p61 = scmp.ne.s32.totalorder %s46, %s60
    %p62 = scmp.eq.s32.totalorder %s15, 0
    %p63 = por %p61, %p62
    %s65 = sadd.s32 %s64, 1
    %p68 = scmp.eq.s32.totalorder %s9, 1
    %p69 = scmp.ne.s32.totalorder %s64, %s66
    %p70 = scmp.eq.s32.totalorder %s9, 0
    %p71 = por %p69, %p70
    %p72 = scmp.ne.s32.totalorder %s64, %s66
    %p73 = scmp.eq.s32.totalorder %s14, 1
    %p74 = por %p72, %p73
    %p75 = scmp.ne.s32.totalorder %s66, %s67
    %p76 = scmp.eq.s32.totalorder %s14, 0
    %p77 = por %p75, %p76
    %p78 = scmp.ne.s32.totalorder %s66, %s67
    %p79 = scmp.eq.s32.totalorder %s15, 1
    %p80 = por %p78, %p79
    %p82 = scmp.ne.s32.totalorder %s67, %s81
    %p83 = scmp.eq.s32.totalorder %s15, 0
    %p84 = por %p82, %p83
    %s85 = ssub.s32 %s9, %s16
    %p86 = scmp.eq.s32.totalorder %s85, 0
    %s88 = sadd.s32 %s87, 1
    %s89 = scalar_select %p86, %s87, %s88
    %p92 = pneg %p86
    %p93 = scmp.eq.s32.totalorder %s9, 1
    %p94 = por %p92, %p93
    %p95 = scmp.ne.s32.totalorder %s87, %s90
    %p96 = scmp.eq.s32.totalorder %s9, 0
    %p97 = por %p95, %p96
    %p98 = scmp.ne.s32.totalorder %s87, %s90
    %p99 = scmp.eq.s32.totalorder %s14, 1
    %p100 = por %p98, %p99
    %p101 = scmp.ne.s32.totalorder %s90, %s91
    %p102 = scmp.eq.s32.totalorder %s14, 0
    %p103 = por %p101, %p102
    %p104 = scmp.ne.s32.totalorder %s90, %s91
    %p105 = scmp.eq.s32.totalorder %s15, 1
    %p106 = por %p104, %p105
    %p108 = scmp.ne.s32.totalorder %s91, %s107
    %p109 = scmp.eq.s32.totalorder %s15, 0
    %p110 = por %p108, %p109
    %p111 = scmp.le.s32.totalorder 1, %s9
    %p112 = scmp.lt.s32.totalorder %s9, 3
    %p113 = pnand %p111, %p112
    %p114 = pneg %p113
    // Predicated region
    $region9: #{discriminator_forward.12} parent=5 // pred_check
      _
    $region10: #{discriminator_forward.12} parent=5 // pred_check_branch
      %116 = sbr.rel (%p113) target = $region12
    $region11: #{discriminator_forward.12} parent=5 // pred_region
      %s117 = ssub.s32 %s9, 1
      // Predicated region
      $region13: #{discriminator_forward.12} parent=11 // pred_check
        %p118 = pneg %p56
      $region14: #{discriminator_forward.12} parent=11 // pred_check_branch
        %120 = sbr.rel (%p118) target = $region16
      $region15: #{discriminator_forward.12} parent=11 // pred_region
        _
      $region16: #{discriminator_forward.12} parent=11 // pred_fallthru
        _
      // Predicated region
      $region17: #{discriminator_forward.12} parent=11 // pred_check
        %p121 = pneg %p77
      $region18: #{discriminator_forward.12} parent=11 // pred_check_branch
        %123 = sbr.rel (%p121) target = $region20
      $region19: #{discriminator_forward.12} parent=11 // pred_region
        _
      $region20: #{discriminator_forward.12} parent=11 // pred_fallthru
        _
    $region12: #{discriminator_forward.12} parent=5 // pred_fallthru
      _
    %p124 = scmp.lt.s32.totalorder %s9, 2
    // Predicated region
    $region21: #{discriminator_forward.12} parent=5 // pred_check
      %p125 = pneg %p124
    $region22: #{discriminator_forward.12} parent=5 // pred_check_branch
      %127 = sbr.rel (%p125) target = $region24
    $region23: #{discriminator_forward.12} parent=5 // pred_region
      // Predicated region
      $region25: #{discriminator_forward.12} parent=23 // pred_check
        %p128 = pneg %p29
      $region26: #{discriminator_forward.12} parent=23 // pred_check_branch
        %130 = sbr.rel (%p128) target = $region28
      $region27: #{discriminator_forward.12} parent=23 // pred_region
        %s131 = smul.u32 2, %s9
        %p132 = scmp.lt.s32.totalorder %s131, 3
        %s133 = scalar_select %p132, %s131, 3
        %s134 = smul.addr %s133, 2
        %s135 = smul.addr %s134, 4
        %s136 = scalar_lea.vmem %s0, %s135
        %s137 = smul.u32 2, %s9
      $region28: #{discriminator_forward.12} parent=23 // pred_fallthru
        _
    $region24: #{discriminator_forward.12} parent=5 // pred_fallthru
      _
    %p138 = scmp.le.s32.totalorder 1, %s9
    %p139 = scmp.lt.s32.totalorder %s9, 3
    %p140 = pnand %p138, %p139
    %p141 = pneg %p140
    // Predicated region
    $region29: #{discriminator_forward.12} parent=5 // pred_check
      _
    $region30: #{discriminator_forward.12} parent=5 // pred_check_branch
      %143 = sbr.rel (%p140) target = $region32
    $region31: #{discriminator_forward.12} parent=5 // pred_region
      %s144 = ssub.s32 %s9, 1
      %s145 = smul.u32 2, %s14
      %p146 = scmp.lt.s32.totalorder %s145, 3
      %s147 = scalar_select %p146, %s145, 3
      %s148 = smul.addr %s147, 2
      %s149 = smul.addr %s148, 4
      %s150 = scalar_lea.vmem %s0, %s149
      %p151 = pneg %p35
      %p152 = pneg %p32
      %p153 = pneg %p56
      %p154 = pneg %p53
      %p155 = pneg %p77
      %p156 = pneg %p74
      %p157 = pneg %p103
      %p158 = pneg %p100
      %s159 = smul.u32 2, %s14
      %p160 = scmp.lt.s32.totalorder %s159, 3
      %s161 = scalar_select %p160, %s159, 3
      %s162 = smul.addr %s161, 2
      %s163 = smul.addr %s162, 4
      %s164 = scalar_lea.vmem %s3, %s163
      %s165 = smul.u32 2, %s14
      %p166 = scmp.lt.s32.totalorder %s165, 3
      %s167 = scalar_select %p166, %s165, 3
      %s168 = smul.addr %s167, 2
      %s169 = smul.addr %s168, 4
      %s170 = scalar_lea.vmem %s0, %s169
      %s171 = smul.u32 2, %s14
      %s172 = smul.u32 2, %s14
      %p173 = scmp.lt.s32.totalorder %s172, 3
      %s174 = scalar_select %p173, %s172, 3
      %s175 = smul.addr %s174, 2
      %s176 = smul.addr %s175, 4
      %s177 = scalar_lea.vmem %s3, %s176
      %s178 = smul.u32 2, %s14
      %v179 = vld [vmem:[%s170] sm:$0xff]
      %v180 = vld [vmem:[%s170 + $0x8] sm:$0xff]
      %v181 = vunpack.c.l.bf16 %v179
      %v182 = vunpack.c.h.bf16 %v179
      %v183 = vunpack.c.l.bf16 %v180
      %v184 = vunpack.c.h.bf16 %v180
      %v185 = vld [vmem:[%s1] sm:$0x3]
      %v187 = vlaneseq
      %v188 = vshrl.u32 %v187, 7
      %v189 = vsub.s32 0, %v188
      %v190 = vrot.slane %v185, %v189
      %v191 = vlaneseq
      %v192 = vshrl.u32 %v191, 7
      %v193 = vsub.s32 1, %v192
      %v194 = vrot.slane %v185, %v193
      %v197 = vmul.f32 %v181, %v190
      %v198 = vmul.f32 %v182, %v194
      %v199 = vmul.f32 %v183, %v190
      %v200 = vmul.f32 %v184, %v194
      %v201 = vld [vmem:[%s2] sm:$0x3]
      %v203 = vlaneseq
      %v204 = vshrl.u32 %v203, 7
      %v205 = vsub.s32 0, %v204
      %v206 = vrot.slane %v201, %v205
      %v207 = vlaneseq
      %v208 = vshrl.u32 %v207, 7
      %v209 = vsub.s32 1, %v208
      %v210 = vrot.slane %v201, %v209
      %v213 = vadd.f32 %v197, %v206
      %v214 = vadd.f32 %v198, %v210
      %v215 = vadd.f32 %v199, %v206
      %v216 = vadd.f32 %v200, %v210
      %vm217 = vcmp.ge.f32.partialorder %v213, 0.0
      %vm218 = vcmp.ge.f32.partialorder %v214, 0.0
      %vm219 = vcmp.ge.f32.partialorder %v215, 0.0
      %vm220 = vcmp.ge.f32.partialorder %v216, 0.0
      %v221 = vmul.f32 %v213, 0.01
      %v222 = vmul.f32 %v214, 0.01
      %v223 = vmul.f32 %v215, 0.01
      %v224 = vmul.f32 %v216, 0.01
      %v225 = vsel %vm217, %v213, %v221
      %v226 = vsel %vm218, %v214, %v222
      %v227 = vsel %vm219, %v215, %v223
      %v228 = vsel %vm220, %v216, %v224
      %v229 = vpack.c.bf16 %v227, %v225
      %v230 = vpack.c.bf16 %v228, %v226
      %v233 = vunpack.c.l.b16 %v229
      %v234 = vunpack.c.l.b16 %v230
      %v235 = vunpack.c.h.b16 %v229
      %v236 = vunpack.c.h.b16 %v230
      %v237 = vpack.c.b16 %v234, %v233
      %v238 = vpack.c.b16 %v236, %v235
      %241 = vst [vmem:[%s177] sm:$0xff] %v237
      %242 = vst [vmem:[%s177 + $0x8] sm:$0xff] %v238
      %s243 = smul.u32 2, %s14
      %p244 = scmp.lt.s32.totalorder %s243, 3
      %s245 = scalar_select %p244, %s243, 3
      %s246 = smul.addr %s245, 2
      %s247 = smul.addr %s246, 4
      %s248 = scalar_lea.vmem %s3, %s247
      // Predicated region
      $region33: #{discriminator_forward.12} parent=31 // pred_check
        %p249 = pneg %p100
      $region34: #{discriminator_forward.12} parent=31 // pred_check_branch
        %251 = sbr.rel (%p249) target = $region36
      $region35: #{discriminator_forward.12} parent=31 // pred_region
        %s252 = smul.u32 2, %s14
      $region36: #{discriminator_forward.12} parent=31 // pred_fallthru
        _
    $region32: #{discriminator_forward.12} parent=5 // pred_fallthru
      _
    %p253 = scmp.le.s32.totalorder 2, %s9
    // Predicated region
    $region37: #{discriminator_forward.12} parent=5 // pred_check
      %p254 = pneg %p253
    $region38: #{discriminator_forward.12} parent=5 // pred_check_branch
      %256 = sbr.rel (%p254) target = $region40
    $region39: #{discriminator_forward.12} parent=5 // pred_region
      %s257 = ssub.s32 %s9, 2
      // Predicated region
      $region41: #{discriminator_forward.12} parent=39 // pred_check
        %p258 = pneg %p106
      $region42: #{discriminator_forward.12} parent=39 // pred_check_branch
        %260 = sbr.rel (%p258) target = $region44
      $region43: #{discriminator_forward.12} parent=39 // pred_region
        %s261 = smul.u32 2, %s15
        %p262 = scmp.lt.s32.totalorder %s261, 3
        %s263 = scalar_select %p262, %s261, 3
        %s264 = smul.addr %s263, 2
        %s265 = smul.addr %s264, 4
        %s266 = scalar_lea.vmem %s3, %s265
      $region44: #{discriminator_forward.12} parent=39 // pred_fallthru
        _
    $region40: #{discriminator_forward.12} parent=5 // pred_fallthru
      _
  $region6: #{discriminator_forward.12} parent=0 // loop_footer
    %s13 = sadd.s32 1, %s9
  $region7: #{discriminator_forward.12} parent=0 // loop_footer_branch
    %8 = sbr.rel target = $region3
  $region8: #{discriminator_forward.12} parent=0 // loop_exit
    _

// kernel: discriminator_forward.11
$region0: #{discriminator_forward.11}
  #allocation0 [shape = 'u32[]', space=smem, size = 0x4, offset = 0x4, fixed_abs, tag = 'smem constant byte address 0x4 - core index']
  #allocation1 [shape = 'u32[144,128]{1,0:T(1,128)}', space=vmem, size = 0x12000, scoped, tag = 'internal scratch']
  %s0 = inlined_call_operand.vmem [shape: bf16[32,2048], index: 0, kind: input, shape index: {}]
  %s1 = inlined_call_operand.vmem [shape: bf16[2048,256], index: 1, kind: input, shape index: {}]
  %s2 = inlined_call_operand.vmem [shape: bf16[32,256], index: 2, kind: output, shape index: {0}]
  %s3 = inlined_call_operand.vmem [shape: f32[2,1,256], index: 3, kind: output, shape index: {1}]
  %s4 = inlined_call_operand.vmem [shape: f32[2,1,256], index: 4, kind: output, shape index: {2}]
  %5 = xla_tuple %s2, %s3, %s4
  %s6 = sld [smem:[#allocation0]]
  $region61: #{discriminator_forward.11} parent=0
    _
  %s8 = ssub.s32 1, %s6
  %s9 = scalar_select 0, %s8, %s6
  loop: start=0, step=1, limit=4
  $region2: #{discriminator_forward.11} parent=0 // loop_pre_header
    _
  $region3: #{discriminator_forward.11} parent=0 // loop_header
    %s11 = sphi 0, %s15
    %p12 = scmp.ge.s32.totalorder %s11, 4
    %s18 = sphi 0, %s30
    %s19 = sphi 0, %s26
    %s20 = sphi 0, %s18
    %s21 = sphi 0, %s19
    %s22 = sphi 0, %s20
    %s23 = sphi 0, %s21
    %s35 = sphi 0, %s37
    %s38 = sphi 0, %s35
    %s39 = sphi 0, %s38
    %s55 = sphi 0, %s39
    %s59 = sphi 0, %s59
    %s61 = sphi 0, %s59
    %s62 = sphi 0, %s61
    %s76 = sphi 0, %s62
    %s84 = sphi 0, %s86
    %s87 = sphi 0, %s84
    %s88 = sphi 0, %s87
    %s104 = sphi 0, %s88
    %s110 = sphi 0, %s112
    %s113 = sphi 0, %s110
    %s114 = sphi 0, %s113
    %s130 = sphi 0, %s114
    %s136 = sphi 0, %s138
    %s139 = sphi 0, %s136
    %s140 = sphi 0, %s139
    %s156 = sphi 0, %s140
  $region4: #{discriminator_forward.11} parent=0 // loop_header_branch
    %14 = sbr.rel (%p12) target = $region8
  $region5: #{discriminator_forward.11} parent=0 // loop_body
    %s16 = ssub.s32 %s11, 1
    %s17 = ssub.s32 %s11, 2
    %s24 = sadd.s32 1, %s19
    %p25 = scmp.ge.s32.totalorder %s24, 1
    %s26 = scalar_select %p25, 0, %s24
    %s27 = sadd.s32 1, %s18
    %s28 = scalar_select %p25, %s27, %s18
    %p29 = scmp.ge.s32.totalorder %s28, 2
    %s30 = scalar_select %p29, 0, %s28
    %s31 = sadd.s32 %s18, %s19
    %s32 = sadd.s32 %s30, %s26
    %s33 = ssub.s32 %s31, %s32
    %p34 = scmp.eq.s32.totalorder %s33, 0
    %s36 = sadd.s32 %s35, 1
    %s37 = scalar_select %p34, %s35, %s36
    %p40 = pneg %p34
    %p41 = scmp.eq.s32.totalorder %s11, 1
    %p42 = por %p40, %p41
    %p43 = scmp.ne.s32.totalorder %s35, %s38
    %p44 = scmp.eq.s32.totalorder %s11, 0
    %p45 = por %p43, %p44
    %p46 = scmp.ne.s32.totalorder %s35, %s38
    %p47 = scmp.eq.s32.totalorder %s16, 1
    %p48 = por %p46, %p47
    %p49 = scmp.ne.s32.totalorder %s38, %s39
    %p50 = scmp.eq.s32.totalorder %s16, 0
    %p51 = por %p49, %p50
    %p52 = scmp.ne.s32.totalorder %s38, %s39
    %p53 = scmp.eq.s32.totalorder %s17, 1
    %p54 = por %p52, %p53
    %p56 = scmp.ne.s32.totalorder %s39, %s55
    %p57 = scmp.eq.s32.totalorder %s17, 0
    %p58 = por %p56, %p57
    %s60 = sadd.s32 %s59, 1
    %p63 = scmp.eq.s32.totalorder %s11, 1
    %p64 = scmp.ne.s32.totalorder %s59, %s61
    %p65 = scmp.eq.s32.totalorder %s11, 0
    %p66 = por %p64, %p65
    %p67 = scmp.ne.s32.totalorder %s59, %s61
    %p68 = scmp.eq.s32.totalorder %s16, 1
    %p69 = por %p67, %p68
    %p70 = scmp.ne.s32.totalorder %s61, %s62
    %p71 = scmp.eq.s32.totalorder %s16, 0
    %p72 = por %p70, %p71
    %p73 = scmp.ne.s32.totalorder %s61, %s62
    %p74 = scmp.eq.s32.totalorder %s17, 1
    %p75 = por %p73, %p74
    %p77 = scmp.ne.s32.totalorder %s62, %s76
    %p78 = scmp.eq.s32.totalorder %s17, 0
    %p79 = por %p77, %p78
    %s80 = sadd.s32 %s18, %s19
    %s81 = sadd.s32 %s30, %s26
    %s82 = ssub.s32 %s80, %s81
    %p83 = scmp.eq.s32.totalorder %s82, 0
    %s85 = sadd.s32 %s84, 1
    %s86 = scalar_select %p83, %s84, %s85
    %p89 = pneg %p83
    %p90 = scmp.eq.s32.totalorder %s11, 1
    %p91 = por %p89, %p90
    %p92 = scmp.ne.s32.totalorder %s84, %s87
    %p93 = scmp.eq.s32.totalorder %s11, 0
    %p94 = por %p92, %p93
    %p95 = scmp.ne.s32.totalorder %s84, %s87
    %p96 = scmp.eq.s32.totalorder %s16, 1
    %p97 = por %p95, %p96
    %p98 = scmp.ne.s32.totalorder %s87, %s88
    %p99 = scmp.eq.s32.totalorder %s16, 0
    %p100 = por %p98, %p99
    %p101 = scmp.ne.s32.totalorder %s87, %s88
    %p102 = scmp.eq.s32.totalorder %s17, 1
    %p103 = por %p101, %p102
    %p105 = scmp.ne.s32.totalorder %s88, %s104
    %p106 = scmp.eq.s32.totalorder %s17, 0
    %p107 = por %p105, %p106
    %s108 = ssub.s32 %s18, %s30
    %p109 = scmp.eq.s32.totalorder %s108, 0
    %s111 = sadd.s32 %s110, 1
    %s112 = scalar_select %p109, %s110, %s111
    %p115 = pneg %p109
    %p116 = scmp.eq.s32.totalorder %s11, 1
    %p117 = por %p115, %p116
    %p118 = scmp.ne.s32.totalorder %s110, %s113
    %p119 = scmp.eq.s32.totalorder %s11, 0
    %p120 = por %p118, %p119
    %p121 = scmp.ne.s32.totalorder %s110, %s113
    %p122 = scmp.eq.s32.totalorder %s16, 1
    %p123 = por %p121, %p122
    %p124 = scmp.ne.s32.totalorder %s113, %s114
    %p125 = scmp.eq.s32.totalorder %s16, 0
    %p126 = por %p124, %p125
    %p127 = scmp.ne.s32.totalorder %s113, %s114
    %p128 = scmp.eq.s32.totalorder %s17, 1
    %p129 = por %p127, %p128
    %p131 = scmp.ne.s32.totalorder %s114, %s130
    %p132 = scmp.eq.s32.totalorder %s17, 0
    %p133 = por %p131, %p132
    %s134 = ssub.s32 %s18, %s30
    %p135 = scmp.eq.s32.totalorder %s134, 0
    %s137 = sadd.s32 %s136, 1
    %s138 = scalar_select %p135, %s136, %s137
    %p141 = pneg %p135
    %p142 = scmp.eq.s32.totalorder %s11, 1
    %p143 = por %p141, %p142
    %p144 = scmp.ne.s32.totalorder %s136, %s139
    %p145 = scmp.eq.s32.totalorder %s11, 0
    %p146 = por %p144, %p145
    %p147 = scmp.ne.s32.totalorder %s136, %s139
    %p148 = scmp.eq.s32.totalorder %s16, 1
    %p149 = por %p147, %p148
    %p150 = scmp.ne.s32.totalorder %s139, %s140
    %p151 = scmp.eq.s32.totalorder %s16, 0
    %p152 = por %p150, %p151
    %p153 = scmp.ne.s32.totalorder %s139, %s140
    %p154 = scmp.eq.s32.totalorder %s17, 1
    %p155 = por %p153, %p154
    %p157 = scmp.ne.s32.totalorder %s140, %s156
    %p158 = scmp.eq.s32.totalorder %s17, 0
    %p159 = por %p157, %p158
    %p160 = scmp.le.s32.totalorder 1, %s11
    %p161 = scmp.lt.s32.totalorder %s11, 3
    %p162 = pnand %p160, %p161
    %p163 = pneg %p162
    // Predicated region
    $region9: #{discriminator_forward.11} parent=5 // pred_check
      _
    $region10: #{discriminator_forward.11} parent=5 // pred_check_branch
      %165 = sbr.rel (%p162) target = $region12
    $region11: #{discriminator_forward.11} parent=5 // pred_region
      %s166 = ssub.s32 %s11, 1
      // Predicated region
      $region13: #{discriminator_forward.11} parent=11 // pred_check
        %p167 = pneg %p72
      $region14: #{discriminator_forward.11} parent=11 // pred_check_branch
        %169 = sbr.rel (%p167) target = $region16
      $region15: #{discriminator_forward.11} parent=11 // pred_region
        _
      $region16: #{discriminator_forward.11} parent=11 // pred_fallthru
        _
    $region12: #{discriminator_forward.11} parent=5 // pred_fallthru
      _
    %p170 = scmp.lt.s32.totalorder %s11, 2
    // Predicated region
    $region17: #{discriminator_forward.11} parent=5 // pred_check
      %p171 = pneg %p170
    $region18: #{discriminator_forward.11} parent=5 // pred_check_branch
      %173 = sbr.rel (%p171) target = $region20
    $region19: #{discriminator_forward.11} parent=5 // pred_region
      // Predicated region
      $region21: #{discriminator_forward.11} parent=19 // pred_check
        %p174 = pneg %p45
      $region22: #{discriminator_forward.11} parent=19 // pred_check_branch
        %176 = sbr.rel (%p174) target = $region24
      $region23: #{discriminator_forward.11} parent=19 // pred_region
        %s177 = sadd.s32 %s18, %s19
        %s178 = smul.u32 2, %s177
        %p179 = scmp.lt.s32.totalorder %s178, 3
        %s180 = scalar_select %p179, %s178, 3
        %s181 = smul.addr %s180, 16
        %s182 = smul.addr %s181, 4
        %s183 = scalar_lea.vmem %s0, %s182
        %s184 = sadd.s32 %s18, %s19
        %s185 = smul.u32 2, %s184
      $region24: #{discriminator_forward.11} parent=19 // pred_fallthru
        _
    $region20: #{discriminator_forward.11} parent=5 // pred_fallthru
      _
    %p186 = scmp.le.s32.totalorder 1, %s11
    %p187 = scmp.lt.s32.totalorder %s11, 3
    %p188 = pnand %p186, %p187
    %p189 = pneg %p188
    // Predicated region
    $region25: #{discriminator_forward.11} parent=5 // pred_check
      _
    $region26: #{discriminator_forward.11} parent=5 // pred_check_branch
      %191 = sbr.rel (%p188) target = $region28
    $region27: #{discriminator_forward.11} parent=5 // pred_region
      %s192 = ssub.s32 %s11, 1
      %s193 = sadd.s32 %s20, %s21
      %s194 = smul.u32 2, %s193
      %p195 = scmp.lt.s32.totalorder %s194, 3
      %s196 = scalar_select %p195, %s194, 3
      %s197 = smul.addr %s196, 16
      %s198 = smul.addr %s197, 4
      %s199 = scalar_lea.vmem %s0, %s198
      %p200 = pneg %p51
      %p201 = pneg %p48
      %p202 = pneg %p72
      %p203 = pneg %p69
      %p204 = pneg %p100
      %p205 = pneg %p97
      %s206 = sadd.s32 %s20, %s21
      %s207 = smul.u32 2, %s206
      %p208 = scmp.lt.s32.totalorder %s207, 3
      %s209 = scalar_select %p208, %s207, 3
      %s210 = smul.addr %s209, 2
      %s211 = smul.addr %s210, 4
      %s212 = scalar_lea.vmem %s2, %s211
      %p213 = pneg %p126
      %p214 = pneg %p123
      %p215 = scmp.lt.s32.totalorder %s20, 1
      %s216 = scalar_select %p215, %s20, 1
      %s217 = smul.addr %s216, 2
      %s218 = scalar_lea.vmem %s3, %s217
      %p219 = pneg %p152
      %p220 = pneg %p149
      %p221 = scmp.lt.s32.totalorder %s20, 1
      %s222 = scalar_select %p221, %s20, 1
      %s223 = smul.addr %s222, 2
      %s224 = scalar_lea.vmem %s4, %s223
      %s225 = sadd.s32 %s20, %s21
      %s226 = smul.u32 2, %s225
      %p227 = scmp.lt.s32.totalorder %s226, 3
      %s228 = scalar_select %p227, %s226, 3
      %s229 = smul.addr %s228, 16
      %s230 = smul.addr %s229, 4
      %s231 = scalar_lea.vmem %s0, %s230
      %s232 = sadd.s32 %s20, %s21
      %s233 = smul.u32 2, %s232
      %s234 = sadd.s32 %s20, %s21
      %s235 = smul.u32 2, %s234
      %p236 = scmp.lt.s32.totalorder %s235, 3
      %s237 = scalar_select %p236, %s235, 3
      %s238 = smul.addr %s237, 2
      %s239 = smul.addr %s238, 4
      %s240 = scalar_lea.vmem %s2, %s239
      %s241 = sadd.s32 %s20, %s21
      %s242 = smul.u32 2, %s241
      %p243 = scmp.lt.s32.totalorder %s20, 1
      %s244 = scalar_select %p243, %s20, 1
      %s245 = smul.addr %s244, 2
      %s246 = scalar_lea.vmem %s3, %s245
      %p247 = scmp.lt.s32.totalorder %s20, 1
      %s248 = scalar_select %p247, %s20, 1
      %s249 = smul.addr %s248, 2
      %s250 = scalar_lea.vmem %s4, %s249
      %v251 = vld [vmem:[%s231] sm:$0xff]
      %v252 = vld [vmem:[%s231 + $0x8] sm:$0xff]
      %v253 = vld [vmem:[%s231 + $0x10] sm:$0xff]
      %v254 = vld [vmem:[%s231 + $0x18] sm:$0xff]
      %v255 = vld [vmem:[%s231 + $0x20] sm:$0xff]
      %v256 = vld [vmem:[%s231 + $0x28] sm:$0xff]
      %v257 = vld [vmem:[%s231 + $0x30] sm:$0xff]
      %v258 = vld [vmem:[%s231 + $0x38] sm:$0xff]
      %v259 = vld [vmem:[%s231 + $0x40] sm:$0xff]
      %v260 = vld [vmem:[%s231 + $0x48] sm:$0xff]
      %v261 = vld [vmem:[%s231 + $0x50] sm:$0xff]
      %v262 = vld [vmem:[%s231 + $0x58] sm:$0xff]
      %v263 = vld [vmem:[%s231 + $0x60] sm:$0xff]
      %v264 = vld [vmem:[%s231 + $0x68] sm:$0xff]
      %v265 = vld [vmem:[%s231 + $0x70] sm:$0xff]
      %v266 = vld [vmem:[%s231 + $0x78] sm:$0xff]
      %v267 = vld [vmem:[%s1] sm:$0xff]
      %v268 = vld [vmem:[%s1 + $0x8] sm:$0xff]
      %v269 = vld [vmem:[%s1 + $0x10] sm:$0xff]
      %v270 = vld [vmem:[%s1 + $0x18] sm:$0xff]
      %v271 = vld [vmem:[%s1 + $0x20] sm:$0xff]
      %v272 = vld [vmem:[%s1 + $0x28] sm:$0xff]
      %v273 = vld [vmem:[%s1 + $0x30] sm:$0xff]
      %v274 = vld [vmem:[%s1 + $0x38] sm:$0xff]
      %v275 = vld [vmem:[%s1 + $0x40] sm:$0xff]
      %v276 = vld [vmem:[%s1 + $0x48] sm:$0xff]
      %v277 = vld [vmem:[%s1 + $0x50] sm:$0xff]
      %v278 = vld [vmem:[%s1 + $0x58] sm:$0xff]
      %v279 = vld [vmem:[%s1 + $0x60] sm:$0xff]
      %v280 = vld [vmem:[%s1 + $0x68] sm:$0xff]
      %v281 = vld [vmem:[%s1 + $0x70] sm:$0xff]
      %v282 = vld [vmem:[%s1 + $0x78] sm:$0xff]
      %v283 = vld [vmem:[%s1 + $0x80] sm:$0xff]
      %v284 = vld [vmem:[%s1 + $0x88] sm:$0xff]
      %v285 = vld [vmem:[%s1 + $0x90] sm:$0xff]
      %v286 = vld [vmem:[%s1 + $0x98] sm:$0xff]
      %v287 = vld [vmem:[%s1 + $0xa0] sm:$0xff]
      %v288 = vld [vmem:[%s1 + $0xa8] sm:$0xff]
      %v289 = vld [vmem:[%s1 + $0xb0] sm:$0xff]
      %v290 = vld [vmem:[%s1 + $0xb8] sm:$0xff]
      %v291 = vld [vmem:[%s1 + $0xc0] sm:$0xff]
      %v292 = vld [vmem:[%s1 + $0xc8] sm:$0xff]
      %v293 = vld [vmem:[%s1 + $0xd0] sm:$0xff]
      %v294 = vld [vmem:[%s1 + $0xd8] sm:$0xff]
      %v295 = vld [vmem:[%s1 + $0xe0] sm:$0xff]
      %v296 = vld [vmem:[%s1 + $0xe8] sm:$0xff]
      %v297 = vld [vmem:[%s1 + $0xf0] sm:$0xff]
      %v298 = vld [vmem:[%s1 + $0xf8] sm:$0xff]
      %v299 = vld [vmem:[%s1 + $0x100] sm:$0xff]
      %v300 = vld [vmem:[%s1 + $0x108] sm:$0xff]
      %v301 = vld [vmem:[%s1 + $0x110] sm:$0xff]
      %v302 = vld [vmem:[%s1 + $0x118] sm:$0xff]
      %v303 = vld [vmem:[%s1 + $0x120] sm:$0xff]
      %v304 = vld [vmem:[%s1 + $0x128] sm:$0xff]
      %v305 = vld [vmem:[%s1 + $0x130] sm:$0xff]
      %v306 = vld [vmem:[%s1 + $0x138] sm:$0xff]
      %v307 = vld [vmem:[%s1 + $0x140] sm:$0xff]
      %v308 = vld [vmem:[%s1 + $0x148] sm:$0xff]
      %v309 = vld [vmem:[%s1 + $0x150] sm:$0xff]
      %v310 = vld [vmem:[%s1 + $0x158] sm:$0xff]
      %v311 = vld [vmem:[%s1 + $0x160] sm:$0xff]
      %v312 = vld [vmem:[%s1 + $0x168] sm:$0xff]
      %v313 = vld [vmem:[%s1 + $0x170] sm:$0xff]
      %v314 = vld [vmem:[%s1 + $0x178] sm:$0xff]
      %v315 = vld [vmem:[%s1 + $0x180] sm:$0xff]
      %v316 = vld [vmem:[%s1 + $0x188] sm:$0xff]
      %v317 = vld [vmem:[%s1 + $0x190] sm:$0xff]
      %v318 = vld [vmem:[%s1 + $0x198] sm:$0xff]
      %v319 = vld [vmem:[%s1 + $0x1a0] sm:$0xff]
      %v320 = vld [vmem:[%s1 + $0x1a8] sm:$0xff]
      %v321 = vld [vmem:[%s1 + $0x1b0] sm:$0xff]
      %v322 = vld [vmem:[%s1 + $0x1b8] sm:$0xff]
      %v323 = vld [vmem:[%s1 + $0x1c0] sm:$0xff]
      %v324 = vld [vmem:[%s1 + $0x1c8] sm:$0xff]
      %v325 = vld [vmem:[%s1 + $0x1d0] sm:$0xff]
      %v326 = vld [vmem:[%s1 + $0x1d8] sm:$0xff]
      %v327 = vld [vmem:[%s1 + $0x1e0] sm:$0xff]
      %v328 = vld [vmem:[%s1 + $0x1e8] sm:$0xff]
      %v329 = vld [vmem:[%s1 + $0x1f0] sm:$0xff]
      %v330 = vld [vmem:[%s1 + $0x1f8] sm:$0xff]
      %v331 = vld [vmem:[%s1 + $0x200] sm:$0xff]
      %v332 = vld [vmem:[%s1 + $0x208] sm:$0xff]
      %v333 = vld [vmem:[%s1 + $0x210] sm:$0xff]
      %v334 = vld [vmem:[%s1 + $0x218] sm:$0xff]
      %v335 = vld [vmem:[%s1 + $0x220] sm:$0xff]
      %v336 = vld [vmem:[%s1 + $0x228] sm:$0xff]
      %v337 = vld [vmem:[%s1 + $0x230] sm:$0xff]
      %v338 = vld [vmem:[%s1 + $0x238] sm:$0xff]
      %v339 = vld [vmem:[%s1 + $0x240] sm:$0xff]
      %v340 = vld [vmem:[%s1 + $0x248] sm:$0xff]
      %v341 = vld [vmem:[%s1 + $0x250] sm:$0xff]
      %v342 = vld [vmem:[%s1 + $0x258] sm:$0xff]
      %v343 = vld [vmem:[%s1 + $0x260] sm:$0xff]
      %v344 = vld [vmem:[%s1 + $0x268] sm:$0xff]
      %v345 = vld [vmem:[%s1 + $0x270] sm:$0xff]
      %v346 = vld [vmem:[%s1 + $0x278] sm:$0xff]
      %v347 = vld [vmem:[%s1 + $0x280] sm:$0xff]
      %v348 = vld [vmem:[%s1 + $0x288] sm:$0xff]
      %v349 = vld [vmem:[%s1 + $0x290] sm:$0xff]
      %v350 = vld [vmem:[%s1 + $0x298] sm:$0xff]
      %v351 = vld [vmem:[%s1 + $0x2a0] sm:$0xff]
      %v352 = vld [vmem:[%s1 + $0x2a8] sm:$0xff]
      %v353 = vld [vmem:[%s1 + $0x2b0] sm:$0xff]
      %v354 = vld [vmem:[%s1 + $0x2b8] sm:$0xff]
      %v355 = vld [vmem:[%s1 + $0x2c0] sm:$0xff]
      %v356 = vld [vmem:[%s1 + $0x2c8] sm:$0xff]
      %v357 = vld [vmem:[%s1 + $0x2d0] sm:$0xff]
      %v358 = vld [vmem:[%s1 + $0x2d8] sm:$0xff]
      %v359 = vld [vmem:[%s1 + $0x2e0] sm:$0xff]
      %v360 = vld [vmem:[%s1 + $0x2e8] sm:$0xff]
      %v361 = vld [vmem:[%s1 + $0x2f0] sm:$0xff]
      %v362 = vld [vmem:[%s1 + $0x2f8] sm:$0xff]
      %v363 = vld [vmem:[%s1 + $0x300] sm:$0xff]
      %v364 = vld [vmem:[%s1 + $0x308] sm:$0xff]
      %v365 = vld [vmem:[%s1 + $0x310] sm:$0xff]
      %v366 = vld [vmem:[%s1 + $0x318] sm:$0xff]
      %v367 = vld [vmem:[%s1 + $0x320] sm:$0xff]
      %v368 = vld [vmem:[%s1 + $0x328] sm:$0xff]
      %v369 = vld [vmem:[%s1 + $0x330] sm:$0xff]
      %v370 = vld [vmem:[%s1 + $0x338] sm:$0xff]
      %v371 = vld [vmem:[%s1 + $0x340] sm:$0xff]
      %v372 = vld [vmem:[%s1 + $0x348] sm:$0xff]
      %v373 = vld [vmem:[%s1 + $0x350] sm:$0xff]
      %v374 = vld [vmem:[%s1 + $0x358] sm:$0xff]
      %v375 = vld [vmem:[%s1 + $0x360] sm:$0xff]
      %v376 = vld [vmem:[%s1 + $0x368] sm:$0xff]
      %v377 = vld [vmem:[%s1 + $0x370] sm:$0xff]
      %v378 = vld [vmem:[%s1 + $0x378] sm:$0xff]
      %v379 = vld [vmem:[%s1 + $0x380] sm:$0xff]
      %v380 = vld [vmem:[%s1 + $0x388] sm:$0xff]
      %v381 = vld [vmem:[%s1 + $0x390] sm:$0xff]
      %v382 = vld [vmem:[%s1 + $0x398] sm:$0xff]
      %v383 = vld [vmem:[%s1 + $0x3a0] sm:$0xff]
      %v384 = vld [vmem:[%s1 + $0x3a8] sm:$0xff]
      %v385 = vld [vmem:[%s1 + $0x3b0] sm:$0xff]
      %v386 = vld [vmem:[%s1 + $0x3b8] sm:$0xff]
      %v387 = vld [vmem:[%s1 + $0x3c0] sm:$0xff]
      %v388 = vld [vmem:[%s1 + $0x3c8] sm:$0xff]
      %v389 = vld [vmem:[%s1 + $0x3d0] sm:$0xff]
      %v390 = vld [vmem:[%s1 + $0x3d8] sm:$0xff]
      %v391 = vld [vmem:[%s1 + $0x3e0] sm:$0xff]
      %v392 = vld [vmem:[%s1 + $0x3e8] sm:$0xff]
      %v393 = vld [vmem:[%s1 + $0x3f0] sm:$0xff]
      %v394 = vld [vmem:[%s1 + $0x3f8] sm:$0xff]
      %v395 = vld [vmem:[%s1 + $0x400] sm:$0xff]
      %v396 = vld [vmem:[%s1 + $0x408] sm:$0xff]
      %v397 = vld [vmem:[%s1 + $0x410] sm:$0xff]
      %v398 = vld [vmem:[%s1 + $0x418] sm:$0xff]
      %v399 = vld [vmem:[%s1 + $0x420] sm:$0xff]
      %v400 = vld [vmem:[%s1 + $0x428] sm:$0xff]
      %v401 = vld [vmem:[%s1 + $0x430] sm:$0xff]
      %v402 = vld [vmem:[%s1 + $0x438] sm:$0xff]
      %v403 = vld [vmem:[%s1 + $0x440] sm:$0xff]
      %v404 = vld [vmem:[%s1 + $0x448] sm:$0xff]
      %v405 = vld [vmem:[%s1 + $0x450] sm:$0xff]
      %v406 = vld [vmem:[%s1 + $0x458] sm:$0xff]
      %v407 = vld [vmem:[%s1 + $0x460] sm:$0xff]
      %v408 = vld [vmem:[%s1 + $0x468] sm:$0xff]
      %v409 = vld [vmem:[%s1 + $0x470] sm:$0xff]
      %v410 = vld [vmem:[%s1 + $0x478] sm:$0xff]
      %v411 = vld [vmem:[%s1 + $0x480] sm:$0xff]
      %v412 = vld [vmem:[%s1 + $0x488] sm:$0xff]
      %v413 = vld [vmem:[%s1 + $0x490] sm:$0xff]
      %v414 = vld [vmem:[%s1 + $0x498] sm:$0xff]
      %v415 = vld [vmem:[%s1 + $0x4a0] sm:$0xff]
      %v416 = vld [vmem:[%s1 + $0x4a8] sm:$0xff]
      %v417 = vld [vmem:[%s1 + $0x4b0] sm:$0xff]
      %v418 = vld [vmem:[%s1 + $0x4b8] sm:$0xff]
      %v419 = vld [vmem:[%s1 + $0x4c0] sm:$0xff]
      %v420 = vld [vmem:[%s1 + $0x4c8] sm:$0xff]
      %v421 = vld [vmem:[%s1 + $0x4d0] sm:$0xff]
      %v422 = vld [vmem:[%s1 + $0x4d8] sm:$0xff]
      %v423 = vld [vmem:[%s1 + $0x4e0] sm:$0xff]
      %v424 = vld [vmem:[%s1 + $0x4e8] sm:$0xff]
      %v425 = vld [vmem:[%s1 + $0x4f0] sm:$0xff]
      %v426 = vld [vmem:[%s1 + $0x4f8] sm:$0xff]
      %v427 = vld [vmem:[%s1 + $0x500] sm:$0xff]
      %v428 = vld [vmem:[%s1 + $0x508] sm:$0xff]
      %v429 = vld [vmem:[%s1 + $0x510] sm:$0xff]
      %v430 = vld [vmem:[%s1 + $0x518] sm:$0xff]
      %v431 = vld [vmem:[%s1 + $0x520] sm:$0xff]
      %v432 = vld [vmem:[%s1 + $0x528] sm:$0xff]
      %v433 = vld [vmem:[%s1 + $0x530] sm:$0xff]
      %v434 = vld [vmem:[%s1 + $0x538] sm:$0xff]
      %v435 = vld [vmem:[%s1 + $0x540] sm:$0xff]
      %v436 = vld [vmem:[%s1 + $0x548] sm:$0xff]
      %v437 = vld [vmem:[%s1 + $0x550] sm:$0xff]
      %v438 = vld [vmem:[%s1 + $0x558] sm:$0xff]
      %v439 = vld [vmem:[%s1 + $0x560] sm:$0xff]
      %v440 = vld [vmem:[%s1 + $0x568] sm:$0xff]
      %v441 = vld [vmem:[%s1 + $0x570] sm:$0xff]
      %v442 = vld [vmem:[%s1 + $0x578] sm:$0xff]
      %v443 = vld [vmem:[%s1 + $0x580] sm:$0xff]
      %v444 = vld [vmem:[%s1 + $0x588] sm:$0xff]
      %v445 = vld [vmem:[%s1 + $0x590] sm:$0xff]
      %v446 = vld [vmem:[%s1 + $0x598] sm:$0xff]
      %v447 = vld [vmem:[%s1 + $0x5a0] sm:$0xff]
      %v448 = vld [vmem:[%s1 + $0x5a8] sm:$0xff]
      %v449 = vld [vmem:[%s1 + $0x5b0] sm:$0xff]
      %v450 = vld [vmem:[%s1 + $0x5b8] sm:$0xff]
      %v451 = vld [vmem:[%s1 + $0x5c0] sm:$0xff]
      %v452 = vld [vmem:[%s1 + $0x5c8] sm:$0xff]
      %v453 = vld [vmem:[%s1 + $0x5d0] sm:$0xff]
      %v454 = vld [vmem:[%s1 + $0x5d8] sm:$0xff]
      %v455 = vld [vmem:[%s1 + $0x5e0] sm:$0xff]
      %v456 = vld [vmem:[%s1 + $0x5e8] sm:$0xff]
      %v457 = vld [vmem:[%s1 + $0x5f0] sm:$0xff]
      %v458 = vld [vmem:[%s1 + $0x5f8] sm:$0xff]
      %v459 = vld [vmem:[%s1 + $0x600] sm:$0xff]
      %v460 = vld [vmem:[%s1 + $0x608] sm:$0xff]
      %v461 = vld [vmem:[%s1 + $0x610] sm:$0xff]
      %v462 = vld [vmem:[%s1 + $0x618] sm:$0xff]
      %v463 = vld [vmem:[%s1 + $0x620] sm:$0xff]
      %v464 = vld [vmem:[%s1 + $0x628] sm:$0xff]
      %v465 = vld [vmem:[%s1 + $0x630] sm:$0xff]
      %v466 = vld [vmem:[%s1 + $0x638] sm:$0xff]
      %v467 = vld [vmem:[%s1 + $0x640] sm:$0xff]
      %v468 = vld [vmem:[%s1 + $0x648] sm:$0xff]
      %v469 = vld [vmem:[%s1 + $0x650] sm:$0xff]
      %v470 = vld [vmem:[%s1 + $0x658] sm:$0xff]
      %v471 = vld [vmem:[%s1 + $0x660] sm:$0xff]
      %v472 = vld [vmem:[%s1 + $0x668] sm:$0xff]
      %v473 = vld [vmem:[%s1 + $0x670] sm:$0xff]
      %v474 = vld [vmem:[%s1 + $0x678] sm:$0xff]
      %v475 = vld [vmem:[%s1 + $0x680] sm:$0xff]
      %v476 = vld [vmem:[%s1 + $0x688] sm:$0xff]
      %v477 = vld [vmem:[%s1 + $0x690] sm:$0xff]
      %v478 = vld [vmem:[%s1 + $0x698] sm:$0xff]
      %v479 = vld [vmem:[%s1 + $0x6a0] sm:$0xff]
      %v480 = vld [vmem:[%s1 + $0x6a8] sm:$0xff]
      %v481 = vld [vmem:[%s1 + $0x6b0] sm:$0xff]
      %v482 = vld [vmem:[%s1 + $0x6b8] sm:$0xff]
      %v483 = vld [vmem:[%s1 + $0x6c0] sm:$0xff]
      %v484 = vld [vmem:[%s1 + $0x6c8] sm:$0xff]
      %v485 = vld [vmem:[%s1 + $0x6d0] sm:$0xff]
      %v486 = vld [vmem:[%s1 + $0x6d8] sm:$0xff]
      %v487 = vld [vmem:[%s1 + $0x6e0] sm:$0xff]
      %v488 = vld [vmem:[%s1 + $0x6e8] sm:$0xff]
      %v489 = vld [vmem:[%s1 + $0x6f0] sm:$0xff]
      %v490 = vld [vmem:[%s1 + $0x6f8] sm:$0xff]
      %v491 = vld [vmem:[%s1 + $0x700] sm:$0xff]
      %v492 = vld [vmem:[%s1 + $0x708] sm:$0xff]
      %v493 = vld [vmem:[%s1 + $0x710] sm:$0xff]
      %v494 = vld [vmem:[%s1 + $0x718] sm:$0xff]
      %v495 = vld [vmem:[%s1 + $0x720] sm:$0xff]
      %v496 = vld [vmem:[%s1 + $0x728] sm:$0xff]
      %v497 = vld [vmem:[%s1 + $0x730] sm:$0xff]
      %v498 = vld [vmem:[%s1 + $0x738] sm:$0xff]
      %v499 = vld [vmem:[%s1 + $0x740] sm:$0xff]
      %v500 = vld [vmem:[%s1 + $0x748] sm:$0xff]
      %v501 = vld [vmem:[%s1 + $0x750] sm:$0xff]
      %v502 = vld [vmem:[%s1 + $0x758] sm:$0xff]
      %v503 = vld [vmem:[%s1 + $0x760] sm:$0xff]
      %v504 = vld [vmem:[%s1 + $0x768] sm:$0xff]
      %v505 = vld [vmem:[%s1 + $0x770] sm:$0xff]
      %v506 = vld [vmem:[%s1 + $0x778] sm:$0xff]
      %v507 = vld [vmem:[%s1 + $0x780] sm:$0xff]
      %v508 = vld [vmem:[%s1 + $0x788] sm:$0xff]
      %v509 = vld [vmem:[%s1 + $0x790] sm:$0xff]
      %v510 = vld [vmem:[%s1 + $0x798] sm:$0xff]
      %v511 = vld [vmem:[%s1 + $0x7a0] sm:$0xff]
      %v512 = vld [vmem:[%s1 + $0x7a8] sm:$0xff]
      %v513 = vld [vmem:[%s1 + $0x7b0] sm:$0xff]
      %v514 = vld [vmem:[%s1 + $0x7b8] sm:$0xff]
      %v515 = vld [vmem:[%s1 + $0x7c0] sm:$0xff]
      %v516 = vld [vmem:[%s1 + $0x7c8] sm:$0xff]
      %v517 = vld [vmem:[%s1 + $0x7d0] sm:$0xff]
      %v518 = vld [vmem:[%s1 + $0x7d8] sm:$0xff]
      %v519 = vld [vmem:[%s1 + $0x7e0] sm:$0xff]
      %v520 = vld [vmem:[%s1 + $0x7e8] sm:$0xff]
      %v521 = vld [vmem:[%s1 + $0x7f0] sm:$0xff]
      %v522 = vld [vmem:[%s1 + $0x7f8] sm:$0xff]
      %v539 = vunpack.c.l.b16 %v251
      %v540 = vunpack.c.h.b16 %v251
      %v541 = vunpack.c.l.b16 %v252
      %v542 = vunpack.c.h.b16 %v252
      %v543 = vunpack.c.l.b16 %v253
      %v544 = vunpack.c.h.b16 %v253
      %v545 = vunpack.c.l.b16 %v254
      %v546 = vunpack.c.h.b16 %v254
      %v547 = vunpack.c.l.b16 %v255
      %v548 = vunpack.c.h.b16 %v255
      %v549 = vunpack.c.l.b16 %v256
      %v550 = vunpack.c.h.b16 %v256
      %v551 = vunpack.c.l.b16 %v257
      %v552 = vunpack.c.h.b16 %v257
      %v553 = vunpack.c.l.b16 %v258
      %v554 = vunpack.c.h.b16 %v258
      %v555 = vunpack.c.l.b16 %v259
      %v556 = vunpack.c.h.b16 %v259
      %v557 = vunpack.c.l.b16 %v260
      %v558 = vunpack.c.h.b16 %v260
      %v559 = vunpack.c.l.b16 %v261
      %v560 = vunpack.c.h.b16 %v261
      %v561 = vunpack.c.l.b16 %v262
      %v562 = vunpack.c.h.b16 %v262
      %v563 = vunpack.c.l.b16 %v263
      %v564 = vunpack.c.h.b16 %v263
      %v565 = vunpack.c.l.b16 %v264
      %v566 = vunpack.c.h.b16 %v264
      %v567 = vunpack.c.l.b16 %v265
      %v568 = vunpack.c.h.b16 %v265
      %v569 = vunpack.c.l.b16 %v266
      %v570 = vunpack.c.h.b16 %v266
      %v571 = vpack.c.b16 %v555, %v539
      %v572 = vpack.c.b16 %v556, %v540
      %v573 = vpack.c.b16 %v557, %v541
      %v574 = vpack.c.b16 %v558, %v542
      %v575 = vpack.c.b16 %v559, %v543
      %v576 = vpack.c.b16 %v560, %v544
      %v577 = vpack.c.b16 %v561, %v545
      %v578 = vpack.c.b16 %v562, %v546
      %v579 = vpack.c.b16 %v563, %v547
      %v580 = vpack.c.b16 %v564, %v548
      %v581 = vpack.c.b16 %v565, %v549
      %v582 = vpack.c.b16 %v566, %v550
      %v583 = vpack.c.b16 %v567, %v551
      %v584 = vpack.c.b16 %v568, %v552
      %v585 = vpack.c.b16 %v569, %v553
      %v586 = vpack.c.b16 %v570, %v554
      %v859 = vunpack.c.l.b16 %v267
      %v860 = vunpack.c.h.b16 %v267
      %v861 = vunpack.c.l.b16 %v268
      %v862 = vunpack.c.h.b16 %v268
      %v863 = vunpack.c.l.b16 %v269
      %v864 = vunpack.c.h.b16 %v269
      %v865 = vunpack.c.l.b16 %v270
      %v866 = vunpack.c.h.b16 %v270
      %v867 = vunpack.c.l.b16 %v271
      %v868 = vunpack.c.h.b16 %v271
      %v869 = vunpack.c.l.b16 %v272
      %v870 = vunpack.c.h.b16 %v272
      %v871 = vunpack.c.l.b16 %v273
      %v872 = vunpack.c.h.b16 %v273
      %v873 = vunpack.c.l.b16 %v274
      %v874 = vunpack.c.h.b16 %v274
      %v875 = vunpack.c.l.b16 %v275
      %v876 = vunpack.c.h.b16 %v275
      %v877 = vunpack.c.l.b16 %v276
      %v878 = vunpack.c.h.b16 %v276
      %v879 = vunpack.c.l.b16 %v277
      %v880 = vunpack.c.h.b16 %v277
      %v881 = vunpack.c.l.b16 %v278
      %v882 = vunpack.c.h.b16 %v278
      %v883 = vunpack.c.l.b16 %v279
      %v884 = vunpack.c.h.b16 %v279
      %v885 = vunpack.c.l.b16 %v280
      %v886 = vunpack.c.h.b16 %v280
      %v887 = vunpack.c.l.b16 %v281
      %v888 = vunpack.c.h.b16 %v281
      %v889 = vunpack.c.l.b16 %v282
      %v890 = vunpack.c.h.b16 %v282
      %v891 = vunpack.c.l.b16 %v283
      %v892 = vunpack.c.h.b16 %v283
      %v893 = vunpack.c.l.b16 %v284
      %v894 = vunpack.c.h.b16 %v284
      %v895 = vunpack.c.l.b16 %v285
      %v896 = vunpack.c.h.b16 %v285
      %v897 = vunpack.c.l.b16 %v286
      %v898 = vunpack.c.h.b16 %v286
      %v899 = vunpack.c.l.b16 %v287
      %v900 = vunpack.c.h.b16 %v287
      %v901 = vunpack.c.l.b16 %v288
      %v902 = vunpack.c.h.b16 %v288
      %v903 = vunpack.c.l.b16 %v289
      %v904 = vunpack.c.h.b16 %v289
      %v905 = vunpack.c.l.b16 %v290
      %v906 = vunpack.c.h.b16 %v290
      %v907 = vunpack.c.l.b16 %v291
      %v908 = vunpack.c.h.b16 %v291
      %v909 = vunpack.c.l.b16 %v292
      %v910 = vunpack.c.h.b16 %v292
      %v911 = vunpack.c.l.b16 %v293
      %v912 = vunpack.c.h.b16 %v293
      %v913 = vunpack.c.l.b16 %v294
      %v914 = vunpack.c.h.b16 %v294
      %v915 = vunpack.c.l.b16 %v295
      %v916 = vunpack.c.h.b16 %v295
      %v917 = vunpack.c.l.b16 %v296
      %v918 = vunpack.c.h.b16 %v296
      %v919 = vunpack.c.l.b16 %v297
      %v920 = vunpack.c.h.b16 %v297
      %v921 = vunpack.c.l.b16 %v298
      %v922 = vunpack.c.h.b16 %v298
      %v923 = vunpack.c.l.b16 %v299
      %v924 = vunpack.c.h.b16 %v299
      %v925 = vunpack.c.l.b16 %v300
      %v926 = vunpack.c.h.b16 %v300
      %v927 = vunpack.c.l.b16 %v301
      %v928 = vunpack.c.h.b16 %v301
      %v929 = vunpack.c.l.b16 %v302
      %v930 = vunpack.c.h.b16 %v302
      %v931 = vunpack.c.l.b16 %v303
      %v932 = vunpack.c.h.b16 %v303
      %v933 = vunpack.c.l.b16 %v304
      %v934 = vunpack.c.h.b16 %v304
      %v935 = vunpack.c.l.b16 %v305
      %v936 = vunpack.c.h.b16 %v305
      %v937 = vunpack.c.l.b16 %v306
      %v938 = vunpack.c.h.b16 %v306
      %v939 = vunpack.c.l.b16 %v307
      %v940 = vunpack.c.h.b16 %v307
      %v941 = vunpack.c.l.b16 %v308
      %v942 = vunpack.c.h.b16 %v308
      %v943 = vunpack.c.l.b16 %v309
      %v944 = vunpack.c.h.b16 %v309
      %v945 = vunpack.c.l.b16 %v310
      %v946 = vunpack.c.h.b16 %v310
      %v947 = vunpack.c.l.b16 %v311
      %v948 = vunpack.c.h.b16 %v311
      %v949 = vunpack.c.l.b16 %v312
      %v950 = vunpack.c.h.b16 %v312
      %v951 = vunpack.c.l.b16 %v313
      %v952 = vunpack.c.h.b16 %v313
      %v953 = vunpack.c.l.b16 %v314
      %v954 = vunpack.c.h.b16 %v314
      %v955 = vunpack.c.l.b16 %v315
      %v956 = vunpack.c.h.b16 %v315
      %v957 = vunpack.c.l.b16 %v316
      %v958 = vunpack.c.h.b16 %v316
      %v959 = vunpack.c.l.b16 %v317
      %v960 = vunpack.c.h.b16 %v317
      %v961 = vunpack.c.l.b16 %v318
      %v962 = vunpack.c.h.b16 %v318
      %v963 = vunpack.c.l.b16 %v319
      %v964 = vunpack.c.h.b16 %v319
      %v965 = vunpack.c.l.b16 %v320
      %v966 = vunpack.c.h.b16 %v320
      %v967 = vunpack.c.l.b16 %v321
      %v968 = vunpack.c.h.b16 %v321
      %v969 = vunpack.c.l.b16 %v322
      %v970 = vunpack.c.h.b16 %v322
      %v971 = vunpack.c.l.b16 %v323
      %v972 = vunpack.c.h.b16 %v323
      %v973 = vunpack.c.l.b16 %v324
      %v974 = vunpack.c.h.b16 %v324
      %v975 = vunpack.c.l.b16 %v325
      %v976 = vunpack.c.h.b16 %v325
      %v977 = vunpack.c.l.b16 %v326
      %v978 = vunpack.c.h.b16 %v326
      %v979 = vunpack.c.l.b16 %v327
      %v980 = vunpack.c.h.b16 %v327
      %v981 = vunpack.c.l.b16 %v328
      %v982 = vunpack.c.h.b16 %v328
      %v983 = vunpack.c.l.b16 %v329
      %v984 = vunpack.c.h.b16 %v329
      %v985 = vunpack.c.l.b16 %v330
      %v986 = vunpack.c.h.b16 %v330
      %v987 = vunpack.c.l.b16 %v331
      %v988 = vunpack.c.h.b16 %v331
      %v989 = vunpack.c.l.b16 %v332
      %v990 = vunpack.c.h.b16 %v332
      %v991 = vunpack.c.l.b16 %v333
      %v992 = vunpack.c.h.b16 %v333
      %v993 = vunpack.c.l.b16 %v334
      %v994 = vunpack.c.h.b16 %v334
      %v995 = vunpack.c.l.b16 %v335
      %v996 = vunpack.c.h.b16 %v335
      %v997 = vunpack.c.l.b16 %v336
      %v998 = vunpack.c.h.b16 %v336
      %v999 = vunpack.c.l.b16 %v337
      %v1000 = vunpack.c.h.b16 %v337
      %v1001 = vunpack.c.l.b16 %v338
      %v1002 = vunpack.c.h.b16 %v338
      %v1003 = vunpack.c.l.b16 %v339
      %v1004 = vunpack.c.h.b16 %v339
      %v1005 = vunpack.c.l.b16 %v340
      %v1006 = vunpack.c.h.b16 %v340
      %v1007 = vunpack.c.l.b16 %v341
      %v1008 = vunpack.c.h.b16 %v341
      %v1009 = vunpack.c.l.b16 %v342
      %v1010 = vunpack.c.h.b16 %v342
      %v1011 = vunpack.c.l.b16 %v343
      %v1012 = vunpack.c.h.b16 %v343
      %v1013 = vunpack.c.l.b16 %v344
      %v1014 = vunpack.c.h.b16 %v344
      %v1015 = vunpack.c.l.b16 %v345
      %v1016 = vunpack.c.h.b16 %v345
      %v1017 = vunpack.c.l.b16 %v346
      %v1018 = vunpack.c.h.b16 %v346
      %v1019 = vunpack.c.l.b16 %v347
      %v1020 = vunpack.c.h.b16 %v347
      %v1021 = vunpack.c.l.b16 %v348
      %v1022 = vunpack.c.h.b16 %v348
      %v1023 = vunpack.c.l.b16 %v349
      %v1024 = vunpack.c.h.b16 %v349
      %v1025 = vunpack.c.l.b16 %v350
      %v1026 = vunpack.c.h.b16 %v350
      %v1027 = vunpack.c.l.b16 %v351
      %v1028 = vunpack.c.h.b16 %v351
      %v1029 = vunpack.c.l.b16 %v352
      %v1030 = vunpack.c.h.b16 %v352
      %v1031 = vunpack.c.l.b16 %v353
      %v1032 = vunpack.c.h.b16 %v353
      %v1033 = vunpack.c.l.b16 %v354
      %v1034 = vunpack.c.h.b16 %v354
      %v1035 = vunpack.c.l.b16 %v355
      %v1036 = vunpack.c.h.b16 %v355
      %v1037 = vunpack.c.l.b16 %v356
      %v1038 = vunpack.c.h.b16 %v356
      %v1039 = vunpack.c.l.b16 %v357
      %v1040 = vunpack.c.h.b16 %v357
      %v1041 = vunpack.c.l.b16 %v358
      %v1042 = vunpack.c.h.b16 %v358
      %v1043 = vunpack.c.l.b16 %v359
      %v1044 = vunpack.c.h.b16 %v359
      %v1045 = vunpack.c.l.b16 %v360
      %v1046 = vunpack.c.h.b16 %v360
      %v1047 = vunpack.c.l.b16 %v361
      %v1048 = vunpack.c.h.b16 %v361
      %v1049 = vunpack.c.l.b16 %v362
      %v1050 = vunpack.c.h.b16 %v362
      %v1051 = vunpack.c.l.b16 %v363
      %v1052 = vunpack.c.h.b16 %v363
      %v1053 = vunpack.c.l.b16 %v364
      %v1054 = vunpack.c.h.b16 %v364
      %v1055 = vunpack.c.l.b16 %v365
      %v1056 = vunpack.c.h.b16 %v365
      %v1057 = vunpack.c.l.b16 %v366
      %v1058 = vunpack.c.h.b16 %v366
      %v1059 = vunpack.c.l.b16 %v367
      %v1060 = vunpack.c.h.b16 %v367
      %v1061 = vunpack.c.l.b16 %v368
      %v1062 = vunpack.c.h.b16 %v368
      %v1063 = vunpack.c.l.b16 %v369
      %v1064 = vunpack.c.h.b16 %v369
      %v1065 = vunpack.c.l.b16 %v370
      %v1066 = vunpack.c.h.b16 %v370
      %v1067 = vunpack.c.l.b16 %v371
      %v1068 = vunpack.c.h.b16 %v371
      %v1069 = vunpack.c.l.b16 %v372
      %v1070 = vunpack.c.h.b16 %v372
      %v1071 = vunpack.c.l.b16 %v373
      %v1072 = vunpack.c.h.b16 %v373
      %v1073 = vunpack.c.l.b16 %v374
      %v1074 = vunpack.c.h.b16 %v374
      %v1075 = vunpack.c.l.b16 %v375
      %v1076 = vunpack.c.h.b16 %v375
      %v1077 = vunpack.c.l.b16 %v376
      %v1078 = vunpack.c.h.b16 %v376
      %v1079 = vunpack.c.l.b16 %v377
      %v1080 = vunpack.c.h.b16 %v377
      %v1081 = vunpack.c.l.b16 %v378
      %v1082 = vunpack.c.h.b16 %v378
      %v1083 = vunpack.c.l.b16 %v379
      %v1084 = vunpack.c.h.b16 %v379
      %v1085 = vunpack.c.l.b16 %v380
      %v1086 = vunpack.c.h.b16 %v380
      %v1087 = vunpack.c.l.b16 %v381
      %v1088 = vunpack.c.h.b16 %v381
      %v1089 = vunpack.c.l.b16 %v382
      %v1090 = vunpack.c.h.b16 %v382
      %v1091 = vunpack.c.l.b16 %v383
      %v1092 = vunpack.c.h.b16 %v383
      %v1093 = vunpack.c.l.b16 %v384
      %v1094 = vunpack.c.h.b16 %v384
      %v1095 = vunpack.c.l.b16 %v385
      %v1096 = vunpack.c.h.b16 %v385
      %v1097 = vunpack.c.l.b16 %v386
      %v1098 = vunpack.c.h.b16 %v386
      %v1099 = vunpack.c.l.b16 %v387
      %v1100 = vunpack.c.h.b16 %v387
      %v1101 = vunpack.c.l.b16 %v388
      %v1102 = vunpack.c.h.b16 %v388
      %v1103 = vunpack.c.l.b16 %v389
      %v1104 = vunpack.c.h.b16 %v389
      %v1105 = vunpack.c.l.b16 %v390
      %v1106 = vunpack.c.h.b16 %v390
      %v1107 = vunpack.c.l.b16 %v391
      %v1108 = vunpack.c.h.b16 %v391
      %v1109 = vunpack.c.l.b16 %v392
      %v1110 = vunpack.c.h.b16 %v392
      %v1111 = vunpack.c.l.b16 %v393
      %v1112 = vunpack.c.h.b16 %v393
      %v1113 = vunpack.c.l.b16 %v394
      %v1114 = vunpack.c.h.b16 %v394
      %v1115 = vunpack.c.l.b16 %v395
      %v1116 = vunpack.c.h.b16 %v395
      %v1117 = vunpack.c.l.b16 %v396
      %v1118 = vunpack.c.h.b16 %v396
      %v1119 = vunpack.c.l.b16 %v397
      %v1120 = vunpack.c.h.b16 %v397
      %v1121 = vunpack.c.l.b16 %v398
      %v1122 = vunpack.c.h.b16 %v398
      %v1123 = vunpack.c.l.b16 %v399
      %v1124 = vunpack.c.h.b16 %v399
      %v1125 = vunpack.c.l.b16 %v400
      %v1126 = vunpack.c.h.b16 %v400
      %v1127 = vunpack.c.l.b16 %v401
      %v1128 = vunpack.c.h.b16 %v401
      %v1129 = vunpack.c.l.b16 %v402
      %v1130 = vunpack.c.h.b16 %v402
      %v1131 = vunpack.c.l.b16 %v403
      %v1132 = vunpack.c.h.b16 %v403
      %v1133 = vunpack.c.l.b16 %v404
      %v1134 = vunpack.c.h.b16 %v404
      %v1135 = vunpack.c.l.b16 %v405
      %v1136 = vunpack.c.h.b16 %v405
      %v1137 = vunpack.c.l.b16 %v406
      %v1138 = vunpack.c.h.b16 %v406
      %v1139 = vunpack.c.l.b16 %v407
      %v1140 = vunpack.c.h.b16 %v407
      %v1141 = vunpack.c.l.b16 %v408
      %v1142 = vunpack.c.h.b16 %v408
      %v1143 = vunpack.c.l.b16 %v409
      %v1144 = vunpack.c.h.b16 %v409
      %v1145 = vunpack.c.l.b16 %v410
      %v1146 = vunpack.c.h.b16 %v410
      %v1147 = vunpack.c.l.b16 %v411
      %v1148 = vunpack.c.h.b16 %v411
      %v1149 = vunpack.c.l.b16 %v412
      %v1150 = vunpack.c.h.b16 %v412
      %v1151 = vunpack.c.l.b16 %v413
      %v1152 = vunpack.c.h.b16 %v413
      %v1153 = vunpack.c.l.b16 %v414
      %v1154 = vunpack.c.h.b16 %v414
      %v1155 = vunpack.c.l.b16 %v415
      %v1156 = vunpack.c.h.b16 %v415
      %v1157 = vunpack.c.l.b16 %v416
      %v1158 = vunpack.c.h.b16 %v416
      %v1159 = vunpack.c.l.b16 %v417
      %v1160 = vunpack.c.h.b16 %v417
      %v1161 = vunpack.c.l.b16 %v418
      %v1162 = vunpack.c.h.b16 %v418
      %v1163 = vunpack.c.l.b16 %v419
      %v1164 = vunpack.c.h.b16 %v419
      %v1165 = vunpack.c.l.b16 %v420
      %v1166 = vunpack.c.h.b16 %v420
      %v1167 = vunpack.c.l.b16 %v421
      %v1168 = vunpack.c.h.b16 %v421
      %v1169 = vunpack.c.l.b16 %v422
      %v1170 = vunpack.c.h.b16 %v422
      %v1171 = vunpack.c.l.b16 %v423
      %v1172 = vunpack.c.h.b16 %v423
      %v1173 = vunpack.c.l.b16 %v424
      %v1174 = vunpack.c.h.b16 %v424
      %v1175 = vunpack.c.l.b16 %v425
      %v1176 = vunpack.c.h.b16 %v425
      %v1177 = vunpack.c.l.b16 %v426
      %v1178 = vunpack.c.h.b16 %v426
      %v1179 = vunpack.c.l.b16 %v427
      %v1180 = vunpack.c.h.b16 %v427
      %v1181 = vunpack.c.l.b16 %v428
      %v1182 = vunpack.c.h.b16 %v428
      %v1183 = vunpack.c.l.b16 %v429
      %v1184 = vunpack.c.h.b16 %v429
      %v1185 = vunpack.c.l.b16 %v430
      %v1186 = vunpack.c.h.b16 %v430
      %v1187 = vunpack.c.l.b16 %v431
      %v1188 = vunpack.c.h.b16 %v431
      %v1189 = vunpack.c.l.b16 %v432
      %v1190 = vunpack.c.h.b16 %v432
      %v1191 = vunpack.c.l.b16 %v433
      %v1192 = vunpack.c.h.b16 %v433
      %v1193 = vunpack.c.l.b16 %v434
      %v1194 = vunpack.c.h.b16 %v434
      %v1195 = vunpack.c.l.b16 %v435
      %v1196 = vunpack.c.h.b16 %v435
      %v1197 = vunpack.c.l.b16 %v436
      %v1198 = vunpack.c.h.b16 %v436
      %v1199 = vunpack.c.l.b16 %v437
      %v1200 = vunpack.c.h.b16 %v437
      %v1201 = vunpack.c.l.b16 %v438
      %v1202 = vunpack.c.h.b16 %v438
      %v1203 = vunpack.c.l.b16 %v439
      %v1204 = vunpack.c.h.b16 %v439
      %v1205 = vunpack.c.l.b16 %v440
      %v1206 = vunpack.c.h.b16 %v440
      %v1207 = vunpack.c.l.b16 %v441
      %v1208 = vunpack.c.h.b16 %v441
      %v1209 = vunpack.c.l.b16 %v442
      %v1210 = vunpack.c.h.b16 %v442
      %v1211 = vunpack.c.l.b16 %v443
      %v1212 = vunpack.c.h.b16 %v443
      %v1213 = vunpack.c.l.b16 %v444
      %v1214 = vunpack.c.h.b16 %v444
      %v1215 = vunpack.c.l.b16 %v445
      %v1216 = vunpack.c.h.b16 %v445
      %v1217 = vunpack.c.l.b16 %v446
      %v1218 = vunpack.c.h.b16 %v446
      %v1219 = vunpack.c.l.b16 %v447
      %v1220 = vunpack.c.h.b16 %v447
      %v1221 = vunpack.c.l.b16 %v448
      %v1222 = vunpack.c.h.b16 %v448
      %v1223 = vunpack.c.l.b16 %v449
      %v1224 = vunpack.c.h.b16 %v449
      %v1225 = vunpack.c.l.b16 %v450
      %v1226 = vunpack.c.h.b16 %v450
      %v1227 = vunpack.c.l.b16 %v451
      %v1228 = vunpack.c.h.b16 %v451
      %v1229 = vunpack.c.l.b16 %v452
      %v1230 = vunpack.c.h.b16 %v452
      %v1231 = vunpack.c.l.b16 %v453
      %v1232 = vunpack.c.h.b16 %v453
      %v1233 = vunpack.c.l.b16 %v454
      %v1234 = vunpack.c.h.b16 %v454
      %v1235 = vunpack.c.l.b16 %v455
      %v1236 = vunpack.c.h.b16 %v455
      %v1237 = vunpack.c.l.b16 %v456
      %v1238 = vunpack.c.h.b16 %v456
      %v1239 = vunpack.c.l.b16 %v457
      %v1240 = vunpack.c.h.b16 %v457
      %v1241 = vunpack.c.l.b16 %v458
      %v1242 = vunpack.c.h.b16 %v458
      %v1243 = vunpack.c.l.b16 %v459
      %v1244 = vunpack.c.h.b16 %v459
      %v1245 = vunpack.c.l.b16 %v460
      %v1246 = vunpack.c.h.b16 %v460
      %v1247 = vunpack.c.l.b16 %v461
      %v1248 = vunpack.c.h.b16 %v461
      %v1249 = vunpack.c.l.b16 %v462
      %v1250 = vunpack.c.h.b16 %v462
      %v1251 = vunpack.c.l.b16 %v463
      %v1252 = vunpack.c.h.b16 %v463
      %v1253 = vunpack.c.l.b16 %v464
      %v1254 = vunpack.c.h.b16 %v464
      %v1255 = vunpack.c.l.b16 %v465
      %v1256 = vunpack.c.h.b16 %v465
      %v1257 = vunpack.c.l.b16 %v466
      %v1258 = vunpack.c.h.b16 %v466
      %v1259 = vunpack.c.l.b16 %v467
      %v1260 = vunpack.c.h.b16 %v467
      %v1261 = vunpack.c.l.b16 %v468
      %v1262 = vunpack.c.h.b16 %v468
      %v1263 = vunpack.c.l.b16 %v469
      %v1264 = vunpack.c.h.b16 %v469
      %v1265 = vunpack.c.l.b16 %v470
      %v1266 = vunpack.c.h.b16 %v470
      %v1267 = vunpack.c.l.b16 %v471
      %v1268 = vunpack.c.h.b16 %v471
      %v1269 = vunpack.c.l.b16 %v472
      %v1270 = vunpack.c.h.b16 %v472
      %v1271 = vunpack.c.l.b16 %v473
      %v1272 = vunpack.c.h.b16 %v473
      %v1273 = vunpack.c.l.b16 %v474
      %v1274 = vunpack.c.h.b16 %v474
      %v1275 = vunpack.c.l.b16 %v475
      %v1276 = vunpack.c.h.b16 %v475
      %v1277 = vunpack.c.l.b16 %v476
      %v1278 = vunpack.c.h.b16 %v476
      %v1279 = vunpack.c.l.b16 %v477
      %v1280 = vunpack.c.h.b16 %v477
      %v1281 = vunpack.c.l.b16 %v478
      %v1282 = vunpack.c.h.b16 %v478
      %v1283 = vunpack.c.l.b16 %v479
      %v1284 = vunpack.c.h.b16 %v479
      %v1285 = vunpack.c.l.b16 %v480
      %v1286 = vunpack.c.h.b16 %v480
      %v1287 = vunpack.c.l.b16 %v481
      %v1288 = vunpack.c.h.b16 %v481
      %v1289 = vunpack.c.l.b16 %v482
      %v1290 = vunpack.c.h.b16 %v482
      %v1291 = vunpack.c.l.b16 %v483
      %v1292 = vunpack.c.h.b16 %v483
      %v1293 = vunpack.c.l.b16 %v484
      %v1294 = vunpack.c.h.b16 %v484
      %v1295 = vunpack.c.l.b16 %v485
      %v1296 = vunpack.c.h.b16 %v485
      %v1297 = vunpack.c.l.b16 %v486
      %v1298 = vunpack.c.h.b16 %v486
      %v1299 = vunpack.c.l.b16 %v487
      %v1300 = vunpack.c.h.b16 %v487
      %v1301 = vunpack.c.l.b16 %v488
      %v1302 = vunpack.c.h.b16 %v488
      %v1303 = vunpack.c.l.b16 %v489
      %v1304 = vunpack.c.h.b16 %v489
      %v1305 = vunpack.c.l.b16 %v490
      %v1306 = vunpack.c.h.b16 %v490
      %v1307 = vunpack.c.l.b16 %v491
      %v1308 = vunpack.c.h.b16 %v491
      %v1309 = vunpack.c.l.b16 %v492
      %v1310 = vunpack.c.h.b16 %v492
      %v1311 = vunpack.c.l.b16 %v493
      %v1312 = vunpack.c.h.b16 %v493
      %v1313 = vunpack.c.l.b16 %v494
      %v1314 = vunpack.c.h.b16 %v494
      %v1315 = vunpack.c.l.b16 %v495
      %v1316 = vunpack.c.h.b16 %v495
      %v1317 = vunpack.c.l.b16 %v496
      %v1318 = vunpack.c.h.b16 %v496
      %v1319 = vunpack.c.l.b16 %v497
      %v1320 = vunpack.c.h.b16 %v497
      %v1321 = vunpack.c.l.b16 %v498
      %v1322 = vunpack.c.h.b16 %v498
      %v1323 = vunpack.c.l.b16 %v499
      %v1324 = vunpack.c.h.b16 %v499
      %v1325 = vunpack.c.l.b16 %v500
      %v1326 = vunpack.c.h.b16 %v500
      %v1327 = vunpack.c.l.b16 %v501
      %v1328 = vunpack.c.h.b16 %v501
      %v1329 = vunpack.c.l.b16 %v502
      %v1330 = vunpack.c.h.b16 %v502
      %v1331 = vunpack.c.l.b16 %v503
      %v1332 = vunpack.c.h.b16 %v503
      %v1333 = vunpack.c.l.b16 %v504
      %v1334 = vunpack.c.h.b16 %v504
      %v1335 = vunpack.c.l.b16 %v505
      %v1336 = vunpack.c.h.b16 %v505
      %v1337 = vunpack.c.l.b16 %v506
      %v1338 = vunpack.c.h.b16 %v506
      %v1339 = vunpack.c.l.b16 %v507
      %v1340 = vunpack.c.h.b16 %v507
      %v1341 = vunpack.c.l.b16 %v508
      %v1342 = vunpack.c.h.b16 %v508
      %v1343 = vunpack.c.l.b16 %v509
      %v1344 = vunpack.c.h.b16 %v509
      %v1345 = vunpack.c.l.b16 %v510
      %v1346 = vunpack.c.h.b16 %v510
      %v1347 = vunpack.c.l.b16 %v511
      %v1348 = vunpack.c.h.b16 %v511
      %v1349 = vunpack.c.l.b16 %v512
      %v1350 = vunpack.c.h.b16 %v512
      %v1351 = vunpack.c.l.b16 %v513
      %v1352 = vunpack.c.h.b16 %v513
      %v1353 = vunpack.c.l.b16 %v514
      %v1354 = vunpack.c.h.b16 %v514
      %v1355 = vunpack.c.l.b16 %v515
      %v1356 = vunpack.c.h.b16 %v515
      %v1357 = vunpack.c.l.b16 %v516
      %v1358 = vunpack.c.h.b16 %v516
      %v1359 = vunpack.c.l.b16 %v517
      %v1360 = vunpack.c.h.b16 %v517
      %v1361 = vunpack.c.l.b16 %v518
      %v1362 = vunpack.c.h.b16 %v518
      %v1363 = vunpack.c.l.b16 %v519
      %v1364 = vunpack.c.h.b16 %v519
      %v1365 = vunpack.c.l.b16 %v520
      %v1366 = vunpack.c.h.b16 %v520
      %v1367 = vunpack.c.l.b16 %v521
      %v1368 = vunpack.c.h.b16 %v521
      %v1369 = vunpack.c.l.b16 %v522
      %v1370 = vunpack.c.h.b16 %v522
      %v1371 = vpack.c.b16 %v861, %v859
      %v1372 = vpack.c.b16 %v862, %v860
      %v1373 = vpack.c.b16 %v865, %v863
      %v1374 = vpack.c.b16 %v866, %v864
      %v1375 = vpack.c.b16 %v869, %v867
      %v1376 = vpack.c.b16 %v870, %v868
      %v1377 = vpack.c.b16 %v873, %v871
      %v1378 = vpack.c.b16 %v874, %v872
      %v1379 = vpack.c.b16 %v877, %v875
      %v1380 = vpack.c.b16 %v878, %v876
      %v1381 = vpack.c.b16 %v881, %v879
      %v1382 = vpack.c.b16 %v882, %v880
      %v1383 = vpack.c.b16 %v885, %v883
      %v1384 = vpack.c.b16 %v886, %v884
      %v1385 = vpack.c.b16 %v889, %v887
      %v1386 = vpack.c.b16 %v890, %v888
      %v1387 = vpack.c.b16 %v893, %v891
      %v1388 = vpack.c.b16 %v894, %v892
      %v1389 = vpack.c.b16 %v897, %v895
      %v1390 = vpack.c.b16 %v898, %v896
      %v1391 = vpack.c.b16 %v901, %v899
      %v1392 = vpack.c.b16 %v902, %v900
      %v1393 = vpack.c.b16 %v905, %v903
      %v1394 = vpack.c.b16 %v906, %v904
      %v1395 = vpack.c.b16 %v909, %v907
      %v1396 = vpack.c.b16 %v910, %v908
      %v1397 = vpack.c.b16 %v913, %v911
      %v1398 = vpack.c.b16 %v914, %v912
      %v1399 = vpack.c.b16 %v917, %v915
      %v1400 = vpack.c.b16 %v918, %v916
      %v1401 = vpack.c.b16 %v921, %v919
      %v1402 = vpack.c.b16 %v922, %v920
      %v1403 = vpack.c.b16 %v925, %v923
      %v1404 = vpack.c.b16 %v926, %v924
      %v1405 = vpack.c.b16 %v929, %v927
      %v1406 = vpack.c.b16 %v930, %v928
      %v1407 = vpack.c.b16 %v933, %v931
      %v1408 = vpack.c.b16 %v934, %v932
      %v1409 = vpack.c.b16 %v937, %v935
      %v1410 = vpack.c.b16 %v938, %v936
      %v1411 = vpack.c.b16 %v941, %v939
      %v1412 = vpack.c.b16 %v942, %v940
      %v1413 = vpack.c.b16 %v945, %v943
      %v1414 = vpack.c.b16 %v946, %v944
      %v1415 = vpack.c.b16 %v949, %v947
      %v1416 = vpack.c.b16 %v950, %v948
      %v1417 = vpack.c.b16 %v953, %v951
      %v1418 = vpack.c.b16 %v954, %v952
      %v1419 = vpack.c.b16 %v957, %v955
      %v1420 = vpack.c.b16 %v958, %v956
      %v1421 = vpack.c.b16 %v961, %v959
      %v1422 = vpack.c.b16 %v962, %v960
      %v1423 = vpack.c.b16 %v965, %v963
      %v1424 = vpack.c.b16 %v966, %v964
      %v1425 = vpack.c.b16 %v969, %v967
      %v1426 = vpack.c.b16 %v970, %v968
      %v1427 = vpack.c.b16 %v973, %v971
      %v1428 = vpack.c.b16 %v974, %v972
      %v1429 = vpack.c.b16 %v977, %v975
      %v1430 = vpack.c.b16 %v978, %v976
      %v1431 = vpack.c.b16 %v981, %v979
      %v1432 = vpack.c.b16 %v982, %v980
      %v1433 = vpack.c.b16 %v985, %v983
      %v1434 = vpack.c.b16 %v986, %v984
      %v1435 = vpack.c.b16 %v989, %v987
      %v1436 = vpack.c.b16 %v990, %v988
      %v1437 = vpack.c.b16 %v993, %v991
      %v1438 = vpack.c.b16 %v994, %v992
      %v1439 = vpack.c.b16 %v997, %v995
      %v1440 = vpack.c.b16 %v998, %v996
      %v1441 = vpack.c.b16 %v1001, %v999
      %v1442 = vpack.c.b16 %v1002, %v1000
      %v1443 = vpack.c.b16 %v1005, %v1003
      %v1444 = vpack.c.b16 %v1006, %v1004
      %v1445 = vpack.c.b16 %v1009, %v1007
      %v1446 = vpack.c.b16 %v1010, %v1008
      %v1447 = vpack.c.b16 %v1013, %v1011
      %v1448 = vpack.c.b16 %v1014, %v1012
      %v1449 = vpack.c.b16 %v1017, %v1015
      %v1450 = vpack.c.b16 %v1018, %v1016
      %v1451 = vpack.c.b16 %v1021, %v1019
      %v1452 = vpack.c.b16 %v1022, %v1020
      %v1453 = vpack.c.b16 %v1025, %v1023
      %v1454 = vpack.c.b16 %v1026, %v1024
      %v1455 = vpack.c.b16 %v1029, %v1027
      %v1456 = vpack.c.b16 %v1030, %v1028
      %v1457 = vpack.c.b16 %v1033, %v1031
      %v1458 = vpack.c.b16 %v1034, %v1032
      %v1459 = vpack.c.b16 %v1037, %v1035
      %v1460 = vpack.c.b16 %v1038, %v1036
      %v1461 = vpack.c.b16 %v1041, %v1039
      %v1462 = vpack.c.b16 %v1042, %v1040
      %v1463 = vpack.c.b16 %v1045, %v1043
      %v1464 = vpack.c.b16 %v1046, %v1044
      %v1465 = vpack.c.b16 %v1049, %v1047
      %v1466 = vpack.c.b16 %v1050, %v1048
      %v1467 = vpack.c.b16 %v1053, %v1051
      %v1468 = vpack.c.b16 %v1054, %v1052
      %v1469 = vpack.c.b16 %v1057, %v1055
      %v1470 = vpack.c.b16 %v1058, %v1056
      %v1471 = vpack.c.b16 %v1061, %v1059
      %v1472 = vpack.c.b16 %v1062, %v1060
      %v1473 = vpack.c.b16 %v1065, %v1063
      %v1474 = vpack.c.b16 %v1066, %v1064
      %v1475 = vpack.c.b16 %v1069, %v1067
      %v1476 = vpack.c.b16 %v1070, %v1068
      %v1477 = vpack.c.b16 %v1073, %v1071
      %v1478 = vpack.c.b16 %v1074, %v1072
      %v1479 = vpack.c.b16 %v1077, %v1075
      %v1480 = vpack.c.b16 %v1078, %v1076
      %v1481 = vpack.c.b16 %v1081, %v1079
      %v1482 = vpack.c.b16 %v1082, %v1080
      %v1483 = vpack.c.b16 %v1085, %v1083
      %v1484 = vpack.c.b16 %v1086, %v1084
      %v1485 = vpack.c.b16 %v1089, %v1087
      %v1486 = vpack.c.b16 %v1090, %v1088
      %v1487 = vpack.c.b16 %v1093, %v1091
      %v1488 = vpack.c.b16 %v1094, %v1092
      %v1489 = vpack.c.b16 %v1097, %v1095
      %v1490 = vpack.c.b16 %v1098, %v1096
      %v1491 = vpack.c.b16 %v1101, %v1099
      %v1492 = vpack.c.b16 %v1102, %v1100
      %v1493 = vpack.c.b16 %v1105, %v1103
      %v1494 = vpack.c.b16 %v1106, %v1104
      %v1495 = vpack.c.b16 %v1109, %v1107
      %v1496 = vpack.c.b16 %v1110, %v1108
      %v1497 = vpack.c.b16 %v1113, %v1111
      %v1498 = vpack.c.b16 %v1114, %v1112
      %v1499 = vpack.c.b16 %v1117, %v1115
      %v1500 = vpack.c.b16 %v1118, %v1116
      %v1501 = vpack.c.b16 %v1121, %v1119
      %v1502 = vpack.c.b16 %v1122, %v1120
      %v1503 = vpack.c.b16 %v1125, %v1123
      %v1504 = vpack.c.b16 %v1126, %v1124
      %v1505 = vpack.c.b16 %v1129, %v1127
      %v1506 = vpack.c.b16 %v1130, %v1128
      %v1507 = vpack.c.b16 %v1133, %v1131
      %v1508 = vpack.c.b16 %v1134, %v1132
      %v1509 = vpack.c.b16 %v1137, %v1135
      %v1510 = vpack.c.b16 %v1138, %v1136
      %v1511 = vpack.c.b16 %v1141, %v1139
      %v1512 = vpack.c.b16 %v1142, %v1140
      %v1513 = vpack.c.b16 %v1145, %v1143
      %v1514 = vpack.c.b16 %v1146, %v1144
      %v1515 = vpack.c.b16 %v1149, %v1147
      %v1516 = vpack.c.b16 %v1150, %v1148
      %v1517 = vpack.c.b16 %v1153, %v1151
      %v1518 = vpack.c.b16 %v1154, %v1152
      %v1519 = vpack.c.b16 %v1157, %v1155
      %v1520 = vpack.c.b16 %v1158, %v1156
      %v1521 = vpack.c.b16 %v1161, %v1159
      %v1522 = vpack.c.b16 %v1162, %v1160
      %v1523 = vpack.c.b16 %v1165, %v1163
      %v1524 = vpack.c.b16 %v1166, %v1164
      %v1525 = vpack.c.b16 %v1169, %v1167
      %v1526 = vpack.c.b16 %v1170, %v1168
      %v1527 = vpack.c.b16 %v1173, %v1171
      %v1528 = vpack.c.b16 %v1174, %v1172
      %v1529 = vpack.c.b16 %v1177, %v1175
      %v1530 = vpack.c.b16 %v1178, %v1176
      %v1531 = vpack.c.b16 %v1181, %v1179
      %v1532 = vpack.c.b16 %v1182, %v1180
      %v1533 = vpack.c.b16 %v1185, %v1183
      %v1534 = vpack.c.b16 %v1186, %v1184
      %v1535 = vpack.c.b16 %v1189, %v1187
      %v1536 = vpack.c.b16 %v1190, %v1188
      %v1537 = vpack.c.b16 %v1193, %v1191
      %v1538 = vpack.c.b16 %v1194, %v1192
      %v1539 = vpack.c.b16 %v1197, %v1195
      %v1540 = vpack.c.b16 %v1198, %v1196
      %v1541 = vpack.c.b16 %v1201, %v1199
      %v1542 = vpack.c.b16 %v1202, %v1200
      %v1543 = vpack.c.b16 %v1205, %v1203
      %v1544 = vpack.c.b16 %v1206, %v1204
      %v1545 = vpack.c.b16 %v1209, %v1207
      %v1546 = vpack.c.b16 %v1210, %v1208
      %v1547 = vpack.c.b16 %v1213, %v1211
      %v1548 = vpack.c.b16 %v1214, %v1212
      %v1549 = vpack.c.b16 %v1217, %v1215
      %v1550 = vpack.c.b16 %v1218, %v1216
      %v1551 = vpack.c.b16 %v1221, %v1219
      %v1552 = vpack.c.b16 %v1222, %v1220
      %v1553 = vpack.c.b16 %v1225, %v1223
      %v1554 = vpack.c.b16 %v1226, %v1224
      %v1555 = vpack.c.b16 %v1229, %v1227
      %v1556 = vpack.c.b16 %v1230, %v1228
      %v1557 = vpack.c.b16 %v1233, %v1231
      %v1558 = vpack.c.b16 %v1234, %v1232
      %v1559 = vpack.c.b16 %v1237, %v1235
      %v1560 = vpack.c.b16 %v1238, %v1236
      %v1561 = vpack.c.b16 %v1241, %v1239
      %v1562 = vpack.c.b16 %v1242, %v1240
      %v1563 = vpack.c.b16 %v1245, %v1243
      %v1564 = vpack.c.b16 %v1246, %v1244
      %v1565 = vpack.c.b16 %v1249, %v1247
      %v1566 = vpack.c.b16 %v1250, %v1248
      %v1567 = vpack.c.b16 %v1253, %v1251
      %v1568 = vpack.c.b16 %v1254, %v1252
      %v1569 = vpack.c.b16 %v1257, %v1255
      %v1570 = vpack.c.b16 %v1258, %v1256
      %v1571 = vpack.c.b16 %v1261, %v1259
      %v1572 = vpack.c.b16 %v1262, %v1260
      %v1573 = vpack.c.b16 %v1265, %v1263
      %v1574 = vpack.c.b16 %v1266, %v1264
      %v1575 = vpack.c.b16 %v1269, %v1267
      %v1576 = vpack.c.b16 %v1270, %v1268
      %v1577 = vpack.c.b16 %v1273, %v1271
      %v1578 = vpack.c.b16 %v1274, %v1272
      %v1579 = vpack.c.b16 %v1277, %v1275
      %v1580 = vpack.c.b16 %v1278, %v1276
      %v1581 = vpack.c.b16 %v1281, %v1279
      %v1582 = vpack.c.b16 %v1282, %v1280
      %v1583 = vpack.c.b16 %v1285, %v1283
      %v1584 = vpack.c.b16 %v1286, %v1284
      %v1585 = vpack.c.b16 %v1289, %v1287
      %v1586 = vpack.c.b16 %v1290, %v1288
      %v1587 = vpack.c.b16 %v1293, %v1291
      %v1588 = vpack.c.b16 %v1294, %v1292
      %v1589 = vpack.c.b16 %v1297, %v1295
      %v1590 = vpack.c.b16 %v1298, %v1296
      %v1591 = vpack.c.b16 %v1301, %v1299
      %v1592 = vpack.c.b16 %v1302, %v1300
      %v1593 = vpack.c.b16 %v1305, %v1303
      %v1594 = vpack.c.b16 %v1306, %v1304
      %v1595 = vpack.c.b16 %v1309, %v1307
      %v1596 = vpack.c.b16 %v1310, %v1308
      %v1597 = vpack.c.b16 %v1313, %v1311
      %v1598 = vpack.c.b16 %v1314, %v1312
      %v1599 = vpack.c.b16 %v1317, %v1315
      %v1600 = vpack.c.b16 %v1318, %v1316
      %v1601 = vpack.c.b16 %v1321, %v1319
      %v1602 = vpack.c.b16 %v1322, %v1320
      %v1603 = vpack.c.b16 %v1325, %v1323
      %v1604 = vpack.c.b16 %v1326, %v1324
      %v1605 = vpack.c.b16 %v1329, %v1327
      %v1606 = vpack.c.b16 %v1330, %v1328
      %v1607 = vpack.c.b16 %v1333, %v1331
      %v1608 = vpack.c.b16 %v1334, %v1332
      %v1609 = vpack.c.b16 %v1337, %v1335
      %v1610 = vpack.c.b16 %v1338, %v1336
      %v1611 = vpack.c.b16 %v1341, %v1339
      %v1612 = vpack.c.b16 %v1342, %v1340
      %v1613 = vpack.c.b16 %v1345, %v1343
      %v1614 = vpack.c.b16 %v1346, %v1344
      %v1615 = vpack.c.b16 %v1349, %v1347
      %v1616 = vpack.c.b16 %v1350, %v1348
      %v1617 = vpack.c.b16 %v1353, %v1351
      %v1618 = vpack.c.b16 %v1354, %v1352
      %v1619 = vpack.c.b16 %v1357, %v1355
      %v1620 = vpack.c.b16 %v1358, %v1356
      %v1621 = vpack.c.b16 %v1361, %v1359
      %v1622 = vpack.c.b16 %v1362, %v1360
      %v1623 = vpack.c.b16 %v1365, %v1363
      %v1624 = vpack.c.b16 %v1366, %v1364
      %v1625 = vpack.c.b16 %v1369, %v1367
      %v1626 = vpack.c.b16 %v1370, %v1368
      %1883 = vmatprep.subr.bf16.mxu0 %v1372
      %1884 = vmatpush1.bf16.msra.mxu0 %v1371
      %1885 = vmatprep.subr.bf16.mxu0 %v1374
      %1886 = vmatpush1.bf16.msra.mxu0 %v1373
      %1887 = vmatprep.subr.bf16.mxu0 %v1376
      %1888 = vmatpush1.bf16.msra.mxu0 %v1375
      %1889 = vmatprep.subr.bf16.mxu0 %v1378
      %1890 = vmatpush1.bf16.msra.mxu0 %v1377
      %1891 = vmatprep.subr.bf16.mxu0 %v1380
      %1892 = vmatpush1.bf16.msra.mxu0 %v1379
      %1893 = vmatprep.subr.bf16.mxu0 %v1382
      %1894 = vmatpush1.bf16.msra.mxu0 %v1381
      %1895 = vmatprep.subr.bf16.mxu0 %v1384
      %1896 = vmatpush1.bf16.msra.mxu0 %v1383
      %1897 = vmatprep.subr.bf16.mxu0 %v1386
      %1898 = vmatpush1.bf16.msra.mxu0 %v1385
      %1899 = vmatprep.subr.bf16.mxu0 %v1388
      %1900 = vmatpush1.bf16.msra.mxu0 %v1387
      %1901 = vmatprep.subr.bf16.mxu0 %v1390
      %1902 = vmatpush1.bf16.msra.mxu0 %v1389
      %1903 = vmatprep.subr.bf16.mxu0 %v1392
      %1904 = vmatpush1.bf16.msra.mxu0 %v1391
      %1905 = vmatprep.subr.bf16.mxu0 %v1394
      %1906 = vmatpush1.bf16.msra.mxu0 %v1393
      %1907 = vmatprep.subr.bf16.mxu0 %v1396
      %1908 = vmatpush1.bf16.msra.mxu0 %v1395
      %1909 = vmatprep.subr.bf16.mxu0 %v1398
      %1910 = vmatpush1.bf16.msra.mxu0 %v1397
      %1911 = vmatprep.subr.bf16.mxu0 %v1400
      %1912 = vmatpush1.bf16.msra.mxu0 %v1399
      %1913 = vmatprep.subr.bf16.mxu0 %v1402
      %1914 = vmatpush1.bf16.msra.mxu0 %v1401
      %1915 = vmatprep.mubr.bf16.mxu0 %v572
      %1916 = vmatmul.mubr.bf16.gmra.mrb[0].mxu0 %v571
      %v1917 = vpop.f32.mrb[0].mxu0
      %v1918 = vadd.f32 0.0, %v1917
      %v1919 = vpop.f32.mrb[0].mxu0
      %v1920 = vadd.f32 0.0, %v1919
      %v1921 = vpop.f32.mrb[0].mxu0
      %v1922 = vadd.f32 0.0, %v1921
      %v1923 = vpop.f32.mrb[0].mxu0
      %v1924 = vadd.f32 0.0, %v1923
      %1925 = vdwg.mxu0
      %1926 = vmatprep.subr.bf16.mxu0 %v1404
      %1927 = vmatpush1.bf16.msra.mxu0 %v1403
      %1928 = vmatprep.subr.bf16.mxu0 %v1406
      %1929 = vmatpush1.bf16.msra.mxu0 %v1405
      %1930 = vmatprep.subr.bf16.mxu0 %v1408
      %1931 = vmatpush1.bf16.msra.mxu0 %v1407
      %1932 = vmatprep.subr.bf16.mxu0 %v1410
      %1933 = vmatpush1.bf16.msra.mxu0 %v1409
      %1934 = vmatprep.subr.bf16.mxu0 %v1412
      %1935 = vmatpush1.bf16.msra.mxu0 %v1411
      %1936 = vmatprep.subr.bf16.mxu0 %v1414
      %1937 = vmatpush1.bf16.msra.mxu0 %v1413
      %1938 = vmatprep.subr.bf16.mxu0 %v1416
      %1939 = vmatpush1.bf16.msra.mxu0 %v1415
      %1940 = vmatprep.subr.bf16.mxu0 %v1418
      %1941 = vmatpush1.bf16.msra.mxu0 %v1417
      %1942 = vmatprep.subr.bf16.mxu0 %v1420
      %1943 = vmatpush1.bf16.msra.mxu0 %v1419
      %1944 = vmatprep.subr.bf16.mxu0 %v1422
      %1945 = vmatpush1.bf16.msra.mxu0 %v1421
      %1946 = vmatprep.subr.bf16.mxu0 %v1424
      %1947 = vmatpush1.bf16.msra.mxu0 %v1423
      %1948 = vmatprep.subr.bf16.mxu0 %v1426
      %1949 = vmatpush1.bf16.msra.mxu0 %v1425
      %1950 = vmatprep.subr.bf16.mxu0 %v1428
      %1951 = vmatpush1.bf16.msra.mxu0 %v1427
      %1952 = vmatprep.subr.bf16.mxu0 %v1430
      %1953 = vmatpush1.bf16.msra.mxu0 %v1429
      %1954 = vmatprep.subr.bf16.mxu0 %v1432
      %1955 = vmatpush1.bf16.msra.mxu0 %v1431
      %1956 = vmatprep.subr.bf16.mxu0 %v1434
      %1957 = vmatpush1.bf16.msra.mxu0 %v1433
      %1958 = vmatprep.mubr.bf16.mxu0 %v574
      %1959 = vmatmul.mubr.bf16.gmra.mrb[0].mxu0 %v573
      %v1960 = vpop.f32.mrb[0].mxu0
      %v1961 = vadd.f32 %v1918, %v1960
      %v1962 = vpop.f32.mrb[0].mxu0
      %v1963 = vadd.f32 %v1920, %v1962
      %v1964 = vpop.f32.mrb[0].mxu0
      %v1965 = vadd.f32 %v1922, %v1964
      %v1966 = vpop.f32.mrb[0].mxu0
      %v1967 = vadd.f32 %v1924, %v1966
      %1968 = vdwg.mxu0
      %1969 = vmatprep.subr.bf16.mxu0 %v1436
      %1970 = vmatpush1.bf16.msra.mxu0 %v1435
      %1971 = vmatprep.subr.bf16.mxu0 %v1438
      %1972 = vmatpush1.bf16.msra.mxu0 %v1437
      %1973 = vmatprep.subr.bf16.mxu0 %v1440
      %1974 = vmatpush1.bf16.msra.mxu0 %v1439
      %1975 = vmatprep.subr.bf16.mxu0 %v1442
      %1976 = vmatpush1.bf16.msra.mxu0 %v1441
      %1977 = vmatprep.subr.bf16.mxu0 %v1444
      %1978 = vmatpush1.bf16.msra.mxu0 %v1443
      %1979 = vmatprep.subr.bf16.mxu0 %v1446
      %1980 = vmatpush1.bf16.msra.mxu0 %v1445
      %1981 = vmatprep.subr.bf16.mxu0 %v1448
      %1982 = vmatpush1.bf16.msra.mxu0 %v1447
      %1983 = vmatprep.subr.bf16.mxu0 %v1450
      %1984 = vmatpush1.bf16.msra.mxu0 %v1449
      %1985 = vmatprep.subr.bf16.mxu0 %v1452
      %1986 = vmatpush1.bf16.msra.mxu0 %v1451
      %1987 = vmatprep.subr.bf16.mxu0 %v1454
      %1988 = vmatpush1.bf16.msra.mxu0 %v1453
      %1989 = vmatprep.subr.bf16.mxu0 %v1456
      %1990 = vmatpush1.bf16.msra.mxu0 %v1455
      %1991 = vmatprep.subr.bf16.mxu0 %v1458
      %1992 = vmatpush1.bf16.msra.mxu0 %v1457
      %1993 = vmatprep.subr.bf16.mxu0 %v1460
      %1994 = vmatpush1.bf16.msra.mxu0 %v1459
      %1995 = vmatprep.subr.bf16.mxu0 %v1462
      %1996 = vmatpush1.bf16.msra.mxu0 %v1461
      %1997 = vmatprep.subr.bf16.mxu0 %v1464
      %1998 = vmatpush1.bf16.msra.mxu0 %v1463
      %1999 = vmatprep.subr.bf16.mxu0 %v1466
      %2000 = vmatpush1.bf16.msra.mxu0 %v1465
      %2001 = vmatprep.mubr.bf16.mxu0 %v576
      %2002 = vmatmul.mubr.bf16.gmra.mrb[0].mxu0 %v575
      %v2003 = vpop.f32.mrb[0].mxu0
      %v2004 = vadd.f32 %v1961, %v2003
      %v2005 = vpop.f32.mrb[0].mxu0
      %v2006 = vadd.f32 %v1963, %v2005
      %v2007 = vpop.f32.mrb[0].mxu0
      %v2008 = vadd.f32 %v1965, %v2007
      %v2009 = vpop.f32.mrb[0].mxu0
      %v2010 = vadd.f32 %v1967, %v2009
      %2011 = vdwg.mxu0
      %2012 = vmatprep.subr.bf16.mxu0 %v1468
      %2013 = vmatpush1.bf16.msra.mxu0 %v1467
      %2014 = vmatprep.subr.bf16.mxu0 %v1470
      %2015 = vmatpush1.bf16.msra.mxu0 %v1469
      %2016 = vmatprep.subr.bf16.mxu0 %v1472
      %2017 = vmatpush1.bf16.msra.mxu0 %v1471
      %2018 = vmatprep.subr.bf16.mxu0 %v1474
      %2019 = vmatpush1.bf16.msra.mxu0 %v1473
      %2020 = vmatprep.subr.bf16.mxu0 %v1476
      %2021 = vmatpush1.bf16.msra.mxu0 %v1475
      %2022 = vmatprep.subr.bf16.mxu0 %v1478
      %2023 = vmatpush1.bf16.msra.mxu0 %v1477
      %2024 = vmatprep.subr.bf16.mxu0 %v1480
      %2025 = vmatpush1.bf16.msra.mxu0 %v1479
      %2026 = vmatprep.subr.bf16.mxu0 %v1482
      %2027 = vmatpush1.bf16.msra.mxu0 %v1481
      %2028 = vmatprep.subr.bf16.mxu0 %v1484
      %2029 = vmatpush1.bf16.msra.mxu0 %v1483
      %2030 = vmatprep.subr.bf16.mxu0 %v1486
      %2031 = vmatpush1.bf16.msra.mxu0 %v1485
      %2032 = vmatprep.subr.bf16.mxu0 %v1488
      %2033 = vmatpush1.bf16.msra.mxu0 %v1487
      %2034 = vmatprep.subr.bf16.mxu0 %v1490
      %2035 = vmatpush1.bf16.msra.mxu0 %v1489
      %2036 = vmatprep.subr.bf16.mxu0 %v1492
      %2037 = vmatpush1.bf16.msra.mxu0 %v1491
      %2038 = vmatprep.subr.bf16.mxu0 %v1494
      %2039 = vmatpush1.bf16.msra.mxu0 %v1493
      %2040 = vmatprep.subr.bf16.mxu0 %v1496
      %2041 = vmatpush1.bf16.msra.mxu0 %v1495
      %2042 = vmatprep.subr.bf16.mxu0 %v1498
      %2043 = vmatpush1.bf16.msra.mxu0 %v1497
      %2044 = vmatprep.mubr.bf16.mxu0 %v578
      %2045 = vmatmul.mubr.bf16.gmra.mrb[0].mxu0 %v577
      %v2046 = vpop.f32.mrb[0].mxu0
      %v2047 = vadd.f32 %v2004, %v2046
      %v2048 = vpop.f32.mrb[0].mxu0
      %v2049 = vadd.f32 %v2006, %v2048
      %v2050 = vpop.f32.mrb[0].mxu0
      %v2051 = vadd.f32 %v2008, %v2050
      %v2052 = vpop.f32.mrb[0].mxu0
      %v2053 = vadd.f32 %v2010, %v2052
      %2054 = vdwg.mxu0
      %2055 = vmatprep.subr.bf16.mxu0 %v1500
      %2056 = vmatpush1.bf16.msra.mxu0 %v1499
      %2057 = vmatprep.subr.bf16.mxu0 %v1502
      %2058 = vmatpush1.bf16.msra.mxu0 %v1501
      %2059 = vmatprep.subr.bf16.mxu0 %v1504
      %2060 = vmatpush1.bf16.msra.mxu0 %v1503
      %2061 = vmatprep.subr.bf16.mxu0 %v1506
      %2062 = vmatpush1.bf16.msra.mxu0 %v1505
      %2063 = vmatprep.subr.bf16.mxu0 %v1508
      %2064 = vmatpush1.bf16.msra.mxu0 %v1507
      %2065 = vmatprep.subr.bf16.mxu0 %v1510
      %2066 = vmatpush1.bf16.msra.mxu0 %v1509
      %2067 = vmatprep.subr.bf16.mxu0 %v1512
      %2068 = vmatpush1.bf16.msra.mxu0 %v1511
      %2069 = vmatprep.subr.bf16.mxu0 %v1514
      %2070 = vmatpush1.bf16.msra.mxu0 %v1513
      %2071 = vmatprep.subr.bf16.mxu0 %v1516
      %2072 = vmatpush1.bf16.msra.mxu0 %v1515
      %2073 = vmatprep.subr.bf16.mxu0 %v1518
      %2074 = vmatpush1.bf16.msra.mxu0 %v1517
      %2075 = vmatprep.subr.bf16.mxu0 %v1520
      %2076 = vmatpush1.bf16.msra.mxu0 %v1519
      %2077 = vmatprep.subr.bf16.mxu0 %v1522
      %2078 = vmatpush1.bf16.msra.mxu0 %v1521
      %2079 = vmatprep.subr.bf16.mxu0 %v1524
      %2080 = vmatpush1.bf16.msra.mxu0 %v1523
      %2081 = vmatprep.subr.bf16.mxu0 %v1526
      %2082 = vmatpush1.bf16.msra.mxu0 %v1525
      %2083 = vmatprep.subr.bf16.mxu0 %v1528
      %2084 = vmatpush1.bf16.msra.mxu0 %v1527
      %2085 = vmatprep.subr.bf16.mxu0 %v1530
      %2086 = vmatpush1.bf16.msra.mxu0 %v1529
      %2087 = vmatprep.mubr.bf16.mxu0 %v580
      %2088 = vmatmul.mubr.bf16.gmra.mrb[0].mxu0 %v579
      %v2089 = vpop.f32.mrb[0].mxu0
      %v2090 = vadd.f32 %v2047, %v2089
      %v2091 = vpop.f32.mrb[0].mxu0
      %v2092 = vadd.f32 %v2049, %v2091
      %v2093 = vpop.f32.mrb[0].mxu0
      %v2094 = vadd.f32 %v2051, %v2093
      %v2095 = vpop.f32.mrb[0].mxu0
      %v2096 = vadd.f32 %v2053, %v2095
      %2097 = vdwg.mxu0
      %2098 = vmatprep.subr.bf16.mxu0 %v1532
      %2099 = vmatpush1.bf16.msra.mxu0 %v1531
      %2100 = vmatprep.subr.bf16.mxu0 %v1534
      %2101 = vmatpush1.bf16.msra.mxu0 %v1533
      %2102 = vmatprep.subr.bf16.mxu0 %v1536
      %2103 = vmatpush1.bf16.msra.mxu0 %v1535
      %2104 = vmatprep.subr.bf16.mxu0 %v1538
      %2105 = vmatpush1.bf16.msra.mxu0 %v1537
      %2106 = vmatprep.subr.bf16.mxu0 %v1540
      %2107 = vmatpush1.bf16.msra.mxu0 %v1539
      %2108 = vmatprep.subr.bf16.mxu0 %v1542
      %2109 = vmatpush1.bf16.msra.mxu0 %v1541
      %2110 = vmatprep.subr.bf16.mxu0 %v1544
      %2111 = vmatpush1.bf16.msra.mxu0 %v1543
      %2112 = vmatprep.subr.bf16.mxu0 %v1546
      %2113 = vmatpush1.bf16.msra.mxu0 %v1545
      %2114 = vmatprep.subr.bf16.mxu0 %v1548
      %2115 = vmatpush1.bf16.msra.mxu0 %v1547
      %2116 = vmatprep.subr.bf16.mxu0 %v1550
      %2117 = vmatpush1.bf16.msra.mxu0 %v1549
      %2118 = vmatprep.subr.bf16.mxu0 %v1552
      %2119 = vmatpush1.bf16.msra.mxu0 %v1551
      %2120 = vmatprep.subr.bf16.mxu0 %v1554
      %2121 = vmatpush1.bf16.msra.mxu0 %v1553
      %2122 = vmatprep.subr.bf16.mxu0 %v1556
      %2123 = vmatpush1.bf16.msra.mxu0 %v1555
      %2124 = vmatprep.subr.bf16.mxu0 %v1558
      %2125 = vmatpush1.bf16.msra.mxu0 %v1557
      %2126 = vmatprep.subr.bf16.mxu0 %v1560
      %2127 = vmatpush1.bf16.msra.mxu0 %v1559
      %2128 = vmatprep.subr.bf16.mxu0 %v1562
      %2129 = vmatpush1.bf16.msra.mxu0 %v1561
      %2130 = vmatprep.mubr.bf16.mxu0 %v582
      %2131 = vmatmul.mubr.bf16.gmra.mrb[0].mxu0 %v581
      %v2132 = vpop.f32.mrb[0].mxu0
      %v2133 = vadd.f32 %v2090, %v2132
      %v2134 = vpop.f32.mrb[0].mxu0
      %v2135 = vadd.f32 %v2092, %v2134
      %v2136 = vpop.f32.mrb[0].mxu0
      %v2137 = vadd.f32 %v2094, %v2136
      %v2138 = vpop.f32.mrb[0].mxu0
      %v2139 = vadd.f32 %v2096, %v2138
      %2140 = vdwg.mxu0
      %2141 = vmatprep.subr.bf16.mxu0 %v1564
      %2142 = vmatpush1.bf16.msra.mxu0 %v1563
      %2143 = vmatprep.subr.bf16.mxu0 %v1566
      %2144 = vmatpush1.bf16.msra.mxu0 %v1565
      %2145 = vmatprep.subr.bf16.mxu0 %v1568
      %2146 = vmatpush1.bf16.msra.mxu0 %v1567
      %2147 = vmatprep.subr.bf16.mxu0 %v1570
      %2148 = vmatpush1.bf16.msra.mxu0 %v1569
      %2149 = vmatprep.subr.bf16.mxu0 %v1572
      %2150 = vmatpush1.bf16.msra.mxu0 %v1571
      %2151 = vmatprep.subr.bf16.mxu0 %v1574
      %2152 = vmatpush1.bf16.msra.mxu0 %v1573
      %2153 = vmatprep.subr.bf16.mxu0 %v1576
      %2154 = vmatpush1.bf16.msra.mxu0 %v1575
      %2155 = vmatprep.subr.bf16.mxu0 %v1578
      %2156 = vmatpush1.bf16.msra.mxu0 %v1577
      %2157 = vmatprep.subr.bf16.mxu0 %v1580
      %2158 = vmatpush1.bf16.msra.mxu0 %v1579
      %2159 = vmatprep.subr.bf16.mxu0 %v1582
      %2160 = vmatpush1.bf16.msra.mxu0 %v1581
      %2161 = vmatprep.subr.bf16.mxu0 %v1584
      %2162 = vmatpush1.bf16.msra.mxu0 %v1583
      %2163 = vmatprep.subr.bf16.mxu0 %v1586
      %2164 = vmatpush1.bf16.msra.mxu0 %v1585
      %2165 = vmatprep.subr.bf16.mxu0 %v1588
      %2166 = vmatpush1.bf16.msra.mxu0 %v1587
      %2167 = vmatprep.subr.bf16.mxu0 %v1590
      %2168 = vmatpush1.bf16.msra.mxu0 %v1589
      %2169 = vmatprep.subr.bf16.mxu0 %v1592
      %2170 = vmatpush1.bf16.msra.mxu0 %v1591
      %2171 = vmatprep.subr.bf16.mxu0 %v1594
      %2172 = vmatpush1.bf16.msra.mxu0 %v1593
      %2173 = vmatprep.mubr.bf16.mxu0 %v584
      %2174 = vmatmul.mubr.bf16.gmra.mrb[0].mxu0 %v583
      %v2175 = vpop.f32.mrb[0].mxu0
      %v2176 = vadd.f32 %v2133, %v2175
      %v2177 = vpop.f32.mrb[0].mxu0
      %v2178 = vadd.f32 %v2135, %v2177
      %v2179 = vpop.f32.mrb[0].mxu0
      %v2180 = vadd.f32 %v2137, %v2179
      %v2181 = vpop.f32.mrb[0].mxu0
      %v2182 = vadd.f32 %v2139, %v2181
      %2183 = vdwg.mxu0
      %2184 = vmatprep.subr.bf16.mxu0 %v1596
      %2185 = vmatpush1.bf16.msra.mxu0 %v1595
      %2186 = vmatprep.subr.bf16.mxu0 %v1598
      %2187 = vmatpush1.bf16.msra.mxu0 %v1597
      %2188 = vmatprep.subr.bf16.mxu0 %v1600
      %2189 = vmatpush1.bf16.msra.mxu0 %v1599
      %2190 = vmatprep.subr.bf16.mxu0 %v1602
      %2191 = vmatpush1.bf16.msra.mxu0 %v1601
      %2192 = vmatprep.subr.bf16.mxu0 %v1604
      %2193 = vmatpush1.bf16.msra.mxu0 %v1603
      %2194 = vmatprep.subr.bf16.mxu0 %v1606
      %2195 = vmatpush1.bf16.msra.mxu0 %v1605
      %2196 = vmatprep.subr.bf16.mxu0 %v1608
      %2197 = vmatpush1.bf16.msra.mxu0 %v1607
      %2198 = vmatprep.subr.bf16.mxu0 %v1610
      %2199 = vmatpush1.bf16.msra.mxu0 %v1609
      %2200 = vmatprep.subr.bf16.mxu0 %v1612
      %2201 = vmatpush1.bf16.msra.mxu0 %v1611
      %2202 = vmatprep.subr.bf16.mxu0 %v1614
      %2203 = vmatpush1.bf16.msra.mxu0 %v1613
      %2204 = vmatprep.subr.bf16.mxu0 %v1616
      %2205 = vmatpush1.bf16.msra.mxu0 %v1615
      %2206 = vmatprep.subr.bf16.mxu0 %v1618
      %2207 = vmatpush1.bf16.msra.mxu0 %v1617
      %2208 = vmatprep.subr.bf16.mxu0 %v1620
      %2209 = vmatpush1.bf16.msra.mxu0 %v1619
      %2210 = vmatprep.subr.bf16.mxu0 %v1622
      %2211 = vmatpush1.bf16.msra.mxu0 %v1621
      %2212 = vmatprep.subr.bf16.mxu0 %v1624
      %2213 = vmatpush1.bf16.msra.mxu0 %v1623
      %2214 = vmatprep.subr.bf16.mxu0 %v1626
      %2215 = vmatpush1.bf16.msra.mxu0 %v1625
      %2216 = vmatprep.mubr.bf16.mxu0 %v586
      %2217 = vmatmul.mubr.bf16.gmra.mrb[0].mxu0 %v585
      %v2218 = vpop.f32.mrb[0].mxu0
      %v2219 = vadd.f32 %v2176, %v2218
      %v2220 = vpop.f32.mrb[0].mxu0
      %v2221 = vadd.f32 %v2178, %v2220
      %v2222 = vpop.f32.mrb[0].mxu0
      %v2223 = vadd.f32 %v2180, %v2222
      %v2224 = vpop.f32.mrb[0].mxu0
      %v2225 = vadd.f32 %v2182, %v2224
      %2226 = vdwg.mxu0
      %v2227 = vpack.c.bf16 %v2223, %v2219
      %v2228 = vpack.c.bf16 %v2225, %v2221
      %v2231 = vunpack.c.l.b16 %v2227
      %v2232 = vunpack.c.l.b16 %v2228
      %v2233 = vunpack.c.h.b16 %v2227
      %v2234 = vunpack.c.h.b16 %v2228
      %v2235 = vpack.c.b16 %v2232, %v2231
      %v2236 = vpack.c.b16 %v2234, %v2233
      %2239 = vst [vmem:[%s240] sm:$0xff] %v2235
      %2240 = vst [vmem:[%s240 + $0x8] sm:$0xff] %v2236
      %p2241 = scmp.eq.s32.totalorder %s21, 0
      // Predicated region
      $region29: #{discriminator_forward.11} parent=27 // pred_check
        %p2242 = pneg %p2241
      $region30: #{discriminator_forward.11} parent=27 // pred_check_branch
        %2244 = sbr.rel (%p2242) target = $region32
      $region31: #{discriminator_forward.11} parent=27 // pred_region
        %v2245 = vlaneseq
        %vm2246 = vcmp.ge.s32.totalorder %v2245, 0
        %vm2247 = vcmp.lt.s32.totalorder %v2245, 256
        %vm2248 = vmand %vm2246, %vm2247
        %2249 = vst.msk [vmem:[%s246] sm:$0x3] %vm2248, 0.0
        %2250 = vst.msk [vmem:[%s250] sm:$0x3] %vm2248, 0.0
      $region32: #{discriminator_forward.11} parent=27 // pred_fallthru
        _
      %v2251 = vld [vmem:[%s246] sm:$0x3]
      %v2252 = vadd.f32 %v2219, %v2223
      %v2253 = vrot.slane %v2252, 4
      %v2254 = vadd.f32 %v2252, %v2253
      %v2255 = vrot.slane %v2254, 2
      %v2256 = vadd.f32 %v2254, %v2255
      %v2257 = vrot.slane %v2256, 1
      %v2258 = vadd.f32 %v2256, %v2257
      %v2259 = vadd.f32 %v2221, %v2225
      %v2260 = vrot.slane %v2259, 4
      %v2261 = vadd.f32 %v2259, %v2260
      %v2262 = vrot.slane %v2261, 2
      %v2263 = vadd.f32 %v2261, %v2262
      %v2264 = vrot.slane %v2263, 1
      %v2265 = vadd.f32 %v2263, %v2264
      %v2268 = vcombine.low %v2258, %v2265
      %v2270 = vunpack.c.l.s4 1966171168
      %v2271 = vunpack.c.0.s8 %v2270
      %v2272 = vlaneseq
      %v2273 = vshrl.u32 %v2272, 7
      %v2274 = vsub.s32 %v2271, %v2273
      %v2275 = vrot.slane %v2268, %v2274
      %v2277 = vunpack.c.l.s4 1966171168
      %v2278 = vunpack.c.0.s8 %v2277
      %v2279 = vlaneseq
      %v2280 = vshrl.u32 %v2279, 7
      %v2281 = vsub.s32 %v2278, %v2280
      %v2282 = vrot.slane %v2275, %v2281
      %v2284 = vadd.f32 %v2251, %v2282
      %v2285 = vlaneseq
      %vm2286 = vcmp.ge.s32.totalorder %v2285, 0
      %vm2287 = vcmp.lt.s32.totalorder %v2285, 256
      %vm2288 = vmand %vm2286, %vm2287
      %2289 = vst.msk [vmem:[%s246] sm:$0x3] %vm2288, %v2284
      %v2290 = vld [vmem:[%s250] sm:$0x3]
      %v2291 = vmul.f32 %v2219, %v2219
      %v2292 = vmul.f32 %v2221, %v2221
      %v2293 = vmul.f32 %v2223, %v2223
      %v2294 = vmul.f32 %v2225, %v2225
      %v2295 = vadd.f32 %v2291, %v2293
      %v2296 = vrot.slane %v2295, 4
      %v2297 = vadd.f32 %v2295, %v2296
      %v2298 = vrot.slane %v2297, 2
      %v2299 = vadd.f32 %v2297, %v2298
      %v2300 = vrot.slane %v2299, 1
      %v2301 = vadd.f32 %v2299, %v2300
      %v2302 = vadd.f32 %v2292, %v2294
      %v2303 = vrot.slane %v2302, 4
      %v2304 = vadd.f32 %v2302, %v2303
      %v2305 = vrot.slane %v2304, 2
      %v2306 = vadd.f32 %v2304, %v2305
      %v2307 = vrot.slane %v2306, 1
      %v2308 = vadd.f32 %v2306, %v2307
      %v2311 = vcombine.low %v2301, %v2308
      %v2313 = vunpack.c.l.s4 1966171168
      %v2314 = vunpack.c.0.s8 %v2313
      %v2315 = vlaneseq
      %v2316 = vshrl.u32 %v2315, 7
      %v2317 = vsub.s32 %v2314, %v2316
      %v2318 = vrot.slane %v2311, %v2317
      %v2320 = vunpack.c.l.s4 1966171168
      %v2321 = vunpack.c.0.s8 %v2320
      %v2322 = vlaneseq
      %v2323 = vshrl.u32 %v2322, 7
      %v2324 = vsub.s32 %v2321, %v2323
      %v2325 = vrot.slane %v2318, %v2324
      %v2327 = vadd.f32 %v2290, %v2325
      %2328 = vst.msk [vmem:[%s250] sm:$0x3] %vm2288, %v2327
      %s2329 = sadd.s32 %s20, %s21
      %s2330 = smul.u32 2, %s2329
      %p2331 = scmp.lt.s32.totalorder %s2330, 3
      %s2332 = scalar_select %p2331, %s2330, 3
      %s2333 = smul.addr %s2332, 2
      %s2334 = smul.addr %s2333, 4
      %s2335 = scalar_lea.vmem %s2, %s2334
      %p2336 = scmp.lt.s32.totalorder %s20, 1
      %s2337 = scalar_select %p2336, %s20, 1
      %s2338 = smul.addr %s2337, 2
      %s2339 = scalar_lea.vmem %s3, %s2338
      %p2340 = scmp.lt.s32.totalorder %s20, 1
      %s2341 = scalar_select %p2340, %s20, 1
      %s2342 = smul.addr %s2341, 2
      %s2343 = scalar_lea.vmem %s4, %s2342
      // Predicated region
      $region33: #{discriminator_forward.11} parent=27 // pred_check
        %p2344 = pneg %p97
      $region34: #{discriminator_forward.11} parent=27 // pred_check_branch
        %2346 = sbr.rel (%p2344) target = $region36
      $region35: #{discriminator_forward.11} parent=27 // pred_region
        %s2347 = sadd.s32 %s20, %s21
        %s2348 = smul.u32 2, %s2347
      $region36: #{discriminator_forward.11} parent=27 // pred_fallthru
        _
      // Predicated region
      $region37: #{discriminator_forward.11} parent=27 // pred_check
        %p2349 = pneg %p123
      $region38: #{discriminator_forward.11} parent=27 // pred_check_branch
        %2351 = sbr.rel (%p2349) target = $region40
      $region39: #{discriminator_forward.11} parent=27 // pred_region
        _
      $region40: #{discriminator_forward.11} parent=27 // pred_fallthru
        _
      // Predicated region
      $region41: #{discriminator_forward.11} parent=27 // pred_check
        %p2352 = pneg %p149
      $region42: #{discriminator_forward.11} parent=27 // pred_check_branch
        %2354 = sbr.rel (%p2352) target = $region44
      $region43: #{discriminator_forward.11} parent=27 // pred_region
        _
      $region44: #{discriminator_forward.11} parent=27 // pred_fallthru
        _
    $region28: #{discriminator_forward.11} parent=5 // pred_fallthru
      _
    %p2355 = scmp.le.s32.totalorder 2, %s11
    // Predicated region
    $region45: #{discriminator_forward.11} parent=5 // pred_check
      %p2356 = pneg %p2355
    $region46: #{discriminator_forward.11} parent=5 // pred_check_branch
      %2358 = sbr.rel (%p2356) target = $region48
    $region47: #{discriminator_forward.11} parent=5 // pred_region
      %s2359 = ssub.s32 %s11, 2
      // Predicated region
      $region49: #{discriminator_forward.11} parent=47 // pred_check
        %p2360 = pneg %p103
      $region50: #{discriminator_forward.11} parent=47 // pred_check_branch
        %2362 = sbr.rel (%p2360) target = $region52
      $region51: #{discriminator_forward.11} parent=47 // pred_region
        %s2363 = sadd.s32 %s22, %s23
        %s2364 = smul.u32 2, %s2363
        %p2365 = scmp.lt.s32.totalorder %s2364, 3
        %s2366 = scalar_select %p2365, %s2364, 3
        %s2367 = smul.addr %s2366, 2
        %s2368 = smul.addr %s2367, 4
        %s2369 = scalar_lea.vmem %s2, %s2368
      $region52: #{discriminator_forward.11} parent=47 // pred_fallthru
        _
      // Predicated region
      $region53: #{discriminator_forward.11} parent=47 // pred_check
        %p2370 = pneg %p129
      $region54: #{discriminator_forward.11} parent=47 // pred_check_branch
        %2372 = sbr.rel (%p2370) target = $region56
      $region55: #{discriminator_forward.11} parent=47 // pred_region
        %p2373 = scmp.lt.s32.totalorder %s22, 1
        %s2374 = scalar_select %p2373, %s22, 1
        %s2375 = smul.addr %s2374, 2
        %s2376 = scalar_lea.vmem %s3, %s2375
      $region56: #{discriminator_forward.11} parent=47 // pred_fallthru
        _
      // Predicated region
      $region57: #{discriminator_forward.11} parent=47 // pred_check
        %p2377 = pneg %p155
      $region58: #{discriminator_forward.11} parent=47 // pred_check_branch
        %2379 = sbr.rel (%p2377) target = $region60
      $region59: #{discriminator_forward.11} parent=47 // pred_region
        %p2380 = scmp.lt.s32.totalorder %s22, 1
        %s2381 = scalar_select %p2380, %s22, 1
        %s2382 = smul.addr %s2381, 2
        %s2383 = scalar_lea.vmem %s4, %s2382
      $region60: #{discriminator_forward.11} parent=47 // pred_fallthru
        _
    $region48: #{discriminator_forward.11} parent=5 // pred_fallthru
      _
  $region6: #{discriminator_forward.11} parent=0 // loop_footer
    %s15 = sadd.s32 1, %s11
  $region7: #{discriminator_forward.11} parent=0 // loop_footer_branch
    %10 = sbr.rel target = $region3
  $region8: #{discriminator_forward.11} parent=0 // loop_exit
    _

// kernel: discriminator_forward.14
$region0: #{discriminator_forward.14}
  #allocation0 [shape = 'u32[]', space=smem, size = 0x4, offset = 0x4, fixed_abs, tag = 'smem constant byte address 0x4 - core index']
  #allocation1 [shape = 'u32[144,128]{1,0:T(1,128)}', space=vmem, size = 0x12000, scoped, tag = 'internal scratch']
  %s0 = inlined_call_operand.vmem [shape: bf16[32,256], index: 0, kind: input, shape index: {}]
  %s1 = inlined_call_operand.vmem [shape: f32[1,256], index: 1, kind: input, shape index: {}]
  %s2 = inlined_call_operand.vmem [shape: f32[1,256], index: 2, kind: input, shape index: {}]
  %s3 = inlined_call_operand.vmem [shape: bf16[32,256], index: 3, kind: output, shape index: {}]
  %s4 = sld [smem:[#allocation0]]
  $region45: #{discriminator_forward.14} parent=0
    _
  %s6 = ssub.s32 1, %s4
  %s7 = scalar_select 0, %s6, %s4
  loop: start=0, step=1, limit=4
  $region2: #{discriminator_forward.14} parent=0 // loop_pre_header
    _
  $region3: #{discriminator_forward.14} parent=0 // loop_header
    %s9 = sphi 0, %s13
    %p10 = scmp.ge.s32.totalorder %s9, 4
    %s19 = sphi 0, %s21
    %s22 = sphi 0, %s19
    %s23 = sphi 0, %s22
    %s39 = sphi 0, %s23
    %s43 = sphi 0, %s43
    %s45 = sphi 0, %s43
    %s46 = sphi 0, %s45
    %s60 = sphi 0, %s46
    %s64 = sphi 0, %s64
    %s66 = sphi 0, %s64
    %s67 = sphi 0, %s66
    %s81 = sphi 0, %s67
    %s87 = sphi 0, %s89
    %s90 = sphi 0, %s87
    %s91 = sphi 0, %s90
    %s107 = sphi 0, %s91
  $region4: #{discriminator_forward.14} parent=0 // loop_header_branch
    %12 = sbr.rel (%p10) target = $region8
  $region5: #{discriminator_forward.14} parent=0 // loop_body
    %s14 = ssub.s32 %s9, 1
    %s15 = ssub.s32 %s9, 2
    %s16 = sadd.s32 %s9, 1
    %s17 = ssub.s32 %s9, %s16
    %p18 = scmp.eq.s32.totalorder %s17, 0
    %s20 = sadd.s32 %s19, 1
    %s21 = scalar_select %p18, %s19, %s20
    %p24 = pneg %p18
    %p25 = scmp.eq.s32.totalorder %s9, 1
    %p26 = por %p24, %p25
    %p27 = scmp.ne.s32.totalorder %s19, %s22
    %p28 = scmp.eq.s32.totalorder %s9, 0
    %p29 = por %p27, %p28
    %p30 = scmp.ne.s32.totalorder %s19, %s22
    %p31 = scmp.eq.s32.totalorder %s14, 1
    %p32 = por %p30, %p31
    %p33 = scmp.ne.s32.totalorder %s22, %s23
    %p34 = scmp.eq.s32.totalorder %s14, 0
    %p35 = por %p33, %p34
    %p36 = scmp.ne.s32.totalorder %s22, %s23
    %p37 = scmp.eq.s32.totalorder %s15, 1
    %p38 = por %p36, %p37
    %p40 = scmp.ne.s32.totalorder %s23, %s39
    %p41 = scmp.eq.s32.totalorder %s15, 0
    %p42 = por %p40, %p41
    %s44 = sadd.s32 %s43, 1
    %p47 = scmp.eq.s32.totalorder %s9, 1
    %p48 = scmp.ne.s32.totalorder %s43, %s45
    %p49 = scmp.eq.s32.totalorder %s9, 0
    %p50 = por %p48, %p49
    %p51 = scmp.ne.s32.totalorder %s43, %s45
    %p52 = scmp.eq.s32.totalorder %s14, 1
    %p53 = por %p51, %p52
    %p54 = scmp.ne.s32.totalorder %s45, %s46
    %p55 = scmp.eq.s32.totalorder %s14, 0
    %p56 = por %p54, %p55
    %p57 = scmp.ne.s32.totalorder %s45, %s46
    %p58 = scmp.eq.s32.totalorder %s15, 1
    %p59 = por %p57, %p58
    %p61 = scmp.ne.s32.totalorder %s46, %s60
    %p62 = scmp.eq.s32.totalorder %s15, 0
    %p63 = por %p61, %p62
    %s65 = sadd.s32 %s64, 1
    %p68 = scmp.eq.s32.totalorder %s9, 1
    %p69 = scmp.ne.s32.totalorder %s64, %s66
    %p70 = scmp.eq.s32.totalorder %s9, 0
    %p71 = por %p69, %p70
    %p72 = scmp.ne.s32.totalorder %s64, %s66
    %p73 = scmp.eq.s32.totalorder %s14, 1
    %p74 = por %p72, %p73
    %p75 = scmp.ne.s32.totalorder %s66, %s67
    %p76 = scmp.eq.s32.totalorder %s14, 0
    %p77 = por %p75, %p76
    %p78 = scmp.ne.s32.totalorder %s66, %s67
    %p79 = scmp.eq.s32.totalorder %s15, 1
    %p80 = por %p78, %p79
    %p82 = scmp.ne.s32.totalorder %s67, %s81
    %p83 = scmp.eq.s32.totalorder %s15, 0
    %p84 = por %p82, %p83
    %s85 = ssub.s32 %s9, %s16
    %p86 = scmp.eq.s32.totalorder %s85, 0
    %s88 = sadd.s32 %s87, 1
    %s89 = scalar_select %p86, %s87, %s88
    %p92 = pneg %p86
    %p93 = scmp.eq.s32.totalorder %s9, 1
    %p94 = por %p92, %p93
    %p95 = scmp.ne.s32.totalorder %s87, %s90
    %p96 = scmp.eq.s32.totalorder %s9, 0
    %p97 = por %p95, %p96
    %p98 = scmp.ne.s32.totalorder %s87, %s90
    %p99 = scmp.eq.s32.totalorder %s14, 1
    %p100 = por %p98, %p99
    %p101 = scmp.ne.s32.totalorder %s90, %s91
    %p102 = scmp.eq.s32.totalorder %s14, 0
    %p103 = por %p101, %p102
    %p104 = scmp.ne.s32.totalorder %s90, %s91
    %p105 = scmp.eq.s32.totalorder %s15, 1
    %p106 = por %p104, %p105
    %p108 = scmp.ne.s32.totalorder %s91, %s107
    %p109 = scmp.eq.s32.totalorder %s15, 0
    %p110 = por %p108, %p109
    %p111 = scmp.le.s32.totalorder 1, %s9
    %p112 = scmp.lt.s32.totalorder %s9, 3
    %p113 = pnand %p111, %p112
    %p114 = pneg %p113
    // Predicated region
    $region9: #{discriminator_forward.14} parent=5 // pred_check
      _
    $region10: #{discriminator_forward.14} parent=5 // pred_check_branch
      %116 = sbr.rel (%p113) target = $region12
    $region11: #{discriminator_forward.14} parent=5 // pred_region
      %s117 = ssub.s32 %s9, 1
      // Predicated region
      $region13: #{discriminator_forward.14} parent=11 // pred_check
        %p118 = pneg %p56
      $region14: #{discriminator_forward.14} parent=11 // pred_check_branch
        %120 = sbr.rel (%p118) target = $region16
      $region15: #{discriminator_forward.14} parent=11 // pred_region
        _
      $region16: #{discriminator_forward.14} parent=11 // pred_fallthru
        _
      // Predicated region
      $region17: #{discriminator_forward.14} parent=11 // pred_check
        %p121 = pneg %p77
      $region18: #{discriminator_forward.14} parent=11 // pred_check_branch
        %123 = sbr.rel (%p121) target = $region20
      $region19: #{discriminator_forward.14} parent=11 // pred_region
        _
      $region20: #{discriminator_forward.14} parent=11 // pred_fallthru
        _
    $region12: #{discriminator_forward.14} parent=5 // pred_fallthru
      _
    %p124 = scmp.lt.s32.totalorder %s9, 2
    // Predicated region
    $region21: #{discriminator_forward.14} parent=5 // pred_check
      %p125 = pneg %p124
    $region22: #{discriminator_forward.14} parent=5 // pred_check_branch
      %127 = sbr.rel (%p125) target = $region24
    $region23: #{discriminator_forward.14} parent=5 // pred_region
      // Predicated region
      $region25: #{discriminator_forward.14} parent=23 // pred_check
        %p128 = pneg %p29
      $region26: #{discriminator_forward.14} parent=23 // pred_check_branch
        %130 = sbr.rel (%p128) target = $region28
      $region27: #{discriminator_forward.14} parent=23 // pred_region
        %s131 = smul.u32 2, %s9
        %p132 = scmp.lt.s32.totalorder %s131, 3
        %s133 = scalar_select %p132, %s131, 3
        %s134 = smul.addr %s133, 2
        %s135 = smul.addr %s134, 4
        %s136 = scalar_lea.vmem %s0, %s135
        %s137 = smul.u32 2, %s9
      $region28: #{discriminator_forward.14} parent=23 // pred_fallthru
        _
    $region24: #{discriminator_forward.14} parent=5 // pred_fallthru
      _
    %p138 = scmp.le.s32.totalorder 1, %s9
    %p139 = scmp.lt.s32.totalorder %s9, 3
    %p140 = pnand %p138, %p139
    %p141 = pneg %p140
    // Predicated region
    $region29: #{discriminator_forward.14} parent=5 // pred_check
      _
    $region30: #{discriminator_forward.14} parent=5 // pred_check_branch
      %143 = sbr.rel (%p140) target = $region32
    $region31: #{discriminator_forward.14} parent=5 // pred_region
      %s144 = ssub.s32 %s9, 1
      %s145 = smul.u32 2, %s14
      %p146 = scmp.lt.s32.totalorder %s145, 3
      %s147 = scalar_select %p146, %s145, 3
      %s148 = smul.addr %s147, 2
      %s149 = smul.addr %s148, 4
      %s150 = scalar_lea.vmem %s0, %s149
      %p151 = pneg %p35
      %p152 = pneg %p32
      %p153 = pneg %p56
      %p154 = pneg %p53
      %p155 = pneg %p77
      %p156 = pneg %p74
      %p157 = pneg %p103
      %p158 = pneg %p100
      %s159 = smul.u32 2, %s14
      %p160 = scmp.lt.s32.totalorder %s159, 3
      %s161 = scalar_select %p160, %s159, 3
      %s162 = smul.addr %s161, 2
      %s163 = smul.addr %s162, 4
      %s164 = scalar_lea.vmem %s3, %s163
      %s165 = smul.u32 2, %s14
      %p166 = scmp.lt.s32.totalorder %s165, 3
      %s167 = scalar_select %p166, %s165, 3
      %s168 = smul.addr %s167, 2
      %s169 = smul.addr %s168, 4
      %s170 = scalar_lea.vmem %s0, %s169
      %s171 = smul.u32 2, %s14
      %s172 = smul.u32 2, %s14
      %p173 = scmp.lt.s32.totalorder %s172, 3
      %s174 = scalar_select %p173, %s172, 3
      %s175 = smul.addr %s174, 2
      %s176 = smul.addr %s175, 4
      %s177 = scalar_lea.vmem %s3, %s176
      %s178 = smul.u32 2, %s14
      %v179 = vld [vmem:[%s170] sm:$0xff]
      %v180 = vld [vmem:[%s170 + $0x8] sm:$0xff]
      %v181 = vunpack.c.l.bf16 %v179
      %v182 = vunpack.c.h.bf16 %v179
      %v183 = vunpack.c.l.bf16 %v180
      %v184 = vunpack.c.h.bf16 %v180
      %v185 = vld [vmem:[%s1] sm:$0x3]
      %v187 = vlaneseq
      %v188 = vshrl.u32 %v187, 7
      %v189 = vsub.s32 0, %v188
      %v190 = vrot.slane %v185, %v189
      %v191 = vlaneseq
      %v192 = vshrl.u32 %v191, 7
      %v193 = vsub.s32 1, %v192
      %v194 = vrot.slane %v185, %v193
      %v197 = vmul.f32 %v181, %v190
      %v198 = vmul.f32 %v182, %v194
      %v199 = vmul.f32 %v183, %v190
      %v200 = vmul.f32 %v184, %v194
      %v201 = vld [vmem:[%s2] sm:$0x3]
      %v203 = vlaneseq
      %v204 = vshrl.u32 %v203, 7
      %v205 = vsub.s32 0, %v204
      %v206 = vrot.slane %v201, %v205
      %v207 = vlaneseq
      %v208 = vshrl.u32 %v207, 7
      %v209 = vsub.s32 1, %v208
      %v210 = vrot.slane %v201, %v209
      %v213 = vadd.f32 %v197, %v206
      %v214 = vadd.f32 %v198, %v210
      %v215 = vadd.f32 %v199, %v206
      %v216 = vadd.f32 %v200, %v210
      %v217 = vmax.f32 %v213, 0.0
      %v218 = vmax.f32 %v214, 0.0
      %v219 = vmax.f32 %v215, 0.0
      %v220 = vmax.f32 %v216, 0.0
      %v221 = vpack.c.bf16 %v219, %v217
      %v222 = vpack.c.bf16 %v220, %v218
      %v225 = vunpack.c.l.b16 %v221
      %v226 = vunpack.c.l.b16 %v222
      %v227 = vunpack.c.h.b16 %v221
      %v228 = vunpack.c.h.b16 %v222
      %v229 = vpack.c.b16 %v226, %v225
      %v230 = vpack.c.b16 %v228, %v227
      %233 = vst [vmem:[%s177] sm:$0xff] %v229
      %234 = vst [vmem:[%s177 + $0x8] sm:$0xff] %v230
      %s235 = smul.u32 2, %s14
      %p236 = scmp.lt.s32.totalorder %s235, 3
      %s237 = scalar_select %p236, %s235, 3
      %s238 = smul.addr %s237, 2
      %s239 = smul.addr %s238, 4
      %s240 = scalar_lea.vmem %s3, %s239
      // Predicated region
      $region33: #{discriminator_forward.14} parent=31 // pred_check
        %p241 = pneg %p100
      $region34: #{discriminator_forward.14} parent=31 // pred_check_branch
        %243 = sbr.rel (%p241) target = $region36
      $region35: #{discriminator_forward.14} parent=31 // pred_region
        %s244 = smul.u32 2, %s14
      $region36: #{discriminator_forward.14} parent=31 // pred_fallthru
        _
    $region32: #{discriminator_forward.14} parent=5 // pred_fallthru
      _
    %p245 = scmp.le.s32.totalorder 2, %s9
    // Predicated region
    $region37: #{discriminator_forward.14} parent=5 // pred_check
      %p246 = pneg %p245
    $region38: #{discriminator_forward.14} parent=5 // pred_check_branch
      %248 = sbr.rel (%p246) target = $region40
    $region39: #{discriminator_forward.14} parent=5 // pred_region
      %s249 = ssub.s32 %s9, 2
      // Predicated region
      $region41: #{discriminator_forward.14} parent=39 // pred_check
        %p250 = pneg %p106
      $region42: #{discriminator_forward.14} parent=39 // pred_check_branch
        %252 = sbr.rel (%p250) target = $region44
      $region43: #{discriminator_forward.14} parent=39 // pred_region
        %s253 = smul.u32 2, %s15
        %p254 = scmp.lt.s32.totalorder %s253, 3
        %s255 = scalar_select %p254, %s253, 3
        %s256 = smul.addr %s255, 2
        %s257 = smul.addr %s256, 4
        %s258 = scalar_lea.vmem %s3, %s257
      $region44: #{discriminator_forward.14} parent=39 // pred_fallthru
        _
    $region40: #{discriminator_forward.14} parent=5 // pred_fallthru
      _
  $region6: #{discriminator_forward.14} parent=0 // loop_footer
    %s13 = sadd.s32 1, %s9
  $region7: #{discriminator_forward.14} parent=0 // loop_footer_branch
    %8 = sbr.rel target = $region3
  $region8: #{discriminator_forward.14} parent=0 // loop_exit
    _

// kernel: discriminator_forward.13
$region0: #{discriminator_forward.13}
  #allocation0 [shape = 'u32[]', space=smem, size = 0x4, offset = 0x4, fixed_abs, tag = 'smem constant byte address 0x4 - core index']
  #allocation1 [shape = 'u32[144,128]{1,0:T(1,128)}', space=vmem, size = 0x12000, scoped, tag = 'internal scratch']
  %s0 = inlined_call_operand.vmem [shape: bf16[32,4096], index: 0, kind: input, shape index: {}]
  %s1 = inlined_call_operand.vmem [shape: bf16[4096,256], index: 1, kind: input, shape index: {}]
  %s2 = inlined_call_operand.vmem [shape: bf16[32,256], index: 2, kind: output, shape index: {0}]
  %s3 = inlined_call_operand.vmem [shape: f32[2,1,256], index: 3, kind: output, shape index: {1}]
  %s4 = inlined_call_operand.vmem [shape: f32[2,1,256], index: 4, kind: output, shape index: {2}]
  %5 = xla_tuple %s2, %s3, %s4
  %s6 = sld [smem:[#allocation0]]
  $region61: #{discriminator_forward.13} parent=0
    _
  %s8 = ssub.s32 1, %s6
  %s9 = scalar_select 0, %s8, %s6
  loop: start=0, step=1, limit=4
  $region2: #{discriminator_forward.13} parent=0 // loop_pre_header
    _
  $region3: #{discriminator_forward.13} parent=0 // loop_header
    %s11 = sphi 0, %s15
    %p12 = scmp.ge.s32.totalorder %s11, 4
    %s18 = sphi 0, %s30
    %s19 = sphi 0, %s26
    %s20 = sphi 0, %s18
    %s21 = sphi 0, %s19
    %s22 = sphi 0, %s20
    %s23 = sphi 0, %s21
    %s35 = sphi 0, %s37
    %s38 = sphi 0, %s35
    %s39 = sphi 0, %s38
    %s55 = sphi 0, %s39
    %s59 = sphi 0, %s59
    %s61 = sphi 0, %s59
    %s62 = sphi 0, %s61
    %s76 = sphi 0, %s62
    %s84 = sphi 0, %s86
    %s87 = sphi 0, %s84
    %s88 = sphi 0, %s87
    %s104 = sphi 0, %s88
    %s110 = sphi 0, %s112
    %s113 = sphi 0, %s110
    %s114 = sphi 0, %s113
    %s130 = sphi 0, %s114
    %s136 = sphi 0, %s138
    %s139 = sphi 0, %s136
    %s140 = sphi 0, %s139
    %s156 = sphi 0, %s140
  $region4: #{discriminator_forward.13} parent=0 // loop_header_branch
    %14 = sbr.rel (%p12) target = $region8
  $region5: #{discriminator_forward.13} parent=0 // loop_body
    %s16 = ssub.s32 %s11, 1
    %s17 = ssub.s32 %s11, 2
    %s24 = sadd.s32 1, %s19
    %p25 = scmp.ge.s32.totalorder %s24, 1
    %s26 = scalar_select %p25, 0, %s24
    %s27 = sadd.s32 1, %s18
    %s28 = scalar_select %p25, %s27, %s18
    %p29 = scmp.ge.s32.totalorder %s28, 2
    %s30 = scalar_select %p29, 0, %s28
    %s31 = sadd.s32 %s18, %s19
    %s32 = sadd.s32 %s30, %s26
    %s33 = ssub.s32 %s31, %s32
    %p34 = scmp.eq.s32.totalorder %s33, 0
    %s36 = sadd.s32 %s35, 1
    %s37 = scalar_select %p34, %s35, %s36
    %p40 = pneg %p34
    %p41 = scmp.eq.s32.totalorder %s11, 1
    %p42 = por %p40, %p41
    %p43 = scmp.ne.s32.totalorder %s35, %s38
    %p44 = scmp.eq.s32.totalorder %s11, 0
    %p45 = por %p43, %p44
    %p46 = scmp.ne.s32.totalorder %s35, %s38
    %p47 = scmp.eq.s32.totalorder %s16, 1
    %p48 = por %p46, %p47
    %p49 = scmp.ne.s32.totalorder %s38, %s39
    %p50 = scmp.eq.s32.totalorder %s16, 0
    %p51 = por %p49, %p50
    %p52 = scmp.ne.s32.totalorder %s38, %s39
    %p53 = scmp.eq.s32.totalorder %s17, 1
    %p54 = por %p52, %p53
    %p56 = scmp.ne.s32.totalorder %s39, %s55
    %p57 = scmp.eq.s32.totalorder %s17, 0
    %p58 = por %p56, %p57
    %s60 = sadd.s32 %s59, 1
    %p63 = scmp.eq.s32.totalorder %s11, 1
    %p64 = scmp.ne.s32.totalorder %s59, %s61
    %p65 = scmp.eq.s32.totalorder %s11, 0
    %p66 = por %p64, %p65
    %p67 = scmp.ne.s32.totalorder %s59, %s61
    %p68 = scmp.eq.s32.totalorder %s16, 1
    %p69 = por %p67, %p68
    %p70 = scmp.ne.s32.totalorder %s61, %s62
    %p71 = scmp.eq.s32.totalorder %s16, 0
    %p72 = por %p70, %p71
    %p73 = scmp.ne.s32.totalorder %s61, %s62
    %p74 = scmp.eq.s32.totalorder %s17, 1
    %p75 = por %p73, %p74
    %p77 = scmp.ne.s32.totalorder %s62, %s76
    %p78 = scmp.eq.s32.totalorder %s17, 0
    %p79 = por %p77, %p78
    %s80 = sadd.s32 %s18, %s19
    %s81 = sadd.s32 %s30, %s26
    %s82 = ssub.s32 %s80, %s81
    %p83 = scmp.eq.s32.totalorder %s82, 0
    %s85 = sadd.s32 %s84, 1
    %s86 = scalar_select %p83, %s84, %s85
    %p89 = pneg %p83
    %p90 = scmp.eq.s32.totalorder %s11, 1
    %p91 = por %p89, %p90
    %p92 = scmp.ne.s32.totalorder %s84, %s87
    %p93 = scmp.eq.s32.totalorder %s11, 0
    %p94 = por %p92, %p93
    %p95 = scmp.ne.s32.totalorder %s84, %s87
    %p96 = scmp.eq.s32.totalorder %s16, 1
    %p97 = por %p95, %p96
    %p98 = scmp.ne.s32.totalorder %s87, %s88
    %p99 = scmp.eq.s32.totalorder %s16, 0
    %p100 = por %p98, %p99
    %p101 = scmp.ne.s32.totalorder %s87, %s88
    %p102 = scmp.eq.s32.totalorder %s17, 1
    %p103 = por %p101, %p102
    %p105 = scmp.ne.s32.totalorder %s88, %s104
    %p106 = scmp.eq.s32.totalorder %s17, 0
    %p107 = por %p105, %p106
    %s108 = ssub.s32 %s18, %s30
    %p109 = scmp.eq.s32.totalorder %s108, 0
    %s111 = sadd.s32 %s110, 1
    %s112 = scalar_select %p109, %s110, %s111
    %p115 = pneg %p109
    %p116 = scmp.eq.s32.totalorder %s11, 1
    %p117 = por %p115, %p116
    %p118 = scmp.ne.s32.totalorder %s110, %s113
    %p119 = scmp.eq.s32.totalorder %s11, 0
    %p120 = por %p118, %p119
    %p121 = scmp.ne.s32.totalorder %s110, %s113
    %p122 = scmp.eq.s32.totalorder %s16, 1
    %p123 = por %p121, %p122
    %p124 = scmp.ne.s32.totalorder %s113, %s114
    %p125 = scmp.eq.s32.totalorder %s16, 0
    %p126 = por %p124, %p125
    %p127 = scmp.ne.s32.totalorder %s113, %s114
    %p128 = scmp.eq.s32.totalorder %s17, 1
    %p129 = por %p127, %p128
    %p131 = scmp.ne.s32.totalorder %s114, %s130
    %p132 = scmp.eq.s32.totalorder %s17, 0
    %p133 = por %p131, %p132
    %s134 = ssub.s32 %s18, %s30
    %p135 = scmp.eq.s32.totalorder %s134, 0
    %s137 = sadd.s32 %s136, 1
    %s138 = scalar_select %p135, %s136, %s137
    %p141 = pneg %p135
    %p142 = scmp.eq.s32.totalorder %s11, 1
    %p143 = por %p141, %p142
    %p144 = scmp.ne.s32.totalorder %s136, %s139
    %p145 = scmp.eq.s32.totalorder %s11, 0
    %p146 = por %p144, %p145
    %p147 = scmp.ne.s32.totalorder %s136, %s139
    %p148 = scmp.eq.s32.totalorder %s16, 1
    %p149 = por %p147, %p148
    %p150 = scmp.ne.s32.totalorder %s139, %s140
    %p151 = scmp.eq.s32.totalorder %s16, 0
    %p152 = por %p150, %p151
    %p153 = scmp.ne.s32.totalorder %s139, %s140
    %p154 = scmp.eq.s32.totalorder %s17, 1
    %p155 = por %p153, %p154
    %p157 = scmp.ne.s32.totalorder %s140, %s156
    %p158 = scmp.eq.s32.totalorder %s17, 0
    %p159 = por %p157, %p158
    %p160 = scmp.le.s32.totalorder 1, %s11
    %p161 = scmp.lt.s32.totalorder %s11, 3
    %p162 = pnand %p160, %p161
    %p163 = pneg %p162
    // Predicated region
    $region9: #{discriminator_forward.13} parent=5 // pred_check
      _
    $region10: #{discriminator_forward.13} parent=5 // pred_check_branch
      %165 = sbr.rel (%p162) target = $region12
    $region11: #{discriminator_forward.13} parent=5 // pred_region
      %s166 = ssub.s32 %s11, 1
      // Predicated region
      $region13: #{discriminator_forward.13} parent=11 // pred_check
        %p167 = pneg %p72
      $region14: #{discriminator_forward.13} parent=11 // pred_check_branch
        %169 = sbr.rel (%p167) target = $region16
      $region15: #{discriminator_forward.13} parent=11 // pred_region
        _
      $region16: #{discriminator_forward.13} parent=11 // pred_fallthru
        _
    $region12: #{discriminator_forward.13} parent=5 // pred_fallthru
      _
    %p170 = scmp.lt.s32.totalorder %s11, 2
    // Predicated region
    $region17: #{discriminator_forward.13} parent=5 // pred_check
      %p171 = pneg %p170
    $region18: #{discriminator_forward.13} parent=5 // pred_check_branch
      %173 = sbr.rel (%p171) target = $region20
    $region19: #{discriminator_forward.13} parent=5 // pred_region
      // Predicated region
      $region21: #{discriminator_forward.13} parent=19 // pred_check
        %p174 = pneg %p45
      $region22: #{discriminator_forward.13} parent=19 // pred_check_branch
        %176 = sbr.rel (%p174) target = $region24
      $region23: #{discriminator_forward.13} parent=19 // pred_region
        %s177 = sadd.s32 %s18, %s19
        %s178 = smul.u32 2, %s177
        %p179 = scmp.lt.s32.totalorder %s178, 3
        %s180 = scalar_select %p179, %s178, 3
        %s181 = smul.addr %s180, 32
        %s182 = smul.addr %s181, 4
        %s183 = scalar_lea.vmem %s0, %s182
        %s184 = sadd.s32 %s18, %s19
        %s185 = smul.u32 2, %s184
      $region24: #{discriminator_forward.13} parent=19 // pred_fallthru
        _
    $region20: #{discriminator_forward.13} parent=5 // pred_fallthru
      _
    %p186 = scmp.le.s32.totalorder 1, %s11
    %p187 = scmp.lt.s32.totalorder %s11, 3
    %p188 = pnand %p186, %p187
    %p189 = pneg %p188
    // Predicated region
    $region25: #{discriminator_forward.13} parent=5 // pred_check
      _
    $region26: #{discriminator_forward.13} parent=5 // pred_check_branch
      %191 = sbr.rel (%p188) target = $region28
    $region27: #{discriminator_forward.13} parent=5 // pred_region
      %s192 = ssub.s32 %s11, 1
      %s193 = sadd.s32 %s20, %s21
      %s194 = smul.u32 2, %s193
      %p195 = scmp.lt.s32.totalorder %s194, 3
      %s196 = scalar_select %p195, %s194, 3
      %s197 = smul.addr %s196, 32
      %s198 = smul.addr %s197, 4
      %s199 = scalar_lea.vmem %s0, %s198
      %p200 = pneg %p51
      %p201 = pneg %p48
      %p202 = pneg %p72
      %p203 = pneg %p69
      %p204 = pneg %p100
      %p205 = pneg %p97
      %s206 = sadd.s32 %s20, %s21
      %s207 = smul.u32 2, %s206
      %p208 = scmp.lt.s32.totalorder %s207, 3
      %s209 = scalar_select %p208, %s207, 3
      %s210 = smul.addr %s209, 2
      %s211 = smul.addr %s210, 4
      %s212 = scalar_lea.vmem %s2, %s211
      %p213 = pneg %p126
      %p214 = pneg %p123
      %p215 = scmp.lt.s32.totalorder %s20, 1
      %s216 = scalar_select %p215, %s20, 1
      %s217 = smul.addr %s216, 2
      %s218 = scalar_lea.vmem %s3, %s217
      %p219 = pneg %p152
      %p220 = pneg %p149
      %p221 = scmp.lt.s32.totalorder %s20, 1
      %s222 = scalar_select %p221, %s20, 1
      %s223 = smul.addr %s222, 2
      %s224 = scalar_lea.vmem %s4, %s223
      %s225 = sadd.s32 %s20, %s21
      %s226 = smul.u32 2, %s225
      %p227 = scmp.lt.s32.totalorder %s226, 3
      %s228 = scalar_select %p227, %s226, 3
      %s229 = smul.addr %s228, 32
      %s230 = smul.addr %s229, 4
      %s231 = scalar_lea.vmem %s0, %s230
      %s232 = sadd.s32 %s20, %s21
      %s233 = smul.u32 2, %s232
      %s234 = sadd.s32 %s20, %s21
      %s235 = smul.u32 2, %s234
      %p236 = scmp.lt.s32.totalorder %s235, 3
      %s237 = scalar_select %p236, %s235, 3
      %s238 = smul.addr %s237, 2
      %s239 = smul.addr %s238, 4
      %s240 = scalar_lea.vmem %s2, %s239
      %s241 = sadd.s32 %s20, %s21
      %s242 = smul.u32 2, %s241
      %p243 = scmp.lt.s32.totalorder %s20, 1
      %s244 = scalar_select %p243, %s20, 1
      %s245 = smul.addr %s244, 2
      %s246 = scalar_lea.vmem %s3, %s245
      %p247 = scmp.lt.s32.totalorder %s20, 1
      %s248 = scalar_select %p247, %s20, 1
      %s249 = smul.addr %s248, 2
      %s250 = scalar_lea.vmem %s4, %s249
      %v251 = vld [vmem:[%s231] sm:$0xff]
      %v252 = vld [vmem:[%s231 + $0x8] sm:$0xff]
      %v253 = vld [vmem:[%s231 + $0x10] sm:$0xff]
      %v254 = vld [vmem:[%s231 + $0x18] sm:$0xff]
      %v255 = vld [vmem:[%s231 + $0x20] sm:$0xff]
      %v256 = vld [vmem:[%s231 + $0x28] sm:$0xff]
      %v257 = vld [vmem:[%s231 + $0x30] sm:$0xff]
      %v258 = vld [vmem:[%s231 + $0x38] sm:$0xff]
      %v259 = vld [vmem:[%s231 + $0x40] sm:$0xff]
      %v260 = vld [vmem:[%s231 + $0x48] sm:$0xff]
      %v261 = vld [vmem:[%s231 + $0x50] sm:$0xff]
      %v262 = vld [vmem:[%s231 + $0x58] sm:$0xff]
      %v263 = vld [vmem:[%s231 + $0x60] sm:$0xff]
      %v264 = vld [vmem:[%s231 + $0x68] sm:$0xff]
      %v265 = vld [vmem:[%s231 + $0x70] sm:$0xff]
      %v266 = vld [vmem:[%s231 + $0x78] sm:$0xff]
      %v267 = vld [vmem:[%s231 + $0x80] sm:$0xff]
      %v268 = vld [vmem:[%s231 + $0x88] sm:$0xff]
      %v269 = vld [vmem:[%s231 + $0x90] sm:$0xff]
      %v270 = vld [vmem:[%s231 + $0x98] sm:$0xff]
      %v271 = vld [vmem:[%s231 + $0xa0] sm:$0xff]
      %v272 = vld [vmem:[%s231 + $0xa8] sm:$0xff]
      %v273 = vld [vmem:[%s231 + $0xb0] sm:$0xff]
      %v274 = vld [vmem:[%s231 + $0xb8] sm:$0xff]
      %v275 = vld [vmem:[%s231 + $0xc0] sm:$0xff]
      %v276 = vld [vmem:[%s231 + $0xc8] sm:$0xff]
      %v277 = vld [vmem:[%s231 + $0xd0] sm:$0xff]
      %v278 = vld [vmem:[%s231 + $0xd8] sm:$0xff]
      %v279 = vld [vmem:[%s231 + $0xe0] sm:$0xff]
      %v280 = vld [vmem:[%s231 + $0xe8] sm:$0xff]
      %v281 = vld [vmem:[%s231 + $0xf0] sm:$0xff]
      %v282 = vld [vmem:[%s231 + $0xf8] sm:$0xff]
      %v283 = vld [vmem:[%s1] sm:$0xff]
      %v284 = vld [vmem:[%s1 + $0x8] sm:$0xff]
      %v285 = vld [vmem:[%s1 + $0x10] sm:$0xff]
      %v286 = vld [vmem:[%s1 + $0x18] sm:$0xff]
      %v287 = vld [vmem:[%s1 + $0x20] sm:$0xff]
      %v288 = vld [vmem:[%s1 + $0x28] sm:$0xff]
      %v289 = vld [vmem:[%s1 + $0x30] sm:$0xff]
      %v290 = vld [vmem:[%s1 + $0x38] sm:$0xff]
      %v291 = vld [vmem:[%s1 + $0x40] sm:$0xff]
      %v292 = vld [vmem:[%s1 + $0x48] sm:$0xff]
      %v293 = vld [vmem:[%s1 + $0x50] sm:$0xff]
      %v294 = vld [vmem:[%s1 + $0x58] sm:$0xff]
      %v295 = vld [vmem:[%s1 + $0x60] sm:$0xff]
      %v296 = vld [vmem:[%s1 + $0x68] sm:$0xff]
      %v297 = vld [vmem:[%s1 + $0x70] sm:$0xff]
      %v298 = vld [vmem:[%s1 + $0x78] sm:$0xff]
      %v299 = vld [vmem:[%s1 + $0x80] sm:$0xff]
      %v300 = vld [vmem:[%s1 + $0x88] sm:$0xff]
      %v301 = vld [vmem:[%s1 + $0x90] sm:$0xff]
      %v302 = vld [vmem:[%s1 + $0x98] sm:$0xff]
      %v303 = vld [vmem:[%s1 + $0xa0] sm:$0xff]
      %v304 = vld [vmem:[%s1 + $0xa8] sm:$0xff]
      %v305 = vld [vmem:[%s1 + $0xb0] sm:$0xff]
      %v306 = vld [vmem:[%s1 + $0xb8] sm:$0xff]
      %v307 = vld [vmem:[%s1 + $0xc0] sm:$0xff]
      %v308 = vld [vmem:[%s1 + $0xc8] sm:$0xff]
      %v309 = vld [vmem:[%s1 + $0xd0] sm:$0xff]
      %v310 = vld [vmem:[%s1 + $0xd8] sm:$0xff]
      %v311 = vld [vmem:[%s1 + $0xe0] sm:$0xff]
      %v312 = vld [vmem:[%s1 + $0xe8] sm:$0xff]
      %v313 = vld [vmem:[%s1 + $0xf0] sm:$0xff]
      %v314 = vld [vmem:[%s1 + $0xf8] sm:$0xff]
      %v315 = vld [vmem:[%s1 + $0x100] sm:$0xff]
      %v316 = vld [vmem:[%s1 + $0x108] sm:$0xff]
      %v317 = vld [vmem:[%s1 + $0x110] sm:$0xff]
      %v318 = vld [vmem:[%s1 + $0x118] sm:$0xff]
      %v319 = vld [vmem:[%s1 + $0x120] sm:$0xff]
      %v320 = vld [vmem:[%s1 + $0x128] sm:$0xff]
      %v321 = vld [vmem:[%s1 + $0x130] sm:$0xff]
      %v322 = vld [vmem:[%s1 + $0x138] sm:$0xff]
      %v323 = vld [vmem:[%s1 + $0x140] sm:$0xff]
      %v324 = vld [vmem:[%s1 + $0x148] sm:$0xff]
      %v325 = vld [vmem:[%s1 + $0x150] sm:$0xff]
      %v326 = vld [vmem:[%s1 + $0x158] sm:$0xff]
      %v327 = vld [vmem:[%s1 + $0x160] sm:$0xff]
      %v328 = vld [vmem:[%s1 + $0x168] sm:$0xff]
      %v329 = vld [vmem:[%s1 + $0x170] sm:$0xff]
      %v330 = vld [vmem:[%s1 + $0x178] sm:$0xff]
      %v331 = vld [vmem:[%s1 + $0x180] sm:$0xff]
      %v332 = vld [vmem:[%s1 + $0x188] sm:$0xff]
      %v333 = vld [vmem:[%s1 + $0x190] sm:$0xff]
      %v334 = vld [vmem:[%s1 + $0x198] sm:$0xff]
      %v335 = vld [vmem:[%s1 + $0x1a0] sm:$0xff]
      %v336 = vld [vmem:[%s1 + $0x1a8] sm:$0xff]
      %v337 = vld [vmem:[%s1 + $0x1b0] sm:$0xff]
      %v338 = vld [vmem:[%s1 + $0x1b8] sm:$0xff]
      %v339 = vld [vmem:[%s1 + $0x1c0] sm:$0xff]
      %v340 = vld [vmem:[%s1 + $0x1c8] sm:$0xff]
      %v341 = vld [vmem:[%s1 + $0x1d0] sm:$0xff]
      %v342 = vld [vmem:[%s1 + $0x1d8] sm:$0xff]
      %v343 = vld [vmem:[%s1 + $0x1e0] sm:$0xff]
      %v344 = vld [vmem:[%s1 + $0x1e8] sm:$0xff]
      %v345 = vld [vmem:[%s1 + $0x1f0] sm:$0xff]
      %v346 = vld [vmem:[%s1 + $0x1f8] sm:$0xff]
      %v347 = vld [vmem:[%s1 + $0x200] sm:$0xff]
      %v348 = vld [vmem:[%s1 + $0x208] sm:$0xff]
      %v349 = vld [vmem:[%s1 + $0x210] sm:$0xff]
      %v350 = vld [vmem:[%s1 + $0x218] sm:$0xff]
      %v351 = vld [vmem:[%s1 + $0x220] sm:$0xff]
      %v352 = vld [vmem:[%s1 + $0x228] sm:$0xff]
      %v353 = vld [vmem:[%s1 + $0x230] sm:$0xff]
      %v354 = vld [vmem:[%s1 + $0x238] sm:$0xff]
      %v355 = vld [vmem:[%s1 + $0x240] sm:$0xff]
      %v356 = vld [vmem:[%s1 + $0x248] sm:$0xff]
      %v357 = vld [vmem:[%s1 + $0x250] sm:$0xff]
      %v358 = vld [vmem:[%s1 + $0x258] sm:$0xff]
      %v359 = vld [vmem:[%s1 + $0x260] sm:$0xff]
      %v360 = vld [vmem:[%s1 + $0x268] sm:$0xff]
      %v361 = vld [vmem:[%s1 + $0x270] sm:$0xff]
      %v362 = vld [vmem:[%s1 + $0x278] sm:$0xff]
      %v363 = vld [vmem:[%s1 + $0x280] sm:$0xff]
      %v364 = vld [vmem:[%s1 + $0x288] sm:$0xff]
      %v365 = vld [vmem:[%s1 + $0x290] sm:$0xff]
      %v366 = vld [vmem:[%s1 + $0x298] sm:$0xff]
      %v367 = vld [vmem:[%s1 + $0x2a0] sm:$0xff]
      %v368 = vld [vmem:[%s1 + $0x2a8] sm:$0xff]
      %v369 = vld [vmem:[%s1 + $0x2b0] sm:$0xff]
      %v370 = vld [vmem:[%s1 + $0x2b8] sm:$0xff]
      %v371 = vld [vmem:[%s1 + $0x2c0] sm:$0xff]
      %v372 = vld [vmem:[%s1 + $0x2c8] sm:$0xff]
      %v373 = vld [vmem:[%s1 + $0x2d0] sm:$0xff]
      %v374 = vld [vmem:[%s1 + $0x2d8] sm:$0xff]
      %v375 = vld [vmem:[%s1 + $0x2e0] sm:$0xff]
      %v376 = vld [vmem:[%s1 + $0x2e8] sm:$0xff]
      %v377 = vld [vmem:[%s1 + $0x2f0] sm:$0xff]
      %v378 = vld [vmem:[%s1 + $0x2f8] sm:$0xff]
      %v379 = vld [vmem:[%s1 + $0x300] sm:$0xff]
      %v380 = vld [vmem:[%s1 + $0x308] sm:$0xff]
      %v381 = vld [vmem:[%s1 + $0x310] sm:$0xff]
      %v382 = vld [vmem:[%s1 + $0x318] sm:$0xff]
      %v383 = vld [vmem:[%s1 + $0x320] sm:$0xff]
      %v384 = vld [vmem:[%s1 + $0x328] sm:$0xff]
      %v385 = vld [vmem:[%s1 + $0x330] sm:$0xff]
      %v386 = vld [vmem:[%s1 + $0x338] sm:$0xff]
      %v387 = vld [vmem:[%s1 + $0x340] sm:$0xff]
      %v388 = vld [vmem:[%s1 + $0x348] sm:$0xff]
      %v389 = vld [vmem:[%s1 + $0x350] sm:$0xff]
      %v390 = vld [vmem:[%s1 + $0x358] sm:$0xff]
      %v391 = vld [vmem:[%s1 + $0x360] sm:$0xff]
      %v392 = vld [vmem:[%s1 + $0x368] sm:$0xff]
      %v393 = vld [vmem:[%s1 + $0x370] sm:$0xff]
      %v394 = vld [vmem:[%s1 + $0x378] sm:$0xff]
      %v395 = vld [vmem:[%s1 + $0x380] sm:$0xff]
      %v396 = vld [vmem:[%s1 + $0x388] sm:$0xff]
      %v397 = vld [vmem:[%s1 + $0x390] sm:$0xff]
      %v398 = vld [vmem:[%s1 + $0x398] sm:$0xff]
      %v399 = vld [vmem:[%s1 + $0x3a0] sm:$0xff]
      %v400 = vld [vmem:[%s1 + $0x3a8] sm:$0xff]
      %v401 = vld [vmem:[%s1 + $0x3b0] sm:$0xff]
      %v402 = vld [vmem:[%s1 + $0x3b8] sm:$0xff]
      %v403 = vld [vmem:[%s1 + $0x3c0] sm:$0xff]
      %v404 = vld [vmem:[%s1 + $0x3c8] sm:$0xff]
      %v405 = vld [vmem:[%s1 + $0x3d0] sm:$0xff]
      %v406 = vld [vmem:[%s1 + $0x3d8] sm:$0xff]
      %v407 = vld [vmem:[%s1 + $0x3e0] sm:$0xff]
      %v408 = vld [vmem:[%s1 + $0x3e8] sm:$0xff]
      %v409 = vld [vmem:[%s1 + $0x3f0] sm:$0xff]
      %v410 = vld [vmem:[%s1 + $0x3f8] sm:$0xff]
      %v411 = vld [vmem:[%s1 + $0x400] sm:$0xff]
      %v412 = vld [vmem:[%s1 + $0x408] sm:$0xff]
      %v413 = vld [vmem:[%s1 + $0x410] sm:$0xff]
      %v414 = vld [vmem:[%s1 + $0x418] sm:$0xff]
      %v415 = vld [vmem:[%s1 + $0x420] sm:$0xff]
      %v416 = vld [vmem:[%s1 + $0x428] sm:$0xff]
      %v417 = vld [vmem:[%s1 + $0x430] sm:$0xff]
      %v418 = vld [vmem:[%s1 + $0x438] sm:$0xff]
      %v419 = vld [vmem:[%s1 + $0x440] sm:$0xff]
      %v420 = vld [vmem:[%s1 + $0x448] sm:$0xff]
      %v421 = vld [vmem:[%s1 + $0x450] sm:$0xff]
      %v422 = vld [vmem:[%s1 + $0x458] sm:$0xff]
      %v423 = vld [vmem:[%s1 + $0x460] sm:$0xff]
      %v424 = vld [vmem:[%s1 + $0x468] sm:$0xff]
      %v425 = vld [vmem:[%s1 + $0x470] sm:$0xff]
      %v426 = vld [vmem:[%s1 + $0x478] sm:$0xff]
      %v427 = vld [vmem:[%s1 + $0x480] sm:$0xff]
      %v428 = vld [vmem:[%s1 + $0x488] sm:$0xff]
      %v429 = vld [vmem:[%s1 + $0x490] sm:$0xff]
      %v430 = vld [vmem:[%s1 + $0x498] sm:$0xff]
      %v431 = vld [vmem:[%s1 + $0x4a0] sm:$0xff]
      %v432 = vld [vmem:[%s1 + $0x4a8] sm:$0xff]
      %v433 = vld [vmem:[%s1 + $0x4b0] sm:$0xff]
      %v434 = vld [vmem:[%s1 + $0x4b8] sm:$0xff]
      %v435 = vld [vmem:[%s1 + $0x4c0] sm:$0xff]
      %v436 = vld [vmem:[%s1 + $0x4c8] sm:$0xff]
      %v437 = vld [vmem:[%s1 + $0x4d0] sm:$0xff]
      %v438 = vld [vmem:[%s1 + $0x4d8] sm:$0xff]
      %v439 = vld [vmem:[%s1 + $0x4e0] sm:$0xff]
      %v440 = vld [vmem:[%s1 + $0x4e8] sm:$0xff]
      %v441 = vld [vmem:[%s1 + $0x4f0] sm:$0xff]
      %v442 = vld [vmem:[%s1 + $0x4f8] sm:$0xff]
      %v443 = vld [vmem:[%s1 + $0x500] sm:$0xff]
      %v444 = vld [vmem:[%s1 + $0x508] sm:$0xff]
      %v445 = vld [vmem:[%s1 + $0x510] sm:$0xff]
      %v446 = vld [vmem:[%s1 + $0x518] sm:$0xff]
      %v447 = vld [vmem:[%s1 + $0x520] sm:$0xff]
      %v448 = vld [vmem:[%s1 + $0x528] sm:$0xff]
      %v449 = vld [vmem:[%s1 + $0x530] sm:$0xff]
      %v450 = vld [vmem:[%s1 + $0x538] sm:$0xff]
      %v451 = vld [vmem:[%s1 + $0x540] sm:$0xff]
      %v452 = vld [vmem:[%s1 + $0x548] sm:$0xff]
      %v453 = vld [vmem:[%s1 + $0x550] sm:$0xff]
      %v454 = vld [vmem:[%s1 + $0x558] sm:$0xff]
      %v455 = vld [vmem:[%s1 + $0x560] sm:$0xff]
      %v456 = vld [vmem:[%s1 + $0x568] sm:$0xff]
      %v457 = vld [vmem:[%s1 + $0x570] sm:$0xff]
      %v458 = vld [vmem:[%s1 + $0x578] sm:$0xff]
      %v459 = vld [vmem:[%s1 + $0x580] sm:$0xff]
      %v460 = vld [vmem:[%s1 + $0x588] sm:$0xff]
      %v461 = vld [vmem:[%s1 + $0x590] sm:$0xff]
      %v462 = vld [vmem:[%s1 + $0x598] sm:$0xff]
      %v463 = vld [vmem:[%s1 + $0x5a0] sm:$0xff]
      %v464 = vld [vmem:[%s1 + $0x5a8] sm:$0xff]
      %v465 = vld [vmem:[%s1 + $0x5b0] sm:$0xff]
      %v466 = vld [vmem:[%s1 + $0x5b8] sm:$0xff]
      %v467 = vld [vmem:[%s1 + $0x5c0] sm:$0xff]
      %v468 = vld [vmem:[%s1 + $0x5c8] sm:$0xff]
      %v469 = vld [vmem:[%s1 + $0x5d0] sm:$0xff]
      %v470 = vld [vmem:[%s1 + $0x5d8] sm:$0xff]
      %v471 = vld [vmem:[%s1 + $0x5e0] sm:$0xff]
      %v472 = vld [vmem:[%s1 + $0x5e8] sm:$0xff]
      %v473 = vld [vmem:[%s1 + $0x5f0] sm:$0xff]
      %v474 = vld [vmem:[%s1 + $0x5f8] sm:$0xff]
      %v475 = vld [vmem:[%s1 + $0x600] sm:$0xff]
      %v476 = vld [vmem:[%s1 + $0x608] sm:$0xff]
      %v477 = vld [vmem:[%s1 + $0x610] sm:$0xff]
      %v478 = vld [vmem:[%s1 + $0x618] sm:$0xff]
      %v479 = vld [vmem:[%s1 + $0x620] sm:$0xff]
      %v480 = vld [vmem:[%s1 + $0x628] sm:$0xff]
      %v481 = vld [vmem:[%s1 + $0x630] sm:$0xff]
      %v482 = vld [vmem:[%s1 + $0x638] sm:$0xff]
      %v483 = vld [vmem:[%s1 + $0x640] sm:$0xff]
      %v484 = vld [vmem:[%s1 + $0x648] sm:$0xff]
      %v485 = vld [vmem:[%s1 + $0x650] sm:$0xff]
      %v486 = vld [vmem:[%s1 + $0x658] sm:$0xff]
      %v487 = vld [vmem:[%s1 + $0x660] sm:$0xff]
      %v488 = vld [vmem:[%s1 + $0x668] sm:$0xff]
      %v489 = vld [vmem:[%s1 + $0x670] sm:$0xff]
      %v490 = vld [vmem:[%s1 + $0x678] sm:$0xff]
      %v491 = vld [vmem:[%s1 + $0x680] sm:$0xff]
      %v492 = vld [vmem:[%s1 + $0x688] sm:$0xff]
      %v493 = vld [vmem:[%s1 + $0x690] sm:$0xff]
      %v494 = vld [vmem:[%s1 + $0x698] sm:$0xff]
      %v495 = vld [vmem:[%s1 + $0x6a0] sm:$0xff]
      %v496 = vld [vmem:[%s1 + $0x6a8] sm:$0xff]
      %v497 = vld [vmem:[%s1 + $0x6b0] sm:$0xff]
      %v498 = vld [vmem:[%s1 + $0x6b8] sm:$0xff]
      %v499 = vld [vmem:[%s1 + $0x6c0] sm:$0xff]
      %v500 = vld [vmem:[%s1 + $0x6c8] sm:$0xff]
      %v501 = vld [vmem:[%s1 + $0x6d0] sm:$0xff]
      %v502 = vld [vmem:[%s1 + $0x6d8] sm:$0xff]
      %v503 = vld [vmem:[%s1 + $0x6e0] sm:$0xff]
      %v504 = vld [vmem:[%s1 + $0x6e8] sm:$0xff]
      %v505 = vld [vmem:[%s1 + $0x6f0] sm:$0xff]
      %v506 = vld [vmem:[%s1 + $0x6f8] sm:$0xff]
      %v507 = vld [vmem:[%s1 + $0x700] sm:$0xff]
      %v508 = vld [vmem:[%s1 + $0x708] sm:$0xff]
      %v509 = vld [vmem:[%s1 + $0x710] sm:$0xff]
      %v510 = vld [vmem:[%s1 + $0x718] sm:$0xff]
      %v511 = vld [vmem:[%s1 + $0x720] sm:$0xff]
      %v512 = vld [vmem:[%s1 + $0x728] sm:$0xff]
      %v513 = vld [vmem:[%s1 + $0x730] sm:$0xff]
      %v514 = vld [vmem:[%s1 + $0x738] sm:$0xff]
      %v515 = vld [vmem:[%s1 + $0x740] sm:$0xff]
      %v516 = vld [vmem:[%s1 + $0x748] sm:$0xff]
      %v517 = vld [vmem:[%s1 + $0x750] sm:$0xff]
      %v518 = vld [vmem:[%s1 + $0x758] sm:$0xff]
      %v519 = vld [vmem:[%s1 + $0x760] sm:$0xff]
      %v520 = vld [vmem:[%s1 + $0x768] sm:$0xff]
      %v521 = vld [vmem:[%s1 + $0x770] sm:$0xff]
      %v522 = vld [vmem:[%s1 + $0x778] sm:$0xff]
      %v523 = vld [vmem:[%s1 + $0x780] sm:$0xff]
      %v524 = vld [vmem:[%s1 + $0x788] sm:$0xff]
      %v525 = vld [vmem:[%s1 + $0x790] sm:$0xff]
      %v526 = vld [vmem:[%s1 + $0x798] sm:$0xff]
      %v527 = vld [vmem:[%s1 + $0x7a0] sm:$0xff]
      %v528 = vld [vmem:[%s1 + $0x7a8] sm:$0xff]
      %v529 = vld [vmem:[%s1 + $0x7b0] sm:$0xff]
      %v530 = vld [vmem:[%s1 + $0x7b8] sm:$0xff]
      %v531 = vld [vmem:[%s1 + $0x7c0] sm:$0xff]
      %v532 = vld [vmem:[%s1 + $0x7c8] sm:$0xff]
      %v533 = vld [vmem:[%s1 + $0x7d0] sm:$0xff]
      %v534 = vld [vmem:[%s1 + $0x7d8] sm:$0xff]
      %v535 = vld [vmem:[%s1 + $0x7e0] sm:$0xff]
      %v536 = vld [vmem:[%s1 + $0x7e8] sm:$0xff]
      %v537 = vld [vmem:[%s1 + $0x7f0] sm:$0xff]
      %v538 = vld [vmem:[%s1 + $0x7f8] sm:$0xff]
      %v539 = vld [vmem:[%s1 + $0x800] sm:$0xff]
      %v540 = vld [vmem:[%s1 + $0x808] sm:$0xff]
      %v541 = vld [vmem:[%s1 + $0x810] sm:$0xff]
      %v542 = vld [vmem:[%s1 + $0x818] sm:$0xff]
      %v543 = vld [vmem:[%s1 + $0x820] sm:$0xff]
      %v544 = vld [vmem:[%s1 + $0x828] sm:$0xff]
      %v545 = vld [vmem:[%s1 + $0x830] sm:$0xff]
      %v546 = vld [vmem:[%s1 + $0x838] sm:$0xff]
      %v547 = vld [vmem:[%s1 + $0x840] sm:$0xff]
      %v548 = vld [vmem:[%s1 + $0x848] sm:$0xff]
      %v549 = vld [vmem:[%s1 + $0x850] sm:$0xff]
      %v550 = vld [vmem:[%s1 + $0x858] sm:$0xff]
      %v551 = vld [vmem:[%s1 + $0x860] sm:$0xff]
      %v552 = vld [vmem:[%s1 + $0x868] sm:$0xff]
      %v553 = vld [vmem:[%s1 + $0x870] sm:$0xff]
      %v554 = vld [vmem:[%s1 + $0x878] sm:$0xff]
      %v555 = vld [vmem:[%s1 + $0x880] sm:$0xff]
      %v556 = vld [vmem:[%s1 + $0x888] sm:$0xff]
      %v557 = vld [vmem:[%s1 + $0x890] sm:$0xff]
      %v558 = vld [vmem:[%s1 + $0x898] sm:$0xff]
      %v559 = vld [vmem:[%s1 + $0x8a0] sm:$0xff]
      %v560 = vld [vmem:[%s1 + $0x8a8] sm:$0xff]
      %v561 = vld [vmem:[%s1 + $0x8b0] sm:$0xff]
      %v562 = vld [vmem:[%s1 + $0x8b8] sm:$0xff]
      %v563 = vld [vmem:[%s1 + $0x8c0] sm:$0xff]
      %v564 = vld [vmem:[%s1 + $0x8c8] sm:$0xff]
      %v565 = vld [vmem:[%s1 + $0x8d0] sm:$0xff]
      %v566 = vld [vmem:[%s1 + $0x8d8] sm:$0xff]
      %v567 = vld [vmem:[%s1 + $0x8e0] sm:$0xff]
      %v568 = vld [vmem:[%s1 + $0x8e8] sm:$0xff]
      %v569 = vld [vmem:[%s1 + $0x8f0] sm:$0xff]
      %v570 = vld [vmem:[%s1 + $0x8f8] sm:$0xff]
      %v571 = vld [vmem:[%s1 + $0x900] sm:$0xff]
      %v572 = vld [vmem:[%s1 + $0x908] sm:$0xff]
      %v573 = vld [vmem:[%s1 + $0x910] sm:$0xff]
      %v574 = vld [vmem:[%s1 + $0x918] sm:$0xff]
      %v575 = vld [vmem:[%s1 + $0x920] sm:$0xff]
      %v576 = vld [vmem:[%s1 + $0x928] sm:$0xff]
      %v577 = vld [vmem:[%s1 + $0x930] sm:$0xff]
      %v578 = vld [vmem:[%s1 + $0x938] sm:$0xff]
      %v579 = vld [vmem:[%s1 + $0x940] sm:$0xff]
      %v580 = vld [vmem:[%s1 + $0x948] sm:$0xff]
      %v581 = vld [vmem:[%s1 + $0x950] sm:$0xff]
      %v582 = vld [vmem:[%s1 + $0x958] sm:$0xff]
      %v583 = vld [vmem:[%s1 + $0x960] sm:$0xff]
      %v584 = vld [vmem:[%s1 + $0x968] sm:$0xff]
      %v585 = vld [vmem:[%s1 + $0x970] sm:$0xff]
      %v586 = vld [vmem:[%s1 + $0x978] sm:$0xff]
      %v587 = vld [vmem:[%s1 + $0x980] sm:$0xff]
      %v588 = vld [vmem:[%s1 + $0x988] sm:$0xff]
      %v589 = vld [vmem:[%s1 + $0x990] sm:$0xff]
      %v590 = vld [vmem:[%s1 + $0x998] sm:$0xff]
      %v591 = vld [vmem:[%s1 + $0x9a0] sm:$0xff]
      %v592 = vld [vmem:[%s1 + $0x9a8] sm:$0xff]
      %v593 = vld [vmem:[%s1 + $0x9b0] sm:$0xff]
      %v594 = vld [vmem:[%s1 + $0x9b8] sm:$0xff]
      %v595 = vld [vmem:[%s1 + $0x9c0] sm:$0xff]
      %v596 = vld [vmem:[%s1 + $0x9c8] sm:$0xff]
      %v597 = vld [vmem:[%s1 + $0x9d0] sm:$0xff]
      %v598 = vld [vmem:[%s1 + $0x9d8] sm:$0xff]
      %v599 = vld [vmem:[%s1 + $0x9e0] sm:$0xff]
      %v600 = vld [vmem:[%s1 + $0x9e8] sm:$0xff]
      %v601 = vld [vmem:[%s1 + $0x9f0] sm:$0xff]
      %v602 = vld [vmem:[%s1 + $0x9f8] sm:$0xff]
      %v603 = vld [vmem:[%s1 + $0xa00] sm:$0xff]
      %v604 = vld [vmem:[%s1 + $0xa08] sm:$0xff]
      %v605 = vld [vmem:[%s1 + $0xa10] sm:$0xff]
      %v606 = vld [vmem:[%s1 + $0xa18] sm:$0xff]
      %v607 = vld [vmem:[%s1 + $0xa20] sm:$0xff]
      %v608 = vld [vmem:[%s1 + $0xa28] sm:$0xff]
      %v609 = vld [vmem:[%s1 + $0xa30] sm:$0xff]
      %v610 = vld [vmem:[%s1 + $0xa38] sm:$0xff]
      %v611 = vld [vmem:[%s1 + $0xa40] sm:$0xff]
      %v612 = vld [vmem:[%s1 + $0xa48] sm:$0xff]
      %v613 = vld [vmem:[%s1 + $0xa50] sm:$0xff]
      %v614 = vld [vmem:[%s1 + $0xa58] sm:$0xff]
      %v615 = vld [vmem:[%s1 + $0xa60] sm:$0xff]
      %v616 = vld [vmem:[%s1 + $0xa68] sm:$0xff]
      %v617 = vld [vmem:[%s1 + $0xa70] sm:$0xff]
      %v618 = vld [vmem:[%s1 + $0xa78] sm:$0xff]
      %v619 = vld [vmem:[%s1 + $0xa80] sm:$0xff]
      %v620 = vld [vmem:[%s1 + $0xa88] sm:$0xff]
      %v621 = vld [vmem:[%s1 + $0xa90] sm:$0xff]
      %v622 = vld [vmem:[%s1 + $0xa98] sm:$0xff]
      %v623 = vld [vmem:[%s1 + $0xaa0] sm:$0xff]
      %v624 = vld [vmem:[%s1 + $0xaa8] sm:$0xff]
      %v625 = vld [vmem:[%s1 + $0xab0] sm:$0xff]
      %v626 = vld [vmem:[%s1 + $0xab8] sm:$0xff]
      %v627 = vld [vmem:[%s1 + $0xac0] sm:$0xff]
      %v628 = vld [vmem:[%s1 + $0xac8] sm:$0xff]
      %v629 = vld [vmem:[%s1 + $0xad0] sm:$0xff]
      %v630 = vld [vmem:[%s1 + $0xad8] sm:$0xff]
      %v631 = vld [vmem:[%s1 + $0xae0] sm:$0xff]
      %v632 = vld [vmem:[%s1 + $0xae8] sm:$0xff]
      %v633 = vld [vmem:[%s1 + $0xaf0] sm:$0xff]
      %v634 = vld [vmem:[%s1 + $0xaf8] sm:$0xff]
      %v635 = vld [vmem:[%s1 + $0xb00] sm:$0xff]
      %v636 = vld [vmem:[%s1 + $0xb08] sm:$0xff]
      %v637 = vld [vmem:[%s1 + $0xb10] sm:$0xff]
      %v638 = vld [vmem:[%s1 + $0xb18] sm:$0xff]
      %v639 = vld [vmem:[%s1 + $0xb20] sm:$0xff]
      %v640 = vld [vmem:[%s1 + $0xb28] sm:$0xff]
      %v641 = vld [vmem:[%s1 + $0xb30] sm:$0xff]
      %v642 = vld [vmem:[%s1 + $0xb38] sm:$0xff]
      %v643 = vld [vmem:[%s1 + $0xb40] sm:$0xff]
      %v644 = vld [vmem:[%s1 + $0xb48] sm:$0xff]
      %v645 = vld [vmem:[%s1 + $0xb50] sm:$0xff]
      %v646 = vld [vmem:[%s1 + $0xb58] sm:$0xff]
      %v647 = vld [vmem:[%s1 + $0xb60] sm:$0xff]
      %v648 = vld [vmem:[%s1 + $0xb68] sm:$0xff]
      %v649 = vld [vmem:[%s1 + $0xb70] sm:$0xff]
      %v650 = vld [vmem:[%s1 + $0xb78] sm:$0xff]
      %v651 = vld [vmem:[%s1 + $0xb80] sm:$0xff]
      %v652 = vld [vmem:[%s1 + $0xb88] sm:$0xff]
      %v653 = vld [vmem:[%s1 + $0xb90] sm:$0xff]
      %v654 = vld [vmem:[%s1 + $0xb98] sm:$0xff]
      %v655 = vld [vmem:[%s1 + $0xba0] sm:$0xff]
      %v656 = vld [vmem:[%s1 + $0xba8] sm:$0xff]
      %v657 = vld [vmem:[%s1 + $0xbb0] sm:$0xff]
      %v658 = vld [vmem:[%s1 + $0xbb8] sm:$0xff]
      %v659 = vld [vmem:[%s1 + $0xbc0] sm:$0xff]
      %v660 = vld [vmem:[%s1 + $0xbc8] sm:$0xff]
      %v661 = vld [vmem:[%s1 + $0xbd0] sm:$0xff]
      %v662 = vld [vmem:[%s1 + $0xbd8] sm:$0xff]
      %v663 = vld [vmem:[%s1 + $0xbe0] sm:$0xff]
      %v664 = vld [vmem:[%s1 + $0xbe8] sm:$0xff]
      %v665 = vld [vmem:[%s1 + $0xbf0] sm:$0xff]
      %v666 = vld [vmem:[%s1 + $0xbf8] sm:$0xff]
      %v667 = vld [vmem:[%s1 + $0xc00] sm:$0xff]
      %v668 = vld [vmem:[%s1 + $0xc08] sm:$0xff]
      %v669 = vld [vmem:[%s1 + $0xc10] sm:$0xff]
      %v670 = vld [vmem:[%s1 + $0xc18] sm:$0xff]
      %v671 = vld [vmem:[%s1 + $0xc20] sm:$0xff]
      %v672 = vld [vmem:[%s1 + $0xc28] sm:$0xff]
      %v673 = vld [vmem:[%s1 + $0xc30] sm:$0xff]
      %v674 = vld [vmem:[%s1 + $0xc38] sm:$0xff]
      %v675 = vld [vmem:[%s1 + $0xc40] sm:$0xff]
      %v676 = vld [vmem:[%s1 + $0xc48] sm:$0xff]
      %v677 = vld [vmem:[%s1 + $0xc50] sm:$0xff]
      %v678 = vld [vmem:[%s1 + $0xc58] sm:$0xff]
      %v679 = vld [vmem:[%s1 + $0xc60] sm:$0xff]
      %v680 = vld [vmem:[%s1 + $0xc68] sm:$0xff]
      %v681 = vld [vmem:[%s1 + $0xc70] sm:$0xff]
      %v682 = vld [vmem:[%s1 + $0xc78] sm:$0xff]
      %v683 = vld [vmem:[%s1 + $0xc80] sm:$0xff]
      %v684 = vld [vmem:[%s1 + $0xc88] sm:$0xff]
      %v685 = vld [vmem:[%s1 + $0xc90] sm:$0xff]
      %v686 = vld [vmem:[%s1 + $0xc98] sm:$0xff]
      %v687 = vld [vmem:[%s1 + $0xca0] sm:$0xff]
      %v688 = vld [vmem:[%s1 + $0xca8] sm:$0xff]
      %v689 = vld [vmem:[%s1 + $0xcb0] sm:$0xff]
      %v690 = vld [vmem:[%s1 + $0xcb8] sm:$0xff]
      %v691 = vld [vmem:[%s1 + $0xcc0] sm:$0xff]
      %v692 = vld [vmem:[%s1 + $0xcc8] sm:$0xff]
      %v693 = vld [vmem:[%s1 + $0xcd0] sm:$0xff]
      %v694 = vld [vmem:[%s1 + $0xcd8] sm:$0xff]
      %v695 = vld [vmem:[%s1 + $0xce0] sm:$0xff]
      %v696 = vld [vmem:[%s1 + $0xce8] sm:$0xff]
      %v697 = vld [vmem:[%s1 + $0xcf0] sm:$0xff]
      %v698 = vld [vmem:[%s1 + $0xcf8] sm:$0xff]
      %v699 = vld [vmem:[%s1 + $0xd00] sm:$0xff]
      %v700 = vld [vmem:[%s1 + $0xd08] sm:$0xff]
      %v701 = vld [vmem:[%s1 + $0xd10] sm:$0xff]
      %v702 = vld [vmem:[%s1 + $0xd18] sm:$0xff]
      %v703 = vld [vmem:[%s1 + $0xd20] sm:$0xff]
      %v704 = vld [vmem:[%s1 + $0xd28] sm:$0xff]
      %v705 = vld [vmem:[%s1 + $0xd30] sm:$0xff]
      %v706 = vld [vmem:[%s1 + $0xd38] sm:$0xff]
      %v707 = vld [vmem:[%s1 + $0xd40] sm:$0xff]
      %v708 = vld [vmem:[%s1 + $0xd48] sm:$0xff]
      %v709 = vld [vmem:[%s1 + $0xd50] sm:$0xff]
      %v710 = vld [vmem:[%s1 + $0xd58] sm:$0xff]
      %v711 = vld [vmem:[%s1 + $0xd60] sm:$0xff]
      %v712 = vld [vmem:[%s1 + $0xd68] sm:$0xff]
      %v713 = vld [vmem:[%s1 + $0xd70] sm:$0xff]
      %v714 = vld [vmem:[%s1 + $0xd78] sm:$0xff]
      %v715 = vld [vmem:[%s1 + $0xd80] sm:$0xff]
      %v716 = vld [vmem:[%s1 + $0xd88] sm:$0xff]
      %v717 = vld [vmem:[%s1 + $0xd90] sm:$0xff]
      %v718 = vld [vmem:[%s1 + $0xd98] sm:$0xff]
      %v719 = vld [vmem:[%s1 + $0xda0] sm:$0xff]
      %v720 = vld [vmem:[%s1 + $0xda8] sm:$0xff]
      %v721 = vld [vmem:[%s1 + $0xdb0] sm:$0xff]
      %v722 = vld [vmem:[%s1 + $0xdb8] sm:$0xff]
      %v723 = vld [vmem:[%s1 + $0xdc0] sm:$0xff]
      %v724 = vld [vmem:[%s1 + $0xdc8] sm:$0xff]
      %v725 = vld [vmem:[%s1 + $0xdd0] sm:$0xff]
      %v726 = vld [vmem:[%s1 + $0xdd8] sm:$0xff]
      %v727 = vld [vmem:[%s1 + $0xde0] sm:$0xff]
      %v728 = vld [vmem:[%s1 + $0xde8] sm:$0xff]
      %v729 = vld [vmem:[%s1 + $0xdf0] sm:$0xff]
      %v730 = vld [vmem:[%s1 + $0xdf8] sm:$0xff]
      %v731 = vld [vmem:[%s1 + $0xe00] sm:$0xff]
      %v732 = vld [vmem:[%s1 + $0xe08] sm:$0xff]
      %v733 = vld [vmem:[%s1 + $0xe10] sm:$0xff]
      %v734 = vld [vmem:[%s1 + $0xe18] sm:$0xff]
      %v735 = vld [vmem:[%s1 + $0xe20] sm:$0xff]
      %v736 = vld [vmem:[%s1 + $0xe28] sm:$0xff]
      %v737 = vld [vmem:[%s1 + $0xe30] sm:$0xff]
      %v738 = vld [vmem:[%s1 + $0xe38] sm:$0xff]
      %v739 = vld [vmem:[%s1 + $0xe40] sm:$0xff]
      %v740 = vld [vmem:[%s1 + $0xe48] sm:$0xff]
      %v741 = vld [vmem:[%s1 + $0xe50] sm:$0xff]
      %v742 = vld [vmem:[%s1 + $0xe58] sm:$0xff]
      %v743 = vld [vmem:[%s1 + $0xe60] sm:$0xff]
      %v744 = vld [vmem:[%s1 + $0xe68] sm:$0xff]
      %v745 = vld [vmem:[%s1 + $0xe70] sm:$0xff]
      %v746 = vld [vmem:[%s1 + $0xe78] sm:$0xff]
      %v747 = vld [vmem:[%s1 + $0xe80] sm:$0xff]
      %v748 = vld [vmem:[%s1 + $0xe88] sm:$0xff]
      %v749 = vld [vmem:[%s1 + $0xe90] sm:$0xff]
      %v750 = vld [vmem:[%s1 + $0xe98] sm:$0xff]
      %v751 = vld [vmem:[%s1 + $0xea0] sm:$0xff]
      %v752 = vld [vmem:[%s1 + $0xea8] sm:$0xff]
      %v753 = vld [vmem:[%s1 + $0xeb0] sm:$0xff]
      %v754 = vld [vmem:[%s1 + $0xeb8] sm:$0xff]
      %v755 = vld [vmem:[%s1 + $0xec0] sm:$0xff]
      %v756 = vld [vmem:[%s1 + $0xec8] sm:$0xff]
      %v757 = vld [vmem:[%s1 + $0xed0] sm:$0xff]
      %v758 = vld [vmem:[%s1 + $0xed8] sm:$0xff]
      %v759 = vld [vmem:[%s1 + $0xee0] sm:$0xff]
      %v760 = vld [vmem:[%s1 + $0xee8] sm:$0xff]
      %v761 = vld [vmem:[%s1 + $0xef0] sm:$0xff]
      %v762 = vld [vmem:[%s1 + $0xef8] sm:$0xff]
      %v763 = vld [vmem:[%s1 + $0xf00] sm:$0xff]
      %v764 = vld [vmem:[%s1 + $0xf08] sm:$0xff]
      %v765 = vld [vmem:[%s1 + $0xf10] sm:$0xff]
      %v766 = vld [vmem:[%s1 + $0xf18] sm:$0xff]
      %v767 = vld [vmem:[%s1 + $0xf20] sm:$0xff]
      %v768 = vld [vmem:[%s1 + $0xf28] sm:$0xff]
      %v769 = vld [vmem:[%s1 + $0xf30] sm:$0xff]
      %v770 = vld [vmem:[%s1 + $0xf38] sm:$0xff]
      %v771 = vld [vmem:[%s1 + $0xf40] sm:$0xff]
      %v772 = vld [vmem:[%s1 + $0xf48] sm:$0xff]
      %v773 = vld [vmem:[%s1 + $0xf50] sm:$0xff]
      %v774 = vld [vmem:[%s1 + $0xf58] sm:$0xff]
      %v775 = vld [vmem:[%s1 + $0xf60] sm:$0xff]
      %v776 = vld [vmem:[%s1 + $0xf68] sm:$0xff]
      %v777 = vld [vmem:[%s1 + $0xf70] sm:$0xff]
      %v778 = vld [vmem:[%s1 + $0xf78] sm:$0xff]
      %v779 = vld [vmem:[%s1 + $0xf80] sm:$0xff]
      %v780 = vld [vmem:[%s1 + $0xf88] sm:$0xff]
      %v781 = vld [vmem:[%s1 + $0xf90] sm:$0xff]
      %v782 = vld [vmem:[%s1 + $0xf98] sm:$0xff]
      %v783 = vld [vmem:[%s1 + $0xfa0] sm:$0xff]
      %v784 = vld [vmem:[%s1 + $0xfa8] sm:$0xff]
      %v785 = vld [vmem:[%s1 + $0xfb0] sm:$0xff]
      %v786 = vld [vmem:[%s1 + $0xfb8] sm:$0xff]
      %v787 = vld [vmem:[%s1 + $0xfc0] sm:$0xff]
      %v788 = vld [vmem:[%s1 + $0xfc8] sm:$0xff]
      %v789 = vld [vmem:[%s1 + $0xfd0] sm:$0xff]
      %v790 = vld [vmem:[%s1 + $0xfd8] sm:$0xff]
      %v791 = vld [vmem:[%s1 + $0xfe0] sm:$0xff]
      %v792 = vld [vmem:[%s1 + $0xfe8] sm:$0xff]
      %v793 = vld [vmem:[%s1 + $0xff0] sm:$0xff]
      %v794 = vld [vmem:[%s1 + $0xff8] sm:$0xff]
      %v827 = vunpack.c.l.b16 %v251
      %v828 = vunpack.c.h.b16 %v251
      %v829 = vunpack.c.l.b16 %v252
      %v830 = vunpack.c.h.b16 %v252
      %v831 = vunpack.c.l.b16 %v253
      %v832 = vunpack.c.h.b16 %v253
      %v833 = vunpack.c.l.b16 %v254
      %v834 = vunpack.c.h.b16 %v254
      %v835 = vunpack.c.l.b16 %v255
      %v836 = vunpack.c.h.b16 %v255
      %v837 = vunpack.c.l.b16 %v256
      %v838 = vunpack.c.h.b16 %v256
      %v839 = vunpack.c.l.b16 %v257
      %v840 = vunpack.c.h.b16 %v257
      %v841 = vunpack.c.l.b16 %v258
      %v842 = vunpack.c.h.b16 %v258
      %v843 = vunpack.c.l.b16 %v259
      %v844 = vunpack.c.h.b16 %v259
      %v845 = vunpack.c.l.b16 %v260
      %v846 = vunpack.c.h.b16 %v260
      %v847 = vunpack.c.l.b16 %v261
      %v848 = vunpack.c.h.b16 %v261
      %v849 = vunpack.c.l.b16 %v262
      %v850 = vunpack.c.h.b16 %v262
      %v851 = vunpack.c.l.b16 %v263
      %v852 = vunpack.c.h.b16 %v263
      %v853 = vunpack.c.l.b16 %v264
      %v854 = vunpack.c.h.b16 %v264
      %v855 = vunpack.c.l.b16 %v265
      %v856 = vunpack.c.h.b16 %v265
      %v857 = vunpack.c.l.b16 %v266
      %v858 = vunpack.c.h.b16 %v266
      %v859 = vunpack.c.l.b16 %v267
      %v860 = vunpack.c.h.b16 %v267
      %v861 = vunpack.c.l.b16 %v268
      %v862 = vunpack.c.h.b16 %v268
      %v863 = vunpack.c.l.b16 %v269
      %v864 = vunpack.c.h.b16 %v269
      %v865 = vunpack.c.l.b16 %v270
      %v866 = vunpack.c.h.b16 %v270
      %v867 = vunpack.c.l.b16 %v271
      %v868 = vunpack.c.h.b16 %v271
      %v869 = vunpack.c.l.b16 %v272
      %v870 = vunpack.c.h.b16 %v272
      %v871 = vunpack.c.l.b16 %v273
      %v872 = vunpack.c.h.b16 %v273
      %v873 = vunpack.c.l.b16 %v274
      %v874 = vunpack.c.h.b16 %v274
      %v875 = vunpack.c.l.b16 %v275
      %v876 = vunpack.c.h.b16 %v275
      %v877 = vunpack.c.l.b16 %v276
      %v878 = vunpack.c.h.b16 %v276
      %v879 = vunpack.c.l.b16 %v277
      %v880 = vunpack.c.h.b16 %v277
      %v881 = vunpack.c.l.b16 %v278
      %v882 = vunpack.c.h.b16 %v278
      %v883 = vunpack.c.l.b16 %v279
      %v884 = vunpack.c.h.b16 %v279
      %v885 = vunpack.c.l.b16 %v280
      %v886 = vunpack.c.h.b16 %v280
      %v887 = vunpack.c.l.b16 %v281
      %v888 = vunpack.c.h.b16 %v281
      %v889 = vunpack.c.l.b16 %v282
      %v890 = vunpack.c.h.b16 %v282
      %v891 = vpack.c.b16 %v859, %v827
      %v892 = vpack.c.b16 %v860, %v828
      %v893 = vpack.c.b16 %v861, %v829
      %v894 = vpack.c.b16 %v862, %v830
      %v895 = vpack.c.b16 %v863, %v831
      %v896 = vpack.c.b16 %v864, %v832
      %v897 = vpack.c.b16 %v865, %v833
      %v898 = vpack.c.b16 %v866, %v834
      %v899 = vpack.c.b16 %v867, %v835
      %v900 = vpack.c.b16 %v868, %v836
      %v901 = vpack.c.b16 %v869, %v837
      %v902 = vpack.c.b16 %v870, %v838
      %v903 = vpack.c.b16 %v871, %v839
      %v904 = vpack.c.b16 %v872, %v840
      %v905 = vpack.c.b16 %v873, %v841
      %v906 = vpack.c.b16 %v874, %v842
      %v907 = vpack.c.b16 %v875, %v843
      %v908 = vpack.c.b16 %v876, %v844
      %v909 = vpack.c.b16 %v877, %v845
      %v910 = vpack.c.b16 %v878, %v846
      %v911 = vpack.c.b16 %v879, %v847
      %v912 = vpack.c.b16 %v880, %v848
      %v913 = vpack.c.b16 %v881, %v849
      %v914 = vpack.c.b16 %v882, %v850
      %v915 = vpack.c.b16 %v883, %v851
      %v916 = vpack.c.b16 %v884, %v852
      %v917 = vpack.c.b16 %v885, %v853
      %v918 = vpack.c.b16 %v886, %v854
      %v919 = vpack.c.b16 %v887, %v855
      %v920 = vpack.c.b16 %v888, %v856
      %v921 = vpack.c.b16 %v889, %v857
      %v922 = vpack.c.b16 %v890, %v858
      %v1467 = vunpack.c.l.b16 %v283
      %v1468 = vunpack.c.h.b16 %v283
      %v1469 = vunpack.c.l.b16 %v284
      %v1470 = vunpack.c.h.b16 %v284
      %v1471 = vunpack.c.l.b16 %v285
      %v1472 = vunpack.c.h.b16 %v285
      %v1473 = vunpack.c.l.b16 %v286
      %v1474 = vunpack.c.h.b16 %v286
      %v1475 = vunpack.c.l.b16 %v287
      %v1476 = vunpack.c.h.b16 %v287
      %v1477 = vunpack.c.l.b16 %v288
      %v1478 = vunpack.c.h.b16 %v288
      %v1479 = vunpack.c.l.b16 %v289
      %v1480 = vunpack.c.h.b16 %v289
      %v1481 = vunpack.c.l.b16 %v290
      %v1482 = vunpack.c.h.b16 %v290
      %v1483 = vunpack.c.l.b16 %v291
      %v1484 = vunpack.c.h.b16 %v291
      %v1485 = vunpack.c.l.b16 %v292
      %v1486 = vunpack.c.h.b16 %v292
      %v1487 = vunpack.c.l.b16 %v293
      %v1488 = vunpack.c.h.b16 %v293
      %v1489 = vunpack.c.l.b16 %v294
      %v1490 = vunpack.c.h.b16 %v294
      %v1491 = vunpack.c.l.b16 %v295
      %v1492 = vunpack.c.h.b16 %v295
      %v1493 = vunpack.c.l.b16 %v296
      %v1494 = vunpack.c.h.b16 %v296
      %v1495 = vunpack.c.l.b16 %v297
      %v1496 = vunpack.c.h.b16 %v297
      %v1497 = vunpack.c.l.b16 %v298
      %v1498 = vunpack.c.h.b16 %v298
      %v1499 = vunpack.c.l.b16 %v299
      %v1500 = vunpack.c.h.b16 %v299
      %v1501 = vunpack.c.l.b16 %v300
      %v1502 = vunpack.c.h.b16 %v300
      %v1503 = vunpack.c.l.b16 %v301
      %v1504 = vunpack.c.h.b16 %v301
      %v1505 = vunpack.c.l.b16 %v302
      %v1506 = vunpack.c.h.b16 %v302
      %v1507 = vunpack.c.l.b16 %v303
      %v1508 = vunpack.c.h.b16 %v303
      %v1509 = vunpack.c.l.b16 %v304
      %v1510 = vunpack.c.h.b16 %v304
      %v1511 = vunpack.c.l.b16 %v305
      %v1512 = vunpack.c.h.b16 %v305
      %v1513 = vunpack.c.l.b16 %v306
      %v1514 = vunpack.c.h.b16 %v306
      %v1515 = vunpack.c.l.b16 %v307
      %v1516 = vunpack.c.h.b16 %v307
      %v1517 = vunpack.c.l.b16 %v308
      %v1518 = vunpack.c.h.b16 %v308
      %v1519 = vunpack.c.l.b16 %v309
      %v1520 = vunpack.c.h.b16 %v309
      %v1521 = vunpack.c.l.b16 %v310
      %v1522 = vunpack.c.h.b16 %v310
      %v1523 = vunpack.c.l.b16 %v311
      %v1524 = vunpack.c.h.b16 %v311
      %v1525 = vunpack.c.l.b16 %v312
      %v1526 = vunpack.c.h.b16 %v312
      %v1527 = vunpack.c.l.b16 %v313
      %v1528 = vunpack.c.h.b16 %v313
      %v1529 = vunpack.c.l.b16 %v314
      %v1530 = vunpack.c.h.b16 %v314
      %v1531 = vunpack.c.l.b16 %v315
      %v1532 = vunpack.c.h.b16 %v315
      %v1533 = vunpack.c.l.b16 %v316
      %v1534 = vunpack.c.h.b16 %v316
      %v1535 = vunpack.c.l.b16 %v317
      %v1536 = vunpack.c.h.b16 %v317
      %v1537 = vunpack.c.l.b16 %v318
      %v1538 = vunpack.c.h.b16 %v318
      %v1539 = vunpack.c.l.b16 %v319
      %v1540 = vunpack.c.h.b16 %v319
      %v1541 = vunpack.c.l.b16 %v320
      %v1542 = vunpack.c.h.b16 %v320
      %v1543 = vunpack.c.l.b16 %v321
      %v1544 = vunpack.c.h.b16 %v321
      %v1545 = vunpack.c.l.b16 %v322
      %v1546 = vunpack.c.h.b16 %v322
      %v1547 = vunpack.c.l.b16 %v323
      %v1548 = vunpack.c.h.b16 %v323
      %v1549 = vunpack.c.l.b16 %v324
      %v1550 = vunpack.c.h.b16 %v324
      %v1551 = vunpack.c.l.b16 %v325
      %v1552 = vunpack.c.h.b16 %v325
      %v1553 = vunpack.c.l.b16 %v326
      %v1554 = vunpack.c.h.b16 %v326
      %v1555 = vunpack.c.l.b16 %v327
      %v1556 = vunpack.c.h.b16 %v327
      %v1557 = vunpack.c.l.b16 %v328
      %v1558 = vunpack.c.h.b16 %v328
      %v1559 = vunpack.c.l.b16 %v329
      %v1560 = vunpack.c.h.b16 %v329
      %v1561 = vunpack.c.l.b16 %v330
      %v1562 = vunpack.c.h.b16 %v330
      %v1563 = vunpack.c.l.b16 %v331
      %v1564 = vunpack.c.h.b16 %v331
      %v1565 = vunpack.c.l.b16 %v332
      %v1566 = vunpack.c.h.b16 %v332
      %v1567 = vunpack.c.l.b16 %v333
      %v1568 = vunpack.c.h.b16 %v333
      %v1569 = vunpack.c.l.b16 %v334
      %v1570 = vunpack.c.h.b16 %v334
      %v1571 = vunpack.c.l.b16 %v335
      %v1572 = vunpack.c.h.b16 %v335
      %v1573 = vunpack.c.l.b16 %v336
      %v1574 = vunpack.c.h.b16 %v336
      %v1575 = vunpack.c.l.b16 %v337
      %v1576 = vunpack.c.h.b16 %v337
      %v1577 = vunpack.c.l.b16 %v338
      %v1578 = vunpack.c.h.b16 %v338
      %v1579 = vunpack.c.l.b16 %v339
      %v1580 = vunpack.c.h.b16 %v339
      %v1581 = vunpack.c.l.b16 %v340
      %v1582 = vunpack.c.h.b16 %v340
      %v1583 = vunpack.c.l.b16 %v341
      %v1584 = vunpack.c.h.b16 %v341
      %v1585 = vunpack.c.l.b16 %v342
      %v1586 = vunpack.c.h.b16 %v342
      %v1587 = vunpack.c.l.b16 %v343
      %v1588 = vunpack.c.h.b16 %v343
      %v1589 = vunpack.c.l.b16 %v344
      %v1590 = vunpack.c.h.b16 %v344
      %v1591 = vunpack.c.l.b16 %v345
      %v1592 = vunpack.c.h.b16 %v345
      %v1593 = vunpack.c.l.b16 %v346
      %v1594 = vunpack.c.h.b16 %v346
      %v1595 = vunpack.c.l.b16 %v347
      %v1596 = vunpack.c.h.b16 %v347
      %v1597 = vunpack.c.l.b16 %v348
      %v1598 = vunpack.c.h.b16 %v348
      %v1599 = vunpack.c.l.b16 %v349
      %v1600 = vunpack.c.h.b16 %v349
      %v1601 = vunpack.c.l.b16 %v350
      %v1602 = vunpack.c.h.b16 %v350
      %v1603 = vunpack.c.l.b16 %v351
      %v1604 = vunpack.c.h.b16 %v351
      %v1605 = vunpack.c.l.b16 %v352
      %v1606 = vunpack.c.h.b16 %v352
      %v1607 = vunpack.c.l.b16 %v353
      %v1608 = vunpack.c.h.b16 %v353
      %v1609 = vunpack.c.l.b16 %v354
      %v1610 = vunpack.c.h.b16 %v354
      %v1611 = vunpack.c.l.b16 %v355
      %v1612 = vunpack.c.h.b16 %v355
      %v1613 = vunpack.c.l.b16 %v356
      %v1614 = vunpack.c.h.b16 %v356
      %v1615 = vunpack.c.l.b16 %v357
      %v1616 = vunpack.c.h.b16 %v357
      %v1617 = vunpack.c.l.b16 %v358
      %v1618 = vunpack.c.h.b16 %v358
      %v1619 = vunpack.c.l.b16 %v359
      %v1620 = vunpack.c.h.b16 %v359
      %v1621 = vunpack.c.l.b16 %v360
      %v1622 = vunpack.c.h.b16 %v360
      %v1623 = vunpack.c.l.b16 %v361
      %v1624 = vunpack.c.h.b16 %v361
      %v1625 = vunpack.c.l.b16 %v362
      %v1626 = vunpack.c.h.b16 %v362
      %v1627 = vunpack.c.l.b16 %v363
      %v1628 = vunpack.c.h.b16 %v363
      %v1629 = vunpack.c.l.b16 %v364
      %v1630 = vunpack.c.h.b16 %v364
      %v1631 = vunpack.c.l.b16 %v365
      %v1632 = vunpack.c.h.b16 %v365
      %v1633 = vunpack.c.l.b16 %v366
      %v1634 = vunpack.c.h.b16 %v366
      %v1635 = vunpack.c.l.b16 %v367
      %v1636 = vunpack.c.h.b16 %v367
      %v1637 = vunpack.c.l.b16 %v368
      %v1638 = vunpack.c.h.b16 %v368
      %v1639 = vunpack.c.l.b16 %v369
      %v1640 = vunpack.c.h.b16 %v369
      %v1641 = vunpack.c.l.b16 %v370
      %v1642 = vunpack.c.h.b16 %v370
      %v1643 = vunpack.c.l.b16 %v371
      %v1644 = vunpack.c.h.b16 %v371
      %v1645 = vunpack.c.l.b16 %v372
      %v1646 = vunpack.c.h.b16 %v372
      %v1647 = vunpack.c.l.b16 %v373
      %v1648 = vunpack.c.h.b16 %v373
      %v1649 = vunpack.c.l.b16 %v374
      %v1650 = vunpack.c.h.b16 %v374
      %v1651 = vunpack.c.l.b16 %v375
      %v1652 = vunpack.c.h.b16 %v375
      %v1653 = vunpack.c.l.b16 %v376
      %v1654 = vunpack.c.h.b16 %v376
      %v1655 = vunpack.c.l.b16 %v377
      %v1656 = vunpack.c.h.b16 %v377
      %v1657 = vunpack.c.l.b16 %v378
      %v1658 = vunpack.c.h.b16 %v378
      %v1659 = vunpack.c.l.b16 %v379
      %v1660 = vunpack.c.h.b16 %v379
      %v1661 = vunpack.c.l.b16 %v380
      %v1662 = vunpack.c.h.b16 %v380
      %v1663 = vunpack.c.l.b16 %v381
      %v1664 = vunpack.c.h.b16 %v381
      %v1665 = vunpack.c.l.b16 %v382
      %v1666 = vunpack.c.h.b16 %v382
      %v1667 = vunpack.c.l.b16 %v383
      %v1668 = vunpack.c.h.b16 %v383
      %v1669 = vunpack.c.l.b16 %v384
      %v1670 = vunpack.c.h.b16 %v384
      %v1671 = vunpack.c.l.b16 %v385
      %v1672 = vunpack.c.h.b16 %v385
      %v1673 = vunpack.c.l.b16 %v386
      %v1674 = vunpack.c.h.b16 %v386
      %v1675 = vunpack.c.l.b16 %v387
      %v1676 = vunpack.c.h.b16 %v387
      %v1677 = vunpack.c.l.b16 %v388
      %v1678 = vunpack.c.h.b16 %v388
      %v1679 = vunpack.c.l.b16 %v389
      %v1680 = vunpack.c.h.b16 %v389
      %v1681 = vunpack.c.l.b16 %v390
      %v1682 = vunpack.c.h.b16 %v390
      %v1683 = vunpack.c.l.b16 %v391
      %v1684 = vunpack.c.h.b16 %v391
      %v1685 = vunpack.c.l.b16 %v392
      %v1686 = vunpack.c.h.b16 %v392
      %v1687 = vunpack.c.l.b16 %v393
      %v1688 = vunpack.c.h.b16 %v393
      %v1689 = vunpack.c.l.b16 %v394
      %v1690 = vunpack.c.h.b16 %v394
      %v1691 = vunpack.c.l.b16 %v395
      %v1692 = vunpack.c.h.b16 %v395
      %v1693 = vunpack.c.l.b16 %v396
      %v1694 = vunpack.c.h.b16 %v396
      %v1695 = vunpack.c.l.b16 %v397
      %v1696 = vunpack.c.h.b16 %v397
      %v1697 = vunpack.c.l.b16 %v398
      %v1698 = vunpack.c.h.b16 %v398
      %v1699 = vunpack.c.l.b16 %v399
      %v1700 = vunpack.c.h.b16 %v399
      %v1701 = vunpack.c.l.b16 %v400
      %v1702 = vunpack.c.h.b16 %v400
      %v1703 = vunpack.c.l.b16 %v401
      %v1704 = vunpack.c.h.b16 %v401
      %v1705 = vunpack.c.l.b16 %v402
      %v1706 = vunpack.c.h.b16 %v402
      %v1707 = vunpack.c.l.b16 %v403
      %v1708 = vunpack.c.h.b16 %v403
      %v1709 = vunpack.c.l.b16 %v404
      %v1710 = vunpack.c.h.b16 %v404
      %v1711 = vunpack.c.l.b16 %v405
      %v1712 = vunpack.c.h.b16 %v405
      %v1713 = vunpack.c.l.b16 %v406
      %v1714 = vunpack.c.h.b16 %v406
      %v1715 = vunpack.c.l.b16 %v407
      %v1716 = vunpack.c.h.b16 %v407
      %v1717 = vunpack.c.l.b16 %v408
      %v1718 = vunpack.c.h.b16 %v408
      %v1719 = vunpack.c.l.b16 %v409
      %v1720 = vunpack.c.h.b16 %v409
      %v1721 = vunpack.c.l.b16 %v410
      %v1722 = vunpack.c.h.b16 %v410
      %v1723 = vunpack.c.l.b16 %v411
      %v1724 = vunpack.c.h.b16 %v411
      %v1725 = vunpack.c.l.b16 %v412
      %v1726 = vunpack.c.h.b16 %v412
      %v1727 = vunpack.c.l.b16 %v413
      %v1728 = vunpack.c.h.b16 %v413
      %v1729 = vunpack.c.l.b16 %v414
      %v1730 = vunpack.c.h.b16 %v414
      %v1731 = vunpack.c.l.b16 %v415
      %v1732 = vunpack.c.h.b16 %v415
      %v1733 = vunpack.c.l.b16 %v416
      %v1734 = vunpack.c.h.b16 %v416
      %v1735 = vunpack.c.l.b16 %v417
      %v1736 = vunpack.c.h.b16 %v417
      %v1737 = vunpack.c.l.b16 %v418
      %v1738 = vunpack.c.h.b16 %v418
      %v1739 = vunpack.c.l.b16 %v419
      %v1740 = vunpack.c.h.b16 %v419
      %v1741 = vunpack.c.l.b16 %v420
      %v1742 = vunpack.c.h.b16 %v420
      %v1743 = vunpack.c.l.b16 %v421
      %v1744 = vunpack.c.h.b16 %v421
      %v1745 = vunpack.c.l.b16 %v422
      %v1746 = vunpack.c.h.b16 %v422
      %v1747 = vunpack.c.l.b16 %v423
      %v1748 = vunpack.c.h.b16 %v423
      %v1749 = vunpack.c.l.b16 %v424
      %v1750 = vunpack.c.h.b16 %v424
      %v1751 = vunpack.c.l.b16 %v425
      %v1752 = vunpack.c.h.b16 %v425
      %v1753 = vunpack.c.l.b16 %v426
      %v1754 = vunpack.c.h.b16 %v426
      %v1755 = vunpack.c.l.b16 %v427
      %v1756 = vunpack.c.h.b16 %v427
      %v1757 = vunpack.c.l.b16 %v428
      %v1758 = vunpack.c.h.b16 %v428
      %v1759 = vunpack.c.l.b16 %v429
      %v1760 = vunpack.c.h.b16 %v429
      %v1761 = vunpack.c.l.b16 %v430
      %v1762 = vunpack.c.h.b16 %v430
      %v1763 = vunpack.c.l.b16 %v431
      %v1764 = vunpack.c.h.b16 %v431
      %v1765 = vunpack.c.l.b16 %v432
      %v1766 = vunpack.c.h.b16 %v432
      %v1767 = vunpack.c.l.b16 %v433
      %v1768 = vunpack.c.h.b16 %v433
      %v1769 = vunpack.c.l.b16 %v434
      %v1770 = vunpack.c.h.b16 %v434
      %v1771 = vunpack.c.l.b16 %v435
      %v1772 = vunpack.c.h.b16 %v435
      %v1773 = vunpack.c.l.b16 %v436
      %v1774 = vunpack.c.h.b16 %v436
      %v1775 = vunpack.c.l.b16 %v437
      %v1776 = vunpack.c.h.b16 %v437
      %v1777 = vunpack.c.l.b16 %v438
      %v1778 = vunpack.c.h.b16 %v438
      %v1779 = vunpack.c.l.b16 %v439
      %v1780 = vunpack.c.h.b16 %v439
      %v1781 = vunpack.c.l.b16 %v440
      %v1782 = vunpack.c.h.b16 %v440
      %v1783 = vunpack.c.l.b16 %v441
      %v1784 = vunpack.c.h.b16 %v441
      %v1785 = vunpack.c.l.b16 %v442
      %v1786 = vunpack.c.h.b16 %v442
      %v1787 = vunpack.c.l.b16 %v443
      %v1788 = vunpack.c.h.b16 %v443
      %v1789 = vunpack.c.l.b16 %v444
      %v1790 = vunpack.c.h.b16 %v444
      %v1791 = vunpack.c.l.b16 %v445
      %v1792 = vunpack.c.h.b16 %v445
      %v1793 = vunpack.c.l.b16 %v446
      %v1794 = vunpack.c.h.b16 %v446
      %v1795 = vunpack.c.l.b16 %v447
      %v1796 = vunpack.c.h.b16 %v447
      %v1797 = vunpack.c.l.b16 %v448
      %v1798 = vunpack.c.h.b16 %v448
      %v1799 = vunpack.c.l.b16 %v449
      %v1800 = vunpack.c.h.b16 %v449
      %v1801 = vunpack.c.l.b16 %v450
      %v1802 = vunpack.c.h.b16 %v450
      %v1803 = vunpack.c.l.b16 %v451
      %v1804 = vunpack.c.h.b16 %v451
      %v1805 = vunpack.c.l.b16 %v452
      %v1806 = vunpack.c.h.b16 %v452
      %v1807 = vunpack.c.l.b16 %v453
      %v1808 = vunpack.c.h.b16 %v453
      %v1809 = vunpack.c.l.b16 %v454
      %v1810 = vunpack.c.h.b16 %v454
      %v1811 = vunpack.c.l.b16 %v455
      %v1812 = vunpack.c.h.b16 %v455
      %v1813 = vunpack.c.l.b16 %v456
      %v1814 = vunpack.c.h.b16 %v456
      %v1815 = vunpack.c.l.b16 %v457
      %v1816 = vunpack.c.h.b16 %v457
      %v1817 = vunpack.c.l.b16 %v458
      %v1818 = vunpack.c.h.b16 %v458
      %v1819 = vunpack.c.l.b16 %v459
      %v1820 = vunpack.c.h.b16 %v459
      %v1821 = vunpack.c.l.b16 %v460
      %v1822 = vunpack.c.h.b16 %v460
      %v1823 = vunpack.c.l.b16 %v461
      %v1824 = vunpack.c.h.b16 %v461
      %v1825 = vunpack.c.l.b16 %v462
      %v1826 = vunpack.c.h.b16 %v462
      %v1827 = vunpack.c.l.b16 %v463
      %v1828 = vunpack.c.h.b16 %v463
      %v1829 = vunpack.c.l.b16 %v464
      %v1830 = vunpack.c.h.b16 %v464
      %v1831 = vunpack.c.l.b16 %v465
      %v1832 = vunpack.c.h.b16 %v465
      %v1833 = vunpack.c.l.b16 %v466
      %v1834 = vunpack.c.h.b16 %v466
      %v1835 = vunpack.c.l.b16 %v467
      %v1836 = vunpack.c.h.b16 %v467
      %v1837 = vunpack.c.l.b16 %v468
      %v1838 = vunpack.c.h.b16 %v468
      %v1839 = vunpack.c.l.b16 %v469
      %v1840 = vunpack.c.h.b16 %v469
      %v1841 = vunpack.c.l.b16 %v470
      %v1842 = vunpack.c.h.b16 %v470
      %v1843 = vunpack.c.l.b16 %v471
      %v1844 = vunpack.c.h.b16 %v471
      %v1845 = vunpack.c.l.b16 %v472
      %v1846 = vunpack.c.h.b16 %v472
      %v1847 = vunpack.c.l.b16 %v473
      %v1848 = vunpack.c.h.b16 %v473
      %v1849 = vunpack.c.l.b16 %v474
      %v1850 = vunpack.c.h.b16 %v474
      %v1851 = vunpack.c.l.b16 %v475
      %v1852 = vunpack.c.h.b16 %v475
      %v1853 = vunpack.c.l.b16 %v476
      %v1854 = vunpack.c.h.b16 %v476
      %v1855 = vunpack.c.l.b16 %v477
      %v1856 = vunpack.c.h.b16 %v477
      %v1857 = vunpack.c.l.b16 %v478
      %v1858 = vunpack.c.h.b16 %v478
      %v1859 = vunpack.c.l.b16 %v479
      %v1860 = vunpack.c.h.b16 %v479
      %v1861 = vunpack.c.l.b16 %v480
      %v1862 = vunpack.c.h.b16 %v480
      %v1863 = vunpack.c.l.b16 %v481
      %v1864 = vunpack.c.h.b16 %v481
      %v1865 = vunpack.c.l.b16 %v482
      %v1866 = vunpack.c.h.b16 %v482
      %v1867 = vunpack.c.l.b16 %v483
      %v1868 = vunpack.c.h.b16 %v483
      %v1869 = vunpack.c.l.b16 %v484
      %v1870 = vunpack.c.h.b16 %v484
      %v1871 = vunpack.c.l.b16 %v485
      %v1872 = vunpack.c.h.b16 %v485
      %v1873 = vunpack.c.l.b16 %v486
      %v1874 = vunpack.c.h.b16 %v486
      %v1875 = vunpack.c.l.b16 %v487
      %v1876 = vunpack.c.h.b16 %v487
      %v1877 = vunpack.c.l.b16 %v488
      %v1878 = vunpack.c.h.b16 %v488
      %v1879 = vunpack.c.l.b16 %v489
      %v1880 = vunpack.c.h.b16 %v489
      %v1881 = vunpack.c.l.b16 %v490
      %v1882 = vunpack.c.h.b16 %v490
      %v1883 = vunpack.c.l.b16 %v491
      %v1884 = vunpack.c.h.b16 %v491
      %v1885 = vunpack.c.l.b16 %v492
      %v1886 = vunpack.c.h.b16 %v492
      %v1887 = vunpack.c.l.b16 %v493
      %v1888 = vunpack.c.h.b16 %v493
      %v1889 = vunpack.c.l.b16 %v494
      %v1890 = vunpack.c.h.b16 %v494
      %v1891 = vunpack.c.l.b16 %v495
      %v1892 = vunpack.c.h.b16 %v495
      %v1893 = vunpack.c.l.b16 %v496
      %v1894 = vunpack.c.h.b16 %v496
      %v1895 = vunpack.c.l.b16 %v497
      %v1896 = vunpack.c.h.b16 %v497
      %v1897 = vunpack.c.l.b16 %v498
      %v1898 = vunpack.c.h.b16 %v498
      %v1899 = vunpack.c.l.b16 %v499
      %v1900 = vunpack.c.h.b16 %v499
      %v1901 = vunpack.c.l.b16 %v500
      %v1902 = vunpack.c.h.b16 %v500
      %v1903 = vunpack.c.l.b16 %v501
      %v1904 = vunpack.c.h.b16 %v501
      %v1905 = vunpack.c.l.b16 %v502
      %v1906 = vunpack.c.h.b16 %v502
      %v1907 = vunpack.c.l.b16 %v503
      %v1908 = vunpack.c.h.b16 %v503
      %v1909 = vunpack.c.l.b16 %v504
      %v1910 = vunpack.c.h.b16 %v504
      %v1911 = vunpack.c.l.b16 %v505
      %v1912 = vunpack.c.h.b16 %v505
      %v1913 = vunpack.c.l.b16 %v506
      %v1914 = vunpack.c.h.b16 %v506
      %v1915 = vunpack.c.l.b16 %v507
      %v1916 = vunpack.c.h.b16 %v507
      %v1917 = vunpack.c.l.b16 %v508
      %v1918 = vunpack.c.h.b16 %v508
      %v1919 = vunpack.c.l.b16 %v509
      %v1920 = vunpack.c.h.b16 %v509
      %v1921 = vunpack.c.l.b16 %v510
      %v1922 = vunpack.c.h.b16 %v510
      %v1923 = vunpack.c.l.b16 %v511
      %v1924 = vunpack.c.h.b16 %v511
      %v1925 = vunpack.c.l.b16 %v512
      %v1926 = vunpack.c.h.b16 %v512
      %v1927 = vunpack.c.l.b16 %v513
      %v1928 = vunpack.c.h.b16 %v513
      %v1929 = vunpack.c.l.b16 %v514
      %v1930 = vunpack.c.h.b16 %v514
      %v1931 = vunpack.c.l.b16 %v515
      %v1932 = vunpack.c.h.b16 %v515
      %v1933 = vunpack.c.l.b16 %v516
      %v1934 = vunpack.c.h.b16 %v516
      %v1935 = vunpack.c.l.b16 %v517
      %v1936 = vunpack.c.h.b16 %v517
      %v1937 = vunpack.c.l.b16 %v518
      %v1938 = vunpack.c.h.b16 %v518
      %v1939 = vunpack.c.l.b16 %v519
      %v1940 = vunpack.c.h.b16 %v519
      %v1941 = vunpack.c.l.b16 %v520
      %v1942 = vunpack.c.h.b16 %v520
      %v1943 = vunpack.c.l.b16 %v521
      %v1944 = vunpack.c.h.b16 %v521
      %v1945 = vunpack.c.l.b16 %v522
      %v1946 = vunpack.c.h.b16 %v522
      %v1947 = vunpack.c.l.b16 %v523
      %v1948 = vunpack.c.h.b16 %v523
      %v1949 = vunpack.c.l.b16 %v524
      %v1950 = vunpack.c.h.b16 %v524
      %v1951 = vunpack.c.l.b16 %v525
      %v1952 = vunpack.c.h.b16 %v525
      %v1953 = vunpack.c.l.b16 %v526
      %v1954 = vunpack.c.h.b16 %v526
      %v1955 = vunpack.c.l.b16 %v527
      %v1956 = vunpack.c.h.b16 %v527
      %v1957 = vunpack.c.l.b16 %v528
      %v1958 = vunpack.c.h.b16 %v528
      %v1959 = vunpack.c.l.b16 %v529
      %v1960 = vunpack.c.h.b16 %v529
      %v1961 = vunpack.c.l.b16 %v530
      %v1962 = vunpack.c.h.b16 %v530
      %v1963 = vunpack.c.l.b16 %v531
      %v1964 = vunpack.c.h.b16 %v531
      %v1965 = vunpack.c.l.b16 %v532
      %v1966 = vunpack.c.h.b16 %v532
      %v1967 = vunpack.c.l.b16 %v533
      %v1968 = vunpack.c.h.b16 %v533
      %v1969 = vunpack.c.l.b16 %v534
      %v1970 = vunpack.c.h.b16 %v534
      %v1971 = vunpack.c.l.b16 %v535
      %v1972 = vunpack.c.h.b16 %v535
      %v1973 = vunpack.c.l.b16 %v536
      %v1974 = vunpack.c.h.b16 %v536
      %v1975 = vunpack.c.l.b16 %v537
      %v1976 = vunpack.c.h.b16 %v537
      %v1977 = vunpack.c.l.b16 %v538
      %v1978 = vunpack.c.h.b16 %v538
      %v1979 = vunpack.c.l.b16 %v539
      %v1980 = vunpack.c.h.b16 %v539
      %v1981 = vunpack.c.l.b16 %v540
      %v1982 = vunpack.c.h.b16 %v540
      %v1983 = vunpack.c.l.b16 %v541
      %v1984 = vunpack.c.h.b16 %v541
      %v1985 = vunpack.c.l.b16 %v542
      %v1986 = vunpack.c.h.b16 %v542
      %v1987 = vunpack.c.l.b16 %v543
      %v1988 = vunpack.c.h.b16 %v543
      %v1989 = vunpack.c.l.b16 %v544
      %v1990 = vunpack.c.h.b16 %v544
      %v1991 = vunpack.c.l.b16 %v545
      %v1992 = vunpack.c.h.b16 %v545
      %v1993 = vunpack.c.l.b16 %v546
      %v1994 = vunpack.c.h.b16 %v546
      %v1995 = vunpack.c.l.b16 %v547
      %v1996 = vunpack.c.h.b16 %v547
      %v1997 = vunpack.c.l.b16 %v548
      %v1998 = vunpack.c.h.b16 %v548
      %v1999 = vunpack.c.l.b16 %v549
      %v2000 = vunpack.c.h.b16 %v549
      %v2001 = vunpack.c.l.b16 %v550
      %v2002 = vunpack.c.h.b16 %v550
      %v2003 = vunpack.c.l.b16 %v551
      %v2004 = vunpack.c.h.b16 %v551
      %v2005 = vunpack.c.l.b16 %v552
      %v2006 = vunpack.c.h.b16 %v552
      %v2007 = vunpack.c.l.b16 %v553
      %v2008 = vunpack.c.h.b16 %v553
      %v2009 = vunpack.c.l.b16 %v554
      %v2010 = vunpack.c.h.b16 %v554
      %v2011 = vunpack.c.l.b16 %v555
      %v2012 = vunpack.c.h.b16 %v555
      %v2013 = vunpack.c.l.b16 %v556
      %v2014 = vunpack.c.h.b16 %v556
      %v2015 = vunpack.c.l.b16 %v557
      %v2016 = vunpack.c.h.b16 %v557
      %v2017 = vunpack.c.l.b16 %v558
      %v2018 = vunpack.c.h.b16 %v558
      %v2019 = vunpack.c.l.b16 %v559
      %v2020 = vunpack.c.h.b16 %v559
      %v2021 = vunpack.c.l.b16 %v560
      %v2022 = vunpack.c.h.b16 %v560
      %v2023 = vunpack.c.l.b16 %v561
      %v2024 = vunpack.c.h.b16 %v561
      %v2025 = vunpack.c.l.b16 %v562
      %v2026 = vunpack.c.h.b16 %v562
      %v2027 = vunpack.c.l.b16 %v563
      %v2028 = vunpack.c.h.b16 %v563
      %v2029 = vunpack.c.l.b16 %v564
      %v2030 = vunpack.c.h.b16 %v564
      %v2031 = vunpack.c.l.b16 %v565
      %v2032 = vunpack.c.h.b16 %v565
      %v2033 = vunpack.c.l.b16 %v566
      %v2034 = vunpack.c.h.b16 %v566
      %v2035 = vunpack.c.l.b16 %v567
      %v2036 = vunpack.c.h.b16 %v567
      %v2037 = vunpack.c.l.b16 %v568
      %v2038 = vunpack.c.h.b16 %v568
      %v2039 = vunpack.c.l.b16 %v569
      %v2040 = vunpack.c.h.b16 %v569
      %v2041 = vunpack.c.l.b16 %v570
      %v2042 = vunpack.c.h.b16 %v570
      %v2043 = vunpack.c.l.b16 %v571
      %v2044 = vunpack.c.h.b16 %v571
      %v2045 = vunpack.c.l.b16 %v572
      %v2046 = vunpack.c.h.b16 %v572
      %v2047 = vunpack.c.l.b16 %v573
      %v2048 = vunpack.c.h.b16 %v573
      %v2049 = vunpack.c.l.b16 %v574
      %v2050 = vunpack.c.h.b16 %v574
      %v2051 = vunpack.c.l.b16 %v575
      %v2052 = vunpack.c.h.b16 %v575
      %v2053 = vunpack.c.l.b16 %v576
      %v2054 = vunpack.c.h.b16 %v576
      %v2055 = vunpack.c.l.b16 %v577
      %v2056 = vunpack.c.h.b16 %v577
      %v2057 = vunpack.c.l.b16 %v578
      %v2058 = vunpack.c.h.b16 %v578
      %v2059 = vunpack.c.l.b16 %v579
      %v2060 = vunpack.c.h.b16 %v579
      %v2061 = vunpack.c.l.b16 %v580
      %v2062 = vunpack.c.h.b16 %v580
      %v2063 = vunpack.c.l.b16 %v581
      %v2064 = vunpack.c.h.b16 %v581
      %v2065 = vunpack.c.l.b16 %v582
      %v2066 = vunpack.c.h.b16 %v582
      %v2067 = vunpack.c.l.b16 %v583
      %v2068 = vunpack.c.h.b16 %v583
      %v2069 = vunpack.c.l.b16 %v584
      %v2070 = vunpack.c.h.b16 %v584
      %v2071 = vunpack.c.l.b16 %v585
      %v2072 = vunpack.c.h.b16 %v585
      %v2073 = vunpack.c.l.b16 %v586
      %v2074 = vunpack.c.h.b16 %v586
      %v2075 = vunpack.c.l.b16 %v587
      %v2076 = vunpack.c.h.b16 %v587
      %v2077 = vunpack.c.l.b16 %v588
      %v2078 = vunpack.c.h.b16 %v588
      %v2079 = vunpack.c.l.b16 %v589
      %v2080 = vunpack.c.h.b16 %v589
      %v2081 = vunpack.c.l.b16 %v590
      %v2082 = vunpack.c.h.b16 %v590
      %v2083 = vunpack.c.l.b16 %v591
      %v2084 = vunpack.c.h.b16 %v591
      %v2085 = vunpack.c.l.b16 %v592
      %v2086 = vunpack.c.h.b16 %v592
      %v2087 = vunpack.c.l.b16 %v593
      %v2088 = vunpack.c.h.b16 %v593
      %v2089 = vunpack.c.l.b16 %v594
      %v2090 = vunpack.c.h.b16 %v594
      %v2091 = vunpack.c.l.b16 %v595
      %v2092 = vunpack.c.h.b16 %v595
      %v2093 = vunpack.c.l.b16 %v596
      %v2094 = vunpack.c.h.b16 %v596
      %v2095 = vunpack.c.l.b16 %v597
      %v2096 = vunpack.c.h.b16 %v597
      %v2097 = vunpack.c.l.b16 %v598
      %v2098 = vunpack.c.h.b16 %v598
      %v2099 = vunpack.c.l.b16 %v599
      %v2100 = vunpack.c.h.b16 %v599
      %v2101 = vunpack.c.l.b16 %v600
      %v2102 = vunpack.c.h.b16 %v600
      %v2103 = vunpack.c.l.b16 %v601
      %v2104 = vunpack.c.h.b16 %v601
      %v2105 = vunpack.c.l.b16 %v602
      %v2106 = vunpack.c.h.b16 %v602
      %v2107 = vunpack.c.l.b16 %v603
      %v2108 = vunpack.c.h.b16 %v603
      %v2109 = vunpack.c.l.b16 %v604
      %v2110 = vunpack.c.h.b16 %v604
      %v2111 = vunpack.c.l.b16 %v605
      %v2112 = vunpack.c.h.b16 %v605
      %v2113 = vunpack.c.l.b16 %v606
      %v2114 = vunpack.c.h.b16 %v606
      %v2115 = vunpack.c.l.b16 %v607
      %v2116 = vunpack.c.h.b16 %v607
      %v2117 = vunpack.c.l.b16 %v608
      %v2118 = vunpack.c.h.b16 %v608
      %v2119 = vunpack.c.l.b16 %v609
      %v2120 = vunpack.c.h.b16 %v609
      %v2121 = vunpack.c.l.b16 %v610
      %v2122 = vunpack.c.h.b16 %v610
      %v2123 = vunpack.c.l.b16 %v611
      %v2124 = vunpack.c.h.b16 %v611
      %v2125 = vunpack.c.l.b16 %v612
      %v2126 = vunpack.c.h.b16 %v612
      %v2127 = vunpack.c.l.b16 %v613
      %v2128 = vunpack.c.h.b16 %v613
      %v2129 = vunpack.c.l.b16 %v614
      %v2130 = vunpack.c.h.b16 %v614
      %v2131 = vunpack.c.l.b16 %v615
      %v2132 = vunpack.c.h.b16 %v615
      %v2133 = vunpack.c.l.b16 %v616
      %v2134 = vunpack.c.h.b16 %v616
      %v2135 = vunpack.c.l.b16 %v617
      %v2136 = vunpack.c.h.b16 %v617
      %v2137 = vunpack.c.l.b16 %v618
      %v2138 = vunpack.c.h.b16 %v618
      %v2139 = vunpack.c.l.b16 %v619
      %v2140 = vunpack.c.h.b16 %v619
      %v2141 = vunpack.c.l.b16 %v620
      %v2142 = vunpack.c.h.b16 %v620
      %v2143 = vunpack.c.l.b16 %v621
      %v2144 = vunpack.c.h.b16 %v621
      %v2145 = vunpack.c.l.b16 %v622
      %v2146 = vunpack.c.h.b16 %v622
      %v2147 = vunpack.c.l.b16 %v623
      %v2148 = vunpack.c.h.b16 %v623
      %v2149 = vunpack.c.l.b16 %v624
      %v2150 = vunpack.c.h.b16 %v624
      %v2151 = vunpack.c.l.b16 %v625
      %v2152 = vunpack.c.h.b16 %v625
      %v2153 = vunpack.c.l.b16 %v626
      %v2154 = vunpack.c.h.b16 %v626
      %v2155 = vunpack.c.l.b16 %v627
      %v2156 = vunpack.c.h.b16 %v627
      %v2157 = vunpack.c.l.b16 %v628
      %v2158 = vunpack.c.h.b16 %v628
      %v2159 = vunpack.c.l.b16 %v629
      %v2160 = vunpack.c.h.b16 %v629
      %v2161 = vunpack.c.l.b16 %v630
      %v2162 = vunpack.c.h.b16 %v630
      %v2163 = vunpack.c.l.b16 %v631
      %v2164 = vunpack.c.h.b16 %v631
      %v2165 = vunpack.c.l.b16 %v632
      %v2166 = vunpack.c.h.b16 %v632
      %v2167 = vunpack.c.l.b16 %v633
      %v2168 = vunpack.c.h.b16 %v633
      %v2169 = vunpack.c.l.b16 %v634
      %v2170 = vunpack.c.h.b16 %v634
      %v2171 = vunpack.c.l.b16 %v635
      %v2172 = vunpack.c.h.b16 %v635
      %v2173 = vunpack.c.l.b16 %v636
      %v2174 = vunpack.c.h.b16 %v636
      %v2175 = vunpack.c.l.b16 %v637
      %v2176 = vunpack.c.h.b16 %v637
      %v2177 = vunpack.c.l.b16 %v638
      %v2178 = vunpack.c.h.b16 %v638
      %v2179 = vunpack.c.l.b16 %v639
      %v2180 = vunpack.c.h.b16 %v639
      %v2181 = vunpack.c.l.b16 %v640
      %v2182 = vunpack.c.h.b16 %v640
      %v2183 = vunpack.c.l.b16 %v641
      %v2184 = vunpack.c.h.b16 %v641
      %v2185 = vunpack.c.l.b16 %v642
      %v2186 = vunpack.c.h.b16 %v642
      %v2187 = vunpack.c.l.b16 %v643
      %v2188 = vunpack.c.h.b16 %v643
      %v2189 = vunpack.c.l.b16 %v644
      %v2190 = vunpack.c.h.b16 %v644
      %v2191 = vunpack.c.l.b16 %v645
      %v2192 = vunpack.c.h.b16 %v645
      %v2193 = vunpack.c.l.b16 %v646
      %v2194 = vunpack.c.h.b16 %v646
      %v2195 = vunpack.c.l.b16 %v647
      %v2196 = vunpack.c.h.b16 %v647
      %v2197 = vunpack.c.l.b16 %v648
      %v2198 = vunpack.c.h.b16 %v648
      %v2199 = vunpack.c.l.b16 %v649
      %v2200 = vunpack.c.h.b16 %v649
      %v2201 = vunpack.c.l.b16 %v650
      %v2202 = vunpack.c.h.b16 %v650
      %v2203 = vunpack.c.l.b16 %v651
      %v2204 = vunpack.c.h.b16 %v651
      %v2205 = vunpack.c.l.b16 %v652
      %v2206 = vunpack.c.h.b16 %v652
      %v2207 = vunpack.c.l.b16 %v653
      %v2208 = vunpack.c.h.b16 %v653
      %v2209 = vunpack.c.l.b16 %v654
      %v2210 = vunpack.c.h.b16 %v654
      %v2211 = vunpack.c.l.b16 %v655
      %v2212 = vunpack.c.h.b16 %v655
      %v2213 = vunpack.c.l.b16 %v656
      %v2214 = vunpack.c.h.b16 %v656
      %v2215 = vunpack.c.l.b16 %v657
      %v2216 = vunpack.c.h.b16 %v657
      %v2217 = vunpack.c.l.b16 %v658
      %v2218 = vunpack.c.h.b16 %v658
      %v2219 = vunpack.c.l.b16 %v659
      %v2220 = vunpack.c.h.b16 %v659
      %v2221 = vunpack.c.l.b16 %v660
      %v2222 = vunpack.c.h.b16 %v660
      %v2223 = vunpack.c.l.b16 %v661
      %v2224 = vunpack.c.h.b16 %v661
      %v2225 = vunpack.c.l.b16 %v662
      %v2226 = vunpack.c.h.b16 %v662
      %v2227 = vunpack.c.l.b16 %v663
      %v2228 = vunpack.c.h.b16 %v663
      %v2229 = vunpack.c.l.b16 %v664
      %v2230 = vunpack.c.h.b16 %v664
      %v2231 = vunpack.c.l.b16 %v665
      %v2232 = vunpack.c.h.b16 %v665
      %v2233 = vunpack.c.l.b16 %v666
      %v2234 = vunpack.c.h.b16 %v666
      %v2235 = vunpack.c.l.b16 %v667
      %v2236 = vunpack.c.h.b16 %v667
      %v2237 = vunpack.c.l.b16 %v668
      %v2238 = vunpack.c.h.b16 %v668
      %v2239 = vunpack.c.l.b16 %v669
      %v2240 = vunpack.c.h.b16 %v669
      %v2241 = vunpack.c.l.b16 %v670
      %v2242 = vunpack.c.h.b16 %v670
      %v2243 = vunpack.c.l.b16 %v671
      %v2244 = vunpack.c.h.b16 %v671
      %v2245 = vunpack.c.l.b16 %v672
      %v2246 = vunpack.c.h.b16 %v672
      %v2247 = vunpack.c.l.b16 %v673
      %v2248 = vunpack.c.h.b16 %v673
      %v2249 = vunpack.c.l.b16 %v674
      %v2250 = vunpack.c.h.b16 %v674
      %v2251 = vunpack.c.l.b16 %v675
      %v2252 = vunpack.c.h.b16 %v675
      %v2253 = vunpack.c.l.b16 %v676
      %v2254 = vunpack.c.h.b16 %v676
      %v2255 = vunpack.c.l.b16 %v677
      %v2256 = vunpack.c.h.b16 %v677
      %v2257 = vunpack.c.l.b16 %v678
      %v2258 = vunpack.c.h.b16 %v678
      %v2259 = vunpack.c.l.b16 %v679
      %v2260 = vunpack.c.h.b16 %v679
      %v2261 = vunpack.c.l.b16 %v680
      %v2262 = vunpack.c.h.b16 %v680
      %v2263 = vunpack.c.l.b16 %v681
      %v2264 = vunpack.c.h.b16 %v681
      %v2265 = vunpack.c.l.b16 %v682
      %v2266 = vunpack.c.h.b16 %v682
      %v2267 = vunpack.c.l.b16 %v683
      %v2268 = vunpack.c.h.b16 %v683
      %v2269 = vunpack.c.l.b16 %v684
      %v2270 = vunpack.c.h.b16 %v684
      %v2271 = vunpack.c.l.b16 %v685
      %v2272 = vunpack.c.h.b16 %v685
      %v2273 = vunpack.c.l.b16 %v686
      %v2274 = vunpack.c.h.b16 %v686
      %v2275 = vunpack.c.l.b16 %v687
      %v2276 = vunpack.c.h.b16 %v687
      %v2277 = vunpack.c.l.b16 %v688
      %v2278 = vunpack.c.h.b16 %v688
      %v2279 = vunpack.c.l.b16 %v689
      %v2280 = vunpack.c.h.b16 %v689
      %v2281 = vunpack.c.l.b16 %v690
      %v2282 = vunpack.c.h.b16 %v690
      %v2283 = vunpack.c.l.b16 %v691
      %v2284 = vunpack.c.h.b16 %v691
      %v2285 = vunpack.c.l.b16 %v692
      %v2286 = vunpack.c.h.b16 %v692
      %v2287 = vunpack.c.l.b16 %v693
      %v2288 = vunpack.c.h.b16 %v693
      %v2289 = vunpack.c.l.b16 %v694
      %v2290 = vunpack.c.h.b16 %v694
      %v2291 = vunpack.c.l.b16 %v695
      %v2292 = vunpack.c.h.b16 %v695
      %v2293 = vunpack.c.l.b16 %v696
      %v2294 = vunpack.c.h.b16 %v696
      %v2295 = vunpack.c.l.b16 %v697
      %v2296 = vunpack.c.h.b16 %v697
      %v2297 = vunpack.c.l.b16 %v698
      %v2298 = vunpack.c.h.b16 %v698
      %v2299 = vunpack.c.l.b16 %v699
      %v2300 = vunpack.c.h.b16 %v699
      %v2301 = vunpack.c.l.b16 %v700
      %v2302 = vunpack.c.h.b16 %v700
      %v2303 = vunpack.c.l.b16 %v701
      %v2304 = vunpack.c.h.b16 %v701
      %v2305 = vunpack.c.l.b16 %v702
      %v2306 = vunpack.c.h.b16 %v702
      %v2307 = vunpack.c.l.b16 %v703
      %v2308 = vunpack.c.h.b16 %v703
      %v2309 = vunpack.c.l.b16 %v704
      %v2310 = vunpack.c.h.b16 %v704
      %v2311 = vunpack.c.l.b16 %v705
      %v2312 = vunpack.c.h.b16 %v705
      %v2313 = vunpack.c.l.b16 %v706
      %v2314 = vunpack.c.h.b16 %v706
      %v2315 = vunpack.c.l.b16 %v707
      %v2316 = vunpack.c.h.b16 %v707
      %v2317 = vunpack.c.l.b16 %v708
      %v2318 = vunpack.c.h.b16 %v708
      %v2319 = vunpack.c.l.b16 %v709
      %v2320 = vunpack.c.h.b16 %v709
      %v2321 = vunpack.c.l.b16 %v710
      %v2322 = vunpack.c.h.b16 %v710
      %v2323 = vunpack.c.l.b16 %v711
      %v2324 = vunpack.c.h.b16 %v711
      %v2325 = vunpack.c.l.b16 %v712
      %v2326 = vunpack.c.h.b16 %v712
      %v2327 = vunpack.c.l.b16 %v713
      %v2328 = vunpack.c.h.b16 %v713
      %v2329 = vunpack.c.l.b16 %v714
      %v2330 = vunpack.c.h.b16 %v714
      %v2331 = vunpack.c.l.b16 %v715
      %v2332 = vunpack.c.h.b16 %v715
      %v2333 = vunpack.c.l.b16 %v716
      %v2334 = vunpack.c.h.b16 %v716
      %v2335 = vunpack.c.l.b16 %v717
      %v2336 = vunpack.c.h.b16 %v717
      %v2337 = vunpack.c.l.b16 %v718
      %v2338 = vunpack.c.h.b16 %v718
      %v2339 = vunpack.c.l.b16 %v719
      %v2340 = vunpack.c.h.b16 %v719
      %v2341 = vunpack.c.l.b16 %v720
      %v2342 = vunpack.c.h.b16 %v720
      %v2343 = vunpack.c.l.b16 %v721
      %v2344 = vunpack.c.h.b16 %v721
      %v2345 = vunpack.c.l.b16 %v722
      %v2346 = vunpack.c.h.b16 %v722
      %v2347 = vunpack.c.l.b16 %v723
      %v2348 = vunpack.c.h.b16 %v723
      %v2349 = vunpack.c.l.b16 %v724
      %v2350 = vunpack.c.h.b16 %v724
      %v2351 = vunpack.c.l.b16 %v725
      %v2352 = vunpack.c.h.b16 %v725
      %v2353 = vunpack.c.l.b16 %v726
      %v2354 = vunpack.c.h.b16 %v726
      %v2355 = vunpack.c.l.b16 %v727
      %v2356 = vunpack.c.h.b16 %v727
      %v2357 = vunpack.c.l.b16 %v728
      %v2358 = vunpack.c.h.b16 %v728
      %v2359 = vunpack.c.l.b16 %v729
      %v2360 = vunpack.c.h.b16 %v729
      %v2361 = vunpack.c.l.b16 %v730
      %v2362 = vunpack.c.h.b16 %v730
      %v2363 = vunpack.c.l.b16 %v731
      %v2364 = vunpack.c.h.b16 %v731
      %v2365 = vunpack.c.l.b16 %v732
      %v2366 = vunpack.c.h.b16 %v732
      %v2367 = vunpack.c.l.b16 %v733
      %v2368 = vunpack.c.h.b16 %v733
      %v2369 = vunpack.c.l.b16 %v734
      %v2370 = vunpack.c.h.b16 %v734
      %v2371 = vunpack.c.l.b16 %v735
      %v2372 = vunpack.c.h.b16 %v735
      %v2373 = vunpack.c.l.b16 %v736
      %v2374 = vunpack.c.h.b16 %v736
      %v2375 = vunpack.c.l.b16 %v737
      %v2376 = vunpack.c.h.b16 %v737
      %v2377 = vunpack.c.l.b16 %v738
      %v2378 = vunpack.c.h.b16 %v738
      %v2379 = vunpack.c.l.b16 %v739
      %v2380 = vunpack.c.h.b16 %v739
      %v2381 = vunpack.c.l.b16 %v740
      %v2382 = vunpack.c.h.b16 %v740
      %v2383 = vunpack.c.l.b16 %v741
      %v2384 = vunpack.c.h.b16 %v741
      %v2385 = vunpack.c.l.b16 %v742
      %v2386 = vunpack.c.h.b16 %v742
      %v2387 = vunpack.c.l.b16 %v743
      %v2388 = vunpack.c.h.b16 %v743
      %v2389 = vunpack.c.l.b16 %v744
      %v2390 = vunpack.c.h.b16 %v744
      %v2391 = vunpack.c.l.b16 %v745
      %v2392 = vunpack.c.h.b16 %v745
      %v2393 = vunpack.c.l.b16 %v746
      %v2394 = vunpack.c.h.b16 %v746
      %v2395 = vunpack.c.l.b16 %v747
      %v2396 = vunpack.c.h.b16 %v747
      %v2397 = vunpack.c.l.b16 %v748
      %v2398 = vunpack.c.h.b16 %v748
      %v2399 = vunpack.c.l.b16 %v749
      %v2400 = vunpack.c.h.b16 %v749
      %v2401 = vunpack.c.l.b16 %v750
      %v2402 = vunpack.c.h.b16 %v750
      %v2403 = vunpack.c.l.b16 %v751
      %v2404 = vunpack.c.h.b16 %v751
      %v2405 = vunpack.c.l.b16 %v752
      %v2406 = vunpack.c.h.b16 %v752
      %v2407 = vunpack.c.l.b16 %v753
      %v2408 = vunpack.c.h.b16 %v753
      %v2409 = vunpack.c.l.b16 %v754
      %v2410 = vunpack.c.h.b16 %v754
      %v2411 = vunpack.c.l.b16 %v755
      %v2412 = vunpack.c.h.b16 %v755
      %v2413 = vunpack.c.l.b16 %v756
      %v2414 = vunpack.c.h.b16 %v756
      %v2415 = vunpack.c.l.b16 %v757
      %v2416 = vunpack.c.h.b16 %v757
      %v2417 = vunpack.c.l.b16 %v758
      %v2418 = vunpack.c.h.b16 %v758
      %v2419 = vunpack.c.l.b16 %v759
      %v2420 = vunpack.c.h.b16 %v759
      %v2421 = vunpack.c.l.b16 %v760
      %v2422 = vunpack.c.h.b16 %v760
      %v2423 = vunpack.c.l.b16 %v761
      %v2424 = vunpack.c.h.b16 %v761
      %v2425 = vunpack.c.l.b16 %v762
      %v2426 = vunpack.c.h.b16 %v762
      %v2427 = vunpack.c.l.b16 %v763
      %v2428 = vunpack.c.h.b16 %v763
      %v2429 = vunpack.c.l.b16 %v764
      %v2430 = vunpack.c.h.b16 %v764
      %v2431 = vunpack.c.l.b16 %v765
      %v2432 = vunpack.c.h.b16 %v765
      %v2433 = vunpack.c.l.b16 %v766
      %v2434 = vunpack.c.h.b16 %v766
      %v2435 = vunpack.c.l.b16 %v767
      %v2436 = vunpack.c.h.b16 %v767
      %v2437 = vunpack.c.l.b16 %v768
      %v2438 = vunpack.c.h.b16 %v768
      %v2439 = vunpack.c.l.b16 %v769
      %v2440 = vunpack.c.h.b16 %v769
      %v2441 = vunpack.c.l.b16 %v770
      %v2442 = vunpack.c.h.b16 %v770
      %v2443 = vunpack.c.l.b16 %v771
      %v2444 = vunpack.c.h.b16 %v771
      %v2445 = vunpack.c.l.b16 %v772
      %v2446 = vunpack.c.h.b16 %v772
      %v2447 = vunpack.c.l.b16 %v773
      %v2448 = vunpack.c.h.b16 %v773
      %v2449 = vunpack.c.l.b16 %v774
      %v2450 = vunpack.c.h.b16 %v774
      %v2451 = vunpack.c.l.b16 %v775
      %v2452 = vunpack.c.h.b16 %v775
      %v2453 = vunpack.c.l.b16 %v776
      %v2454 = vunpack.c.h.b16 %v776
      %v2455 = vunpack.c.l.b16 %v777
      %v2456 = vunpack.c.h.b16 %v777
      %v2457 = vunpack.c.l.b16 %v778
      %v2458 = vunpack.c.h.b16 %v778
      %v2459 = vunpack.c.l.b16 %v779
      %v2460 = vunpack.c.h.b16 %v779
      %v2461 = vunpack.c.l.b16 %v780
      %v2462 = vunpack.c.h.b16 %v780
      %v2463 = vunpack.c.l.b16 %v781
      %v2464 = vunpack.c.h.b16 %v781
      %v2465 = vunpack.c.l.b16 %v782
      %v2466 = vunpack.c.h.b16 %v782
      %v2467 = vunpack.c.l.b16 %v783
      %v2468 = vunpack.c.h.b16 %v783
      %v2469 = vunpack.c.l.b16 %v784
      %v2470 = vunpack.c.h.b16 %v784
      %v2471 = vunpack.c.l.b16 %v785
      %v2472 = vunpack.c.h.b16 %v785
      %v2473 = vunpack.c.l.b16 %v786
      %v2474 = vunpack.c.h.b16 %v786
      %v2475 = vunpack.c.l.b16 %v787
      %v2476 = vunpack.c.h.b16 %v787
      %v2477 = vunpack.c.l.b16 %v788
      %v2478 = vunpack.c.h.b16 %v788
      %v2479 = vunpack.c.l.b16 %v789
      %v2480 = vunpack.c.h.b16 %v789
      %v2481 = vunpack.c.l.b16 %v790
      %v2482 = vunpack.c.h.b16 %v790
      %v2483 = vunpack.c.l.b16 %v791
      %v2484 = vunpack.c.h.b16 %v791
      %v2485 = vunpack.c.l.b16 %v792
      %v2486 = vunpack.c.h.b16 %v792
      %v2487 = vunpack.c.l.b16 %v793
      %v2488 = vunpack.c.h.b16 %v793
      %v2489 = vunpack.c.l.b16 %v794
      %v2490 = vunpack.c.h.b16 %v794
      %v2491 = vpack.c.b16 %v1469, %v1467
      %v2492 = vpack.c.b16 %v1470, %v1468
      %v2493 = vpack.c.b16 %v1473, %v1471
      %v2494 = vpack.c.b16 %v1474, %v1472
      %v2495 = vpack.c.b16 %v1477, %v1475
      %v2496 = vpack.c.b16 %v1478, %v1476
      %v2497 = vpack.c.b16 %v1481, %v1479
      %v2498 = vpack.c.b16 %v1482, %v1480
      %v2499 = vpack.c.b16 %v1485, %v1483
      %v2500 = vpack.c.b16 %v1486, %v1484
      %v2501 = vpack.c.b16 %v1489, %v1487
      %v2502 = vpack.c.b16 %v1490, %v1488
      %v2503 = vpack.c.b16 %v1493, %v1491
      %v2504 = vpack.c.b16 %v1494, %v1492
      %v2505 = vpack.c.b16 %v1497, %v1495
      %v2506 = vpack.c.b16 %v1498, %v1496
      %v2507 = vpack.c.b16 %v1501, %v1499
      %v2508 = vpack.c.b16 %v1502, %v1500
      %v2509 = vpack.c.b16 %v1505, %v1503
      %v2510 = vpack.c.b16 %v1506, %v1504
      %v2511 = vpack.c.b16 %v1509, %v1507
      %v2512 = vpack.c.b16 %v1510, %v1508
      %v2513 = vpack.c.b16 %v1513, %v1511
      %v2514 = vpack.c.b16 %v1514, %v1512
      %v2515 = vpack.c.b16 %v1517, %v1515
      %v2516 = vpack.c.b16 %v1518, %v1516
      %v2517 = vpack.c.b16 %v1521, %v1519
      %v2518 = vpack.c.b16 %v1522, %v1520
      %v2519 = vpack.c.b16 %v1525, %v1523
      %v2520 = vpack.c.b16 %v1526, %v1524
      %v2521 = vpack.c.b16 %v1529, %v1527
      %v2522 = vpack.c.b16 %v1530, %v1528
      %v2523 = vpack.c.b16 %v1533, %v1531
      %v2524 = vpack.c.b16 %v1534, %v1532
      %v2525 = vpack.c.b16 %v1537, %v1535
      %v2526 = vpack.c.b16 %v1538, %v1536
      %v2527 = vpack.c.b16 %v1541, %v1539
      %v2528 = vpack.c.b16 %v1542, %v1540
      %v2529 = vpack.c.b16 %v1545, %v1543
      %v2530 = vpack.c.b16 %v1546, %v1544
      %v2531 = vpack.c.b16 %v1549, %v1547
      %v2532 = vpack.c.b16 %v1550, %v1548
      %v2533 = vpack.c.b16 %v1553, %v1551
      %v2534 = vpack.c.b16 %v1554, %v1552
      %v2535 = vpack.c.b16 %v1557, %v1555
      %v2536 = vpack.c.b16 %v1558, %v1556
      %v2537 = vpack.c.b16 %v1561, %v1559
      %v2538 = vpack.c.b16 %v1562, %v1560
      %v2539 = vpack.c.b16 %v1565, %v1563
      %v2540 = vpack.c.b16 %v1566, %v1564
      %v2541 = vpack.c.b16 %v1569, %v1567
      %v2542 = vpack.c.b16 %v1570, %v1568
      %v2543 = vpack.c.b16 %v1573, %v1571
      %v2544 = vpack.c.b16 %v1574, %v1572
      %v2545 = vpack.c.b16 %v1577, %v1575
      %v2546 = vpack.c.b16 %v1578, %v1576
      %v2547 = vpack.c.b16 %v1581, %v1579
      %v2548 = vpack.c.b16 %v1582, %v1580
      %v2549 = vpack.c.b16 %v1585, %v1583
      %v2550 = vpack.c.b16 %v1586, %v1584
      %v2551 = vpack.c.b16 %v1589, %v1587
      %v2552 = vpack.c.b16 %v1590, %v1588
      %v2553 = vpack.c.b16 %v1593, %v1591
      %v2554 = vpack.c.b16 %v1594, %v1592
      %v2555 = vpack.c.b16 %v1597, %v1595
      %v2556 = vpack.c.b16 %v1598, %v1596
      %v2557 = vpack.c.b16 %v1601, %v1599
      %v2558 = vpack.c.b16 %v1602, %v1600
      %v2559 = vpack.c.b16 %v1605, %v1603
      %v2560 = vpack.c.b16 %v1606, %v1604
      %v2561 = vpack.c.b16 %v1609, %v1607
      %v2562 = vpack.c.b16 %v1610, %v1608
      %v2563 = vpack.c.b16 %v1613, %v1611
      %v2564 = vpack.c.b16 %v1614, %v1612
      %v2565 = vpack.c.b16 %v1617, %v1615
      %v2566 = vpack.c.b16 %v1618, %v1616
      %v2567 = vpack.c.b16 %v1621, %v1619
      %v2568 = vpack.c.b16 %v1622, %v1620
      %v2569 = vpack.c.b16 %v1625, %v1623
      %v2570 = vpack.c.b16 %v1626, %v1624
      %v2571 = vpack.c.b16 %v1629, %v1627
      %v2572 = vpack.c.b16 %v1630, %v1628
      %v2573 = vpack.c.b16 %v1633, %v1631
      %v2574 = vpack.c.b16 %v1634, %v1632
      %v2575 = vpack.c.b16 %v1637, %v1635
      %v2576 = vpack.c.b16 %v1638, %v1636
      %v2577 = vpack.c.b16 %v1641, %v1639
      %v2578 = vpack.c.b16 %v1642, %v1640
      %v2579 = vpack.c.b16 %v1645, %v1643
      %v2580 = vpack.c.b16 %v1646, %v1644
      %v2581 = vpack.c.b16 %v1649, %v1647
      %v2582 = vpack.c.b16 %v1650, %v1648
      %v2583 = vpack.c.b16 %v1653, %v1651
      %v2584 = vpack.c.b16 %v1654, %v1652
      %v2585 = vpack.c.b16 %v1657, %v1655
      %v2586 = vpack.c.b16 %v1658, %v1656
      %v2587 = vpack.c.b16 %v1661, %v1659
      %v2588 = vpack.c.b16 %v1662, %v1660
      %v2589 = vpack.c.b16 %v1665, %v1663
      %v2590 = vpack.c.b16 %v1666, %v1664
      %v2591 = vpack.c.b16 %v1669, %v1667
      %v2592 = vpack.c.b16 %v1670, %v1668
      %v2593 = vpack.c.b16 %v1673, %v1671
      %v2594 = vpack.c.b16 %v1674, %v1672
      %v2595 = vpack.c.b16 %v1677, %v1675
      %v2596 = vpack.c.b16 %v1678, %v1676
      %v2597 = vpack.c.b16 %v1681, %v1679
      %v2598 = vpack.c.b16 %v1682, %v1680
      %v2599 = vpack.c.b16 %v1685, %v1683
      %v2600 = vpack.c.b16 %v1686, %v1684
      %v2601 = vpack.c.b16 %v1689, %v1687
      %v2602 = vpack.c.b16 %v1690, %v1688
      %v2603 = vpack.c.b16 %v1693, %v1691
      %v2604 = vpack.c.b16 %v1694, %v1692
      %v2605 = vpack.c.b16 %v1697, %v1695
      %v2606 = vpack.c.b16 %v1698, %v1696
      %v2607 = vpack.c.b16 %v1701, %v1699
      %v2608 = vpack.c.b16 %v1702, %v1700
      %v2609 = vpack.c.b16 %v1705, %v1703
      %v2610 = vpack.c.b16 %v1706, %v1704
      %v2611 = vpack.c.b16 %v1709, %v1707
      %v2612 = vpack.c.b16 %v1710, %v1708
      %v2613 = vpack.c.b16 %v1713, %v1711
      %v2614 = vpack.c.b16 %v1714, %v1712
      %v2615 = vpack.c.b16 %v1717, %v1715
      %v2616 = vpack.c.b16 %v1718, %v1716
      %v2617 = vpack.c.b16 %v1721, %v1719
      %v2618 = vpack.c.b16 %v1722, %v1720
      %v2619 = vpack.c.b16 %v1725, %v1723
      %v2620 = vpack.c.b16 %v1726, %v1724
      %v2621 = vpack.c.b16 %v1729, %v1727
      %v2622 = vpack.c.b16 %v1730, %v1728
      %v2623 = vpack.c.b16 %v1733, %v1731
      %v2624 = vpack.c.b16 %v1734, %v1732
      %v2625 = vpack.c.b16 %v1737, %v1735
      %v2626 = vpack.c.b16 %v1738, %v1736
      %v2627 = vpack.c.b16 %v1741, %v1739
      %v2628 = vpack.c.b16 %v1742, %v1740
      %v2629 = vpack.c.b16 %v1745, %v1743
      %v2630 = vpack.c.b16 %v1746, %v1744
      %v2631 = vpack.c.b16 %v1749, %v1747
      %v2632 = vpack.c.b16 %v1750, %v1748
      %v2633 = vpack.c.b16 %v1753, %v1751
      %v2634 = vpack.c.b16 %v1754, %v1752
      %v2635 = vpack.c.b16 %v1757, %v1755
      %v2636 = vpack.c.b16 %v1758, %v1756
      %v2637 = vpack.c.b16 %v1761, %v1759
      %v2638 = vpack.c.b16 %v1762, %v1760
      %v2639 = vpack.c.b16 %v1765, %v1763
      %v2640 = vpack.c.b16 %v1766, %v1764
      %v2641 = vpack.c.b16 %v1769, %v1767
      %v2642 = vpack.c.b16 %v1770, %v1768
      %v2643 = vpack.c.b16 %v1773, %v1771
      %v2644 = vpack.c.b16 %v1774, %v1772
      %v2645 = vpack.c.b16 %v1777, %v1775
      %v2646 = vpack.c.b16 %v1778, %v1776
      %v2647 = vpack.c.b16 %v1781, %v1779
      %v2648 = vpack.c.b16 %v1782, %v1780
      %v2649 = vpack.c.b16 %v1785, %v1783
      %v2650 = vpack.c.b16 %v1786, %v1784
      %v2651 = vpack.c.b16 %v1789, %v1787
      %v2652 = vpack.c.b16 %v1790, %v1788
      %v2653 = vpack.c.b16 %v1793, %v1791
      %v2654 = vpack.c.b16 %v1794, %v1792
      %v2655 = vpack.c.b16 %v1797, %v1795
      %v2656 = vpack.c.b16 %v1798, %v1796
      %v2657 = vpack.c.b16 %v1801, %v1799
      %v2658 = vpack.c.b16 %v1802, %v1800
      %v2659 = vpack.c.b16 %v1805, %v1803
      %v2660 = vpack.c.b16 %v1806, %v1804
      %v2661 = vpack.c.b16 %v1809, %v1807
      %v2662 = vpack.c.b16 %v1810, %v1808
      %v2663 = vpack.c.b16 %v1813, %v1811
      %v2664 = vpack.c.b16 %v1814, %v1812
      %v2665 = vpack.c.b16 %v1817, %v1815
      %v2666 = vpack.c.b16 %v1818, %v1816
      %v2667 = vpack.c.b16 %v1821, %v1819
      %v2668 = vpack.c.b16 %v1822, %v1820
      %v2669 = vpack.c.b16 %v1825, %v1823
      %v2670 = vpack.c.b16 %v1826, %v1824
      %v2671 = vpack.c.b16 %v1829, %v1827
      %v2672 = vpack.c.b16 %v1830, %v1828
      %v2673 = vpack.c.b16 %v1833, %v1831
      %v2674 = vpack.c.b16 %v1834, %v1832
      %v2675 = vpack.c.b16 %v1837, %v1835
      %v2676 = vpack.c.b16 %v1838, %v1836
      %v2677 = vpack.c.b16 %v1841, %v1839
      %v2678 = vpack.c.b16 %v1842, %v1840
      %v2679 = vpack.c.b16 %v1845, %v1843
      %v2680 = vpack.c.b16 %v1846, %v1844
      %v2681 = vpack.c.b16 %v1849, %v1847
      %v2682 = vpack.c.b16 %v1850, %v1848
      %v2683 = vpack.c.b16 %v1853, %v1851
      %v2684 = vpack.c.b16 %v1854, %v1852
      %v2685 = vpack.c.b16 %v1857, %v1855
      %v2686 = vpack.c.b16 %v1858, %v1856
      %v2687 = vpack.c.b16 %v1861, %v1859
      %v2688 = vpack.c.b16 %v1862, %v1860
      %v2689 = vpack.c.b16 %v1865, %v1863
      %v2690 = vpack.c.b16 %v1866, %v1864
      %v2691 = vpack.c.b16 %v1869, %v1867
      %v2692 = vpack.c.b16 %v1870, %v1868
      %v2693 = vpack.c.b16 %v1873, %v1871
      %v2694 = vpack.c.b16 %v1874, %v1872
      %v2695 = vpack.c.b16 %v1877, %v1875
      %v2696 = vpack.c.b16 %v1878, %v1876
      %v2697 = vpack.c.b16 %v1881, %v1879
      %v2698 = vpack.c.b16 %v1882, %v1880
      %v2699 = vpack.c.b16 %v1885, %v1883
      %v2700 = vpack.c.b16 %v1886, %v1884
      %v2701 = vpack.c.b16 %v1889, %v1887
      %v2702 = vpack.c.b16 %v1890, %v1888
      %v2703 = vpack.c.b16 %v1893, %v1891
      %v2704 = vpack.c.b16 %v1894, %v1892
      %v2705 = vpack.c.b16 %v1897, %v1895
      %v2706 = vpack.c.b16 %v1898, %v1896
      %v2707 = vpack.c.b16 %v1901, %v1899
      %v2708 = vpack.c.b16 %v1902, %v1900
      %v2709 = vpack.c.b16 %v1905, %v1903
      %v2710 = vpack.c.b16 %v1906, %v1904
      %v2711 = vpack.c.b16 %v1909, %v1907
      %v2712 = vpack.c.b16 %v1910, %v1908
      %v2713 = vpack.c.b16 %v1913, %v1911
      %v2714 = vpack.c.b16 %v1914, %v1912
      %v2715 = vpack.c.b16 %v1917, %v1915
      %v2716 = vpack.c.b16 %v1918, %v1916
      %v2717 = vpack.c.b16 %v1921, %v1919
      %v2718 = vpack.c.b16 %v1922, %v1920
      %v2719 = vpack.c.b16 %v1925, %v1923
      %v2720 = vpack.c.b16 %v1926, %v1924
      %v2721 = vpack.c.b16 %v1929, %v1927
      %v2722 = vpack.c.b16 %v1930, %v1928
      %v2723 = vpack.c.b16 %v1933, %v1931
      %v2724 = vpack.c.b16 %v1934, %v1932
      %v2725 = vpack.c.b16 %v1937, %v1935
      %v2726 = vpack.c.b16 %v1938, %v1936
      %v2727 = vpack.c.b16 %v1941, %v1939
      %v2728 = vpack.c.b16 %v1942, %v1940
      %v2729 = vpack.c.b16 %v1945, %v1943
      %v2730 = vpack.c.b16 %v1946, %v1944
      %v2731 = vpack.c.b16 %v1949, %v1947
      %v2732 = vpack.c.b16 %v1950, %v1948
      %v2733 = vpack.c.b16 %v1953, %v1951
      %v2734 = vpack.c.b16 %v1954, %v1952
      %v2735 = vpack.c.b16 %v1957, %v1955
      %v2736 = vpack.c.b16 %v1958, %v1956
      %v2737 = vpack.c.b16 %v1961, %v1959
      %v2738 = vpack.c.b16 %v1962, %v1960
      %v2739 = vpack.c.b16 %v1965, %v1963
      %v2740 = vpack.c.b16 %v1966, %v1964
      %v2741 = vpack.c.b16 %v1969, %v1967
      %v2742 = vpack.c.b16 %v1970, %v1968
      %v2743 = vpack.c.b16 %v1973, %v1971
      %v2744 = vpack.c.b16 %v1974, %v1972
      %v2745 = vpack.c.b16 %v1977, %v1975
      %v2746 = vpack.c.b16 %v1978, %v1976
      %v2747 = vpack.c.b16 %v1981, %v1979
      %v2748 = vpack.c.b16 %v1982, %v1980
      %v2749 = vpack.c.b16 %v1985, %v1983
      %v2750 = vpack.c.b16 %v1986, %v1984
      %v2751 = vpack.c.b16 %v1989, %v1987
      %v2752 = vpack.c.b16 %v1990, %v1988
      %v2753 = vpack.c.b16 %v1993, %v1991
      %v2754 = vpack.c.b16 %v1994, %v1992
      %v2755 = vpack.c.b16 %v1997, %v1995
      %v2756 = vpack.c.b16 %v1998, %v1996
      %v2757 = vpack.c.b16 %v2001, %v1999
      %v2758 = vpack.c.b16 %v2002, %v2000
      %v2759 = vpack.c.b16 %v2005, %v2003
      %v2760 = vpack.c.b16 %v2006, %v2004
      %v2761 = vpack.c.b16 %v2009, %v2007
      %v2762 = vpack.c.b16 %v2010, %v2008
      %v2763 = vpack.c.b16 %v2013, %v2011
      %v2764 = vpack.c.b16 %v2014, %v2012
      %v2765 = vpack.c.b16 %v2017, %v2015
      %v2766 = vpack.c.b16 %v2018, %v2016
      %v2767 = vpack.c.b16 %v2021, %v2019
      %v2768 = vpack.c.b16 %v2022, %v2020
      %v2769 = vpack.c.b16 %v2025, %v2023
      %v2770 = vpack.c.b16 %v2026, %v2024
      %v2771 = vpack.c.b16 %v2029, %v2027
      %v2772 = vpack.c.b16 %v2030, %v2028
      %v2773 = vpack.c.b16 %v2033, %v2031
      %v2774 = vpack.c.b16 %v2034, %v2032
      %v2775 = vpack.c.b16 %v2037, %v2035
      %v2776 = vpack.c.b16 %v2038, %v2036
      %v2777 = vpack.c.b16 %v2041, %v2039
      %v2778 = vpack.c.b16 %v2042, %v2040
      %v2779 = vpack.c.b16 %v2045, %v2043
      %v2780 = vpack.c.b16 %v2046, %v2044
      %v2781 = vpack.c.b16 %v2049, %v2047
      %v2782 = vpack.c.b16 %v2050, %v2048
      %v2783 = vpack.c.b16 %v2053, %v2051
      %v2784 = vpack.c.b16 %v2054, %v2052
      %v2785 = vpack.c.b16 %v2057, %v2055
      %v2786 = vpack.c.b16 %v2058, %v2056
      %v2787 = vpack.c.b16 %v2061, %v2059
      %v2788 = vpack.c.b16 %v2062, %v2060
      %v2789 = vpack.c.b16 %v2065, %v2063
      %v2790 = vpack.c.b16 %v2066, %v2064
      %v2791 = vpack.c.b16 %v2069, %v2067
      %v2792 = vpack.c.b16 %v2070, %v2068
      %v2793 = vpack.c.b16 %v2073, %v2071
      %v2794 = vpack.c.b16 %v2074, %v2072
      %v2795 = vpack.c.b16 %v2077, %v2075
      %v2796 = vpack.c.b16 %v2078, %v2076
      %v2797 = vpack.c.b16 %v2081, %v2079
      %v2798 = vpack.c.b16 %v2082, %v2080
      %v2799 = vpack.c.b16 %v2085, %v2083
      %v2800 = vpack.c.b16 %v2086, %v2084
      %v2801 = vpack.c.b16 %v2089, %v2087
      %v2802 = vpack.c.b16 %v2090, %v2088
      %v2803 = vpack.c.b16 %v2093, %v2091
      %v2804 = vpack.c.b16 %v2094, %v2092
      %v2805 = vpack.c.b16 %v2097, %v2095
      %v2806 = vpack.c.b16 %v2098, %v2096
      %v2807 = vpack.c.b16 %v2101, %v2099
      %v2808 = vpack.c.b16 %v2102, %v2100
      %v2809 = vpack.c.b16 %v2105, %v2103
      %v2810 = vpack.c.b16 %v2106, %v2104
      %v2811 = vpack.c.b16 %v2109, %v2107
      %v2812 = vpack.c.b16 %v2110, %v2108
      %v2813 = vpack.c.b16 %v2113, %v2111
      %v2814 = vpack.c.b16 %v2114, %v2112
      %v2815 = vpack.c.b16 %v2117, %v2115
      %v2816 = vpack.c.b16 %v2118, %v2116
      %v2817 = vpack.c.b16 %v2121, %v2119
      %v2818 = vpack.c.b16 %v2122, %v2120
      %v2819 = vpack.c.b16 %v2125, %v2123
      %v2820 = vpack.c.b16 %v2126, %v2124
      %v2821 = vpack.c.b16 %v2129, %v2127
      %v2822 = vpack.c.b16 %v2130, %v2128
      %v2823 = vpack.c.b16 %v2133, %v2131
      %v2824 = vpack.c.b16 %v2134, %v2132
      %v2825 = vpack.c.b16 %v2137, %v2135
      %v2826 = vpack.c.b16 %v2138, %v2136
      %v2827 = vpack.c.b16 %v2141, %v2139
      %v2828 = vpack.c.b16 %v2142, %v2140
      %v2829 = vpack.c.b16 %v2145, %v2143
      %v2830 = vpack.c.b16 %v2146, %v2144
      %v2831 = vpack.c.b16 %v2149, %v2147
      %v2832 = vpack.c.b16 %v2150, %v2148
      %v2833 = vpack.c.b16 %v2153, %v2151
      %v2834 = vpack.c.b16 %v2154, %v2152
      %v2835 = vpack.c.b16 %v2157, %v2155
      %v2836 = vpack.c.b16 %v2158, %v2156
      %v2837 = vpack.c.b16 %v2161, %v2159
      %v2838 = vpack.c.b16 %v2162, %v2160
      %v2839 = vpack.c.b16 %v2165, %v2163
      %v2840 = vpack.c.b16 %v2166, %v2164
      %v2841 = vpack.c.b16 %v2169, %v2167
      %v2842 = vpack.c.b16 %v2170, %v2168
      %v2843 = vpack.c.b16 %v2173, %v2171
      %v2844 = vpack.c.b16 %v2174, %v2172
      %v2845 = vpack.c.b16 %v2177, %v2175
      %v2846 = vpack.c.b16 %v2178, %v2176
      %v2847 = vpack.c.b16 %v2181, %v2179
      %v2848 = vpack.c.b16 %v2182, %v2180
      %v2849 = vpack.c.b16 %v2185, %v2183
      %v2850 = vpack.c.b16 %v2186, %v2184
      %v2851 = vpack.c.b16 %v2189, %v2187
      %v2852 = vpack.c.b16 %v2190, %v2188
      %v2853 = vpack.c.b16 %v2193, %v2191
      %v2854 = vpack.c.b16 %v2194, %v2192
      %v2855 = vpack.c.b16 %v2197, %v2195
      %v2856 = vpack.c.b16 %v2198, %v2196
      %v2857 = vpack.c.b16 %v2201, %v2199
      %v2858 = vpack.c.b16 %v2202, %v2200
      %v2859 = vpack.c.b16 %v2205, %v2203
      %v2860 = vpack.c.b16 %v2206, %v2204
      %v2861 = vpack.c.b16 %v2209, %v2207
      %v2862 = vpack.c.b16 %v2210, %v2208
      %v2863 = vpack.c.b16 %v2213, %v2211
      %v2864 = vpack.c.b16 %v2214, %v2212
      %v2865 = vpack.c.b16 %v2217, %v2215
      %v2866 = vpack.c.b16 %v2218, %v2216
      %v2867 = vpack.c.b16 %v2221, %v2219
      %v2868 = vpack.c.b16 %v2222, %v2220
      %v2869 = vpack.c.b16 %v2225, %v2223
      %v2870 = vpack.c.b16 %v2226, %v2224
      %v2871 = vpack.c.b16 %v2229, %v2227
      %v2872 = vpack.c.b16 %v2230, %v2228
      %v2873 = vpack.c.b16 %v2233, %v2231
      %v2874 = vpack.c.b16 %v2234, %v2232
      %v2875 = vpack.c.b16 %v2237, %v2235
      %v2876 = vpack.c.b16 %v2238, %v2236
      %v2877 = vpack.c.b16 %v2241, %v2239
      %v2878 = vpack.c.b16 %v2242, %v2240
      %v2879 = vpack.c.b16 %v2245, %v2243
      %v2880 = vpack.c.b16 %v2246, %v2244
      %v2881 = vpack.c.b16 %v2249, %v2247
      %v2882 = vpack.c.b16 %v2250, %v2248
      %v2883 = vpack.c.b16 %v2253, %v2251
      %v2884 = vpack.c.b16 %v2254, %v2252
      %v2885 = vpack.c.b16 %v2257, %v2255
      %v2886 = vpack.c.b16 %v2258, %v2256
      %v2887 = vpack.c.b16 %v2261, %v2259
      %v2888 = vpack.c.b16 %v2262, %v2260
      %v2889 = vpack.c.b16 %v2265, %v2263
      %v2890 = vpack.c.b16 %v2266, %v2264
      %v2891 = vpack.c.b16 %v2269, %v2267
      %v2892 = vpack.c.b16 %v2270, %v2268
      %v2893 = vpack.c.b16 %v2273, %v2271
      %v2894 = vpack.c.b16 %v2274, %v2272
      %v2895 = vpack.c.b16 %v2277, %v2275
      %v2896 = vpack.c.b16 %v2278, %v2276
      %v2897 = vpack.c.b16 %v2281, %v2279
      %v2898 = vpack.c.b16 %v2282, %v2280
      %v2899 = vpack.c.b16 %v2285, %v2283
      %v2900 = vpack.c.b16 %v2286, %v2284
      %v2901 = vpack.c.b16 %v2289, %v2287
      %v2902 = vpack.c.b16 %v2290, %v2288
      %v2903 = vpack.c.b16 %v2293, %v2291
      %v2904 = vpack.c.b16 %v2294, %v2292
      %v2905 = vpack.c.b16 %v2297, %v2295
      %v2906 = vpack.c.b16 %v2298, %v2296
      %v2907 = vpack.c.b16 %v2301, %v2299
      %v2908 = vpack.c.b16 %v2302, %v2300
      %v2909 = vpack.c.b16 %v2305, %v2303
      %v2910 = vpack.c.b16 %v2306, %v2304
      %v2911 = vpack.c.b16 %v2309, %v2307
      %v2912 = vpack.c.b16 %v2310, %v2308
      %v2913 = vpack.c.b16 %v2313, %v2311
      %v2914 = vpack.c.b16 %v2314, %v2312
      %v2915 = vpack.c.b16 %v2317, %v2315
      %v2916 = vpack.c.b16 %v2318, %v2316
      %v2917 = vpack.c.b16 %v2321, %v2319
      %v2918 = vpack.c.b16 %v2322, %v2320
      %v2919 = vpack.c.b16 %v2325, %v2323
      %v2920 = vpack.c.b16 %v2326, %v2324
      %v2921 = vpack.c.b16 %v2329, %v2327
      %v2922 = vpack.c.b16 %v2330, %v2328
      %v2923 = vpack.c.b16 %v2333, %v2331
      %v2924 = vpack.c.b16 %v2334, %v2332
      %v2925 = vpack.c.b16 %v2337, %v2335
      %v2926 = vpack.c.b16 %v2338, %v2336
      %v2927 = vpack.c.b16 %v2341, %v2339
      %v2928 = vpack.c.b16 %v2342, %v2340
      %v2929 = vpack.c.b16 %v2345, %v2343
      %v2930 = vpack.c.b16 %v2346, %v2344
      %v2931 = vpack.c.b16 %v2349, %v2347
      %v2932 = vpack.c.b16 %v2350, %v2348
      %v2933 = vpack.c.b16 %v2353, %v2351
      %v2934 = vpack.c.b16 %v2354, %v2352
      %v2935 = vpack.c.b16 %v2357, %v2355
      %v2936 = vpack.c.b16 %v2358, %v2356
      %v2937 = vpack.c.b16 %v2361, %v2359
      %v2938 = vpack.c.b16 %v2362, %v2360
      %v2939 = vpack.c.b16 %v2365, %v2363
      %v2940 = vpack.c.b16 %v2366, %v2364
      %v2941 = vpack.c.b16 %v2369, %v2367
      %v2942 = vpack.c.b16 %v2370, %v2368
      %v2943 = vpack.c.b16 %v2373, %v2371
      %v2944 = vpack.c.b16 %v2374, %v2372
      %v2945 = vpack.c.b16 %v2377, %v2375
      %v2946 = vpack.c.b16 %v2378, %v2376
      %v2947 = vpack.c.b16 %v2381, %v2379
      %v2948 = vpack.c.b16 %v2382, %v2380
      %v2949 = vpack.c.b16 %v2385, %v2383
      %v2950 = vpack.c.b16 %v2386, %v2384
      %v2951 = vpack.c.b16 %v2389, %v2387
      %v2952 = vpack.c.b16 %v2390, %v2388
      %v2953 = vpack.c.b16 %v2393, %v2391
      %v2954 = vpack.c.b16 %v2394, %v2392
      %v2955 = vpack.c.b16 %v2397, %v2395
      %v2956 = vpack.c.b16 %v2398, %v2396
      %v2957 = vpack.c.b16 %v2401, %v2399
      %v2958 = vpack.c.b16 %v2402, %v2400
      %v2959 = vpack.c.b16 %v2405, %v2403
      %v2960 = vpack.c.b16 %v2406, %v2404
      %v2961 = vpack.c.b16 %v2409, %v2407
      %v2962 = vpack.c.b16 %v2410, %v2408
      %v2963 = vpack.c.b16 %v2413, %v2411
      %v2964 = vpack.c.b16 %v2414, %v2412
      %v2965 = vpack.c.b16 %v2417, %v2415
      %v2966 = vpack.c.b16 %v2418, %v2416
      %v2967 = vpack.c.b16 %v2421, %v2419
      %v2968 = vpack.c.b16 %v2422, %v2420
      %v2969 = vpack.c.b16 %v2425, %v2423
      %v2970 = vpack.c.b16 %v2426, %v2424
      %v2971 = vpack.c.b16 %v2429, %v2427
      %v2972 = vpack.c.b16 %v2430, %v2428
      %v2973 = vpack.c.b16 %v2433, %v2431
      %v2974 = vpack.c.b16 %v2434, %v2432
      %v2975 = vpack.c.b16 %v2437, %v2435
      %v2976 = vpack.c.b16 %v2438, %v2436
      %v2977 = vpack.c.b16 %v2441, %v2439
      %v2978 = vpack.c.b16 %v2442, %v2440
      %v2979 = vpack.c.b16 %v2445, %v2443
      %v2980 = vpack.c.b16 %v2446, %v2444
      %v2981 = vpack.c.b16 %v2449, %v2447
      %v2982 = vpack.c.b16 %v2450, %v2448
      %v2983 = vpack.c.b16 %v2453, %v2451
      %v2984 = vpack.c.b16 %v2454, %v2452
      %v2985 = vpack.c.b16 %v2457, %v2455
      %v2986 = vpack.c.b16 %v2458, %v2456
      %v2987 = vpack.c.b16 %v2461, %v2459
      %v2988 = vpack.c.b16 %v2462, %v2460
      %v2989 = vpack.c.b16 %v2465, %v2463
      %v2990 = vpack.c.b16 %v2466, %v2464
      %v2991 = vpack.c.b16 %v2469, %v2467
      %v2992 = vpack.c.b16 %v2470, %v2468
      %v2993 = vpack.c.b16 %v2473, %v2471
      %v2994 = vpack.c.b16 %v2474, %v2472
      %v2995 = vpack.c.b16 %v2477, %v2475
      %v2996 = vpack.c.b16 %v2478, %v2476
      %v2997 = vpack.c.b16 %v2481, %v2479
      %v2998 = vpack.c.b16 %v2482, %v2480
      %v2999 = vpack.c.b16 %v2485, %v2483
      %v3000 = vpack.c.b16 %v2486, %v2484
      %v3001 = vpack.c.b16 %v2489, %v2487
      %v3002 = vpack.c.b16 %v2490, %v2488
      %3515 = vmatprep.subr.bf16.mxu0 %v2492
      %3516 = vmatpush1.bf16.msra.mxu0 %v2491
      %3517 = vmatprep.subr.bf16.mxu0 %v2494
      %3518 = vmatpush1.bf16.msra.mxu0 %v2493
      %3519 = vmatprep.subr.bf16.mxu0 %v2496
      %3520 = vmatpush1.bf16.msra.mxu0 %v2495
      %3521 = vmatprep.subr.bf16.mxu0 %v2498
      %3522 = vmatpush1.bf16.msra.mxu0 %v2497
      %3523 = vmatprep.subr.bf16.mxu0 %v2500
      %3524 = vmatpush1.bf16.msra.mxu0 %v2499
      %3525 = vmatprep.subr.bf16.mxu0 %v2502
      %3526 = vmatpush1.bf16.msra.mxu0 %v2501
      %3527 = vmatprep.subr.bf16.mxu0 %v2504
      %3528 = vmatpush1.bf16.msra.mxu0 %v2503
      %3529 = vmatprep.subr.bf16.mxu0 %v2506
      %3530 = vmatpush1.bf16.msra.mxu0 %v2505
      %3531 = vmatprep.subr.bf16.mxu0 %v2508
      %3532 = vmatpush1.bf16.msra.mxu0 %v2507
      %3533 = vmatprep.subr.bf16.mxu0 %v2510
      %3534 = vmatpush1.bf16.msra.mxu0 %v2509
      %3535 = vmatprep.subr.bf16.mxu0 %v2512
      %3536 = vmatpush1.bf16.msra.mxu0 %v2511
      %3537 = vmatprep.subr.bf16.mxu0 %v2514
      %3538 = vmatpush1.bf16.msra.mxu0 %v2513
      %3539 = vmatprep.subr.bf16.mxu0 %v2516
      %3540 = vmatpush1.bf16.msra.mxu0 %v2515
      %3541 = vmatprep.subr.bf16.mxu0 %v2518
      %3542 = vmatpush1.bf16.msra.mxu0 %v2517
      %3543 = vmatprep.subr.bf16.mxu0 %v2520
      %3544 = vmatpush1.bf16.msra.mxu0 %v2519
      %3545 = vmatprep.subr.bf16.mxu0 %v2522
      %3546 = vmatpush1.bf16.msra.mxu0 %v2521
      %3547 = vmatprep.mubr.bf16.mxu0 %v892
      %3548 = vmatmul.mubr.bf16.gmra.mrb[0].mxu0 %v891
      %v3549 = vpop.f32.mrb[0].mxu0
      %v3550 = vadd.f32 0.0, %v3549
      %v3551 = vpop.f32.mrb[0].mxu0
      %v3552 = vadd.f32 0.0, %v3551
      %v3553 = vpop.f32.mrb[0].mxu0
      %v3554 = vadd.f32 0.0, %v3553
      %v3555 = vpop.f32.mrb[0].mxu0
      %v3556 = vadd.f32 0.0, %v3555
      %3557 = vdwg.mxu0
      %3558 = vmatprep.subr.bf16.mxu0 %v2524
      %3559 = vmatpush1.bf16.msra.mxu0 %v2523
      %3560 = vmatprep.subr.bf16.mxu0 %v2526
      %3561 = vmatpush1.bf16.msra.mxu0 %v2525
      %3562 = vmatprep.subr.bf16.mxu0 %v2528
      %3563 = vmatpush1.bf16.msra.mxu0 %v2527
      %3564 = vmatprep.subr.bf16.mxu0 %v2530
      %3565 = vmatpush1.bf16.msra.mxu0 %v2529
      %3566 = vmatprep.subr.bf16.mxu0 %v2532
      %3567 = vmatpush1.bf16.msra.mxu0 %v2531
      %3568 = vmatprep.subr.bf16.mxu0 %v2534
      %3569 = vmatpush1.bf16.msra.mxu0 %v2533
      %3570 = vmatprep.subr.bf16.mxu0 %v2536
      %3571 = vmatpush1.bf16.msra.mxu0 %v2535
      %3572 = vmatprep.subr.bf16.mxu0 %v2538
      %3573 = vmatpush1.bf16.msra.mxu0 %v2537
      %3574 = vmatprep.subr.bf16.mxu0 %v2540
      %3575 = vmatpush1.bf16.msra.mxu0 %v2539
      %3576 = vmatprep.subr.bf16.mxu0 %v2542
      %3577 = vmatpush1.bf16.msra.mxu0 %v2541
      %3578 = vmatprep.subr.bf16.mxu0 %v2544
      %3579 = vmatpush1.bf16.msra.mxu0 %v2543
      %3580 = vmatprep.subr.bf16.mxu0 %v2546
      %3581 = vmatpush1.bf16.msra.mxu0 %v2545
      %3582 = vmatprep.subr.bf16.mxu0 %v2548
      %3583 = vmatpush1.bf16.msra.mxu0 %v2547
      %3584 = vmatprep.subr.bf16.mxu0 %v2550
      %3585 = vmatpush1.bf16.msra.mxu0 %v2549
      %3586 = vmatprep.subr.bf16.mxu0 %v2552
      %3587 = vmatpush1.bf16.msra.mxu0 %v2551
      %3588 = vmatprep.subr.bf16.mxu0 %v2554
      %3589 = vmatpush1.bf16.msra.mxu0 %v2553
      %3590 = vmatprep.mubr.bf16.mxu0 %v894
      %3591 = vmatmul.mubr.bf16.gmra.mrb[0].mxu0 %v893
      %v3592 = vpop.f32.mrb[0].mxu0
      %v3593 = vadd.f32 %v3550, %v3592
      %v3594 = vpop.f32.mrb[0].mxu0
      %v3595 = vadd.f32 %v3552, %v3594
      %v3596 = vpop.f32.mrb[0].mxu0
      %v3597 = vadd.f32 %v3554, %v3596
      %v3598 = vpop.f32.mrb[0].mxu0
      %v3599 = vadd.f32 %v3556, %v3598
      %3600 = vdwg.mxu0
      %3601 = vmatprep.subr.bf16.mxu0 %v2556
      %3602 = vmatpush1.bf16.msra.mxu0 %v2555
      %3603 = vmatprep.subr.bf16.mxu0 %v2558
      %3604 = vmatpush1.bf16.msra.mxu0 %v2557
      %3605 = vmatprep.subr.bf16.mxu0 %v2560
      %3606 = vmatpush1.bf16.msra.mxu0 %v2559
      %3607 = vmatprep.subr.bf16.mxu0 %v2562
      %3608 = vmatpush1.bf16.msra.mxu0 %v2561
      %3609 = vmatprep.subr.bf16.mxu0 %v2564
      %3610 = vmatpush1.bf16.msra.mxu0 %v2563
      %3611 = vmatprep.subr.bf16.mxu0 %v2566
      %3612 = vmatpush1.bf16.msra.mxu0 %v2565
      %3613 = vmatprep.subr.bf16.mxu0 %v2568
      %3614 = vmatpush1.bf16.msra.mxu0 %v2567
      %3615 = vmatprep.subr.bf16.mxu0 %v2570
      %3616 = vmatpush1.bf16.msra.mxu0 %v2569
      %3617 = vmatprep.subr.bf16.mxu0 %v2572
      %3618 = vmatpush1.bf16.msra.mxu0 %v2571
      %3619 = vmatprep.subr.bf16.mxu0 %v2574
      %3620 = vmatpush1.bf16.msra.mxu0 %v2573
      %3621 = vmatprep.subr.bf16.mxu0 %v2576
      %3622 = vmatpush1.bf16.msra.mxu0 %v2575
      %3623 = vmatprep.subr.bf16.mxu0 %v2578
      %3624 = vmatpush1.bf16.msra.mxu0 %v2577
      %3625 = vmatprep.subr.bf16.mxu0 %v2580
      %3626 = vmatpush1.bf16.msra.mxu0 %v2579
      %3627 = vmatprep.subr.bf16.mxu0 %v2582
      %3628 = vmatpush1.bf16.msra.mxu0 %v2581
      %3629 = vmatprep.subr.bf16.mxu0 %v2584
      %3630 = vmatpush1.bf16.msra.mxu0 %v2583
      %3631 = vmatprep.subr.bf16.mxu0 %v2586
      %3632 = vmatpush1.bf16.msra.mxu0 %v2585
      %3633 = vmatprep.mubr.bf16.mxu0 %v896
      %3634 = vmatmul.mubr.bf16.gmra.mrb[0].mxu0 %v895
      %v3635 = vpop.f32.mrb[0].mxu0
      %v3636 = vadd.f32 %v3593, %v3635
      %v3637 = vpop.f32.mrb[0].mxu0
      %v3638 = vadd.f32 %v3595, %v3637
      %v3639 = vpop.f32.mrb[0].mxu0
      %v3640 = vadd.f32 %v3597, %v3639
      %v3641 = vpop.f32.mrb[0].mxu0
      %v3642 = vadd.f32 %v3599, %v3641
      %3643 = vdwg.mxu0
      %3644 = vmatprep.subr.bf16.mxu0 %v2588
      %3645 = vmatpush1.bf16.msra.mxu0 %v2587
      %3646 = vmatprep.subr.bf16.mxu0 %v2590
      %3647 = vmatpush1.bf16.msra.mxu0 %v2589
      %3648 = vmatprep.subr.bf16.mxu0 %v2592
      %3649 = vmatpush1.bf16.msra.mxu0 %v2591
      %3650 = vmatprep.subr.bf16.mxu0 %v2594
      %3651 = vmatpush1.bf16.msra.mxu0 %v2593
      %3652 = vmatprep.subr.bf16.mxu0 %v2596
      %3653 = vmatpush1.bf16.msra.mxu0 %v2595
      %3654 = vmatprep.subr.bf16.mxu0 %v2598
      %3655 = vmatpush1.bf16.msra.mxu0 %v2597
      %3656 = vmatprep.subr.bf16.mxu0 %v2600
      %3657 = vmatpush1.bf16.msra.mxu0 %v2599
      %3658 = vmatprep.subr.bf16.mxu0 %v2602
      %3659 = vmatpush1.bf16.msra.mxu0 %v2601
      %3660 = vmatprep.subr.bf16.mxu0 %v2604
      %3661 = vmatpush1.bf16.msra.mxu0 %v2603
      %3662 = vmatprep.subr.bf16.mxu0 %v2606
      %3663 = vmatpush1.bf16.msra.mxu0 %v2605
      %3664 = vmatprep.subr.bf16.mxu0 %v2608
      %3665 = vmatpush1.bf16.msra.mxu0 %v2607
      %3666 = vmatprep.subr.bf16.mxu0 %v2610
      %3667 = vmatpush1.bf16.msra.mxu0 %v2609
      %3668 = vmatprep.subr.bf16.mxu0 %v2612
      %3669 = vmatpush1.bf16.msra.mxu0 %v2611
      %3670 = vmatprep.subr.bf16.mxu0 %v2614
      %3671 = vmatpush1.bf16.msra.mxu0 %v2613
      %3672 = vmatprep.subr.bf16.mxu0 %v2616
      %3673 = vmatpush1.bf16.msra.mxu0 %v2615
      %3674 = vmatprep.subr.bf16.mxu0 %v2618
      %3675 = vmatpush1.bf16.msra.mxu0 %v2617
      %3676 = vmatprep.mubr.bf16.mxu0 %v898
      %3677 = vmatmul.mubr.bf16.gmra.mrb[0].mxu0 %v897
      %v3678 = vpop.f32.mrb[0].mxu0
      %v3679 = vadd.f32 %v3636, %v3678
      %v3680 = vpop.f32.mrb[0].mxu0
      %v3681 = vadd.f32 %v3638, %v3680
      %v3682 = vpop.f32.mrb[0].mxu0
      %v3683 = vadd.f32 %v3640, %v3682
      %v3684 = vpop.f32.mrb[0].mxu0
      %v3685 = vadd.f32 %v3642, %v3684
      %3686 = vdwg.mxu0
      %3687 = vmatprep.subr.bf16.mxu0 %v2620
      %3688 = vmatpush1.bf16.msra.mxu0 %v2619
      %3689 = vmatprep.subr.bf16.mxu0 %v2622
      %3690 = vmatpush1.bf16.msra.mxu0 %v2621
      %3691 = vmatprep.subr.bf16.mxu0 %v2624
      %3692 = vmatpush1.bf16.msra.mxu0 %v2623
      %3693 = vmatprep.subr.bf16.mxu0 %v2626
      %3694 = vmatpush1.bf16.msra.mxu0 %v2625
      %3695 = vmatprep.subr.bf16.mxu0 %v2628
      %3696 = vmatpush1.bf16.msra.mxu0 %v2627
      %3697 = vmatprep.subr.bf16.mxu0 %v2630
      %3698 = vmatpush1.bf16.msra.mxu0 %v2629
      %3699 = vmatprep.subr.bf16.mxu0 %v2632
      %3700 = vmatpush1.bf16.msra.mxu0 %v2631
      %3701 = vmatprep.subr.bf16.mxu0 %v2634
      %3702 = vmatpush1.bf16.msra.mxu0 %v2633
      %3703 = vmatprep.subr.bf16.mxu0 %v2636
      %3704 = vmatpush1.bf16.msra.mxu0 %v2635
      %3705 = vmatprep.subr.bf16.mxu0 %v2638
      %3706 = vmatpush1.bf16.msra.mxu0 %v2637
      %3707 = vmatprep.subr.bf16.mxu0 %v2640
      %3708 = vmatpush1.bf16.msra.mxu0 %v2639
      %3709 = vmatprep.subr.bf16.mxu0 %v2642
      %3710 = vmatpush1.bf16.msra.mxu0 %v2641
      %3711 = vmatprep.subr.bf16.mxu0 %v2644
      %3712 = vmatpush1.bf16.msra.mxu0 %v2643
      %3713 = vmatprep.subr.bf16.mxu0 %v2646
      %3714 = vmatpush1.bf16.msra.mxu0 %v2645
      %3715 = vmatprep.subr.bf16.mxu0 %v2648
      %3716 = vmatpush1.bf16.msra.mxu0 %v2647
      %3717 = vmatprep.subr.bf16.mxu0 %v2650
      %3718 = vmatpush1.bf16.msra.mxu0 %v2649
      %3719 = vmatprep.mubr.bf16.mxu0 %v900
      %3720 = vmatmul.mubr.bf16.gmra.mrb[0].mxu0 %v899
      %v3721 = vpop.f32.mrb[0].mxu0
      %v3722 = vadd.f32 %v3679, %v3721
      %v3723 = vpop.f32.mrb[0].mxu0
      %v3724 = vadd.f32 %v3681, %v3723
      %v3725 = vpop.f32.mrb[0].mxu0
      %v3726 = vadd.f32 %v3683, %v3725
      %v3727 = vpop.f32.mrb[0].mxu0
      %v3728 = vadd.f32 %v3685, %v3727
      %3729 = vdwg.mxu0
      %3730 = vmatprep.subr.bf16.mxu0 %v2652
      %3731 = vmatpush1.bf16.msra.mxu0 %v2651
      %3732 = vmatprep.subr.bf16.mxu0 %v2654
      %3733 = vmatpush1.bf16.msra.mxu0 %v2653
      %3734 = vmatprep.subr.bf16.mxu0 %v2656
      %3735 = vmatpush1.bf16.msra.mxu0 %v2655
      %3736 = vmatprep.subr.bf16.mxu0 %v2658
      %3737 = vmatpush1.bf16.msra.mxu0 %v2657
      %3738 = vmatprep.subr.bf16.mxu0 %v2660
      %3739 = vmatpush1.bf16.msra.mxu0 %v2659
      %3740 = vmatprep.subr.bf16.mxu0 %v2662
      %3741 = vmatpush1.bf16.msra.mxu0 %v2661
      %3742 = vmatprep.subr.bf16.mxu0 %v2664
      %3743 = vmatpush1.bf16.msra.mxu0 %v2663
      %3744 = vmatprep.subr.bf16.mxu0 %v2666
      %3745 = vmatpush1.bf16.msra.mxu0 %v2665
      %3746 = vmatprep.subr.bf16.mxu0 %v2668
      %3747 = vmatpush1.bf16.msra.mxu0 %v2667
      %3748 = vmatprep.subr.bf16.mxu0 %v2670
      %3749 = vmatpush1.bf16.msra.mxu0 %v2669
      %3750 = vmatprep.subr.bf16.mxu0 %v2672
      %3751 = vmatpush1.bf16.msra.mxu0 %v2671
      %3752 = vmatprep.subr.bf16.mxu0 %v2674
      %3753 = vmatpush1.bf16.msra.mxu0 %v2673
      %3754 = vmatprep.subr.bf16.mxu0 %v2676
      %3755 = vmatpush1.bf16.msra.mxu0 %v2675
      %3756 = vmatprep.subr.bf16.mxu0 %v2678
      %3757 = vmatpush1.bf16.msra.mxu0 %v2677
      %3758 = vmatprep.subr.bf16.mxu0 %v2680
      %3759 = vmatpush1.bf16.msra.mxu0 %v2679
      %3760 = vmatprep.subr.bf16.mxu0 %v2682
      %3761 = vmatpush1.bf16.msra.mxu0 %v2681
      %3762 = vmatprep.mubr.bf16.mxu0 %v902
      %3763 = vmatmul.mubr.bf16.gmra.mrb[0].mxu0 %v901
      %v3764 = vpop.f32.mrb[0].mxu0
      %v3765 = vadd.f32 %v3722, %v3764
      %v3766 = vpop.f32.mrb[0].mxu0
      %v3767 = vadd.f32 %v3724, %v3766
      %v3768 = vpop.f32.mrb[0].mxu0
      %v3769 = vadd.f32 %v3726, %v3768
      %v3770 = vpop.f32.mrb[0].mxu0
      %v3771 = vadd.f32 %v3728, %v3770
      %3772 = vdwg.mxu0
      %3773 = vmatprep.subr.bf16.mxu0 %v2684
      %3774 = vmatpush1.bf16.msra.mxu0 %v2683
      %3775 = vmatprep.subr.bf16.mxu0 %v2686
      %3776 = vmatpush1.bf16.msra.mxu0 %v2685
      %3777 = vmatprep.subr.bf16.mxu0 %v2688
      %3778 = vmatpush1.bf16.msra.mxu0 %v2687
      %3779 = vmatprep.subr.bf16.mxu0 %v2690
      %3780 = vmatpush1.bf16.msra.mxu0 %v2689
      %3781 = vmatprep.subr.bf16.mxu0 %v2692
      %3782 = vmatpush1.bf16.msra.mxu0 %v2691
      %3783 = vmatprep.subr.bf16.mxu0 %v2694
      %3784 = vmatpush1.bf16.msra.mxu0 %v2693
      %3785 = vmatprep.subr.bf16.mxu0 %v2696
      %3786 = vmatpush1.bf16.msra.mxu0 %v2695
      %3787 = vmatprep.subr.bf16.mxu0 %v2698
      %3788 = vmatpush1.bf16.msra.mxu0 %v2697
      %3789 = vmatprep.subr.bf16.mxu0 %v2700
      %3790 = vmatpush1.bf16.msra.mxu0 %v2699
      %3791 = vmatprep.subr.bf16.mxu0 %v2702
      %3792 = vmatpush1.bf16.msra.mxu0 %v2701
      %3793 = vmatprep.subr.bf16.mxu0 %v2704
      %3794 = vmatpush1.bf16.msra.mxu0 %v2703
      %3795 = vmatprep.subr.bf16.mxu0 %v2706
      %3796 = vmatpush1.bf16.msra.mxu0 %v2705
      %3797 = vmatprep.subr.bf16.mxu0 %v2708
      %3798 = vmatpush1.bf16.msra.mxu0 %v2707
      %3799 = vmatprep.subr.bf16.mxu0 %v2710
      %3800 = vmatpush1.bf16.msra.mxu0 %v2709
      %3801 = vmatprep.subr.bf16.mxu0 %v2712
      %3802 = vmatpush1.bf16.msra.mxu0 %v2711
      %3803 = vmatprep.subr.bf16.mxu0 %v2714
      %3804 = vmatpush1.bf16.msra.mxu0 %v2713
      %3805 = vmatprep.mubr.bf16.mxu0 %v904
      %3806 = vmatmul.mubr.bf16.gmra.mrb[0].mxu0 %v903
      %v3807 = vpop.f32.mrb[0].mxu0
      %v3808 = vadd.f32 %v3765, %v3807
      %v3809 = vpop.f32.mrb[0].mxu0
      %v3810 = vadd.f32 %v3767, %v3809
      %v3811 = vpop.f32.mrb[0].mxu0
      %v3812 = vadd.f32 %v3769, %v3811
      %v3813 = vpop.f32.mrb[0].mxu0
      %v3814 = vadd.f32 %v3771, %v3813
      %3815 = vdwg.mxu0
      %3816 = vmatprep.subr.bf16.mxu0 %v2716
      %3817 = vmatpush1.bf16.msra.mxu0 %v2715
      %3818 = vmatprep.subr.bf16.mxu0 %v2718
      %3819 = vmatpush1.bf16.msra.mxu0 %v2717
      %3820 = vmatprep.subr.bf16.mxu0 %v2720
      %3821 = vmatpush1.bf16.msra.mxu0 %v2719
      %3822 = vmatprep.subr.bf16.mxu0 %v2722
      %3823 = vmatpush1.bf16.msra.mxu0 %v2721
      %3824 = vmatprep.subr.bf16.mxu0 %v2724
      %3825 = vmatpush1.bf16.msra.mxu0 %v2723
      %3826 = vmatprep.subr.bf16.mxu0 %v2726
      %3827 = vmatpush1.bf16.msra.mxu0 %v2725
      %3828 = vmatprep.subr.bf16.mxu0 %v2728
      %3829 = vmatpush1.bf16.msra.mxu0 %v2727
      %3830 = vmatprep.subr.bf16.mxu0 %v2730
      %3831 = vmatpush1.bf16.msra.mxu0 %v2729
      %3832 = vmatprep.subr.bf16.mxu0 %v2732
      %3833 = vmatpush1.bf16.msra.mxu0 %v2731
      %3834 = vmatprep.subr.bf16.mxu0 %v2734
      %3835 = vmatpush1.bf16.msra.mxu0 %v2733
      %3836 = vmatprep.subr.bf16.mxu0 %v2736
      %3837 = vmatpush1.bf16.msra.mxu0 %v2735
      %3838 = vmatprep.subr.bf16.mxu0 %v2738
      %3839 = vmatpush1.bf16.msra.mxu0 %v2737
      %3840 = vmatprep.subr.bf16.mxu0 %v2740
      %3841 = vmatpush1.bf16.msra.mxu0 %v2739
      %3842 = vmatprep.subr.bf16.mxu0 %v2742
      %3843 = vmatpush1.bf16.msra.mxu0 %v2741
      %3844 = vmatprep.subr.bf16.mxu0 %v2744
      %3845 = vmatpush1.bf16.msra.mxu0 %v2743
      %3846 = vmatprep.subr.bf16.mxu0 %v2746
      %3847 = vmatpush1.bf16.msra.mxu0 %v2745
      %3848 = vmatprep.mubr.bf16.mxu0 %v906
      %3849 = vmatmul.mubr.bf16.gmra.mrb[0].mxu0 %v905
      %v3850 = vpop.f32.mrb[0].mxu0
      %v3851 = vadd.f32 %v3808, %v3850
      %v3852 = vpop.f32.mrb[0].mxu0
      %v3853 = vadd.f32 %v3810, %v3852
      %v3854 = vpop.f32.mrb[0].mxu0
      %v3855 = vadd.f32 %v3812, %v3854
      %v3856 = vpop.f32.mrb[0].mxu0
      %v3857 = vadd.f32 %v3814, %v3856
      %3858 = vdwg.mxu0
      %3859 = vmatprep.subr.bf16.mxu0 %v2748
      %3860 = vmatpush1.bf16.msra.mxu0 %v2747
      %3861 = vmatprep.subr.bf16.mxu0 %v2750
      %3862 = vmatpush1.bf16.msra.mxu0 %v2749
      %3863 = vmatprep.subr.bf16.mxu0 %v2752
      %3864 = vmatpush1.bf16.msra.mxu0 %v2751
      %3865 = vmatprep.subr.bf16.mxu0 %v2754
      %3866 = vmatpush1.bf16.msra.mxu0 %v2753
      %3867 = vmatprep.subr.bf16.mxu0 %v2756
      %3868 = vmatpush1.bf16.msra.mxu0 %v2755
      %3869 = vmatprep.subr.bf16.mxu0 %v2758
      %3870 = vmatpush1.bf16.msra.mxu0 %v2757
      %3871 = vmatprep.subr.bf16.mxu0 %v2760
      %3872 = vmatpush1.bf16.msra.mxu0 %v2759
      %3873 = vmatprep.subr.bf16.mxu0 %v2762
      %3874 = vmatpush1.bf16.msra.mxu0 %v2761
      %3875 = vmatprep.subr.bf16.mxu0 %v2764
      %3876 = vmatpush1.bf16.msra.mxu0 %v2763
      %3877 = vmatprep.subr.bf16.mxu0 %v2766
      %3878 = vmatpush1.bf16.msra.mxu0 %v2765
      %3879 = vmatprep.subr.bf16.mxu0 %v2768
      %3880 = vmatpush1.bf16.msra.mxu0 %v2767
      %3881 = vmatprep.subr.bf16.mxu0 %v2770
      %3882 = vmatpush1.bf16.msra.mxu0 %v2769
      %3883 = vmatprep.subr.bf16.mxu0 %v2772
      %3884 = vmatpush1.bf16.msra.mxu0 %v2771
      %3885 = vmatprep.subr.bf16.mxu0 %v2774
      %3886 = vmatpush1.bf16.msra.mxu0 %v2773
      %3887 = vmatprep.subr.bf16.mxu0 %v2776
      %3888 = vmatpush1.bf16.msra.mxu0 %v2775
      %3889 = vmatprep.subr.bf16.mxu0 %v2778
      %3890 = vmatpush1.bf16.msra.mxu0 %v2777
      %3891 = vmatprep.mubr.bf16.mxu0 %v908
      %3892 = vmatmul.mubr.bf16.gmra.mrb[0].mxu0 %v907
      %v3893 = vpop.f32.mrb[0].mxu0
      %v3894 = vadd.f32 %v3851, %v3893
      %v3895 = vpop.f32.mrb[0].mxu0
      %v3896 = vadd.f32 %v3853, %v3895
      %v3897 = vpop.f32.mrb[0].mxu0
      %v3898 = vadd.f32 %v3855, %v3897
      %v3899 = vpop.f32.mrb[0].mxu0
      %v3900 = vadd.f32 %v3857, %v3899
      %3901 = vdwg.mxu0
      %3902 = vmatprep.subr.bf16.mxu0 %v2780
      %3903 = vmatpush1.bf16.msra.mxu0 %v2779
      %3904 = vmatprep.subr.bf16.mxu0 %v2782
      %3905 = vmatpush1.bf16.msra.mxu0 %v2781
      %3906 = vmatprep.subr.bf16.mxu0 %v2784
      %3907 = vmatpush1.bf16.msra.mxu0 %v2783
      %3908 = vmatprep.subr.bf16.mxu0 %v2786
      %3909 = vmatpush1.bf16.msra.mxu0 %v2785
      %3910 = vmatprep.subr.bf16.mxu0 %v2788
      %3911 = vmatpush1.bf16.msra.mxu0 %v2787
      %3912 = vmatprep.subr.bf16.mxu0 %v2790
      %3913 = vmatpush1.bf16.msra.mxu0 %v2789
      %3914 = vmatprep.subr.bf16.mxu0 %v2792
      %3915 = vmatpush1.bf16.msra.mxu0 %v2791
      %3916 = vmatprep.subr.bf16.mxu0 %v2794
      %3917 = vmatpush1.bf16.msra.mxu0 %v2793
      %3918 = vmatprep.subr.bf16.mxu0 %v2796
      %3919 = vmatpush1.bf16.msra.mxu0 %v2795
      %3920 = vmatprep.subr.bf16.mxu0 %v2798
      %3921 = vmatpush1.bf16.msra.mxu0 %v2797
      %3922 = vmatprep.subr.bf16.mxu0 %v2800
      %3923 = vmatpush1.bf16.msra.mxu0 %v2799
      %3924 = vmatprep.subr.bf16.mxu0 %v2802
      %3925 = vmatpush1.bf16.msra.mxu0 %v2801
      %3926 = vmatprep.subr.bf16.mxu0 %v2804
      %3927 = vmatpush1.bf16.msra.mxu0 %v2803
      %3928 = vmatprep.subr.bf16.mxu0 %v2806
      %3929 = vmatpush1.bf16.msra.mxu0 %v2805
      %3930 = vmatprep.subr.bf16.mxu0 %v2808
      %3931 = vmatpush1.bf16.msra.mxu0 %v2807
      %3932 = vmatprep.subr.bf16.mxu0 %v2810
      %3933 = vmatpush1.bf16.msra.mxu0 %v2809
      %3934 = vmatprep.mubr.bf16.mxu0 %v910
      %3935 = vmatmul.mubr.bf16.gmra.mrb[0].mxu0 %v909
      %v3936 = vpop.f32.mrb[0].mxu0
      %v3937 = vadd.f32 %v3894, %v3936
      %v3938 = vpop.f32.mrb[0].mxu0
      %v3939 = vadd.f32 %v3896, %v3938
      %v3940 = vpop.f32.mrb[0].mxu0
      %v3941 = vadd.f32 %v3898, %v3940
      %v3942 = vpop.f32.mrb[0].mxu0
      %v3943 = vadd.f32 %v3900, %v3942
      %3944 = vdwg.mxu0
      %3945 = vmatprep.subr.bf16.mxu0 %v2812
      %3946 = vmatpush1.bf16.msra.mxu0 %v2811
      %3947 = vmatprep.subr.bf16.mxu0 %v2814
      %3948 = vmatpush1.bf16.msra.mxu0 %v2813
      %3949 = vmatprep.subr.bf16.mxu0 %v2816
      %3950 = vmatpush1.bf16.msra.mxu0 %v2815
      %3951 = vmatprep.subr.bf16.mxu0 %v2818
      %3952 = vmatpush1.bf16.msra.mxu0 %v2817
      %3953 = vmatprep.subr.bf16.mxu0 %v2820
      %3954 = vmatpush1.bf16.msra.mxu0 %v2819
      %3955 = vmatprep.subr.bf16.mxu0 %v2822
      %3956 = vmatpush1.bf16.msra.mxu0 %v2821
      %3957 = vmatprep.subr.bf16.mxu0 %v2824
      %3958 = vmatpush1.bf16.msra.mxu0 %v2823
      %3959 = vmatprep.subr.bf16.mxu0 %v2826
      %3960 = vmatpush1.bf16.msra.mxu0 %v2825
      %3961 = vmatprep.subr.bf16.mxu0 %v2828
      %3962 = vmatpush1.bf16.msra.mxu0 %v2827
      %3963 = vmatprep.subr.bf16.mxu0 %v2830
      %3964 = vmatpush1.bf16.msra.mxu0 %v2829
      %3965 = vmatprep.subr.bf16.mxu0 %v2832
      %3966 = vmatpush1.bf16.msra.mxu0 %v2831
      %3967 = vmatprep.subr.bf16.mxu0 %v2834
      %3968 = vmatpush1.bf16.msra.mxu0 %v2833
      %3969 = vmatprep.subr.bf16.mxu0 %v2836
      %3970 = vmatpush1.bf16.msra.mxu0 %v2835
      %3971 = vmatprep.subr.bf16.mxu0 %v2838
      %3972 = vmatpush1.bf16.msra.mxu0 %v2837
      %3973 = vmatprep.subr.bf16.mxu0 %v2840
      %3974 = vmatpush1.bf16.msra.mxu0 %v2839
      %3975 = vmatprep.subr.bf16.mxu0 %v2842
      %3976 = vmatpush1.bf16.msra.mxu0 %v2841
      %3977 = vmatprep.mubr.bf16.mxu0 %v912
      %3978 = vmatmul.mubr.bf16.gmra.mrb[0].mxu0 %v911
      %v3979 = vpop.f32.mrb[0].mxu0
      %v3980 = vadd.f32 %v3937, %v3979
      %v3981 = vpop.f32.mrb[0].mxu0
      %v3982 = vadd.f32 %v3939, %v3981
      %v3983 = vpop.f32.mrb[0].mxu0
      %v3984 = vadd.f32 %v3941, %v3983
      %v3985 = vpop.f32.mrb[0].mxu0
      %v3986 = vadd.f32 %v3943, %v3985
      %3987 = vdwg.mxu0
      %3988 = vmatprep.subr.bf16.mxu0 %v2844
      %3989 = vmatpush1.bf16.msra.mxu0 %v2843
      %3990 = vmatprep.subr.bf16.mxu0 %v2846
      %3991 = vmatpush1.bf16.msra.mxu0 %v2845
      %3992 = vmatprep.subr.bf16.mxu0 %v2848
      %3993 = vmatpush1.bf16.msra.mxu0 %v2847
      %3994 = vmatprep.subr.bf16.mxu0 %v2850
      %3995 = vmatpush1.bf16.msra.mxu0 %v2849
      %3996 = vmatprep.subr.bf16.mxu0 %v2852
      %3997 = vmatpush1.bf16.msra.mxu0 %v2851
      %3998 = vmatprep.subr.bf16.mxu0 %v2854
      %3999 = vmatpush1.bf16.msra.mxu0 %v2853
      %4000 = vmatprep.subr.bf16.mxu0 %v2856
      %4001 = vmatpush1.bf16.msra.mxu0 %v2855
      %4002 = vmatprep.subr.bf16.mxu0 %v2858
      %4003 = vmatpush1.bf16.msra.mxu0 %v2857
      %4004 = vmatprep.subr.bf16.mxu0 %v2860
      %4005 = vmatpush1.bf16.msra.mxu0 %v2859
      %4006 = vmatprep.subr.bf16.mxu0 %v2862
      %4007 = vmatpush1.bf16.msra.mxu0 %v2861
      %4008 = vmatprep.subr.bf16.mxu0 %v2864
      %4009 = vmatpush1.bf16.msra.mxu0 %v2863
      %4010 = vmatprep.subr.bf16.mxu0 %v2866
      %4011 = vmatpush1.bf16.msra.mxu0 %v2865
      %4012 = vmatprep.subr.bf16.mxu0 %v2868
      %4013 = vmatpush1.bf16.msra.mxu0 %v2867
      %4014 = vmatprep.subr.bf16.mxu0 %v2870
      %4015 = vmatpush1.bf16.msra.mxu0 %v2869
      %4016 = vmatprep.subr.bf16.mxu0 %v2872
      %4017 = vmatpush1.bf16.msra.mxu0 %v2871
      %4018 = vmatprep.subr.bf16.mxu0 %v2874
      %4019 = vmatpush1.bf16.msra.mxu0 %v2873
      %4020 = vmatprep.mubr.bf16.mxu0 %v914
      %4021 = vmatmul.mubr.bf16.gmra.mrb[0].mxu0 %v913
      %v4022 = vpop.f32.mrb[0].mxu0
      %v4023 = vadd.f32 %v3980, %v4022
      %v4024 = vpop.f32.mrb[0].mxu0
      %v4025 = vadd.f32 %v3982, %v4024
      %v4026 = vpop.f32.mrb[0].mxu0
      %v4027 = vadd.f32 %v3984, %v4026
      %v4028 = vpop.f32.mrb[0].mxu0
      %v4029 = vadd.f32 %v3986, %v4028
      %4030 = vdwg.mxu0
      %4031 = vmatprep.subr.bf16.mxu0 %v2876
      %4032 = vmatpush1.bf16.msra.mxu0 %v2875
      %4033 = vmatprep.subr.bf16.mxu0 %v2878
      %4034 = vmatpush1.bf16.msra.mxu0 %v2877
      %4035 = vmatprep.subr.bf16.mxu0 %v2880
      %4036 = vmatpush1.bf16.msra.mxu0 %v2879
      %4037 = vmatprep.subr.bf16.mxu0 %v2882
      %4038 = vmatpush1.bf16.msra.mxu0 %v2881
      %4039 = vmatprep.subr.bf16.mxu0 %v2884
      %4040 = vmatpush1.bf16.msra.mxu0 %v2883
      %4041 = vmatprep.subr.bf16.mxu0 %v2886
      %4042 = vmatpush1.bf16.msra.mxu0 %v2885
      %4043 = vmatprep.subr.bf16.mxu0 %v2888
      %4044 = vmatpush1.bf16.msra.mxu0 %v2887
      %4045 = vmatprep.subr.bf16.mxu0 %v2890
      %4046 = vmatpush1.bf16.msra.mxu0 %v2889
      %4047 = vmatprep.subr.bf16.mxu0 %v2892
      %4048 = vmatpush1.bf16.msra.mxu0 %v2891
      %4049 = vmatprep.subr.bf16.mxu0 %v2894
      %4050 = vmatpush1.bf16.msra.mxu0 %v2893
      %4051 = vmatprep.subr.bf16.mxu0 %v2896
      %4052 = vmatpush1.bf16.msra.mxu0 %v2895
      %4053 = vmatprep.subr.bf16.mxu0 %v2898
      %4054 = vmatpush1.bf16.msra.mxu0 %v2897
      %4055 = vmatprep.subr.bf16.mxu0 %v2900
      %4056 = vmatpush1.bf16.msra.mxu0 %v2899
      %4057 = vmatprep.subr.bf16.mxu0 %v2902
      %4058 = vmatpush1.bf16.msra.mxu0 %v2901
      %4059 = vmatprep.subr.bf16.mxu0 %v2904
      %4060 = vmatpush1.bf16.msra.mxu0 %v2903
      %4061 = vmatprep.subr.bf16.mxu0 %v2906
      %4062 = vmatpush1.bf16.msra.mxu0 %v2905
      %4063 = vmatprep.mubr.bf16.mxu0 %v916
      %4064 = vmatmul.mubr.bf16.gmra.mrb[0].mxu0 %v915
      %v4065 = vpop.f32.mrb[0].mxu0
      %v4066 = vadd.f32 %v4023, %v4065
      %v4067 = vpop.f32.mrb[0].mxu0
      %v4068 = vadd.f32 %v4025, %v4067
      %v4069 = vpop.f32.mrb[0].mxu0
      %v4070 = vadd.f32 %v4027, %v4069
      %v4071 = vpop.f32.mrb[0].mxu0
      %v4072 = vadd.f32 %v4029, %v4071
      %4073 = vdwg.mxu0
      %4074 = vmatprep.subr.bf16.mxu0 %v2908
      %4075 = vmatpush1.bf16.msra.mxu0 %v2907
      %4076 = vmatprep.subr.bf16.mxu0 %v2910
      %4077 = vmatpush1.bf16.msra.mxu0 %v2909
      %4078 = vmatprep.subr.bf16.mxu0 %v2912
      %4079 = vmatpush1.bf16.msra.mxu0 %v2911
      %4080 = vmatprep.subr.bf16.mxu0 %v2914
      %4081 = vmatpush1.bf16.msra.mxu0 %v2913
      %4082 = vmatprep.subr.bf16.mxu0 %v2916
      %4083 = vmatpush1.bf16.msra.mxu0 %v2915
      %4084 = vmatprep.subr.bf16.mxu0 %v2918
      %4085 = vmatpush1.bf16.msra.mxu0 %v2917
      %4086 = vmatprep.subr.bf16.mxu0 %v2920
      %4087 = vmatpush1.bf16.msra.mxu0 %v2919
      %4088 = vmatprep.subr.bf16.mxu0 %v2922
      %4089 = vmatpush1.bf16.msra.mxu0 %v2921
      %4090 = vmatprep.subr.bf16.mxu0 %v2924
      %4091 = vmatpush1.bf16.msra.mxu0 %v2923
      %4092 = vmatprep.subr.bf16.mxu0 %v2926
      %4093 = vmatpush1.bf16.msra.mxu0 %v2925
      %4094 = vmatprep.subr.bf16.mxu0 %v2928
      %4095 = vmatpush1.bf16.msra.mxu0 %v2927
      %4096 = vmatprep.subr.bf16.mxu0 %v2930
      %4097 = vmatpush1.bf16.msra.mxu0 %v2929
      %4098 = vmatprep.subr.bf16.mxu0 %v2932
      %4099 = vmatpush1.bf16.msra.mxu0 %v2931
      %4100 = vmatprep.subr.bf16.mxu0 %v2934
      %4101 = vmatpush1.bf16.msra.mxu0 %v2933
      %4102 = vmatprep.subr.bf16.mxu0 %v2936
      %4103 = vmatpush1.bf16.msra.mxu0 %v2935
      %4104 = vmatprep.subr.bf16.mxu0 %v2938
      %4105 = vmatpush1.bf16.msra.mxu0 %v2937
      %4106 = vmatprep.mubr.bf16.mxu0 %v918
      %4107 = vmatmul.mubr.bf16.gmra.mrb[0].mxu0 %v917
      %v4108 = vpop.f32.mrb[0].mxu0
      %v4109 = vadd.f32 %v4066, %v4108
      %v4110 = vpop.f32.mrb[0].mxu0
      %v4111 = vadd.f32 %v4068, %v4110
      %v4112 = vpop.f32.mrb[0].mxu0
      %v4113 = vadd.f32 %v4070, %v4112
      %v4114 = vpop.f32.mrb[0].mxu0
      %v4115 = vadd.f32 %v4072, %v4114
      %4116 = vdwg.mxu0
      %4117 = vmatprep.subr.bf16.mxu0 %v2940
      %4118 = vmatpush1.bf16.msra.mxu0 %v2939
      %4119 = vmatprep.subr.bf16.mxu0 %v2942
      %4120 = vmatpush1.bf16.msra.mxu0 %v2941
      %4121 = vmatprep.subr.bf16.mxu0 %v2944
      %4122 = vmatpush1.bf16.msra.mxu0 %v2943
      %4123 = vmatprep.subr.bf16.mxu0 %v2946
      %4124 = vmatpush1.bf16.msra.mxu0 %v2945
      %4125 = vmatprep.subr.bf16.mxu0 %v2948
      %4126 = vmatpush1.bf16.msra.mxu0 %v2947
      %4127 = vmatprep.subr.bf16.mxu0 %v2950
      %4128 = vmatpush1.bf16.msra.mxu0 %v2949
      %4129 = vmatprep.subr.bf16.mxu0 %v2952
      %4130 = vmatpush1.bf16.msra.mxu0 %v2951
      %4131 = vmatprep.subr.bf16.mxu0 %v2954
      %4132 = vmatpush1.bf16.msra.mxu0 %v2953
      %4133 = vmatprep.subr.bf16.mxu0 %v2956
      %4134 = vmatpush1.bf16.msra.mxu0 %v2955
      %4135 = vmatprep.subr.bf16.mxu0 %v2958
      %4136 = vmatpush1.bf16.msra.mxu0 %v2957
      %4137 = vmatprep.subr.bf16.mxu0 %v2960
      %4138 = vmatpush1.bf16.msra.mxu0 %v2959
      %4139 = vmatprep.subr.bf16.mxu0 %v2962
      %4140 = vmatpush1.bf16.msra.mxu0 %v2961
      %4141 = vmatprep.subr.bf16.mxu0 %v2964
      %4142 = vmatpush1.bf16.msra.mxu0 %v2963
      %4143 = vmatprep.subr.bf16.mxu0 %v2966
      %4144 = vmatpush1.bf16.msra.mxu0 %v2965
      %4145 = vmatprep.subr.bf16.mxu0 %v2968
      %4146 = vmatpush1.bf16.msra.mxu0 %v2967
      %4147 = vmatprep.subr.bf16.mxu0 %v2970
      %4148 = vmatpush1.bf16.msra.mxu0 %v2969
      %4149 = vmatprep.mubr.bf16.mxu0 %v920
      %4150 = vmatmul.mubr.bf16.gmra.mrb[0].mxu0 %v919
      %v4151 = vpop.f32.mrb[0].mxu0
      %v4152 = vadd.f32 %v4109, %v4151
      %v4153 = vpop.f32.mrb[0].mxu0
      %v4154 = vadd.f32 %v4111, %v4153
      %v4155 = vpop.f32.mrb[0].mxu0
      %v4156 = vadd.f32 %v4113, %v4155
      %v4157 = vpop.f32.mrb[0].mxu0
      %v4158 = vadd.f32 %v4115, %v4157
      %4159 = vdwg.mxu0
      %4160 = vmatprep.subr.bf16.mxu0 %v2972
      %4161 = vmatpush1.bf16.msra.mxu0 %v2971
      %4162 = vmatprep.subr.bf16.mxu0 %v2974
      %4163 = vmatpush1.bf16.msra.mxu0 %v2973
      %4164 = vmatprep.subr.bf16.mxu0 %v2976
      %4165 = vmatpush1.bf16.msra.mxu0 %v2975
      %4166 = vmatprep.subr.bf16.mxu0 %v2978
      %4167 = vmatpush1.bf16.msra.mxu0 %v2977
      %4168 = vmatprep.subr.bf16.mxu0 %v2980
      %4169 = vmatpush1.bf16.msra.mxu0 %v2979
      %4170 = vmatprep.subr.bf16.mxu0 %v2982
      %4171 = vmatpush1.bf16.msra.mxu0 %v2981
      %4172 = vmatprep.subr.bf16.mxu0 %v2984
      %4173 = vmatpush1.bf16.msra.mxu0 %v2983
      %4174 = vmatprep.subr.bf16.mxu0 %v2986
      %4175 = vmatpush1.bf16.msra.mxu0 %v2985
      %4176 = vmatprep.subr.bf16.mxu0 %v2988
      %4177 = vmatpush1.bf16.msra.mxu0 %v2987
      %4178 = vmatprep.subr.bf16.mxu0 %v2990
      %4179 = vmatpush1.bf16.msra.mxu0 %v2989
      %4180 = vmatprep.subr.bf16.mxu0 %v2992
      %4181 = vmatpush1.bf16.msra.mxu0 %v2991
      %4182 = vmatprep.subr.bf16.mxu0 %v2994
      %4183 = vmatpush1.bf16.msra.mxu0 %v2993
      %4184 = vmatprep.subr.bf16.mxu0 %v2996
      %4185 = vmatpush1.bf16.msra.mxu0 %v2995
      %4186 = vmatprep.subr.bf16.mxu0 %v2998
      %4187 = vmatpush1.bf16.msra.mxu0 %v2997
      %4188 = vmatprep.subr.bf16.mxu0 %v3000
      %4189 = vmatpush1.bf16.msra.mxu0 %v2999
      %4190 = vmatprep.subr.bf16.mxu0 %v3002
      %4191 = vmatpush1.bf16.msra.mxu0 %v3001
      %4192 = vmatprep.mubr.bf16.mxu0 %v922
      %4193 = vmatmul.mubr.bf16.gmra.mrb[0].mxu0 %v921
      %v4194 = vpop.f32.mrb[0].mxu0
      %v4195 = vadd.f32 %v4152, %v4194
      %v4196 = vpop.f32.mrb[0].mxu0
      %v4197 = vadd.f32 %v4154, %v4196
      %v4198 = vpop.f32.mrb[0].mxu0
      %v4199 = vadd.f32 %v4156, %v4198
      %v4200 = vpop.f32.mrb[0].mxu0
      %v4201 = vadd.f32 %v4158, %v4200
      %4202 = vdwg.mxu0
      %v4203 = vpack.c.bf16 %v4199, %v4195
      %v4204 = vpack.c.bf16 %v4201, %v4197
      %v4207 = vunpack.c.l.b16 %v4203
      %v4208 = vunpack.c.l.b16 %v4204
      %v4209 = vunpack.c.h.b16 %v4203
      %v4210 = vunpack.c.h.b16 %v4204
      %v4211 = vpack.c.b16 %v4208, %v4207
      %v4212 = vpack.c.b16 %v4210, %v4209
      %4215 = vst [vmem:[%s240] sm:$0xff] %v4211
      %4216 = vst [vmem:[%s240 + $0x8] sm:$0xff] %v4212
      %p4217 = scmp.eq.s32.totalorder %s21, 0
      // Predicated region
      $region29: #{discriminator_forward.13} parent=27 // pred_check
        %p4218 = pneg %p4217
      $region30: #{discriminator_forward.13} parent=27 // pred_check_branch
        %4220 = sbr.rel (%p4218) target = $region32
      $region31: #{discriminator_forward.13} parent=27 // pred_region
        %v4221 = vlaneseq
        %vm4222 = vcmp.ge.s32.totalorder %v4221, 0
        %vm4223 = vcmp.lt.s32.totalorder %v4221, 256
        %vm4224 = vmand %vm4222, %vm4223
        %4225 = vst.msk [vmem:[%s246] sm:$0x3] %vm4224, 0.0
        %4226 = vst.msk [vmem:[%s250] sm:$0x3] %vm4224, 0.0
      $region32: #{discriminator_forward.13} parent=27 // pred_fallthru
        _
      %v4227 = vld [vmem:[%s246] sm:$0x3]
      %v4228 = vadd.f32 %v4195, %v4199
      %v4229 = vrot.slane %v4228, 4
      %v4230 = vadd.f32 %v4228, %v4229
      %v4231 = vrot.slane %v4230, 2
      %v4232 = vadd.f32 %v4230, %v4231
      %v4233 = vrot.slane %v4232, 1
      %v4234 = vadd.f32 %v4232, %v4233
      %v4235 = vadd.f32 %v4197, %v4201
      %v4236 = vrot.slane %v4235, 4
      %v4237 = vadd.f32 %v4235, %v4236
      %v4238 = vrot.slane %v4237, 2
      %v4239 = vadd.f32 %v4237, %v4238
      %v4240 = vrot.slane %v4239, 1
      %v4241 = vadd.f32 %v4239, %v4240
      %v4244 = vcombine.low %v4234, %v4241
      %v4246 = vunpack.c.l.s4 1966171168
      %v4247 = vunpack.c.0.s8 %v4246
      %v4248 = vlaneseq
      %v4249 = vshrl.u32 %v4248, 7
      %v4250 = vsub.s32 %v4247, %v4249
      %v4251 = vrot.slane %v4244, %v4250
      %v4253 = vunpack.c.l.s4 1966171168
      %v4254 = vunpack.c.0.s8 %v4253
      %v4255 = vlaneseq
      %v4256 = vshrl.u32 %v4255, 7
      %v4257 = vsub.s32 %v4254, %v4256
      %v4258 = vrot.slane %v4251, %v4257
      %v4260 = vadd.f32 %v4227, %v4258
      %v4261 = vlaneseq
      %vm4262 = vcmp.ge.s32.totalorder %v4261, 0
      %vm4263 = vcmp.lt.s32.totalorder %v4261, 256
      %vm4264 = vmand %vm4262, %vm4263
      %4265 = vst.msk [vmem:[%s246] sm:$0x3] %vm4264, %v4260
      %v4266 = vld [vmem:[%s250] sm:$0x3]
      %v4267 = vmul.f32 %v4195, %v4195
      %v4268 = vmul.f32 %v4197, %v4197
      %v4269 = vmul.f32 %v4199, %v4199
      %v4270 = vmul.f32 %v4201, %v4201
      %v4271 = vadd.f32 %v4267, %v4269
      %v4272 = vrot.slane %v4271, 4
      %v4273 = vadd.f32 %v4271, %v4272
      %v4274 = vrot.slane %v4273, 2
      %v4275 = vadd.f32 %v4273, %v4274
      %v4276 = vrot.slane %v4275, 1
      %v4277 = vadd.f32 %v4275, %v4276
      %v4278 = vadd.f32 %v4268, %v4270
      %v4279 = vrot.slane %v4278, 4
      %v4280 = vadd.f32 %v4278, %v4279
      %v4281 = vrot.slane %v4280, 2
      %v4282 = vadd.f32 %v4280, %v4281
      %v4283 = vrot.slane %v4282, 1
      %v4284 = vadd.f32 %v4282, %v4283
      %v4287 = vcombine.low %v4277, %v4284
      %v4289 = vunpack.c.l.s4 1966171168
      %v4290 = vunpack.c.0.s8 %v4289
      %v4291 = vlaneseq
      %v4292 = vshrl.u32 %v4291, 7
      %v4293 = vsub.s32 %v4290, %v4292
      %v4294 = vrot.slane %v4287, %v4293
      %v4296 = vunpack.c.l.s4 1966171168
      %v4297 = vunpack.c.0.s8 %v4296
      %v4298 = vlaneseq
      %v4299 = vshrl.u32 %v4298, 7
      %v4300 = vsub.s32 %v4297, %v4299
      %v4301 = vrot.slane %v4294, %v4300
      %v4303 = vadd.f32 %v4266, %v4301
      %4304 = vst.msk [vmem:[%s250] sm:$0x3] %vm4264, %v4303
      %s4305 = sadd.s32 %s20, %s21
      %s4306 = smul.u32 2, %s4305
      %p4307 = scmp.lt.s32.totalorder %s4306, 3
      %s4308 = scalar_select %p4307, %s4306, 3
      %s4309 = smul.addr %s4308, 2
      %s4310 = smul.addr %s4309, 4
      %s4311 = scalar_lea.vmem %s2, %s4310
      %p4312 = scmp.lt.s32.totalorder %s20, 1
      %s4313 = scalar_select %p4312, %s20, 1
      %s4314 = smul.addr %s4313, 2
      %s4315 = scalar_lea.vmem %s3, %s4314
      %p4316 = scmp.lt.s32.totalorder %s20, 1
      %s4317 = scalar_select %p4316, %s20, 1
      %s4318 = smul.addr %s4317, 2
      %s4319 = scalar_lea.vmem %s4, %s4318
      // Predicated region
      $region33: #{discriminator_forward.13} parent=27 // pred_check
        %p4320 = pneg %p97
      $region34: #{discriminator_forward.13} parent=27 // pred_check_branch
        %4322 = sbr.rel (%p4320) target = $region36
      $region35: #{discriminator_forward.13} parent=27 // pred_region
        %s4323 = sadd.s32 %s20, %s21
        %s4324 = smul.u32 2, %s4323
      $region36: #{discriminator_forward.13} parent=27 // pred_fallthru
        _
      // Predicated region
      $region37: #{discriminator_forward.13} parent=27 // pred_check
        %p4325 = pneg %p123
      $region38: #{discriminator_forward.13} parent=27 // pred_check_branch
        %4327 = sbr.rel (%p4325) target = $region40
      $region39: #{discriminator_forward.13} parent=27 // pred_region
        _
      $region40: #{discriminator_forward.13} parent=27 // pred_fallthru
        _
      // Predicated region
      $region41: #{discriminator_forward.13} parent=27 // pred_check
        %p4328 = pneg %p149
      $region42: #{discriminator_forward.13} parent=27 // pred_check_branch
        %4330 = sbr.rel (%p4328) target = $region44
      $region43: #{discriminator_forward.13} parent=27 // pred_region
        _
      $region44: #{discriminator_forward.13} parent=27 // pred_fallthru
        _
    $region28: #{discriminator_forward.13} parent=5 // pred_fallthru
      _
    %p4331 = scmp.le.s32.totalorder 2, %s11
    // Predicated region
    $region45: #{discriminator_forward.13} parent=5 // pred_check
      %p4332 = pneg %p4331
    $region46: #{discriminator_forward.13} parent=5 // pred_check_branch
      %4334 = sbr.rel (%p4332) target = $region48
    $region47: #{discriminator_forward.13} parent=5 // pred_region
      %s4335 = ssub.s32 %s11, 2
      // Predicated region
      $region49: #{discriminator_forward.13} parent=47 // pred_check
        %p4336 = pneg %p103
      $region50: #{discriminator_forward.13} parent=47 // pred_check_branch
        %4338 = sbr.rel (%p4336) target = $region52
      $region51: #{discriminator_forward.13} parent=47 // pred_region
        %s4339 = sadd.s32 %s22, %s23
        %s4340 = smul.u32 2, %s4339
        %p4341 = scmp.lt.s32.totalorder %s4340, 3
        %s4342 = scalar_select %p4341, %s4340, 3
        %s4343 = smul.addr %s4342, 2
        %s4344 = smul.addr %s4343, 4
        %s4345 = scalar_lea.vmem %s2, %s4344
      $region52: #{discriminator_forward.13} parent=47 // pred_fallthru
        _
      // Predicated region
      $region53: #{discriminator_forward.13} parent=47 // pred_check
        %p4346 = pneg %p129
      $region54: #{discriminator_forward.13} parent=47 // pred_check_branch
        %4348 = sbr.rel (%p4346) target = $region56
      $region55: #{discriminator_forward.13} parent=47 // pred_region
        %p4349 = scmp.lt.s32.totalorder %s22, 1
        %s4350 = scalar_select %p4349, %s22, 1
        %s4351 = smul.addr %s4350, 2
        %s4352 = scalar_lea.vmem %s3, %s4351
      $region56: #{discriminator_forward.13} parent=47 // pred_fallthru
        _
      // Predicated region
      $region57: #{discriminator_forward.13} parent=47 // pred_check
        %p4353 = pneg %p155
      $region58: #{discriminator_forward.13} parent=47 // pred_check_branch
        %4355 = sbr.rel (%p4353) target = $region60
      $region59: #{discriminator_forward.13} parent=47 // pred_region
        %p4356 = scmp.lt.s32.totalorder %s22, 1
        %s4357 = scalar_select %p4356, %s22, 1
        %s4358 = smul.addr %s4357, 2
        %s4359 = scalar_lea.vmem %s4, %s4358
      $region60: #{discriminator_forward.13} parent=47 // pred_fallthru
        _
    $region48: #{discriminator_forward.13} parent=5 // pred_fallthru
      _
  $region6: #{discriminator_forward.13} parent=0 // loop_footer
    %s15 = sadd.s32 1, %s11
  $region7: #{discriminator_forward.13} parent=0 // loop_footer_branch
    %10 = sbr.rel target = $region3
  $region8: #{discriminator_forward.13} parent=0 // loop_exit
    _

// kernel: discriminator_forward.15
$region0: #{discriminator_forward.15}
  #allocation0 [shape = 'u32[]', space=smem, size = 0x4, offset = 0x4, fixed_abs, tag = 'smem constant byte address 0x4 - core index']
  #allocation1 [shape = 'u32[144,128]{1,0:T(1,128)}', space=vmem, size = 0x12000, scoped, tag = 'internal scratch']
  %s0 = inlined_call_operand.vmem [shape: bf16[16,4096], index: 0, kind: input, shape index: {}]
  %s1 = inlined_call_operand.vmem [shape: bf16[4096,128], index: 1, kind: input, shape index: {}]
  %s2 = inlined_call_operand.vmem [shape: f32[1,128], index: 2, kind: input, shape index: {}]
  %s3 = inlined_call_operand.vmem [shape: f32[16,128], index: 3, kind: output, shape index: {}]
  %s4 = sld [smem:[#allocation0]]
  $region22: #{discriminator_forward.15} parent=0
    _
  %s6 = ssub.s32 1, %s4
  %s7 = scalar_select 0, %s6, %s4
  // Predicated region
  $region2: #{discriminator_forward.15} parent=0 // pred_check
    _
  $region3: #{discriminator_forward.15} parent=0 // pred_check_branch
    %9 = sbr.rel (0) target = $region5
  $region4: #{discriminator_forward.15} parent=0 // pred_region
    _
  $region5: #{discriminator_forward.15} parent=0 // pred_fallthru
    _
  // Predicated region
  $region6: #{discriminator_forward.15} parent=0 // pred_check
    _
  $region7: #{discriminator_forward.15} parent=0 // pred_check_branch
    %11 = sbr.rel (0) target = $region9
  $region8: #{discriminator_forward.15} parent=0 // pred_region
    _
  $region9: #{discriminator_forward.15} parent=0 // pred_fallthru
    _
  // Predicated region
  $region10: #{discriminator_forward.15} parent=0 // pred_check
    _
  $region11: #{discriminator_forward.15} parent=0 // pred_check_branch
    %13 = sbr.rel (0) target = $region13
  $region12: #{discriminator_forward.15} parent=0 // pred_region
    _
  $region13: #{discriminator_forward.15} parent=0 // pred_fallthru
    _
  %v15 = vld [vmem:[%s0] sm:$0xff]
  %v16 = vld [vmem:[%s0 + $0x8] sm:$0xff]
  %v17 = vld [vmem:[%s0 + $0x10] sm:$0xff]
  %v18 = vld [vmem:[%s0 + $0x18] sm:$0xff]
  %v19 = vld [vmem:[%s0 + $0x20] sm:$0xff]
  %v20 = vld [vmem:[%s0 + $0x28] sm:$0xff]
  %v21 = vld [vmem:[%s0 + $0x30] sm:$0xff]
  %v22 = vld [vmem:[%s0 + $0x38] sm:$0xff]
  %v23 = vld [vmem:[%s0 + $0x40] sm:$0xff]
  %v24 = vld [vmem:[%s0 + $0x48] sm:$0xff]
  %v25 = vld [vmem:[%s0 + $0x50] sm:$0xff]
  %v26 = vld [vmem:[%s0 + $0x58] sm:$0xff]
  %v27 = vld [vmem:[%s0 + $0x60] sm:$0xff]
  %v28 = vld [vmem:[%s0 + $0x68] sm:$0xff]
  %v29 = vld [vmem:[%s0 + $0x70] sm:$0xff]
  %v30 = vld [vmem:[%s0 + $0x78] sm:$0xff]
  %v31 = vld [vmem:[%s0 + $0x80] sm:$0xff]
  %v32 = vld [vmem:[%s0 + $0x88] sm:$0xff]
  %v33 = vld [vmem:[%s0 + $0x90] sm:$0xff]
  %v34 = vld [vmem:[%s0 + $0x98] sm:$0xff]
  %v35 = vld [vmem:[%s0 + $0xa0] sm:$0xff]
  %v36 = vld [vmem:[%s0 + $0xa8] sm:$0xff]
  %v37 = vld [vmem:[%s0 + $0xb0] sm:$0xff]
  %v38 = vld [vmem:[%s0 + $0xb8] sm:$0xff]
  %v39 = vld [vmem:[%s0 + $0xc0] sm:$0xff]
  %v40 = vld [vmem:[%s0 + $0xc8] sm:$0xff]
  %v41 = vld [vmem:[%s0 + $0xd0] sm:$0xff]
  %v42 = vld [vmem:[%s0 + $0xd8] sm:$0xff]
  %v43 = vld [vmem:[%s0 + $0xe0] sm:$0xff]
  %v44 = vld [vmem:[%s0 + $0xe8] sm:$0xff]
  %v45 = vld [vmem:[%s0 + $0xf0] sm:$0xff]
  %v46 = vld [vmem:[%s0 + $0xf8] sm:$0xff]
  %v47 = vld [vmem:[%s1] sm:$0xf]
  %v48 = vld [vmem:[%s1 + $0x4] sm:$0xf]
  %v49 = vld [vmem:[%s1 + $0x8] sm:$0xf]
  %v50 = vld [vmem:[%s1 + $0xc] sm:$0xf]
  %v51 = vld [vmem:[%s1 + $0x10] sm:$0xf]
  %v52 = vld [vmem:[%s1 + $0x14] sm:$0xf]
  %v53 = vld [vmem:[%s1 + $0x18] sm:$0xf]
  %v54 = vld [vmem:[%s1 + $0x1c] sm:$0xf]
  %v55 = vld [vmem:[%s1 + $0x20] sm:$0xf]
  %v56 = vld [vmem:[%s1 + $0x24] sm:$0xf]
  %v57 = vld [vmem:[%s1 + $0x28] sm:$0xf]
  %v58 = vld [vmem:[%s1 + $0x2c] sm:$0xf]
  %v59 = vld [vmem:[%s1 + $0x30] sm:$0xf]
  %v60 = vld [vmem:[%s1 + $0x34] sm:$0xf]
  %v61 = vld [vmem:[%s1 + $0x38] sm:$0xf]
  %v62 = vld [vmem:[%s1 + $0x3c] sm:$0xf]
  %v63 = vld [vmem:[%s1 + $0x40] sm:$0xf]
  %v64 = vld [vmem:[%s1 + $0x44] sm:$0xf]
  %v65 = vld [vmem:[%s1 + $0x48] sm:$0xf]
  %v66 = vld [vmem:[%s1 + $0x4c] sm:$0xf]
  %v67 = vld [vmem:[%s1 + $0x50] sm:$0xf]
  %v68 = vld [vmem:[%s1 + $0x54] sm:$0xf]
  %v69 = vld [vmem:[%s1 + $0x58] sm:$0xf]
  %v70 = vld [vmem:[%s1 + $0x5c] sm:$0xf]
  %v71 = vld [vmem:[%s1 + $0x60] sm:$0xf]
  %v72 = vld [vmem:[%s1 + $0x64] sm:$0xf]
  %v73 = vld [vmem:[%s1 + $0x68] sm:$0xf]
  %v74 = vld [vmem:[%s1 + $0x6c] sm:$0xf]
  %v75 = vld [vmem:[%s1 + $0x70] sm:$0xf]
  %v76 = vld [vmem:[%s1 + $0x74] sm:$0xf]
  %v77 = vld [vmem:[%s1 + $0x78] sm:$0xf]
  %v78 = vld [vmem:[%s1 + $0x7c] sm:$0xf]
  %v79 = vld [vmem:[%s1 + $0x80] sm:$0xf]
  %v80 = vld [vmem:[%s1 + $0x84] sm:$0xf]
  %v81 = vld [vmem:[%s1 + $0x88] sm:$0xf]
  %v82 = vld [vmem:[%s1 + $0x8c] sm:$0xf]
  %v83 = vld [vmem:[%s1 + $0x90] sm:$0xf]
  %v84 = vld [vmem:[%s1 + $0x94] sm:$0xf]
  %v85 = vld [vmem:[%s1 + $0x98] sm:$0xf]
  %v86 = vld [vmem:[%s1 + $0x9c] sm:$0xf]
  %v87 = vld [vmem:[%s1 + $0xa0] sm:$0xf]
  %v88 = vld [vmem:[%s1 + $0xa4] sm:$0xf]
  %v89 = vld [vmem:[%s1 + $0xa8] sm:$0xf]
  %v90 = vld [vmem:[%s1 + $0xac] sm:$0xf]
  %v91 = vld [vmem:[%s1 + $0xb0] sm:$0xf]
  %v92 = vld [vmem:[%s1 + $0xb4] sm:$0xf]
  %v93 = vld [vmem:[%s1 + $0xb8] sm:$0xf]
  %v94 = vld [vmem:[%s1 + $0xbc] sm:$0xf]
  %v95 = vld [vmem:[%s1 + $0xc0] sm:$0xf]
  %v96 = vld [vmem:[%s1 + $0xc4] sm:$0xf]
  %v97 = vld [vmem:[%s1 + $0xc8] sm:$0xf]
  %v98 = vld [vmem:[%s1 + $0xcc] sm:$0xf]
  %v99 = vld [vmem:[%s1 + $0xd0] sm:$0xf]
  %v100 = vld [vmem:[%s1 + $0xd4] sm:$0xf]
  %v101 = vld [vmem:[%s1 + $0xd8] sm:$0xf]
  %v102 = vld [vmem:[%s1 + $0xdc] sm:$0xf]
  %v103 = vld [vmem:[%s1 + $0xe0] sm:$0xf]
  %v104 = vld [vmem:[%s1 + $0xe4] sm:$0xf]
  %v105 = vld [vmem:[%s1 + $0xe8] sm:$0xf]
  %v106 = vld [vmem:[%s1 + $0xec] sm:$0xf]
  %v107 = vld [vmem:[%s1 + $0xf0] sm:$0xf]
  %v108 = vld [vmem:[%s1 + $0xf4] sm:$0xf]
  %v109 = vld [vmem:[%s1 + $0xf8] sm:$0xf]
  %v110 = vld [vmem:[%s1 + $0xfc] sm:$0xf]
  %v111 = vld [vmem:[%s1 + $0x100] sm:$0xf]
  %v112 = vld [vmem:[%s1 + $0x104] sm:$0xf]
  %v113 = vld [vmem:[%s1 + $0x108] sm:$0xf]
  %v114 = vld [vmem:[%s1 + $0x10c] sm:$0xf]
  %v115 = vld [vmem:[%s1 + $0x110] sm:$0xf]
  %v116 = vld [vmem:[%s1 + $0x114] sm:$0xf]
  %v117 = vld [vmem:[%s1 + $0x118] sm:$0xf]
  %v118 = vld [vmem:[%s1 + $0x11c] sm:$0xf]
  %v119 = vld [vmem:[%s1 + $0x120] sm:$0xf]
  %v120 = vld [vmem:[%s1 + $0x124] sm:$0xf]
  %v121 = vld [vmem:[%s1 + $0x128] sm:$0xf]
  %v122 = vld [vmem:[%s1 + $0x12c] sm:$0xf]
  %v123 = vld [vmem:[%s1 + $0x130] sm:$0xf]
  %v124 = vld [vmem:[%s1 + $0x134] sm:$0xf]
  %v125 = vld [vmem:[%s1 + $0x138] sm:$0xf]
  %v126 = vld [vmem:[%s1 + $0x13c] sm:$0xf]
  %v127 = vld [vmem:[%s1 + $0x140] sm:$0xf]
  %v128 = vld [vmem:[%s1 + $0x144] sm:$0xf]
  %v129 = vld [vmem:[%s1 + $0x148] sm:$0xf]
  %v130 = vld [vmem:[%s1 + $0x14c] sm:$0xf]
  %v131 = vld [vmem:[%s1 + $0x150] sm:$0xf]
  %v132 = vld [vmem:[%s1 + $0x154] sm:$0xf]
  %v133 = vld [vmem:[%s1 + $0x158] sm:$0xf]
  %v134 = vld [vmem:[%s1 + $0x15c] sm:$0xf]
  %v135 = vld [vmem:[%s1 + $0x160] sm:$0xf]
  %v136 = vld [vmem:[%s1 + $0x164] sm:$0xf]
  %v137 = vld [vmem:[%s1 + $0x168] sm:$0xf]
  %v138 = vld [vmem:[%s1 + $0x16c] sm:$0xf]
  %v139 = vld [vmem:[%s1 + $0x170] sm:$0xf]
  %v140 = vld [vmem:[%s1 + $0x174] sm:$0xf]
  %v141 = vld [vmem:[%s1 + $0x178] sm:$0xf]
  %v142 = vld [vmem:[%s1 + $0x17c] sm:$0xf]
  %v143 = vld [vmem:[%s1 + $0x180] sm:$0xf]
  %v144 = vld [vmem:[%s1 + $0x184] sm:$0xf]
  %v145 = vld [vmem:[%s1 + $0x188] sm:$0xf]
  %v146 = vld [vmem:[%s1 + $0x18c] sm:$0xf]
  %v147 = vld [vmem:[%s1 + $0x190] sm:$0xf]
  %v148 = vld [vmem:[%s1 + $0x194] sm:$0xf]
  %v149 = vld [vmem:[%s1 + $0x198] sm:$0xf]
  %v150 = vld [vmem:[%s1 + $0x19c] sm:$0xf]
  %v151 = vld [vmem:[%s1 + $0x1a0] sm:$0xf]
  %v152 = vld [vmem:[%s1 + $0x1a4] sm:$0xf]
  %v153 = vld [vmem:[%s1 + $0x1a8] sm:$0xf]
  %v154 = vld [vmem:[%s1 + $0x1ac] sm:$0xf]
  %v155 = vld [vmem:[%s1 + $0x1b0] sm:$0xf]
  %v156 = vld [vmem:[%s1 + $0x1b4] sm:$0xf]
  %v157 = vld [vmem:[%s1 + $0x1b8] sm:$0xf]
  %v158 = vld [vmem:[%s1 + $0x1bc] sm:$0xf]
  %v159 = vld [vmem:[%s1 + $0x1c0] sm:$0xf]
  %v160 = vld [vmem:[%s1 + $0x1c4] sm:$0xf]
  %v161 = vld [vmem:[%s1 + $0x1c8] sm:$0xf]
  %v162 = vld [vmem:[%s1 + $0x1cc] sm:$0xf]
  %v163 = vld [vmem:[%s1 + $0x1d0] sm:$0xf]
  %v164 = vld [vmem:[%s1 + $0x1d4] sm:$0xf]
  %v165 = vld [vmem:[%s1 + $0x1d8] sm:$0xf]
  %v166 = vld [vmem:[%s1 + $0x1dc] sm:$0xf]
  %v167 = vld [vmem:[%s1 + $0x1e0] sm:$0xf]
  %v168 = vld [vmem:[%s1 + $0x1e4] sm:$0xf]
  %v169 = vld [vmem:[%s1 + $0x1e8] sm:$0xf]
  %v170 = vld [vmem:[%s1 + $0x1ec] sm:$0xf]
  %v171 = vld [vmem:[%s1 + $0x1f0] sm:$0xf]
  %v172 = vld [vmem:[%s1 + $0x1f4] sm:$0xf]
  %v173 = vld [vmem:[%s1 + $0x1f8] sm:$0xf]
  %v174 = vld [vmem:[%s1 + $0x1fc] sm:$0xf]
  %v175 = vld [vmem:[%s1 + $0x200] sm:$0xf]
  %v176 = vld [vmem:[%s1 + $0x204] sm:$0xf]
  %v177 = vld [vmem:[%s1 + $0x208] sm:$0xf]
  %v178 = vld [vmem:[%s1 + $0x20c] sm:$0xf]
  %v179 = vld [vmem:[%s1 + $0x210] sm:$0xf]
  %v180 = vld [vmem:[%s1 + $0x214] sm:$0xf]
  %v181 = vld [vmem:[%s1 + $0x218] sm:$0xf]
  %v182 = vld [vmem:[%s1 + $0x21c] sm:$0xf]
  %v183 = vld [vmem:[%s1 + $0x220] sm:$0xf]
  %v184 = vld [vmem:[%s1 + $0x224] sm:$0xf]
  %v185 = vld [vmem:[%s1 + $0x228] sm:$0xf]
  %v186 = vld [vmem:[%s1 + $0x22c] sm:$0xf]
  %v187 = vld [vmem:[%s1 + $0x230] sm:$0xf]
  %v188 = vld [vmem:[%s1 + $0x234] sm:$0xf]
  %v189 = vld [vmem:[%s1 + $0x238] sm:$0xf]
  %v190 = vld [vmem:[%s1 + $0x23c] sm:$0xf]
  %v191 = vld [vmem:[%s1 + $0x240] sm:$0xf]
  %v192 = vld [vmem:[%s1 + $0x244] sm:$0xf]
  %v193 = vld [vmem:[%s1 + $0x248] sm:$0xf]
  %v194 = vld [vmem:[%s1 + $0x24c] sm:$0xf]
  %v195 = vld [vmem:[%s1 + $0x250] sm:$0xf]
  %v196 = vld [vmem:[%s1 + $0x254] sm:$0xf]
  %v197 = vld [vmem:[%s1 + $0x258] sm:$0xf]
  %v198 = vld [vmem:[%s1 + $0x25c] sm:$0xf]
  %v199 = vld [vmem:[%s1 + $0x260] sm:$0xf]
  %v200 = vld [vmem:[%s1 + $0x264] sm:$0xf]
  %v201 = vld [vmem:[%s1 + $0x268] sm:$0xf]
  %v202 = vld [vmem:[%s1 + $0x26c] sm:$0xf]
  %v203 = vld [vmem:[%s1 + $0x270] sm:$0xf]
  %v204 = vld [vmem:[%s1 + $0x274] sm:$0xf]
  %v205 = vld [vmem:[%s1 + $0x278] sm:$0xf]
  %v206 = vld [vmem:[%s1 + $0x27c] sm:$0xf]
  %v207 = vld [vmem:[%s1 + $0x280] sm:$0xf]
  %v208 = vld [vmem:[%s1 + $0x284] sm:$0xf]
  %v209 = vld [vmem:[%s1 + $0x288] sm:$0xf]
  %v210 = vld [vmem:[%s1 + $0x28c] sm:$0xf]
  %v211 = vld [vmem:[%s1 + $0x290] sm:$0xf]
  %v212 = vld [vmem:[%s1 + $0x294] sm:$0xf]
  %v213 = vld [vmem:[%s1 + $0x298] sm:$0xf]
  %v214 = vld [vmem:[%s1 + $0x29c] sm:$0xf]
  %v215 = vld [vmem:[%s1 + $0x2a0] sm:$0xf]
  %v216 = vld [vmem:[%s1 + $0x2a4] sm:$0xf]
  %v217 = vld [vmem:[%s1 + $0x2a8] sm:$0xf]
  %v218 = vld [vmem:[%s1 + $0x2ac] sm:$0xf]
  %v219 = vld [vmem:[%s1 + $0x2b0] sm:$0xf]
  %v220 = vld [vmem:[%s1 + $0x2b4] sm:$0xf]
  %v221 = vld [vmem:[%s1 + $0x2b8] sm:$0xf]
  %v222 = vld [vmem:[%s1 + $0x2bc] sm:$0xf]
  %v223 = vld [vmem:[%s1 + $0x2c0] sm:$0xf]
  %v224 = vld [vmem:[%s1 + $0x2c4] sm:$0xf]
  %v225 = vld [vmem:[%s1 + $0x2c8] sm:$0xf]
  %v226 = vld [vmem:[%s1 + $0x2cc] sm:$0xf]
  %v227 = vld [vmem:[%s1 + $0x2d0] sm:$0xf]
  %v228 = vld [vmem:[%s1 + $0x2d4] sm:$0xf]
  %v229 = vld [vmem:[%s1 + $0x2d8] sm:$0xf]
  %v230 = vld [vmem:[%s1 + $0x2dc] sm:$0xf]
  %v231 = vld [vmem:[%s1 + $0x2e0] sm:$0xf]
  %v232 = vld [vmem:[%s1 + $0x2e4] sm:$0xf]
  %v233 = vld [vmem:[%s1 + $0x2e8] sm:$0xf]
  %v234 = vld [vmem:[%s1 + $0x2ec] sm:$0xf]
  %v235 = vld [vmem:[%s1 + $0x2f0] sm:$0xf]
  %v236 = vld [vmem:[%s1 + $0x2f4] sm:$0xf]
  %v237 = vld [vmem:[%s1 + $0x2f8] sm:$0xf]
  %v238 = vld [vmem:[%s1 + $0x2fc] sm:$0xf]
  %v239 = vld [vmem:[%s1 + $0x300] sm:$0xf]
  %v240 = vld [vmem:[%s1 + $0x304] sm:$0xf]
  %v241 = vld [vmem:[%s1 + $0x308] sm:$0xf]
  %v242 = vld [vmem:[%s1 + $0x30c] sm:$0xf]
  %v243 = vld [vmem:[%s1 + $0x310] sm:$0xf]
  %v244 = vld [vmem:[%s1 + $0x314] sm:$0xf]
  %v245 = vld [vmem:[%s1 + $0x318] sm:$0xf]
  %v246 = vld [vmem:[%s1 + $0x31c] sm:$0xf]
  %v247 = vld [vmem:[%s1 + $0x320] sm:$0xf]
  %v248 = vld [vmem:[%s1 + $0x324] sm:$0xf]
  %v249 = vld [vmem:[%s1 + $0x328] sm:$0xf]
  %v250 = vld [vmem:[%s1 + $0x32c] sm:$0xf]
  %v251 = vld [vmem:[%s1 + $0x330] sm:$0xf]
  %v252 = vld [vmem:[%s1 + $0x334] sm:$0xf]
  %v253 = vld [vmem:[%s1 + $0x338] sm:$0xf]
  %v254 = vld [vmem:[%s1 + $0x33c] sm:$0xf]
  %v255 = vld [vmem:[%s1 + $0x340] sm:$0xf]
  %v256 = vld [vmem:[%s1 + $0x344] sm:$0xf]
  %v257 = vld [vmem:[%s1 + $0x348] sm:$0xf]
  %v258 = vld [vmem:[%s1 + $0x34c] sm:$0xf]
  %v259 = vld [vmem:[%s1 + $0x350] sm:$0xf]
  %v260 = vld [vmem:[%s1 + $0x354] sm:$0xf]
  %v261 = vld [vmem:[%s1 + $0x358] sm:$0xf]
  %v262 = vld [vmem:[%s1 + $0x35c] sm:$0xf]
  %v263 = vld [vmem:[%s1 + $0x360] sm:$0xf]
  %v264 = vld [vmem:[%s1 + $0x364] sm:$0xf]
  %v265 = vld [vmem:[%s1 + $0x368] sm:$0xf]
  %v266 = vld [vmem:[%s1 + $0x36c] sm:$0xf]
  %v267 = vld [vmem:[%s1 + $0x370] sm:$0xf]
  %v268 = vld [vmem:[%s1 + $0x374] sm:$0xf]
  %v269 = vld [vmem:[%s1 + $0x378] sm:$0xf]
  %v270 = vld [vmem:[%s1 + $0x37c] sm:$0xf]
  %v271 = vld [vmem:[%s1 + $0x380] sm:$0xf]
  %v272 = vld [vmem:[%s1 + $0x384] sm:$0xf]
  %v273 = vld [vmem:[%s1 + $0x388] sm:$0xf]
  %v274 = vld [vmem:[%s1 + $0x38c] sm:$0xf]
  %v275 = vld [vmem:[%s1 + $0x390] sm:$0xf]
  %v276 = vld [vmem:[%s1 + $0x394] sm:$0xf]
  %v277 = vld [vmem:[%s1 + $0x398] sm:$0xf]
  %v278 = vld [vmem:[%s1 + $0x39c] sm:$0xf]
  %v279 = vld [vmem:[%s1 + $0x3a0] sm:$0xf]
  %v280 = vld [vmem:[%s1 + $0x3a4] sm:$0xf]
  %v281 = vld [vmem:[%s1 + $0x3a8] sm:$0xf]
  %v282 = vld [vmem:[%s1 + $0x3ac] sm:$0xf]
  %v283 = vld [vmem:[%s1 + $0x3b0] sm:$0xf]
  %v284 = vld [vmem:[%s1 + $0x3b4] sm:$0xf]
  %v285 = vld [vmem:[%s1 + $0x3b8] sm:$0xf]
  %v286 = vld [vmem:[%s1 + $0x3bc] sm:$0xf]
  %v287 = vld [vmem:[%s1 + $0x3c0] sm:$0xf]
  %v288 = vld [vmem:[%s1 + $0x3c4] sm:$0xf]
  %v289 = vld [vmem:[%s1 + $0x3c8] sm:$0xf]
  %v290 = vld [vmem:[%s1 + $0x3cc] sm:$0xf]
  %v291 = vld [vmem:[%s1 + $0x3d0] sm:$0xf]
  %v292 = vld [vmem:[%s1 + $0x3d4] sm:$0xf]
  %v293 = vld [vmem:[%s1 + $0x3d8] sm:$0xf]
  %v294 = vld [vmem:[%s1 + $0x3dc] sm:$0xf]
  %v295 = vld [vmem:[%s1 + $0x3e0] sm:$0xf]
  %v296 = vld [vmem:[%s1 + $0x3e4] sm:$0xf]
  %v297 = vld [vmem:[%s1 + $0x3e8] sm:$0xf]
  %v298 = vld [vmem:[%s1 + $0x3ec] sm:$0xf]
  %v299 = vld [vmem:[%s1 + $0x3f0] sm:$0xf]
  %v300 = vld [vmem:[%s1 + $0x3f4] sm:$0xf]
  %v301 = vld [vmem:[%s1 + $0x3f8] sm:$0xf]
  %v302 = vld [vmem:[%s1 + $0x3fc] sm:$0xf]
  %v303 = vld [vmem:[%s1 + $0x400] sm:$0xf]
  %v304 = vld [vmem:[%s1 + $0x404] sm:$0xf]
  %v305 = vld [vmem:[%s1 + $0x408] sm:$0xf]
  %v306 = vld [vmem:[%s1 + $0x40c] sm:$0xf]
  %v307 = vld [vmem:[%s1 + $0x410] sm:$0xf]
  %v308 = vld [vmem:[%s1 + $0x414] sm:$0xf]
  %v309 = vld [vmem:[%s1 + $0x418] sm:$0xf]
  %v310 = vld [vmem:[%s1 + $0x41c] sm:$0xf]
  %v311 = vld [vmem:[%s1 + $0x420] sm:$0xf]
  %v312 = vld [vmem:[%s1 + $0x424] sm:$0xf]
  %v313 = vld [vmem:[%s1 + $0x428] sm:$0xf]
  %v314 = vld [vmem:[%s1 + $0x42c] sm:$0xf]
  %v315 = vld [vmem:[%s1 + $0x430] sm:$0xf]
  %v316 = vld [vmem:[%s1 + $0x434] sm:$0xf]
  %v317 = vld [vmem:[%s1 + $0x438] sm:$0xf]
  %v318 = vld [vmem:[%s1 + $0x43c] sm:$0xf]
  %v319 = vld [vmem:[%s1 + $0x440] sm:$0xf]
  %v320 = vld [vmem:[%s1 + $0x444] sm:$0xf]
  %v321 = vld [vmem:[%s1 + $0x448] sm:$0xf]
  %v322 = vld [vmem:[%s1 + $0x44c] sm:$0xf]
  %v323 = vld [vmem:[%s1 + $0x450] sm:$0xf]
  %v324 = vld [vmem:[%s1 + $0x454] sm:$0xf]
  %v325 = vld [vmem:[%s1 + $0x458] sm:$0xf]
  %v326 = vld [vmem:[%s1 + $0x45c] sm:$0xf]
  %v327 = vld [vmem:[%s1 + $0x460] sm:$0xf]
  %v328 = vld [vmem:[%s1 + $0x464] sm:$0xf]
  %v329 = vld [vmem:[%s1 + $0x468] sm:$0xf]
  %v330 = vld [vmem:[%s1 + $0x46c] sm:$0xf]
  %v331 = vld [vmem:[%s1 + $0x470] sm:$0xf]
  %v332 = vld [vmem:[%s1 + $0x474] sm:$0xf]
  %v333 = vld [vmem:[%s1 + $0x478] sm:$0xf]
  %v334 = vld [vmem:[%s1 + $0x47c] sm:$0xf]
  %v335 = vld [vmem:[%s1 + $0x480] sm:$0xf]
  %v336 = vld [vmem:[%s1 + $0x484] sm:$0xf]
  %v337 = vld [vmem:[%s1 + $0x488] sm:$0xf]
  %v338 = vld [vmem:[%s1 + $0x48c] sm:$0xf]
  %v339 = vld [vmem:[%s1 + $0x490] sm:$0xf]
  %v340 = vld [vmem:[%s1 + $0x494] sm:$0xf]
  %v341 = vld [vmem:[%s1 + $0x498] sm:$0xf]
  %v342 = vld [vmem:[%s1 + $0x49c] sm:$0xf]
  %v343 = vld [vmem:[%s1 + $0x4a0] sm:$0xf]
  %v344 = vld [vmem:[%s1 + $0x4a4] sm:$0xf]
  %v345 = vld [vmem:[%s1 + $0x4a8] sm:$0xf]
  %v346 = vld [vmem:[%s1 + $0x4ac] sm:$0xf]
  %v347 = vld [vmem:[%s1 + $0x4b0] sm:$0xf]
  %v348 = vld [vmem:[%s1 + $0x4b4] sm:$0xf]
  %v349 = vld [vmem:[%s1 + $0x4b8] sm:$0xf]
  %v350 = vld [vmem:[%s1 + $0x4bc] sm:$0xf]
  %v351 = vld [vmem:[%s1 + $0x4c0] sm:$0xf]
  %v352 = vld [vmem:[%s1 + $0x4c4] sm:$0xf]
  %v353 = vld [vmem:[%s1 + $0x4c8] sm:$0xf]
  %v354 = vld [vmem:[%s1 + $0x4cc] sm:$0xf]
  %v355 = vld [vmem:[%s1 + $0x4d0] sm:$0xf]
  %v356 = vld [vmem:[%s1 + $0x4d4] sm:$0xf]
  %v357 = vld [vmem:[%s1 + $0x4d8] sm:$0xf]
  %v358 = vld [vmem:[%s1 + $0x4dc] sm:$0xf]
  %v359 = vld [vmem:[%s1 + $0x4e0] sm:$0xf]
  %v360 = vld [vmem:[%s1 + $0x4e4] sm:$0xf]
  %v361 = vld [vmem:[%s1 + $0x4e8] sm:$0xf]
  %v362 = vld [vmem:[%s1 + $0x4ec] sm:$0xf]
  %v363 = vld [vmem:[%s1 + $0x4f0] sm:$0xf]
  %v364 = vld [vmem:[%s1 + $0x4f4] sm:$0xf]
  %v365 = vld [vmem:[%s1 + $0x4f8] sm:$0xf]
  %v366 = vld [vmem:[%s1 + $0x4fc] sm:$0xf]
  %v367 = vld [vmem:[%s1 + $0x500] sm:$0xf]
  %v368 = vld [vmem:[%s1 + $0x504] sm:$0xf]
  %v369 = vld [vmem:[%s1 + $0x508] sm:$0xf]
  %v370 = vld [vmem:[%s1 + $0x50c] sm:$0xf]
  %v371 = vld [vmem:[%s1 + $0x510] sm:$0xf]
  %v372 = vld [vmem:[%s1 + $0x514] sm:$0xf]
  %v373 = vld [vmem:[%s1 + $0x518] sm:$0xf]
  %v374 = vld [vmem:[%s1 + $0x51c] sm:$0xf]
  %v375 = vld [vmem:[%s1 + $0x520] sm:$0xf]
  %v376 = vld [vmem:[%s1 + $0x524] sm:$0xf]
  %v377 = vld [vmem:[%s1 + $0x528] sm:$0xf]
  %v378 = vld [vmem:[%s1 + $0x52c] sm:$0xf]
  %v379 = vld [vmem:[%s1 + $0x530] sm:$0xf]
  %v380 = vld [vmem:[%s1 + $0x534] sm:$0xf]
  %v381 = vld [vmem:[%s1 + $0x538] sm:$0xf]
  %v382 = vld [vmem:[%s1 + $0x53c] sm:$0xf]
  %v383 = vld [vmem:[%s1 + $0x540] sm:$0xf]
  %v384 = vld [vmem:[%s1 + $0x544] sm:$0xf]
  %v385 = vld [vmem:[%s1 + $0x548] sm:$0xf]
  %v386 = vld [vmem:[%s1 + $0x54c] sm:$0xf]
  %v387 = vld [vmem:[%s1 + $0x550] sm:$0xf]
  %v388 = vld [vmem:[%s1 + $0x554] sm:$0xf]
  %v389 = vld [vmem:[%s1 + $0x558] sm:$0xf]
  %v390 = vld [vmem:[%s1 + $0x55c] sm:$0xf]
  %v391 = vld [vmem:[%s1 + $0x560] sm:$0xf]
  %v392 = vld [vmem:[%s1 + $0x564] sm:$0xf]
  %v393 = vld [vmem:[%s1 + $0x568] sm:$0xf]
  %v394 = vld [vmem:[%s1 + $0x56c] sm:$0xf]
  %v395 = vld [vmem:[%s1 + $0x570] sm:$0xf]
  %v396 = vld [vmem:[%s1 + $0x574] sm:$0xf]
  %v397 = vld [vmem:[%s1 + $0x578] sm:$0xf]
  %v398 = vld [vmem:[%s1 + $0x57c] sm:$0xf]
  %v399 = vld [vmem:[%s1 + $0x580] sm:$0xf]
  %v400 = vld [vmem:[%s1 + $0x584] sm:$0xf]
  %v401 = vld [vmem:[%s1 + $0x588] sm:$0xf]
  %v402 = vld [vmem:[%s1 + $0x58c] sm:$0xf]
  %v403 = vld [vmem:[%s1 + $0x590] sm:$0xf]
  %v404 = vld [vmem:[%s1 + $0x594] sm:$0xf]
  %v405 = vld [vmem:[%s1 + $0x598] sm:$0xf]
  %v406 = vld [vmem:[%s1 + $0x59c] sm:$0xf]
  %v407 = vld [vmem:[%s1 + $0x5a0] sm:$0xf]
  %v408 = vld [vmem:[%s1 + $0x5a4] sm:$0xf]
  %v409 = vld [vmem:[%s1 + $0x5a8] sm:$0xf]
  %v410 = vld [vmem:[%s1 + $0x5ac] sm:$0xf]
  %v411 = vld [vmem:[%s1 + $0x5b0] sm:$0xf]
  %v412 = vld [vmem:[%s1 + $0x5b4] sm:$0xf]
  %v413 = vld [vmem:[%s1 + $0x5b8] sm:$0xf]
  %v414 = vld [vmem:[%s1 + $0x5bc] sm:$0xf]
  %v415 = vld [vmem:[%s1 + $0x5c0] sm:$0xf]
  %v416 = vld [vmem:[%s1 + $0x5c4] sm:$0xf]
  %v417 = vld [vmem:[%s1 + $0x5c8] sm:$0xf]
  %v418 = vld [vmem:[%s1 + $0x5cc] sm:$0xf]
  %v419 = vld [vmem:[%s1 + $0x5d0] sm:$0xf]
  %v420 = vld [vmem:[%s1 + $0x5d4] sm:$0xf]
  %v421 = vld [vmem:[%s1 + $0x5d8] sm:$0xf]
  %v422 = vld [vmem:[%s1 + $0x5dc] sm:$0xf]
  %v423 = vld [vmem:[%s1 + $0x5e0] sm:$0xf]
  %v424 = vld [vmem:[%s1 + $0x5e4] sm:$0xf]
  %v425 = vld [vmem:[%s1 + $0x5e8] sm:$0xf]
  %v426 = vld [vmem:[%s1 + $0x5ec] sm:$0xf]
  %v427 = vld [vmem:[%s1 + $0x5f0] sm:$0xf]
  %v428 = vld [vmem:[%s1 + $0x5f4] sm:$0xf]
  %v429 = vld [vmem:[%s1 + $0x5f8] sm:$0xf]
  %v430 = vld [vmem:[%s1 + $0x5fc] sm:$0xf]
  %v431 = vld [vmem:[%s1 + $0x600] sm:$0xf]
  %v432 = vld [vmem:[%s1 + $0x604] sm:$0xf]
  %v433 = vld [vmem:[%s1 + $0x608] sm:$0xf]
  %v434 = vld [vmem:[%s1 + $0x60c] sm:$0xf]
  %v435 = vld [vmem:[%s1 + $0x610] sm:$0xf]
  %v436 = vld [vmem:[%s1 + $0x614] sm:$0xf]
  %v437 = vld [vmem:[%s1 + $0x618] sm:$0xf]
  %v438 = vld [vmem:[%s1 + $0x61c] sm:$0xf]
  %v439 = vld [vmem:[%s1 + $0x620] sm:$0xf]
  %v440 = vld [vmem:[%s1 + $0x624] sm:$0xf]
  %v441 = vld [vmem:[%s1 + $0x628] sm:$0xf]
  %v442 = vld [vmem:[%s1 + $0x62c] sm:$0xf]
  %v443 = vld [vmem:[%s1 + $0x630] sm:$0xf]
  %v444 = vld [vmem:[%s1 + $0x634] sm:$0xf]
  %v445 = vld [vmem:[%s1 + $0x638] sm:$0xf]
  %v446 = vld [vmem:[%s1 + $0x63c] sm:$0xf]
  %v447 = vld [vmem:[%s1 + $0x640] sm:$0xf]
  %v448 = vld [vmem:[%s1 + $0x644] sm:$0xf]
  %v449 = vld [vmem:[%s1 + $0x648] sm:$0xf]
  %v450 = vld [vmem:[%s1 + $0x64c] sm:$0xf]
  %v451 = vld [vmem:[%s1 + $0x650] sm:$0xf]
  %v452 = vld [vmem:[%s1 + $0x654] sm:$0xf]
  %v453 = vld [vmem:[%s1 + $0x658] sm:$0xf]
  %v454 = vld [vmem:[%s1 + $0x65c] sm:$0xf]
  %v455 = vld [vmem:[%s1 + $0x660] sm:$0xf]
  %v456 = vld [vmem:[%s1 + $0x664] sm:$0xf]
  %v457 = vld [vmem:[%s1 + $0x668] sm:$0xf]
  %v458 = vld [vmem:[%s1 + $0x66c] sm:$0xf]
  %v459 = vld [vmem:[%s1 + $0x670] sm:$0xf]
  %v460 = vld [vmem:[%s1 + $0x674] sm:$0xf]
  %v461 = vld [vmem:[%s1 + $0x678] sm:$0xf]
  %v462 = vld [vmem:[%s1 + $0x67c] sm:$0xf]
  %v463 = vld [vmem:[%s1 + $0x680] sm:$0xf]
  %v464 = vld [vmem:[%s1 + $0x684] sm:$0xf]
  %v465 = vld [vmem:[%s1 + $0x688] sm:$0xf]
  %v466 = vld [vmem:[%s1 + $0x68c] sm:$0xf]
  %v467 = vld [vmem:[%s1 + $0x690] sm:$0xf]
  %v468 = vld [vmem:[%s1 + $0x694] sm:$0xf]
  %v469 = vld [vmem:[%s1 + $0x698] sm:$0xf]
  %v470 = vld [vmem:[%s1 + $0x69c] sm:$0xf]
  %v471 = vld [vmem:[%s1 + $0x6a0] sm:$0xf]
  %v472 = vld [vmem:[%s1 + $0x6a4] sm:$0xf]
  %v473 = vld [vmem:[%s1 + $0x6a8] sm:$0xf]
  %v474 = vld [vmem:[%s1 + $0x6ac] sm:$0xf]
  %v475 = vld [vmem:[%s1 + $0x6b0] sm:$0xf]
  %v476 = vld [vmem:[%s1 + $0x6b4] sm:$0xf]
  %v477 = vld [vmem:[%s1 + $0x6b8] sm:$0xf]
  %v478 = vld [vmem:[%s1 + $0x6bc] sm:$0xf]
  %v479 = vld [vmem:[%s1 + $0x6c0] sm:$0xf]
  %v480 = vld [vmem:[%s1 + $0x6c4] sm:$0xf]
  %v481 = vld [vmem:[%s1 + $0x6c8] sm:$0xf]
  %v482 = vld [vmem:[%s1 + $0x6cc] sm:$0xf]
  %v483 = vld [vmem:[%s1 + $0x6d0] sm:$0xf]
  %v484 = vld [vmem:[%s1 + $0x6d4] sm:$0xf]
  %v485 = vld [vmem:[%s1 + $0x6d8] sm:$0xf]
  %v486 = vld [vmem:[%s1 + $0x6dc] sm:$0xf]
  %v487 = vld [vmem:[%s1 + $0x6e0] sm:$0xf]
  %v488 = vld [vmem:[%s1 + $0x6e4] sm:$0xf]
  %v489 = vld [vmem:[%s1 + $0x6e8] sm:$0xf]
  %v490 = vld [vmem:[%s1 + $0x6ec] sm:$0xf]
  %v491 = vld [vmem:[%s1 + $0x6f0] sm:$0xf]
  %v492 = vld [vmem:[%s1 + $0x6f4] sm:$0xf]
  %v493 = vld [vmem:[%s1 + $0x6f8] sm:$0xf]
  %v494 = vld [vmem:[%s1 + $0x6fc] sm:$0xf]
  %v495 = vld [vmem:[%s1 + $0x700] sm:$0xf]
  %v496 = vld [vmem:[%s1 + $0x704] sm:$0xf]
  %v497 = vld [vmem:[%s1 + $0x708] sm:$0xf]
  %v498 = vld [vmem:[%s1 + $0x70c] sm:$0xf]
  %v499 = vld [vmem:[%s1 + $0x710] sm:$0xf]
  %v500 = vld [vmem:[%s1 + $0x714] sm:$0xf]
  %v501 = vld [vmem:[%s1 + $0x718] sm:$0xf]
  %v502 = vld [vmem:[%s1 + $0x71c] sm:$0xf]
  %v503 = vld [vmem:[%s1 + $0x720] sm:$0xf]
  %v504 = vld [vmem:[%s1 + $0x724] sm:$0xf]
  %v505 = vld [vmem:[%s1 + $0x728] sm:$0xf]
  %v506 = vld [vmem:[%s1 + $0x72c] sm:$0xf]
  %v507 = vld [vmem:[%s1 + $0x730] sm:$0xf]
  %v508 = vld [vmem:[%s1 + $0x734] sm:$0xf]
  %v509 = vld [vmem:[%s1 + $0x738] sm:$0xf]
  %v510 = vld [vmem:[%s1 + $0x73c] sm:$0xf]
  %v511 = vld [vmem:[%s1 + $0x740] sm:$0xf]
  %v512 = vld [vmem:[%s1 + $0x744] sm:$0xf]
  %v513 = vld [vmem:[%s1 + $0x748] sm:$0xf]
  %v514 = vld [vmem:[%s1 + $0x74c] sm:$0xf]
  %v515 = vld [vmem:[%s1 + $0x750] sm:$0xf]
  %v516 = vld [vmem:[%s1 + $0x754] sm:$0xf]
  %v517 = vld [vmem:[%s1 + $0x758] sm:$0xf]
  %v518 = vld [vmem:[%s1 + $0x75c] sm:$0xf]
  %v519 = vld [vmem:[%s1 + $0x760] sm:$0xf]
  %v520 = vld [vmem:[%s1 + $0x764] sm:$0xf]
  %v521 = vld [vmem:[%s1 + $0x768] sm:$0xf]
  %v522 = vld [vmem:[%s1 + $0x76c] sm:$0xf]
  %v523 = vld [vmem:[%s1 + $0x770] sm:$0xf]
  %v524 = vld [vmem:[%s1 + $0x774] sm:$0xf]
  %v525 = vld [vmem:[%s1 + $0x778] sm:$0xf]
  %v526 = vld [vmem:[%s1 + $0x77c] sm:$0xf]
  %v527 = vld [vmem:[%s1 + $0x780] sm:$0xf]
  %v528 = vld [vmem:[%s1 + $0x784] sm:$0xf]
  %v529 = vld [vmem:[%s1 + $0x788] sm:$0xf]
  %v530 = vld [vmem:[%s1 + $0x78c] sm:$0xf]
  %v531 = vld [vmem:[%s1 + $0x790] sm:$0xf]
  %v532 = vld [vmem:[%s1 + $0x794] sm:$0xf]
  %v533 = vld [vmem:[%s1 + $0x798] sm:$0xf]
  %v534 = vld [vmem:[%s1 + $0x79c] sm:$0xf]
  %v535 = vld [vmem:[%s1 + $0x7a0] sm:$0xf]
  %v536 = vld [vmem:[%s1 + $0x7a4] sm:$0xf]
  %v537 = vld [vmem:[%s1 + $0x7a8] sm:$0xf]
  %v538 = vld [vmem:[%s1 + $0x7ac] sm:$0xf]
  %v539 = vld [vmem:[%s1 + $0x7b0] sm:$0xf]
  %v540 = vld [vmem:[%s1 + $0x7b4] sm:$0xf]
  %v541 = vld [vmem:[%s1 + $0x7b8] sm:$0xf]
  %v542 = vld [vmem:[%s1 + $0x7bc] sm:$0xf]
  %v543 = vld [vmem:[%s1 + $0x7c0] sm:$0xf]
  %v544 = vld [vmem:[%s1 + $0x7c4] sm:$0xf]
  %v545 = vld [vmem:[%s1 + $0x7c8] sm:$0xf]
  %v546 = vld [vmem:[%s1 + $0x7cc] sm:$0xf]
  %v547 = vld [vmem:[%s1 + $0x7d0] sm:$0xf]
  %v548 = vld [vmem:[%s1 + $0x7d4] sm:$0xf]
  %v549 = vld [vmem:[%s1 + $0x7d8] sm:$0xf]
  %v550 = vld [vmem:[%s1 + $0x7dc] sm:$0xf]
  %v551 = vld [vmem:[%s1 + $0x7e0] sm:$0xf]
  %v552 = vld [vmem:[%s1 + $0x7e4] sm:$0xf]
  %v553 = vld [vmem:[%s1 + $0x7e8] sm:$0xf]
  %v554 = vld [vmem:[%s1 + $0x7ec] sm:$0xf]
  %v555 = vld [vmem:[%s1 + $0x7f0] sm:$0xf]
  %v556 = vld [vmem:[%s1 + $0x7f4] sm:$0xf]
  %v557 = vld [vmem:[%s1 + $0x7f8] sm:$0xf]
  %v558 = vld [vmem:[%s1 + $0x7fc] sm:$0xf]
  %v559 = vld [vmem:[%s2] sm:$0x1]
  %v561 = vlaneseq
  %v562 = vshrl.u32 %v561, 7
  %v563 = vsub.s32 0, %v562
  %v564 = vrot.slane %v559, %v563
  %v598 = vunpack.c.l.b16 %v15
  %v599 = vunpack.c.h.b16 %v15
  %v600 = vunpack.c.l.b16 %v16
  %v601 = vunpack.c.h.b16 %v16
  %v602 = vunpack.c.l.b16 %v17
  %v603 = vunpack.c.h.b16 %v17
  %v604 = vunpack.c.l.b16 %v18
  %v605 = vunpack.c.h.b16 %v18
  %v606 = vunpack.c.l.b16 %v19
  %v607 = vunpack.c.h.b16 %v19
  %v608 = vunpack.c.l.b16 %v20
  %v609 = vunpack.c.h.b16 %v20
  %v610 = vunpack.c.l.b16 %v21
  %v611 = vunpack.c.h.b16 %v21
  %v612 = vunpack.c.l.b16 %v22
  %v613 = vunpack.c.h.b16 %v22
  %v614 = vunpack.c.l.b16 %v23
  %v615 = vunpack.c.h.b16 %v23
  %v616 = vunpack.c.l.b16 %v24
  %v617 = vunpack.c.h.b16 %v24
  %v618 = vunpack.c.l.b16 %v25
  %v619 = vunpack.c.h.b16 %v25
  %v620 = vunpack.c.l.b16 %v26
  %v621 = vunpack.c.h.b16 %v26
  %v622 = vunpack.c.l.b16 %v27
  %v623 = vunpack.c.h.b16 %v27
  %v624 = vunpack.c.l.b16 %v28
  %v625 = vunpack.c.h.b16 %v28
  %v626 = vunpack.c.l.b16 %v29
  %v627 = vunpack.c.h.b16 %v29
  %v628 = vunpack.c.l.b16 %v30
  %v629 = vunpack.c.h.b16 %v30
  %v630 = vunpack.c.l.b16 %v31
  %v631 = vunpack.c.h.b16 %v31
  %v632 = vunpack.c.l.b16 %v32
  %v633 = vunpack.c.h.b16 %v32
  %v634 = vunpack.c.l.b16 %v33
  %v635 = vunpack.c.h.b16 %v33
  %v636 = vunpack.c.l.b16 %v34
  %v637 = vunpack.c.h.b16 %v34
  %v638 = vunpack.c.l.b16 %v35
  %v639 = vunpack.c.h.b16 %v35
  %v640 = vunpack.c.l.b16 %v36
  %v641 = vunpack.c.h.b16 %v36
  %v642 = vunpack.c.l.b16 %v37
  %v643 = vunpack.c.h.b16 %v37
  %v644 = vunpack.c.l.b16 %v38
  %v645 = vunpack.c.h.b16 %v38
  %v646 = vunpack.c.l.b16 %v39
  %v647 = vunpack.c.h.b16 %v39
  %v648 = vunpack.c.l.b16 %v40
  %v649 = vunpack.c.h.b16 %v40
  %v650 = vunpack.c.l.b16 %v41
  %v651 = vunpack.c.h.b16 %v41
  %v652 = vunpack.c.l.b16 %v42
  %v653 = vunpack.c.h.b16 %v42
  %v654 = vunpack.c.l.b16 %v43
  %v655 = vunpack.c.h.b16 %v43
  %v656 = vunpack.c.l.b16 %v44
  %v657 = vunpack.c.h.b16 %v44
  %v658 = vunpack.c.l.b16 %v45
  %v659 = vunpack.c.h.b16 %v45
  %v660 = vunpack.c.l.b16 %v46
  %v661 = vunpack.c.h.b16 %v46
  %v662 = vpack.c.b16 %v630, %v598
  %v663 = vpack.c.b16 %v631, %v599
  %v664 = vpack.c.b16 %v632, %v600
  %v665 = vpack.c.b16 %v633, %v601
  %v666 = vpack.c.b16 %v634, %v602
  %v667 = vpack.c.b16 %v635, %v603
  %v668 = vpack.c.b16 %v636, %v604
  %v669 = vpack.c.b16 %v637, %v605
  %v670 = vpack.c.b16 %v638, %v606
  %v671 = vpack.c.b16 %v639, %v607
  %v672 = vpack.c.b16 %v640, %v608
  %v673 = vpack.c.b16 %v641, %v609
  %v674 = vpack.c.b16 %v642, %v610
  %v675 = vpack.c.b16 %v643, %v611
  %v676 = vpack.c.b16 %v644, %v612
  %v677 = vpack.c.b16 %v645, %v613
  %v678 = vpack.c.b16 %v646, %v614
  %v679 = vpack.c.b16 %v647, %v615
  %v680 = vpack.c.b16 %v648, %v616
  %v681 = vpack.c.b16 %v649, %v617
  %v682 = vpack.c.b16 %v650, %v618
  %v683 = vpack.c.b16 %v651, %v619
  %v684 = vpack.c.b16 %v652, %v620
  %v685 = vpack.c.b16 %v653, %v621
  %v686 = vpack.c.b16 %v654, %v622
  %v687 = vpack.c.b16 %v655, %v623
  %v688 = vpack.c.b16 %v656, %v624
  %v689 = vpack.c.b16 %v657, %v625
  %v690 = vpack.c.b16 %v658, %v626
  %v691 = vpack.c.b16 %v659, %v627
  %v692 = vpack.c.b16 %v660, %v628
  %v693 = vpack.c.b16 %v661, %v629
  %v1238 = vunpack.c.l.b16 %v47
  %v1239 = vunpack.c.l.b16 %v48
  %v1240 = vunpack.c.l.b16 %v49
  %v1241 = vunpack.c.l.b16 %v50
  %v1242 = vunpack.c.l.b16 %v51
  %v1243 = vunpack.c.l.b16 %v52
  %v1244 = vunpack.c.l.b16 %v53
  %v1245 = vunpack.c.l.b16 %v54
  %v1246 = vunpack.c.l.b16 %v55
  %v1247 = vunpack.c.l.b16 %v56
  %v1248 = vunpack.c.l.b16 %v57
  %v1249 = vunpack.c.l.b16 %v58
  %v1250 = vunpack.c.l.b16 %v59
  %v1251 = vunpack.c.l.b16 %v60
  %v1252 = vunpack.c.l.b16 %v61
  %v1253 = vunpack.c.l.b16 %v62
  %v1254 = vunpack.c.l.b16 %v63
  %v1255 = vunpack.c.l.b16 %v64
  %v1256 = vunpack.c.l.b16 %v65
  %v1257 = vunpack.c.l.b16 %v66
  %v1258 = vunpack.c.l.b16 %v67
  %v1259 = vunpack.c.l.b16 %v68
  %v1260 = vunpack.c.l.b16 %v69
  %v1261 = vunpack.c.l.b16 %v70
  %v1262 = vunpack.c.l.b16 %v71
  %v1263 = vunpack.c.l.b16 %v72
  %v1264 = vunpack.c.l.b16 %v73
  %v1265 = vunpack.c.l.b16 %v74
  %v1266 = vunpack.c.l.b16 %v75
  %v1267 = vunpack.c.l.b16 %v76
  %v1268 = vunpack.c.l.b16 %v77
  %v1269 = vunpack.c.l.b16 %v78
  %v1270 = vunpack.c.l.b16 %v79
  %v1271 = vunpack.c.l.b16 %v80
  %v1272 = vunpack.c.l.b16 %v81
  %v1273 = vunpack.c.l.b16 %v82
  %v1274 = vunpack.c.l.b16 %v83
  %v1275 = vunpack.c.l.b16 %v84
  %v1276 = vunpack.c.l.b16 %v85
  %v1277 = vunpack.c.l.b16 %v86
  %v1278 = vunpack.c.l.b16 %v87
  %v1279 = vunpack.c.l.b16 %v88
  %v1280 = vunpack.c.l.b16 %v89
  %v1281 = vunpack.c.l.b16 %v90
  %v1282 = vunpack.c.l.b16 %v91
  %v1283 = vunpack.c.l.b16 %v92
  %v1284 = vunpack.c.l.b16 %v93
  %v1285 = vunpack.c.l.b16 %v94
  %v1286 = vunpack.c.l.b16 %v95
  %v1287 = vunpack.c.l.b16 %v96
  %v1288 = vunpack.c.l.b16 %v97
  %v1289 = vunpack.c.l.b16 %v98
  %v1290 = vunpack.c.l.b16 %v99
  %v1291 = vunpack.c.l.b16 %v100
  %v1292 = vunpack.c.l.b16 %v101
  %v1293 = vunpack.c.l.b16 %v102
  %v1294 = vunpack.c.l.b16 %v103
  %v1295 = vunpack.c.l.b16 %v104
  %v1296 = vunpack.c.l.b16 %v105
  %v1297 = vunpack.c.l.b16 %v106
  %v1298 = vunpack.c.l.b16 %v107
  %v1299 = vunpack.c.l.b16 %v108
  %v1300 = vunpack.c.l.b16 %v109
  %v1301 = vunpack.c.l.b16 %v110
  %v1302 = vunpack.c.l.b16 %v111
  %v1303 = vunpack.c.l.b16 %v112
  %v1304 = vunpack.c.l.b16 %v113
  %v1305 = vunpack.c.l.b16 %v114
  %v1306 = vunpack.c.l.b16 %v115
  %v1307 = vunpack.c.l.b16 %v116
  %v1308 = vunpack.c.l.b16 %v117
  %v1309 = vunpack.c.l.b16 %v118
  %v1310 = vunpack.c.l.b16 %v119
  %v1311 = vunpack.c.l.b16 %v120
  %v1312 = vunpack.c.l.b16 %v121
  %v1313 = vunpack.c.l.b16 %v122
  %v1314 = vunpack.c.l.b16 %v123
  %v1315 = vunpack.c.l.b16 %v124
  %v1316 = vunpack.c.l.b16 %v125
  %v1317 = vunpack.c.l.b16 %v126
  %v1318 = vunpack.c.l.b16 %v127
  %v1319 = vunpack.c.l.b16 %v128
  %v1320 = vunpack.c.l.b16 %v129
  %v1321 = vunpack.c.l.b16 %v130
  %v1322 = vunpack.c.l.b16 %v131
  %v1323 = vunpack.c.l.b16 %v132
  %v1324 = vunpack.c.l.b16 %v133
  %v1325 = vunpack.c.l.b16 %v134
  %v1326 = vunpack.c.l.b16 %v135
  %v1327 = vunpack.c.l.b16 %v136
  %v1328 = vunpack.c.l.b16 %v137
  %v1329 = vunpack.c.l.b16 %v138
  %v1330 = vunpack.c.l.b16 %v139
  %v1331 = vunpack.c.l.b16 %v140
  %v1332 = vunpack.c.l.b16 %v141
  %v1333 = vunpack.c.l.b16 %v142
  %v1334 = vunpack.c.l.b16 %v143
  %v1335 = vunpack.c.l.b16 %v144
  %v1336 = vunpack.c.l.b16 %v145
  %v1337 = vunpack.c.l.b16 %v146
  %v1338 = vunpack.c.l.b16 %v147
  %v1339 = vunpack.c.l.b16 %v148
  %v1340 = vunpack.c.l.b16 %v149
  %v1341 = vunpack.c.l.b16 %v150
  %v1342 = vunpack.c.l.b16 %v151
  %v1343 = vunpack.c.l.b16 %v152
  %v1344 = vunpack.c.l.b16 %v153
  %v1345 = vunpack.c.l.b16 %v154
  %v1346 = vunpack.c.l.b16 %v155
  %v1347 = vunpack.c.l.b16 %v156
  %v1348 = vunpack.c.l.b16 %v157
  %v1349 = vunpack.c.l.b16 %v158
  %v1350 = vunpack.c.l.b16 %v159
  %v1351 = vunpack.c.l.b16 %v160
  %v1352 = vunpack.c.l.b16 %v161
  %v1353 = vunpack.c.l.b16 %v162
  %v1354 = vunpack.c.l.b16 %v163
  %v1355 = vunpack.c.l.b16 %v164
  %v1356 = vunpack.c.l.b16 %v165
  %v1357 = vunpack.c.l.b16 %v166
  %v1358 = vunpack.c.l.b16 %v167
  %v1359 = vunpack.c.l.b16 %v168
  %v1360 = vunpack.c.l.b16 %v169
  %v1361 = vunpack.c.l.b16 %v170
  %v1362 = vunpack.c.l.b16 %v171
  %v1363 = vunpack.c.l.b16 %v172
  %v1364 = vunpack.c.l.b16 %v173
  %v1365 = vunpack.c.l.b16 %v174
  %v1366 = vunpack.c.l.b16 %v175
  %v1367 = vunpack.c.l.b16 %v176
  %v1368 = vunpack.c.l.b16 %v177
  %v1369 = vunpack.c.l.b16 %v178
  %v1370 = vunpack.c.l.b16 %v179
  %v1371 = vunpack.c.l.b16 %v180
  %v1372 = vunpack.c.l.b16 %v181
  %v1373 = vunpack.c.l.b16 %v182
  %v1374 = vunpack.c.l.b16 %v183
  %v1375 = vunpack.c.l.b16 %v184
  %v1376 = vunpack.c.l.b16 %v185
  %v1377 = vunpack.c.l.b16 %v186
  %v1378 = vunpack.c.l.b16 %v187
  %v1379 = vunpack.c.l.b16 %v188
  %v1380 = vunpack.c.l.b16 %v189
  %v1381 = vunpack.c.l.b16 %v190
  %v1382 = vunpack.c.l.b16 %v191
  %v1383 = vunpack.c.l.b16 %v192
  %v1384 = vunpack.c.l.b16 %v193
  %v1385 = vunpack.c.l.b16 %v194
  %v1386 = vunpack.c.l.b16 %v195
  %v1387 = vunpack.c.l.b16 %v196
  %v1388 = vunpack.c.l.b16 %v197
  %v1389 = vunpack.c.l.b16 %v198
  %v1390 = vunpack.c.l.b16 %v199
  %v1391 = vunpack.c.l.b16 %v200
  %v1392 = vunpack.c.l.b16 %v201
  %v1393 = vunpack.c.l.b16 %v202
  %v1394 = vunpack.c.l.b16 %v203
  %v1395 = vunpack.c.l.b16 %v204
  %v1396 = vunpack.c.l.b16 %v205
  %v1397 = vunpack.c.l.b16 %v206
  %v1398 = vunpack.c.l.b16 %v207
  %v1399 = vunpack.c.l.b16 %v208
  %v1400 = vunpack.c.l.b16 %v209
  %v1401 = vunpack.c.l.b16 %v210
  %v1402 = vunpack.c.l.b16 %v211
  %v1403 = vunpack.c.l.b16 %v212
  %v1404 = vunpack.c.l.b16 %v213
  %v1405 = vunpack.c.l.b16 %v214
  %v1406 = vunpack.c.l.b16 %v215
  %v1407 = vunpack.c.l.b16 %v216
  %v1408 = vunpack.c.l.b16 %v217
  %v1409 = vunpack.c.l.b16 %v218
  %v1410 = vunpack.c.l.b16 %v219
  %v1411 = vunpack.c.l.b16 %v220
  %v1412 = vunpack.c.l.b16 %v221
  %v1413 = vunpack.c.l.b16 %v222
  %v1414 = vunpack.c.l.b16 %v223
  %v1415 = vunpack.c.l.b16 %v224
  %v1416 = vunpack.c.l.b16 %v225
  %v1417 = vunpack.c.l.b16 %v226
  %v1418 = vunpack.c.l.b16 %v227
  %v1419 = vunpack.c.l.b16 %v228
  %v1420 = vunpack.c.l.b16 %v229
  %v1421 = vunpack.c.l.b16 %v230
  %v1422 = vunpack.c.l.b16 %v231
  %v1423 = vunpack.c.l.b16 %v232
  %v1424 = vunpack.c.l.b16 %v233
  %v1425 = vunpack.c.l.b16 %v234
  %v1426 = vunpack.c.l.b16 %v235
  %v1427 = vunpack.c.l.b16 %v236
  %v1428 = vunpack.c.l.b16 %v237
  %v1429 = vunpack.c.l.b16 %v238
  %v1430 = vunpack.c.l.b16 %v239
  %v1431 = vunpack.c.l.b16 %v240
  %v1432 = vunpack.c.l.b16 %v241
  %v1433 = vunpack.c.l.b16 %v242
  %v1434 = vunpack.c.l.b16 %v243
  %v1435 = vunpack.c.l.b16 %v244
  %v1436 = vunpack.c.l.b16 %v245
  %v1437 = vunpack.c.l.b16 %v246
  %v1438 = vunpack.c.l.b16 %v247
  %v1439 = vunpack.c.l.b16 %v248
  %v1440 = vunpack.c.l.b16 %v249
  %v1441 = vunpack.c.l.b16 %v250
  %v1442 = vunpack.c.l.b16 %v251
  %v1443 = vunpack.c.l.b16 %v252
  %v1444 = vunpack.c.l.b16 %v253
  %v1445 = vunpack.c.l.b16 %v254
  %v1446 = vunpack.c.l.b16 %v255
  %v1447 = vunpack.c.l.b16 %v256
  %v1448 = vunpack.c.l.b16 %v257
  %v1449 = vunpack.c.l.b16 %v258
  %v1450 = vunpack.c.l.b16 %v259
  %v1451 = vunpack.c.l.b16 %v260
  %v1452 = vunpack.c.l.b16 %v261
  %v1453 = vunpack.c.l.b16 %v262
  %v1454 = vunpack.c.l.b16 %v263
  %v1455 = vunpack.c.l.b16 %v264
  %v1456 = vunpack.c.l.b16 %v265
  %v1457 = vunpack.c.l.b16 %v266
  %v1458 = vunpack.c.l.b16 %v267
  %v1459 = vunpack.c.l.b16 %v268
  %v1460 = vunpack.c.l.b16 %v269
  %v1461 = vunpack.c.l.b16 %v270
  %v1462 = vunpack.c.l.b16 %v271
  %v1463 = vunpack.c.l.b16 %v272
  %v1464 = vunpack.c.l.b16 %v273
  %v1465 = vunpack.c.l.b16 %v274
  %v1466 = vunpack.c.l.b16 %v275
  %v1467 = vunpack.c.l.b16 %v276
  %v1468 = vunpack.c.l.b16 %v277
  %v1469 = vunpack.c.l.b16 %v278
  %v1470 = vunpack.c.l.b16 %v279
  %v1471 = vunpack.c.l.b16 %v280
  %v1472 = vunpack.c.l.b16 %v281
  %v1473 = vunpack.c.l.b16 %v282
  %v1474 = vunpack.c.l.b16 %v283
  %v1475 = vunpack.c.l.b16 %v284
  %v1476 = vunpack.c.l.b16 %v285
  %v1477 = vunpack.c.l.b16 %v286
  %v1478 = vunpack.c.l.b16 %v287
  %v1479 = vunpack.c.l.b16 %v288
  %v1480 = vunpack.c.l.b16 %v289
  %v1481 = vunpack.c.l.b16 %v290
  %v1482 = vunpack.c.l.b16 %v291
  %v1483 = vunpack.c.l.b16 %v292
  %v1484 = vunpack.c.l.b16 %v293
  %v1485 = vunpack.c.l.b16 %v294
  %v1486 = vunpack.c.l.b16 %v295
  %v1487 = vunpack.c.l.b16 %v296
  %v1488 = vunpack.c.l.b16 %v297
  %v1489 = vunpack.c.l.b16 %v298
  %v1490 = vunpack.c.l.b16 %v299
  %v1491 = vunpack.c.l.b16 %v300
  %v1492 = vunpack.c.l.b16 %v301
  %v1493 = vunpack.c.l.b16 %v302
  %v1494 = vunpack.c.l.b16 %v303
  %v1495 = vunpack.c.l.b16 %v304
  %v1496 = vunpack.c.l.b16 %v305
  %v1497 = vunpack.c.l.b16 %v306
  %v1498 = vunpack.c.l.b16 %v307
  %v1499 = vunpack.c.l.b16 %v308
  %v1500 = vunpack.c.l.b16 %v309
  %v1501 = vunpack.c.l.b16 %v310
  %v1502 = vunpack.c.l.b16 %v311
  %v1503 = vunpack.c.l.b16 %v312
  %v1504 = vunpack.c.l.b16 %v313
  %v1505 = vunpack.c.l.b16 %v314
  %v1506 = vunpack.c.l.b16 %v315
  %v1507 = vunpack.c.l.b16 %v316
  %v1508 = vunpack.c.l.b16 %v317
  %v1509 = vunpack.c.l.b16 %v318
  %v1510 = vunpack.c.l.b16 %v319
  %v1511 = vunpack.c.l.b16 %v320
  %v1512 = vunpack.c.l.b16 %v321
  %v1513 = vunpack.c.l.b16 %v322
  %v1514 = vunpack.c.l.b16 %v323
  %v1515 = vunpack.c.l.b16 %v324
  %v1516 = vunpack.c.l.b16 %v325
  %v1517 = vunpack.c.l.b16 %v326
  %v1518 = vunpack.c.l.b16 %v327
  %v1519 = vunpack.c.l.b16 %v328
  %v1520 = vunpack.c.l.b16 %v329
  %v1521 = vunpack.c.l.b16 %v330
  %v1522 = vunpack.c.l.b16 %v331
  %v1523 = vunpack.c.l.b16 %v332
  %v1524 = vunpack.c.l.b16 %v333
  %v1525 = vunpack.c.l.b16 %v334
  %v1526 = vunpack.c.l.b16 %v335
  %v1527 = vunpack.c.l.b16 %v336
  %v1528 = vunpack.c.l.b16 %v337
  %v1529 = vunpack.c.l.b16 %v338
  %v1530 = vunpack.c.l.b16 %v339
  %v1531 = vunpack.c.l.b16 %v340
  %v1532 = vunpack.c.l.b16 %v341
  %v1533 = vunpack.c.l.b16 %v342
  %v1534 = vunpack.c.l.b16 %v343
  %v1535 = vunpack.c.l.b16 %v344
  %v1536 = vunpack.c.l.b16 %v345
  %v1537 = vunpack.c.l.b16 %v346
  %v1538 = vunpack.c.l.b16 %v347
  %v1539 = vunpack.c.l.b16 %v348
  %v1540 = vunpack.c.l.b16 %v349
  %v1541 = vunpack.c.l.b16 %v350
  %v1542 = vunpack.c.l.b16 %v351
  %v1543 = vunpack.c.l.b16 %v352
  %v1544 = vunpack.c.l.b16 %v353
  %v1545 = vunpack.c.l.b16 %v354
  %v1546 = vunpack.c.l.b16 %v355
  %v1547 = vunpack.c.l.b16 %v356
  %v1548 = vunpack.c.l.b16 %v357
  %v1549 = vunpack.c.l.b16 %v358
  %v1550 = vunpack.c.l.b16 %v359
  %v1551 = vunpack.c.l.b16 %v360
  %v1552 = vunpack.c.l.b16 %v361
  %v1553 = vunpack.c.l.b16 %v362
  %v1554 = vunpack.c.l.b16 %v363
  %v1555 = vunpack.c.l.b16 %v364
  %v1556 = vunpack.c.l.b16 %v365
  %v1557 = vunpack.c.l.b16 %v366
  %v1558 = vunpack.c.l.b16 %v367
  %v1559 = vunpack.c.l.b16 %v368
  %v1560 = vunpack.c.l.b16 %v369
  %v1561 = vunpack.c.l.b16 %v370
  %v1562 = vunpack.c.l.b16 %v371
  %v1563 = vunpack.c.l.b16 %v372
  %v1564 = vunpack.c.l.b16 %v373
  %v1565 = vunpack.c.l.b16 %v374
  %v1566 = vunpack.c.l.b16 %v375
  %v1567 = vunpack.c.l.b16 %v376
  %v1568 = vunpack.c.l.b16 %v377
  %v1569 = vunpack.c.l.b16 %v378
  %v1570 = vunpack.c.l.b16 %v379
  %v1571 = vunpack.c.l.b16 %v380
  %v1572 = vunpack.c.l.b16 %v381
  %v1573 = vunpack.c.l.b16 %v382
  %v1574 = vunpack.c.l.b16 %v383
  %v1575 = vunpack.c.l.b16 %v384
  %v1576 = vunpack.c.l.b16 %v385
  %v1577 = vunpack.c.l.b16 %v386
  %v1578 = vunpack.c.l.b16 %v387
  %v1579 = vunpack.c.l.b16 %v388
  %v1580 = vunpack.c.l.b16 %v389
  %v1581 = vunpack.c.l.b16 %v390
  %v1582 = vunpack.c.l.b16 %v391
  %v1583 = vunpack.c.l.b16 %v392
  %v1584 = vunpack.c.l.b16 %v393
  %v1585 = vunpack.c.l.b16 %v394
  %v1586 = vunpack.c.l.b16 %v395
  %v1587 = vunpack.c.l.b16 %v396
  %v1588 = vunpack.c.l.b16 %v397
  %v1589 = vunpack.c.l.b16 %v398
  %v1590 = vunpack.c.l.b16 %v399
  %v1591 = vunpack.c.l.b16 %v400
  %v1592 = vunpack.c.l.b16 %v401
  %v1593 = vunpack.c.l.b16 %v402
  %v1594 = vunpack.c.l.b16 %v403
  %v1595 = vunpack.c.l.b16 %v404
  %v1596 = vunpack.c.l.b16 %v405
  %v1597 = vunpack.c.l.b16 %v406
  %v1598 = vunpack.c.l.b16 %v407
  %v1599 = vunpack.c.l.b16 %v408
  %v1600 = vunpack.c.l.b16 %v409
  %v1601 = vunpack.c.l.b16 %v410
  %v1602 = vunpack.c.l.b16 %v411
  %v1603 = vunpack.c.l.b16 %v412
  %v1604 = vunpack.c.l.b16 %v413
  %v1605 = vunpack.c.l.b16 %v414
  %v1606 = vunpack.c.l.b16 %v415
  %v1607 = vunpack.c.l.b16 %v416
  %v1608 = vunpack.c.l.b16 %v417
  %v1609 = vunpack.c.l.b16 %v418
  %v1610 = vunpack.c.l.b16 %v419
  %v1611 = vunpack.c.l.b16 %v420
  %v1612 = vunpack.c.l.b16 %v421
  %v1613 = vunpack.c.l.b16 %v422
  %v1614 = vunpack.c.l.b16 %v423
  %v1615 = vunpack.c.l.b16 %v424
  %v1616 = vunpack.c.l.b16 %v425
  %v1617 = vunpack.c.l.b16 %v426
  %v1618 = vunpack.c.l.b16 %v427
  %v1619 = vunpack.c.l.b16 %v428
  %v1620 = vunpack.c.l.b16 %v429
  %v1621 = vunpack.c.l.b16 %v430
  %v1622 = vunpack.c.l.b16 %v431
  %v1623 = vunpack.c.l.b16 %v432
  %v1624 = vunpack.c.l.b16 %v433
  %v1625 = vunpack.c.l.b16 %v434
  %v1626 = vunpack.c.l.b16 %v435
  %v1627 = vunpack.c.l.b16 %v436
  %v1628 = vunpack.c.l.b16 %v437
  %v1629 = vunpack.c.l.b16 %v438
  %v1630 = vunpack.c.l.b16 %v439
  %v1631 = vunpack.c.l.b16 %v440
  %v1632 = vunpack.c.l.b16 %v441
  %v1633 = vunpack.c.l.b16 %v442
  %v1634 = vunpack.c.l.b16 %v443
  %v1635 = vunpack.c.l.b16 %v444
  %v1636 = vunpack.c.l.b16 %v445
  %v1637 = vunpack.c.l.b16 %v446
  %v1638 = vunpack.c.l.b16 %v447
  %v1639 = vunpack.c.l.b16 %v448
  %v1640 = vunpack.c.l.b16 %v449
  %v1641 = vunpack.c.l.b16 %v450
  %v1642 = vunpack.c.l.b16 %v451
  %v1643 = vunpack.c.l.b16 %v452
  %v1644 = vunpack.c.l.b16 %v453
  %v1645 = vunpack.c.l.b16 %v454
  %v1646 = vunpack.c.l.b16 %v455
  %v1647 = vunpack.c.l.b16 %v456
  %v1648 = vunpack.c.l.b16 %v457
  %v1649 = vunpack.c.l.b16 %v458
  %v1650 = vunpack.c.l.b16 %v459
  %v1651 = vunpack.c.l.b16 %v460
  %v1652 = vunpack.c.l.b16 %v461
  %v1653 = vunpack.c.l.b16 %v462
  %v1654 = vunpack.c.l.b16 %v463
  %v1655 = vunpack.c.l.b16 %v464
  %v1656 = vunpack.c.l.b16 %v465
  %v1657 = vunpack.c.l.b16 %v466
  %v1658 = vunpack.c.l.b16 %v467
  %v1659 = vunpack.c.l.b16 %v468
  %v1660 = vunpack.c.l.b16 %v469
  %v1661 = vunpack.c.l.b16 %v470
  %v1662 = vunpack.c.l.b16 %v471
  %v1663 = vunpack.c.l.b16 %v472
  %v1664 = vunpack.c.l.b16 %v473
  %v1665 = vunpack.c.l.b16 %v474
  %v1666 = vunpack.c.l.b16 %v475
  %v1667 = vunpack.c.l.b16 %v476
  %v1668 = vunpack.c.l.b16 %v477
  %v1669 = vunpack.c.l.b16 %v478
  %v1670 = vunpack.c.l.b16 %v479
  %v1671 = vunpack.c.l.b16 %v480
  %v1672 = vunpack.c.l.b16 %v481
  %v1673 = vunpack.c.l.b16 %v482
  %v1674 = vunpack.c.l.b16 %v483
  %v1675 = vunpack.c.l.b16 %v484
  %v1676 = vunpack.c.l.b16 %v485
  %v1677 = vunpack.c.l.b16 %v486
  %v1678 = vunpack.c.l.b16 %v487
  %v1679 = vunpack.c.l.b16 %v488
  %v1680 = vunpack.c.l.b16 %v489
  %v1681 = vunpack.c.l.b16 %v490
  %v1682 = vunpack.c.l.b16 %v491
  %v1683 = vunpack.c.l.b16 %v492
  %v1684 = vunpack.c.l.b16 %v493
  %v1685 = vunpack.c.l.b16 %v494
  %v1686 = vunpack.c.l.b16 %v495
  %v1687 = vunpack.c.l.b16 %v496
  %v1688 = vunpack.c.l.b16 %v497
  %v1689 = vunpack.c.l.b16 %v498
  %v1690 = vunpack.c.l.b16 %v499
  %v1691 = vunpack.c.l.b16 %v500
  %v1692 = vunpack.c.l.b16 %v501
  %v1693 = vunpack.c.l.b16 %v502
  %v1694 = vunpack.c.l.b16 %v503
  %v1695 = vunpack.c.l.b16 %v504
  %v1696 = vunpack.c.l.b16 %v505
  %v1697 = vunpack.c.l.b16 %v506
  %v1698 = vunpack.c.l.b16 %v507
  %v1699 = vunpack.c.l.b16 %v508
  %v1700 = vunpack.c.l.b16 %v509
  %v1701 = vunpack.c.l.b16 %v510
  %v1702 = vunpack.c.l.b16 %v511
  %v1703 = vunpack.c.l.b16 %v512
  %v1704 = vunpack.c.l.b16 %v513
  %v1705 = vunpack.c.l.b16 %v514
  %v1706 = vunpack.c.l.b16 %v515
  %v1707 = vunpack.c.l.b16 %v516
  %v1708 = vunpack.c.l.b16 %v517
  %v1709 = vunpack.c.l.b16 %v518
  %v1710 = vunpack.c.l.b16 %v519
  %v1711 = vunpack.c.l.b16 %v520
  %v1712 = vunpack.c.l.b16 %v521
  %v1713 = vunpack.c.l.b16 %v522
  %v1714 = vunpack.c.l.b16 %v523
  %v1715 = vunpack.c.l.b16 %v524
  %v1716 = vunpack.c.l.b16 %v525
  %v1717 = vunpack.c.l.b16 %v526
  %v1718 = vunpack.c.l.b16 %v527
  %v1719 = vunpack.c.l.b16 %v528
  %v1720 = vunpack.c.l.b16 %v529
  %v1721 = vunpack.c.l.b16 %v530
  %v1722 = vunpack.c.l.b16 %v531
  %v1723 = vunpack.c.l.b16 %v532
  %v1724 = vunpack.c.l.b16 %v533
  %v1725 = vunpack.c.l.b16 %v534
  %v1726 = vunpack.c.l.b16 %v535
  %v1727 = vunpack.c.l.b16 %v536
  %v1728 = vunpack.c.l.b16 %v537
  %v1729 = vunpack.c.l.b16 %v538
  %v1730 = vunpack.c.l.b16 %v539
  %v1731 = vunpack.c.l.b16 %v540
  %v1732 = vunpack.c.l.b16 %v541
  %v1733 = vunpack.c.l.b16 %v542
  %v1734 = vunpack.c.l.b16 %v543
  %v1735 = vunpack.c.l.b16 %v544
  %v1736 = vunpack.c.l.b16 %v545
  %v1737 = vunpack.c.l.b16 %v546
  %v1738 = vunpack.c.l.b16 %v547
  %v1739 = vunpack.c.l.b16 %v548
  %v1740 = vunpack.c.l.b16 %v549
  %v1741 = vunpack.c.l.b16 %v550
  %v1742 = vunpack.c.l.b16 %v551
  %v1743 = vunpack.c.l.b16 %v552
  %v1744 = vunpack.c.l.b16 %v553
  %v1745 = vunpack.c.l.b16 %v554
  %v1746 = vunpack.c.l.b16 %v555
  %v1747 = vunpack.c.l.b16 %v556
  %v1748 = vunpack.c.l.b16 %v557
  %v1749 = vunpack.c.l.b16 %v558
  %v1750 = vpack.c.b16 %v1239, %v1238
  %v1751 = vpack.c.b16 %v1241, %v1240
  %v1752 = vpack.c.b16 %v1243, %v1242
  %v1753 = vpack.c.b16 %v1245, %v1244
  %v1754 = vpack.c.b16 %v1247, %v1246
  %v1755 = vpack.c.b16 %v1249, %v1248
  %v1756 = vpack.c.b16 %v1251, %v1250
  %v1757 = vpack.c.b16 %v1253, %v1252
  %v1758 = vpack.c.b16 %v1255, %v1254
  %v1759 = vpack.c.b16 %v1257, %v1256
  %v1760 = vpack.c.b16 %v1259, %v1258
  %v1761 = vpack.c.b16 %v1261, %v1260
  %v1762 = vpack.c.b16 %v1263, %v1262
  %v1763 = vpack.c.b16 %v1265, %v1264
  %v1764 = vpack.c.b16 %v1267, %v1266
  %v1765 = vpack.c.b16 %v1269, %v1268
  %v1766 = vpack.c.b16 %v1271, %v1270
  %v1767 = vpack.c.b16 %v1273, %v1272
  %v1768 = vpack.c.b16 %v1275, %v1274
  %v1769 = vpack.c.b16 %v1277, %v1276
  %v1770 = vpack.c.b16 %v1279, %v1278
  %v1771 = vpack.c.b16 %v1281, %v1280
  %v1772 = vpack.c.b16 %v1283, %v1282
  %v1773 = vpack.c.b16 %v1285, %v1284
  %v1774 = vpack.c.b16 %v1287, %v1286
  %v1775 = vpack.c.b16 %v1289, %v1288
  %v1776 = vpack.c.b16 %v1291, %v1290
  %v1777 = vpack.c.b16 %v1293, %v1292
  %v1778 = vpack.c.b16 %v1295, %v1294
  %v1779 = vpack.c.b16 %v1297, %v1296
  %v1780 = vpack.c.b16 %v1299, %v1298
  %v1781 = vpack.c.b16 %v1301, %v1300
  %v1782 = vpack.c.b16 %v1303, %v1302
  %v1783 = vpack.c.b16 %v1305, %v1304
  %v1784 = vpack.c.b16 %v1307, %v1306
  %v1785 = vpack.c.b16 %v1309, %v1308
  %v1786 = vpack.c.b16 %v1311, %v1310
  %v1787 = vpack.c.b16 %v1313, %v1312
  %v1788 = vpack.c.b16 %v1315, %v1314
  %v1789 = vpack.c.b16 %v1317, %v1316
  %v1790 = vpack.c.b16 %v1319, %v1318
  %v1791 = vpack.c.b16 %v1321, %v1320
  %v1792 = vpack.c.b16 %v1323, %v1322
  %v1793 = vpack.c.b16 %v1325, %v1324
  %v1794 = vpack.c.b16 %v1327, %v1326
  %v1795 = vpack.c.b16 %v1329, %v1328
  %v1796 = vpack.c.b16 %v1331, %v1330
  %v1797 = vpack.c.b16 %v1333, %v1332
  %v1798 = vpack.c.b16 %v1335, %v1334
  %v1799 = vpack.c.b16 %v1337, %v1336
  %v1800 = vpack.c.b16 %v1339, %v1338
  %v1801 = vpack.c.b16 %v1341, %v1340
  %v1802 = vpack.c.b16 %v1343, %v1342
  %v1803 = vpack.c.b16 %v1345, %v1344
  %v1804 = vpack.c.b16 %v1347, %v1346
  %v1805 = vpack.c.b16 %v1349, %v1348
  %v1806 = vpack.c.b16 %v1351, %v1350
  %v1807 = vpack.c.b16 %v1353, %v1352
  %v1808 = vpack.c.b16 %v1355, %v1354
  %v1809 = vpack.c.b16 %v1357, %v1356
  %v1810 = vpack.c.b16 %v1359, %v1358
  %v1811 = vpack.c.b16 %v1361, %v1360
  %v1812 = vpack.c.b16 %v1363, %v1362
  %v1813 = vpack.c.b16 %v1365, %v1364
  %v1814 = vpack.c.b16 %v1367, %v1366
  %v1815 = vpack.c.b16 %v1369, %v1368
  %v1816 = vpack.c.b16 %v1371, %v1370
  %v1817 = vpack.c.b16 %v1373, %v1372
  %v1818 = vpack.c.b16 %v1375, %v1374
  %v1819 = vpack.c.b16 %v1377, %v1376
  %v1820 = vpack.c.b16 %v1379, %v1378
  %v1821 = vpack.c.b16 %v1381, %v1380
  %v1822 = vpack.c.b16 %v1383, %v1382
  %v1823 = vpack.c.b16 %v1385, %v1384
  %v1824 = vpack.c.b16 %v1387, %v1386
  %v1825 = vpack.c.b16 %v1389, %v1388
  %v1826 = vpack.c.b16 %v1391, %v1390
  %v1827 = vpack.c.b16 %v1393, %v1392
  %v1828 = vpack.c.b16 %v1395, %v1394
  %v1829 = vpack.c.b16 %v1397, %v1396
  %v1830 = vpack.c.b16 %v1399, %v1398
  %v1831 = vpack.c.b16 %v1401, %v1400
  %v1832 = vpack.c.b16 %v1403, %v1402
  %v1833 = vpack.c.b16 %v1405, %v1404
  %v1834 = vpack.c.b16 %v1407, %v1406
  %v1835 = vpack.c.b16 %v1409, %v1408
  %v1836 = vpack.c.b16 %v1411, %v1410
  %v1837 = vpack.c.b16 %v1413, %v1412
  %v1838 = vpack.c.b16 %v1415, %v1414
  %v1839 = vpack.c.b16 %v1417, %v1416
  %v1840 = vpack.c.b16 %v1419, %v1418
  %v1841 = vpack.c.b16 %v1421, %v1420
  %v1842 = vpack.c.b16 %v1423, %v1422
  %v1843 = vpack.c.b16 %v1425, %v1424
  %v1844 = vpack.c.b16 %v1427, %v1426
  %v1845 = vpack.c.b16 %v1429, %v1428
  %v1846 = vpack.c.b16 %v1431, %v1430
  %v1847 = vpack.c.b16 %v1433, %v1432
  %v1848 = vpack.c.b16 %v1435, %v1434
  %v1849 = vpack.c.b16 %v1437, %v1436
  %v1850 = vpack.c.b16 %v1439, %v1438
  %v1851 = vpack.c.b16 %v1441, %v1440
  %v1852 = vpack.c.b16 %v1443, %v1442
  %v1853 = vpack.c.b16 %v1445, %v1444
  %v1854 = vpack.c.b16 %v1447, %v1446
  %v1855 = vpack.c.b16 %v1449, %v1448
  %v1856 = vpack.c.b16 %v1451, %v1450
  %v1857 = vpack.c.b16 %v1453, %v1452
  %v1858 = vpack.c.b16 %v1455, %v1454
  %v1859 = vpack.c.b16 %v1457, %v1456
  %v1860 = vpack.c.b16 %v1459, %v1458
  %v1861 = vpack.c.b16 %v1461, %v1460
  %v1862 = vpack.c.b16 %v1463, %v1462
  %v1863 = vpack.c.b16 %v1465, %v1464
  %v1864 = vpack.c.b16 %v1467, %v1466
  %v1865 = vpack.c.b16 %v1469, %v1468
  %v1866 = vpack.c.b16 %v1471, %v1470
  %v1867 = vpack.c.b16 %v1473, %v1472
  %v1868 = vpack.c.b16 %v1475, %v1474
  %v1869 = vpack.c.b16 %v1477, %v1476
  %v1870 = vpack.c.b16 %v1479, %v1478
  %v1871 = vpack.c.b16 %v1481, %v1480
  %v1872 = vpack.c.b16 %v1483, %v1482
  %v1873 = vpack.c.b16 %v1485, %v1484
  %v1874 = vpack.c.b16 %v1487, %v1486
  %v1875 = vpack.c.b16 %v1489, %v1488
  %v1876 = vpack.c.b16 %v1491, %v1490
  %v1877 = vpack.c.b16 %v1493, %v1492
  %v1878 = vpack.c.b16 %v1495, %v1494
  %v1879 = vpack.c.b16 %v1497, %v1496
  %v1880 = vpack.c.b16 %v1499, %v1498
  %v1881 = vpack.c.b16 %v1501, %v1500
  %v1882 = vpack.c.b16 %v1503, %v1502
  %v1883 = vpack.c.b16 %v1505, %v1504
  %v1884 = vpack.c.b16 %v1507, %v1506
  %v1885 = vpack.c.b16 %v1509, %v1508
  %v1886 = vpack.c.b16 %v1511, %v1510
  %v1887 = vpack.c.b16 %v1513, %v1512
  %v1888 = vpack.c.b16 %v1515, %v1514
  %v1889 = vpack.c.b16 %v1517, %v1516
  %v1890 = vpack.c.b16 %v1519, %v1518
  %v1891 = vpack.c.b16 %v1521, %v1520
  %v1892 = vpack.c.b16 %v1523, %v1522
  %v1893 = vpack.c.b16 %v1525, %v1524
  %v1894 = vpack.c.b16 %v1527, %v1526
  %v1895 = vpack.c.b16 %v1529, %v1528
  %v1896 = vpack.c.b16 %v1531, %v1530
  %v1897 = vpack.c.b16 %v1533, %v1532
  %v1898 = vpack.c.b16 %v1535, %v1534
  %v1899 = vpack.c.b16 %v1537, %v1536
  %v1900 = vpack.c.b16 %v1539, %v1538
  %v1901 = vpack.c.b16 %v1541, %v1540
  %v1902 = vpack.c.b16 %v1543, %v1542
  %v1903 = vpack.c.b16 %v1545, %v1544
  %v1904 = vpack.c.b16 %v1547, %v1546
  %v1905 = vpack.c.b16 %v1549, %v1548
  %v1906 = vpack.c.b16 %v1551, %v1550
  %v1907 = vpack.c.b16 %v1553, %v1552
  %v1908 = vpack.c.b16 %v1555, %v1554
  %v1909 = vpack.c.b16 %v1557, %v1556
  %v1910 = vpack.c.b16 %v1559, %v1558
  %v1911 = vpack.c.b16 %v1561, %v1560
  %v1912 = vpack.c.b16 %v1563, %v1562
  %v1913 = vpack.c.b16 %v1565, %v1564
  %v1914 = vpack.c.b16 %v1567, %v1566
  %v1915 = vpack.c.b16 %v1569, %v1568
  %v1916 = vpack.c.b16 %v1571, %v1570
  %v1917 = vpack.c.b16 %v1573, %v1572
  %v1918 = vpack.c.b16 %v1575, %v1574
  %v1919 = vpack.c.b16 %v1577, %v1576
  %v1920 = vpack.c.b16 %v1579, %v1578
  %v1921 = vpack.c.b16 %v1581, %v1580
  %v1922 = vpack.c.b16 %v1583, %v1582
  %v1923 = vpack.c.b16 %v1585, %v1584
  %v1924 = vpack.c.b16 %v1587, %v1586
  %v1925 = vpack.c.b16 %v1589, %v1588
  %v1926 = vpack.c.b16 %v1591, %v1590
  %v1927 = vpack.c.b16 %v1593, %v1592
  %v1928 = vpack.c.b16 %v1595, %v1594
  %v1929 = vpack.c.b16 %v1597, %v1596
  %v1930 = vpack.c.b16 %v1599, %v1598
  %v1931 = vpack.c.b16 %v1601, %v1600
  %v1932 = vpack.c.b16 %v1603, %v1602
  %v1933 = vpack.c.b16 %v1605, %v1604
  %v1934 = vpack.c.b16 %v1607, %v1606
  %v1935 = vpack.c.b16 %v1609, %v1608
  %v1936 = vpack.c.b16 %v1611, %v1610
  %v1937 = vpack.c.b16 %v1613, %v1612
  %v1938 = vpack.c.b16 %v1615, %v1614
  %v1939 = vpack.c.b16 %v1617, %v1616
  %v1940 = vpack.c.b16 %v1619, %v1618
  %v1941 = vpack.c.b16 %v1621, %v1620
  %v1942 = vpack.c.b16 %v1623, %v1622
  %v1943 = vpack.c.b16 %v1625, %v1624
  %v1944 = vpack.c.b16 %v1627, %v1626
  %v1945 = vpack.c.b16 %v1629, %v1628
  %v1946 = vpack.c.b16 %v1631, %v1630
  %v1947 = vpack.c.b16 %v1633, %v1632
  %v1948 = vpack.c.b16 %v1635, %v1634
  %v1949 = vpack.c.b16 %v1637, %v1636
  %v1950 = vpack.c.b16 %v1639, %v1638
  %v1951 = vpack.c.b16 %v1641, %v1640
  %v1952 = vpack.c.b16 %v1643, %v1642
  %v1953 = vpack.c.b16 %v1645, %v1644
  %v1954 = vpack.c.b16 %v1647, %v1646
  %v1955 = vpack.c.b16 %v1649, %v1648
  %v1956 = vpack.c.b16 %v1651, %v1650
  %v1957 = vpack.c.b16 %v1653, %v1652
  %v1958 = vpack.c.b16 %v1655, %v1654
  %v1959 = vpack.c.b16 %v1657, %v1656
  %v1960 = vpack.c.b16 %v1659, %v1658
  %v1961 = vpack.c.b16 %v1661, %v1660
  %v1962 = vpack.c.b16 %v1663, %v1662
  %v1963 = vpack.c.b16 %v1665, %v1664
  %v1964 = vpack.c.b16 %v1667, %v1666
  %v1965 = vpack.c.b16 %v1669, %v1668
  %v1966 = vpack.c.b16 %v1671, %v1670
  %v1967 = vpack.c.b16 %v1673, %v1672
  %v1968 = vpack.c.b16 %v1675, %v1674
  %v1969 = vpack.c.b16 %v1677, %v1676
  %v1970 = vpack.c.b16 %v1679, %v1678
  %v1971 = vpack.c.b16 %v1681, %v1680
  %v1972 = vpack.c.b16 %v1683, %v1682
  %v1973 = vpack.c.b16 %v1685, %v1684
  %v1974 = vpack.c.b16 %v1687, %v1686
  %v1975 = vpack.c.b16 %v1689, %v1688
  %v1976 = vpack.c.b16 %v1691, %v1690
  %v1977 = vpack.c.b16 %v1693, %v1692
  %v1978 = vpack.c.b16 %v1695, %v1694
  %v1979 = vpack.c.b16 %v1697, %v1696
  %v1980 = vpack.c.b16 %v1699, %v1698
  %v1981 = vpack.c.b16 %v1701, %v1700
  %v1982 = vpack.c.b16 %v1703, %v1702
  %v1983 = vpack.c.b16 %v1705, %v1704
  %v1984 = vpack.c.b16 %v1707, %v1706
  %v1985 = vpack.c.b16 %v1709, %v1708
  %v1986 = vpack.c.b16 %v1711, %v1710
  %v1987 = vpack.c.b16 %v1713, %v1712
  %v1988 = vpack.c.b16 %v1715, %v1714
  %v1989 = vpack.c.b16 %v1717, %v1716
  %v1990 = vpack.c.b16 %v1719, %v1718
  %v1991 = vpack.c.b16 %v1721, %v1720
  %v1992 = vpack.c.b16 %v1723, %v1722
  %v1993 = vpack.c.b16 %v1725, %v1724
  %v1994 = vpack.c.b16 %v1727, %v1726
  %v1995 = vpack.c.b16 %v1729, %v1728
  %v1996 = vpack.c.b16 %v1731, %v1730
  %v1997 = vpack.c.b16 %v1733, %v1732
  %v1998 = vpack.c.b16 %v1735, %v1734
  %v1999 = vpack.c.b16 %v1737, %v1736
  %v2000 = vpack.c.b16 %v1739, %v1738
  %v2001 = vpack.c.b16 %v1741, %v1740
  %v2002 = vpack.c.b16 %v1743, %v1742
  %v2003 = vpack.c.b16 %v1745, %v1744
  %v2004 = vpack.c.b16 %v1747, %v1746
  %v2005 = vpack.c.b16 %v1749, %v1748
  %2262 = vmatprep.subr.bf16.mxu0 0
  %2263 = vmatpush1.bf16.msra.mxu0 %v1750
  %2264 = vmatprep.subr.bf16.mxu0 0
  %2265 = vmatpush1.bf16.msra.mxu0 %v1751
  %2266 = vmatprep.subr.bf16.mxu0 0
  %2267 = vmatpush1.bf16.msra.mxu0 %v1752
  %2268 = vmatprep.subr.bf16.mxu0 0
  %2269 = vmatpush1.bf16.msra.mxu0 %v1753
  %2270 = vmatprep.subr.bf16.mxu0 0
  %2271 = vmatpush1.bf16.msra.mxu0 %v1754
  %2272 = vmatprep.subr.bf16.mxu0 0
  %2273 = vmatpush1.bf16.msra.mxu0 %v1755
  %2274 = vmatprep.subr.bf16.mxu0 0
  %2275 = vmatpush1.bf16.msra.mxu0 %v1756
  %2276 = vmatprep.subr.bf16.mxu0 0
  %2277 = vmatpush1.bf16.msra.mxu0 %v1757
  %2278 = vmatprep.subr.bf16.mxu0 0
  %2279 = vmatpush1.bf16.msra.mxu0 %v1758
  %2280 = vmatprep.subr.bf16.mxu0 0
  %2281 = vmatpush1.bf16.msra.mxu0 %v1759
  %2282 = vmatprep.subr.bf16.mxu0 0
  %2283 = vmatpush1.bf16.msra.mxu0 %v1760
  %2284 = vmatprep.subr.bf16.mxu0 0
  %2285 = vmatpush1.bf16.msra.mxu0 %v1761
  %2286 = vmatprep.subr.bf16.mxu0 0
  %2287 = vmatpush1.bf16.msra.mxu0 %v1762
  %2288 = vmatprep.subr.bf16.mxu0 0
  %2289 = vmatpush1.bf16.msra.mxu0 %v1763
  %2290 = vmatprep.subr.bf16.mxu0 0
  %2291 = vmatpush1.bf16.msra.mxu0 %v1764
  %2292 = vmatprep.subr.bf16.mxu0 0
  %2293 = vmatpush1.bf16.msra.mxu0 %v1765
  %2294 = vmatprep.mubr.bf16.mxu0 %v663
  %2295 = vmatmul.mubr.bf16.gmra.mrb[0].mxu0 %v662
  %v2296 = vpop.f32.mrb[0].mxu0
  %v2297 = vadd.f32 %v564, %v2296
  %v2298 = vpop.f32.mrb[0].mxu0
  %v2299 = vpop.f32.mrb[0].mxu0
  %v2300 = vadd.f32 %v564, %v2299
  %v2301 = vpop.f32.mrb[0].mxu0
  %2302 = vdwg.mxu0
  %2303 = vmatprep.subr.bf16.mxu0 0
  %2304 = vmatpush1.bf16.msra.mxu0 %v1766
  %2305 = vmatprep.subr.bf16.mxu0 0
  %2306 = vmatpush1.bf16.msra.mxu0 %v1767
  %2307 = vmatprep.subr.bf16.mxu0 0
  %2308 = vmatpush1.bf16.msra.mxu0 %v1768
  %2309 = vmatprep.subr.bf16.mxu0 0
  %2310 = vmatpush1.bf16.msra.mxu0 %v1769
  %2311 = vmatprep.subr.bf16.mxu0 0
  %2312 = vmatpush1.bf16.msra.mxu0 %v1770
  %2313 = vmatprep.subr.bf16.mxu0 0
  %2314 = vmatpush1.bf16.msra.mxu0 %v1771
  %2315 = vmatprep.subr.bf16.mxu0 0
  %2316 = vmatpush1.bf16.msra.mxu0 %v1772
  %2317 = vmatprep.subr.bf16.mxu0 0
  %2318 = vmatpush1.bf16.msra.mxu0 %v1773
  %2319 = vmatprep.subr.bf16.mxu0 0
  %2320 = vmatpush1.bf16.msra.mxu0 %v1774
  %2321 = vmatprep.subr.bf16.mxu0 0
  %2322 = vmatpush1.bf16.msra.mxu0 %v1775
  %2323 = vmatprep.subr.bf16.mxu0 0
  %2324 = vmatpush1.bf16.msra.mxu0 %v1776
  %2325 = vmatprep.subr.bf16.mxu0 0
  %2326 = vmatpush1.bf16.msra.mxu0 %v1777
  %2327 = vmatprep.subr.bf16.mxu0 0
  %2328 = vmatpush1.bf16.msra.mxu0 %v1778
  %2329 = vmatprep.subr.bf16.mxu0 0
  %2330 = vmatpush1.bf16.msra.mxu0 %v1779
  %2331 = vmatprep.subr.bf16.mxu0 0
  %2332 = vmatpush1.bf16.msra.mxu0 %v1780
  %2333 = vmatprep.subr.bf16.mxu0 0
  %2334 = vmatpush1.bf16.msra.mxu0 %v1781
  %2335 = vmatprep.mubr.bf16.mxu0 %v665
  %2336 = vmatmul.mubr.bf16.gmra.mrb[0].mxu0 %v664
  %v2337 = vpop.f32.mrb[0].mxu0
  %v2338 = vadd.f32 %v2297, %v2337
  %v2339 = vpop.f32.mrb[0].mxu0
  %v2340 = vpop.f32.mrb[0].mxu0
  %v2341 = vadd.f32 %v2300, %v2340
  %v2342 = vpop.f32.mrb[0].mxu0
  %2343 = vdwg.mxu0
  %2344 = vmatprep.subr.bf16.mxu0 0
  %2345 = vmatpush1.bf16.msra.mxu0 %v1782
  %2346 = vmatprep.subr.bf16.mxu0 0
  %2347 = vmatpush1.bf16.msra.mxu0 %v1783
  %2348 = vmatprep.subr.bf16.mxu0 0
  %2349 = vmatpush1.bf16.msra.mxu0 %v1784
  %2350 = vmatprep.subr.bf16.mxu0 0
  %2351 = vmatpush1.bf16.msra.mxu0 %v1785
  %2352 = vmatprep.subr.bf16.mxu0 0
  %2353 = vmatpush1.bf16.msra.mxu0 %v1786
  %2354 = vmatprep.subr.bf16.mxu0 0
  %2355 = vmatpush1.bf16.msra.mxu0 %v1787
  %2356 = vmatprep.subr.bf16.mxu0 0
  %2357 = vmatpush1.bf16.msra.mxu0 %v1788
  %2358 = vmatprep.subr.bf16.mxu0 0
  %2359 = vmatpush1.bf16.msra.mxu0 %v1789
  %2360 = vmatprep.subr.bf16.mxu0 0
  %2361 = vmatpush1.bf16.msra.mxu0 %v1790
  %2362 = vmatprep.subr.bf16.mxu0 0
  %2363 = vmatpush1.bf16.msra.mxu0 %v1791
  %2364 = vmatprep.subr.bf16.mxu0 0
  %2365 = vmatpush1.bf16.msra.mxu0 %v1792
  %2366 = vmatprep.subr.bf16.mxu0 0
  %2367 = vmatpush1.bf16.msra.mxu0 %v1793
  %2368 = vmatprep.subr.bf16.mxu0 0
  %2369 = vmatpush1.bf16.msra.mxu0 %v1794
  %2370 = vmatprep.subr.bf16.mxu0 0
  %2371 = vmatpush1.bf16.msra.mxu0 %v1795
  %2372 = vmatprep.subr.bf16.mxu0 0
  %2373 = vmatpush1.bf16.msra.mxu0 %v1796
  %2374 = vmatprep.subr.bf16.mxu0 0
  %2375 = vmatpush1.bf16.msra.mxu0 %v1797
  %2376 = vmatprep.mubr.bf16.mxu0 %v667
  %2377 = vmatmul.mubr.bf16.gmra.mrb[0].mxu0 %v666
  %v2378 = vpop.f32.mrb[0].mxu0
  %v2379 = vadd.f32 %v2338, %v2378
  %v2380 = vpop.f32.mrb[0].mxu0
  %v2381 = vpop.f32.mrb[0].mxu0
  %v2382 = vadd.f32 %v2341, %v2381
  %v2383 = vpop.f32.mrb[0].mxu0
  %2384 = vdwg.mxu0
  %2385 = vmatprep.subr.bf16.mxu0 0
  %2386 = vmatpush1.bf16.msra.mxu0 %v1798
  %2387 = vmatprep.subr.bf16.mxu0 0
  %2388 = vmatpush1.bf16.msra.mxu0 %v1799
  %2389 = vmatprep.subr.bf16.mxu0 0
  %2390 = vmatpush1.bf16.msra.mxu0 %v1800
  %2391 = vmatprep.subr.bf16.mxu0 0
  %2392 = vmatpush1.bf16.msra.mxu0 %v1801
  %2393 = vmatprep.subr.bf16.mxu0 0
  %2394 = vmatpush1.bf16.msra.mxu0 %v1802
  %2395 = vmatprep.subr.bf16.mxu0 0
  %2396 = vmatpush1.bf16.msra.mxu0 %v1803
  %2397 = vmatprep.subr.bf16.mxu0 0
  %2398 = vmatpush1.bf16.msra.mxu0 %v1804
  %2399 = vmatprep.subr.bf16.mxu0 0
  %2400 = vmatpush1.bf16.msra.mxu0 %v1805
  %2401 = vmatprep.subr.bf16.mxu0 0
  %2402 = vmatpush1.bf16.msra.mxu0 %v1806
  %2403 = vmatprep.subr.bf16.mxu0 0
  %2404 = vmatpush1.bf16.msra.mxu0 %v1807
  %2405 = vmatprep.subr.bf16.mxu0 0
  %2406 = vmatpush1.bf16.msra.mxu0 %v1808
  %2407 = vmatprep.subr.bf16.mxu0 0
  %2408 = vmatpush1.bf16.msra.mxu0 %v1809
  %2409 = vmatprep.subr.bf16.mxu0 0
  %2410 = vmatpush1.bf16.msra.mxu0 %v1810
  %2411 = vmatprep.subr.bf16.mxu0 0
  %2412 = vmatpush1.bf16.msra.mxu0 %v1811
  %2413 = vmatprep.subr.bf16.mxu0 0
  %2414 = vmatpush1.bf16.msra.mxu0 %v1812
  %2415 = vmatprep.subr.bf16.mxu0 0
  %2416 = vmatpush1.bf16.msra.mxu0 %v1813
  %2417 = vmatprep.mubr.bf16.mxu0 %v669
  %2418 = vmatmul.mubr.bf16.gmra.mrb[0].mxu0 %v668
  %v2419 = vpop.f32.mrb[0].mxu0
  %v2420 = vadd.f32 %v2379, %v2419
  %v2421 = vpop.f32.mrb[0].mxu0
  %v2422 = vpop.f32.mrb[0].mxu0
  %v2423 = vadd.f32 %v2382, %v2422
  %v2424 = vpop.f32.mrb[0].mxu0
  %2425 = vdwg.mxu0
  %2426 = vmatprep.subr.bf16.mxu0 0
  %2427 = vmatpush1.bf16.msra.mxu0 %v1814
  %2428 = vmatprep.subr.bf16.mxu0 0
  %2429 = vmatpush1.bf16.msra.mxu0 %v1815
  %2430 = vmatprep.subr.bf16.mxu0 0
  %2431 = vmatpush1.bf16.msra.mxu0 %v1816
  %2432 = vmatprep.subr.bf16.mxu0 0
  %2433 = vmatpush1.bf16.msra.mxu0 %v1817
  %2434 = vmatprep.subr.bf16.mxu0 0
  %2435 = vmatpush1.bf16.msra.mxu0 %v1818
  %2436 = vmatprep.subr.bf16.mxu0 0
  %2437 = vmatpush1.bf16.msra.mxu0 %v1819
  %2438 = vmatprep.subr.bf16.mxu0 0
  %2439 = vmatpush1.bf16.msra.mxu0 %v1820
  %2440 = vmatprep.subr.bf16.mxu0 0
  %2441 = vmatpush1.bf16.msra.mxu0 %v1821
  %2442 = vmatprep.subr.bf16.mxu0 0
  %2443 = vmatpush1.bf16.msra.mxu0 %v1822
  %2444 = vmatprep.subr.bf16.mxu0 0
  %2445 = vmatpush1.bf16.msra.mxu0 %v1823
  %2446 = vmatprep.subr.bf16.mxu0 0
  %2447 = vmatpush1.bf16.msra.mxu0 %v1824
  %2448 = vmatprep.subr.bf16.mxu0 0
  %2449 = vmatpush1.bf16.msra.mxu0 %v1825
  %2450 = vmatprep.subr.bf16.mxu0 0
  %2451 = vmatpush1.bf16.msra.mxu0 %v1826
  %2452 = vmatprep.subr.bf16.mxu0 0
  %2453 = vmatpush1.bf16.msra.mxu0 %v1827
  %2454 = vmatprep.subr.bf16.mxu0 0
  %2455 = vmatpush1.bf16.msra.mxu0 %v1828
  %2456 = vmatprep.subr.bf16.mxu0 0
  %2457 = vmatpush1.bf16.msra.mxu0 %v1829
  %2458 = vmatprep.mubr.bf16.mxu0 %v671
  %2459 = vmatmul.mubr.bf16.gmra.mrb[0].mxu0 %v670
  %v2460 = vpop.f32.mrb[0].mxu0
  %v2461 = vadd.f32 %v2420, %v2460
  %v2462 = vpop.f32.mrb[0].mxu0
  %v2463 = vpop.f32.mrb[0].mxu0
  %v2464 = vadd.f32 %v2423, %v2463
  %v2465 = vpop.f32.mrb[0].mxu0
  %2466 = vdwg.mxu0
  %2467 = vmatprep.subr.bf16.mxu0 0
  %2468 = vmatpush1.bf16.msra.mxu0 %v1830
  %2469 = vmatprep.subr.bf16.mxu0 0
  %2470 = vmatpush1.bf16.msra.mxu0 %v1831
  %2471 = vmatprep.subr.bf16.mxu0 0
  %2472 = vmatpush1.bf16.msra.mxu0 %v1832
  %2473 = vmatprep.subr.bf16.mxu0 0
  %2474 = vmatpush1.bf16.msra.mxu0 %v1833
  %2475 = vmatprep.subr.bf16.mxu0 0
  %2476 = vmatpush1.bf16.msra.mxu0 %v1834
  %2477 = vmatprep.subr.bf16.mxu0 0
  %2478 = vmatpush1.bf16.msra.mxu0 %v1835
  %2479 = vmatprep.subr.bf16.mxu0 0
  %2480 = vmatpush1.bf16.msra.mxu0 %v1836
  %2481 = vmatprep.subr.bf16.mxu0 0
  %2482 = vmatpush1.bf16.msra.mxu0 %v1837
  %2483 = vmatprep.subr.bf16.mxu0 0
  %2484 = vmatpush1.bf16.msra.mxu0 %v1838
  %2485 = vmatprep.subr.bf16.mxu0 0
  %2486 = vmatpush1.bf16.msra.mxu0 %v1839
  %2487 = vmatprep.subr.bf16.mxu0 0
  %2488 = vmatpush1.bf16.msra.mxu0 %v1840
  %2489 = vmatprep.subr.bf16.mxu0 0
  %2490 = vmatpush1.bf16.msra.mxu0 %v1841
  %2491 = vmatprep.subr.bf16.mxu0 0
  %2492 = vmatpush1.bf16.msra.mxu0 %v1842
  %2493 = vmatprep.subr.bf16.mxu0 0
  %2494 = vmatpush1.bf16.msra.mxu0 %v1843
  %2495 = vmatprep.subr.bf16.mxu0 0
  %2496 = vmatpush1.bf16.msra.mxu0 %v1844
  %2497 = vmatprep.subr.bf16.mxu0 0
  %2498 = vmatpush1.bf16.msra.mxu0 %v1845
  %2499 = vmatprep.mubr.bf16.mxu0 %v673
  %2500 = vmatmul.mubr.bf16.gmra.mrb[0].mxu0 %v672
  %v2501 = vpop.f32.mrb[0].mxu0
  %v2502 = vadd.f32 %v2461, %v2501
  %v2503 = vpop.f32.mrb[0].mxu0
  %v2504 = vpop.f32.mrb[0].mxu0
  %v2505 = vadd.f32 %v2464, %v2504
  %v2506 = vpop.f32.mrb[0].mxu0
  %2507 = vdwg.mxu0
  %2508 = vmatprep.subr.bf16.mxu0 0
  %2509 = vmatpush1.bf16.msra.mxu0 %v1846
  %2510 = vmatprep.subr.bf16.mxu0 0
  %2511 = vmatpush1.bf16.msra.mxu0 %v1847
  %2512 = vmatprep.subr.bf16.mxu0 0
  %2513 = vmatpush1.bf16.msra.mxu0 %v1848
  %2514 = vmatprep.subr.bf16.mxu0 0
  %2515 = vmatpush1.bf16.msra.mxu0 %v1849
  %2516 = vmatprep.subr.bf16.mxu0 0
  %2517 = vmatpush1.bf16.msra.mxu0 %v1850
  %2518 = vmatprep.subr.bf16.mxu0 0
  %2519 = vmatpush1.bf16.msra.mxu0 %v1851
  %2520 = vmatprep.subr.bf16.mxu0 0
  %2521 = vmatpush1.bf16.msra.mxu0 %v1852
  %2522 = vmatprep.subr.bf16.mxu0 0
  %2523 = vmatpush1.bf16.msra.mxu0 %v1853
  %2524 = vmatprep.subr.bf16.mxu0 0
  %2525 = vmatpush1.bf16.msra.mxu0 %v1854
  %2526 = vmatprep.subr.bf16.mxu0 0
  %2527 = vmatpush1.bf16.msra.mxu0 %v1855
  %2528 = vmatprep.subr.bf16.mxu0 0
  %2529 = vmatpush1.bf16.msra.mxu0 %v1856
  %2530 = vmatprep.subr.bf16.mxu0 0
  %2531 = vmatpush1.bf16.msra.mxu0 %v1857
  %2532 = vmatprep.subr.bf16.mxu0 0
  %2533 = vmatpush1.bf16.msra.mxu0 %v1858
  %2534 = vmatprep.subr.bf16.mxu0 0
  %2535 = vmatpush1.bf16.msra.mxu0 %v1859
  %2536 = vmatprep.subr.bf16.mxu0 0
  %2537 = vmatpush1.bf16.msra.mxu0 %v1860
  %2538 = vmatprep.subr.bf16.mxu0 0
  %2539 = vmatpush1.bf16.msra.mxu0 %v1861
  %2540 = vmatprep.mubr.bf16.mxu0 %v675
  %2541 = vmatmul.mubr.bf16.gmra.mrb[0].mxu0 %v674
  %v2542 = vpop.f32.mrb[0].mxu0
  %v2543 = vadd.f32 %v2502, %v2542
  %v2544 = vpop.f32.mrb[0].mxu0
  %v2545 = vpop.f32.mrb[0].mxu0
  %v2546 = vadd.f32 %v2505, %v2545
  %v2547 = vpop.f32.mrb[0].mxu0
  %2548 = vdwg.mxu0
  %2549 = vmatprep.subr.bf16.mxu0 0
  %2550 = vmatpush1.bf16.msra.mxu0 %v1862
  %2551 = vmatprep.subr.bf16.mxu0 0
  %2552 = vmatpush1.bf16.msra.mxu0 %v1863
  %2553 = vmatprep.subr.bf16.mxu0 0
  %2554 = vmatpush1.bf16.msra.mxu0 %v1864
  %2555 = vmatprep.subr.bf16.mxu0 0
  %2556 = vmatpush1.bf16.msra.mxu0 %v1865
  %2557 = vmatprep.subr.bf16.mxu0 0
  %2558 = vmatpush1.bf16.msra.mxu0 %v1866
  %2559 = vmatprep.subr.bf16.mxu0 0
  %2560 = vmatpush1.bf16.msra.mxu0 %v1867
  %2561 = vmatprep.subr.bf16.mxu0 0
  %2562 = vmatpush1.bf16.msra.mxu0 %v1868
  %2563 = vmatprep.subr.bf16.mxu0 0
  %2564 = vmatpush1.bf16.msra.mxu0 %v1869
  %2565 = vmatprep.subr.bf16.mxu0 0
  %2566 = vmatpush1.bf16.msra.mxu0 %v1870
  %2567 = vmatprep.subr.bf16.mxu0 0
  %2568 = vmatpush1.bf16.msra.mxu0 %v1871
  %2569 = vmatprep.subr.bf16.mxu0 0
  %2570 = vmatpush1.bf16.msra.mxu0 %v1872
  %2571 = vmatprep.subr.bf16.mxu0 0
  %2572 = vmatpush1.bf16.msra.mxu0 %v1873
  %2573 = vmatprep.subr.bf16.mxu0 0
  %2574 = vmatpush1.bf16.msra.mxu0 %v1874
  %2575 = vmatprep.subr.bf16.mxu0 0
  %2576 = vmatpush1.bf16.msra.mxu0 %v1875
  %2577 = vmatprep.subr.bf16.mxu0 0
  %2578 = vmatpush1.bf16.msra.mxu0 %v1876
  %2579 = vmatprep.subr.bf16.mxu0 0
  %2580 = vmatpush1.bf16.msra.mxu0 %v1877
  %2581 = vmatprep.mubr.bf16.mxu0 %v677
  %2582 = vmatmul.mubr.bf16.gmra.mrb[0].mxu0 %v676
  %v2583 = vpop.f32.mrb[0].mxu0
  %v2584 = vadd.f32 %v2543, %v2583
  %v2585 = vpop.f32.mrb[0].mxu0
  %v2586 = vpop.f32.mrb[0].mxu0
  %v2587 = vadd.f32 %v2546, %v2586
  %v2588 = vpop.f32.mrb[0].mxu0
  %2589 = vdwg.mxu0
  %2590 = vmatprep.subr.bf16.mxu0 0
  %2591 = vmatpush1.bf16.msra.mxu0 %v1878
  %2592 = vmatprep.subr.bf16.mxu0 0
  %2593 = vmatpush1.bf16.msra.mxu0 %v1879
  %2594 = vmatprep.subr.bf16.mxu0 0
  %2595 = vmatpush1.bf16.msra.mxu0 %v1880
  %2596 = vmatprep.subr.bf16.mxu0 0
  %2597 = vmatpush1.bf16.msra.mxu0 %v1881
  %2598 = vmatprep.subr.bf16.mxu0 0
  %2599 = vmatpush1.bf16.msra.mxu0 %v1882
  %2600 = vmatprep.subr.bf16.mxu0 0
  %2601 = vmatpush1.bf16.msra.mxu0 %v1883
  %2602 = vmatprep.subr.bf16.mxu0 0
  %2603 = vmatpush1.bf16.msra.mxu0 %v1884
  %2604 = vmatprep.subr.bf16.mxu0 0
  %2605 = vmatpush1.bf16.msra.mxu0 %v1885
  %2606 = vmatprep.subr.bf16.mxu0 0
  %2607 = vmatpush1.bf16.msra.mxu0 %v1886
  %2608 = vmatprep.subr.bf16.mxu0 0
  %2609 = vmatpush1.bf16.msra.mxu0 %v1887
  %2610 = vmatprep.subr.bf16.mxu0 0
  %2611 = vmatpush1.bf16.msra.mxu0 %v1888
  %2612 = vmatprep.subr.bf16.mxu0 0
  %2613 = vmatpush1.bf16.msra.mxu0 %v1889
  %2614 = vmatprep.subr.bf16.mxu0 0
  %2615 = vmatpush1.bf16.msra.mxu0 %v1890
  %2616 = vmatprep.subr.bf16.mxu0 0
  %2617 = vmatpush1.bf16.msra.mxu0 %v1891
  %2618 = vmatprep.subr.bf16.mxu0 0
  %2619 = vmatpush1.bf16.msra.mxu0 %v1892
  %2620 = vmatprep.subr.bf16.mxu0 0
  %2621 = vmatpush1.bf16.msra.mxu0 %v1893
  %2622 = vmatprep.mubr.bf16.mxu0 %v679
  %2623 = vmatmul.mubr.bf16.gmra.mrb[0].mxu0 %v678
  %v2624 = vpop.f32.mrb[0].mxu0
  %v2625 = vadd.f32 %v2584, %v2624
  %v2626 = vpop.f32.mrb[0].mxu0
  %v2627 = vpop.f32.mrb[0].mxu0
  %v2628 = vadd.f32 %v2587, %v2627
  %v2629 = vpop.f32.mrb[0].mxu0
  %2630 = vdwg.mxu0
  %2631 = vmatprep.subr.bf16.mxu0 0
  %2632 = vmatpush1.bf16.msra.mxu0 %v1894
  %2633 = vmatprep.subr.bf16.mxu0 0
  %2634 = vmatpush1.bf16.msra.mxu0 %v1895
  %2635 = vmatprep.subr.bf16.mxu0 0
  %2636 = vmatpush1.bf16.msra.mxu0 %v1896
  %2637 = vmatprep.subr.bf16.mxu0 0
  %2638 = vmatpush1.bf16.msra.mxu0 %v1897
  %2639 = vmatprep.subr.bf16.mxu0 0
  %2640 = vmatpush1.bf16.msra.mxu0 %v1898
  %2641 = vmatprep.subr.bf16.mxu0 0
  %2642 = vmatpush1.bf16.msra.mxu0 %v1899
  %2643 = vmatprep.subr.bf16.mxu0 0
  %2644 = vmatpush1.bf16.msra.mxu0 %v1900
  %2645 = vmatprep.subr.bf16.mxu0 0
  %2646 = vmatpush1.bf16.msra.mxu0 %v1901
  %2647 = vmatprep.subr.bf16.mxu0 0
  %2648 = vmatpush1.bf16.msra.mxu0 %v1902
  %2649 = vmatprep.subr.bf16.mxu0 0
  %2650 = vmatpush1.bf16.msra.mxu0 %v1903
  %2651 = vmatprep.subr.bf16.mxu0 0
  %2652 = vmatpush1.bf16.msra.mxu0 %v1904
  %2653 = vmatprep.subr.bf16.mxu0 0
  %2654 = vmatpush1.bf16.msra.mxu0 %v1905
  %2655 = vmatprep.subr.bf16.mxu0 0
  %2656 = vmatpush1.bf16.msra.mxu0 %v1906
  %2657 = vmatprep.subr.bf16.mxu0 0
  %2658 = vmatpush1.bf16.msra.mxu0 %v1907
  %2659 = vmatprep.subr.bf16.mxu0 0
  %2660 = vmatpush1.bf16.msra.mxu0 %v1908
  %2661 = vmatprep.subr.bf16.mxu0 0
  %2662 = vmatpush1.bf16.msra.mxu0 %v1909
  %2663 = vmatprep.mubr.bf16.mxu0 %v681
  %2664 = vmatmul.mubr.bf16.gmra.mrb[0].mxu0 %v680
  %v2665 = vpop.f32.mrb[0].mxu0
  %v2666 = vadd.f32 %v2625, %v2665
  %v2667 = vpop.f32.mrb[0].mxu0
  %v2668 = vpop.f32.mrb[0].mxu0
  %v2669 = vadd.f32 %v2628, %v2668
  %v2670 = vpop.f32.mrb[0].mxu0
  %2671 = vdwg.mxu0
  %2672 = vmatprep.subr.bf16.mxu0 0
  %2673 = vmatpush1.bf16.msra.mxu0 %v1910
  %2674 = vmatprep.subr.bf16.mxu0 0
  %2675 = vmatpush1.bf16.msra.mxu0 %v1911
  %2676 = vmatprep.subr.bf16.mxu0 0
  %2677 = vmatpush1.bf16.msra.mxu0 %v1912
  %2678 = vmatprep.subr.bf16.mxu0 0
  %2679 = vmatpush1.bf16.msra.mxu0 %v1913
  %2680 = vmatprep.subr.bf16.mxu0 0
  %2681 = vmatpush1.bf16.msra.mxu0 %v1914
  %2682 = vmatprep.subr.bf16.mxu0 0
  %2683 = vmatpush1.bf16.msra.mxu0 %v1915
  %2684 = vmatprep.subr.bf16.mxu0 0
  %2685 = vmatpush1.bf16.msra.mxu0 %v1916
  %2686 = vmatprep.subr.bf16.mxu0 0
  %2687 = vmatpush1.bf16.msra.mxu0 %v1917
  %2688 = vmatprep.subr.bf16.mxu0 0
  %2689 = vmatpush1.bf16.msra.mxu0 %v1918
  %2690 = vmatprep.subr.bf16.mxu0 0
  %2691 = vmatpush1.bf16.msra.mxu0 %v1919
  %2692 = vmatprep.subr.bf16.mxu0 0
  %2693 = vmatpush1.bf16.msra.mxu0 %v1920
  %2694 = vmatprep.subr.bf16.mxu0 0
  %2695 = vmatpush1.bf16.msra.mxu0 %v1921
  %2696 = vmatprep.subr.bf16.mxu0 0
  %2697 = vmatpush1.bf16.msra.mxu0 %v1922
  %2698 = vmatprep.subr.bf16.mxu0 0
  %2699 = vmatpush1.bf16.msra.mxu0 %v1923
  %2700 = vmatprep.subr.bf16.mxu0 0
  %2701 = vmatpush1.bf16.msra.mxu0 %v1924
  %2702 = vmatprep.subr.bf16.mxu0 0
  %2703 = vmatpush1.bf16.msra.mxu0 %v1925
  %2704 = vmatprep.mubr.bf16.mxu0 %v683
  %2705 = vmatmul.mubr.bf16.gmra.mrb[0].mxu0 %v682
  %v2706 = vpop.f32.mrb[0].mxu0
  %v2707 = vadd.f32 %v2666, %v2706
  %v2708 = vpop.f32.mrb[0].mxu0
  %v2709 = vpop.f32.mrb[0].mxu0
  %v2710 = vadd.f32 %v2669, %v2709
  %v2711 = vpop.f32.mrb[0].mxu0
  %2712 = vdwg.mxu0
  %2713 = vmatprep.subr.bf16.mxu0 0
  %2714 = vmatpush1.bf16.msra.mxu0 %v1926
  %2715 = vmatprep.subr.bf16.mxu0 0
  %2716 = vmatpush1.bf16.msra.mxu0 %v1927
  %2717 = vmatprep.subr.bf16.mxu0 0
  %2718 = vmatpush1.bf16.msra.mxu0 %v1928
  %2719 = vmatprep.subr.bf16.mxu0 0
  %2720 = vmatpush1.bf16.msra.mxu0 %v1929
  %2721 = vmatprep.subr.bf16.mxu0 0
  %2722 = vmatpush1.bf16.msra.mxu0 %v1930
  %2723 = vmatprep.subr.bf16.mxu0 0
  %2724 = vmatpush1.bf16.msra.mxu0 %v1931
  %2725 = vmatprep.subr.bf16.mxu0 0
  %2726 = vmatpush1.bf16.msra.mxu0 %v1932
  %2727 = vmatprep.subr.bf16.mxu0 0
  %2728 = vmatpush1.bf16.msra.mxu0 %v1933
  %2729 = vmatprep.subr.bf16.mxu0 0
  %2730 = vmatpush1.bf16.msra.mxu0 %v1934
  %2731 = vmatprep.subr.bf16.mxu0 0
  %2732 = vmatpush1.bf16.msra.mxu0 %v1935
  %2733 = vmatprep.subr.bf16.mxu0 0
  %2734 = vmatpush1.bf16.msra.mxu0 %v1936
  %2735 = vmatprep.subr.bf16.mxu0 0
  %2736 = vmatpush1.bf16.msra.mxu0 %v1937
  %2737 = vmatprep.subr.bf16.mxu0 0
  %2738 = vmatpush1.bf16.msra.mxu0 %v1938
  %2739 = vmatprep.subr.bf16.mxu0 0
  %2740 = vmatpush1.bf16.msra.mxu0 %v1939
  %2741 = vmatprep.subr.bf16.mxu0 0
  %2742 = vmatpush1.bf16.msra.mxu0 %v1940
  %2743 = vmatprep.subr.bf16.mxu0 0
  %2744 = vmatpush1.bf16.msra.mxu0 %v1941
  %2745 = vmatprep.mubr.bf16.mxu0 %v685
  %2746 = vmatmul.mubr.bf16.gmra.mrb[0].mxu0 %v684
  %v2747 = vpop.f32.mrb[0].mxu0
  %v2748 = vadd.f32 %v2707, %v2747
  %v2749 = vpop.f32.mrb[0].mxu0
  %v2750 = vpop.f32.mrb[0].mxu0
  %v2751 = vadd.f32 %v2710, %v2750
  %v2752 = vpop.f32.mrb[0].mxu0
  %2753 = vdwg.mxu0
  %2754 = vmatprep.subr.bf16.mxu0 0
  %2755 = vmatpush1.bf16.msra.mxu0 %v1942
  %2756 = vmatprep.subr.bf16.mxu0 0
  %2757 = vmatpush1.bf16.msra.mxu0 %v1943
  %2758 = vmatprep.subr.bf16.mxu0 0
  %2759 = vmatpush1.bf16.msra.mxu0 %v1944
  %2760 = vmatprep.subr.bf16.mxu0 0
  %2761 = vmatpush1.bf16.msra.mxu0 %v1945
  %2762 = vmatprep.subr.bf16.mxu0 0
  %2763 = vmatpush1.bf16.msra.mxu0 %v1946
  %2764 = vmatprep.subr.bf16.mxu0 0
  %2765 = vmatpush1.bf16.msra.mxu0 %v1947
  %2766 = vmatprep.subr.bf16.mxu0 0
  %2767 = vmatpush1.bf16.msra.mxu0 %v1948
  %2768 = vmatprep.subr.bf16.mxu0 0
  %2769 = vmatpush1.bf16.msra.mxu0 %v1949
  %2770 = vmatprep.subr.bf16.mxu0 0
  %2771 = vmatpush1.bf16.msra.mxu0 %v1950
  %2772 = vmatprep.subr.bf16.mxu0 0
  %2773 = vmatpush1.bf16.msra.mxu0 %v1951
  %2774 = vmatprep.subr.bf16.mxu0 0
  %2775 = vmatpush1.bf16.msra.mxu0 %v1952
  %2776 = vmatprep.subr.bf16.mxu0 0
  %2777 = vmatpush1.bf16.msra.mxu0 %v1953
  %2778 = vmatprep.subr.bf16.mxu0 0
  %2779 = vmatpush1.bf16.msra.mxu0 %v1954
  %2780 = vmatprep.subr.bf16.mxu0 0
  %2781 = vmatpush1.bf16.msra.mxu0 %v1955
  %2782 = vmatprep.subr.bf16.mxu0 0
  %2783 = vmatpush1.bf16.msra.mxu0 %v1956
  %2784 = vmatprep.subr.bf16.mxu0 0
  %2785 = vmatpush1.bf16.msra.mxu0 %v1957
  %2786 = vmatprep.mubr.bf16.mxu0 %v687
  %2787 = vmatmul.mubr.bf16.gmra.mrb[0].mxu0 %v686
  %v2788 = vpop.f32.mrb[0].mxu0
  %v2789 = vadd.f32 %v2748, %v2788
  %v2790 = vpop.f32.mrb[0].mxu0
  %v2791 = vpop.f32.mrb[0].mxu0
  %v2792 = vadd.f32 %v2751, %v2791
  %v2793 = vpop.f32.mrb[0].mxu0
  %2794 = vdwg.mxu0
  %2795 = vmatprep.subr.bf16.mxu0 0
  %2796 = vmatpush1.bf16.msra.mxu0 %v1958
  %2797 = vmatprep.subr.bf16.mxu0 0
  %2798 = vmatpush1.bf16.msra.mxu0 %v1959
  %2799 = vmatprep.subr.bf16.mxu0 0
  %2800 = vmatpush1.bf16.msra.mxu0 %v1960
  %2801 = vmatprep.subr.bf16.mxu0 0
  %2802 = vmatpush1.bf16.msra.mxu0 %v1961
  %2803 = vmatprep.subr.bf16.mxu0 0
  %2804 = vmatpush1.bf16.msra.mxu0 %v1962
  %2805 = vmatprep.subr.bf16.mxu0 0
  %2806 = vmatpush1.bf16.msra.mxu0 %v1963
  %2807 = vmatprep.subr.bf16.mxu0 0
  %2808 = vmatpush1.bf16.msra.mxu0 %v1964
  %2809 = vmatprep.subr.bf16.mxu0 0
  %2810 = vmatpush1.bf16.msra.mxu0 %v1965
  %2811 = vmatprep.subr.bf16.mxu0 0
  %2812 = vmatpush1.bf16.msra.mxu0 %v1966
  %2813 = vmatprep.subr.bf16.mxu0 0
  %2814 = vmatpush1.bf16.msra.mxu0 %v1967
  %2815 = vmatprep.subr.bf16.mxu0 0
  %2816 = vmatpush1.bf16.msra.mxu0 %v1968
  %2817 = vmatprep.subr.bf16.mxu0 0
  %2818 = vmatpush1.bf16.msra.mxu0 %v1969
  %2819 = vmatprep.subr.bf16.mxu0 0
  %2820 = vmatpush1.bf16.msra.mxu0 %v1970
  %2821 = vmatprep.subr.bf16.mxu0 0
  %2822 = vmatpush1.bf16.msra.mxu0 %v1971
  %2823 = vmatprep.subr.bf16.mxu0 0
  %2824 = vmatpush1.bf16.msra.mxu0 %v1972
  %2825 = vmatprep.subr.bf16.mxu0 0
  %2826 = vmatpush1.bf16.msra.mxu0 %v1973
  %2827 = vmatprep.mubr.bf16.mxu0 %v689
  %2828 = vmatmul.mubr.bf16.gmra.mrb[0].mxu0 %v688
  %v2829 = vpop.f32.mrb[0].mxu0
  %v2830 = vadd.f32 %v2789, %v2829
  %v2831 = vpop.f32.mrb[0].mxu0
  %v2832 = vpop.f32.mrb[0].mxu0
  %v2833 = vadd.f32 %v2792, %v2832
  %v2834 = vpop.f32.mrb[0].mxu0
  %2835 = vdwg.mxu0
  %2836 = vmatprep.subr.bf16.mxu0 0
  %2837 = vmatpush1.bf16.msra.mxu0 %v1974
  %2838 = vmatprep.subr.bf16.mxu0 0
  %2839 = vmatpush1.bf16.msra.mxu0 %v1975
  %2840 = vmatprep.subr.bf16.mxu0 0
  %2841 = vmatpush1.bf16.msra.mxu0 %v1976
  %2842 = vmatprep.subr.bf16.mxu0 0
  %2843 = vmatpush1.bf16.msra.mxu0 %v1977
  %2844 = vmatprep.subr.bf16.mxu0 0
  %2845 = vmatpush1.bf16.msra.mxu0 %v1978
  %2846 = vmatprep.subr.bf16.mxu0 0
  %2847 = vmatpush1.bf16.msra.mxu0 %v1979
  %2848 = vmatprep.subr.bf16.mxu0 0
  %2849 = vmatpush1.bf16.msra.mxu0 %v1980
  %2850 = vmatprep.subr.bf16.mxu0 0
  %2851 = vmatpush1.bf16.msra.mxu0 %v1981
  %2852 = vmatprep.subr.bf16.mxu0 0
  %2853 = vmatpush1.bf16.msra.mxu0 %v1982
  %2854 = vmatprep.subr.bf16.mxu0 0
  %2855 = vmatpush1.bf16.msra.mxu0 %v1983
  %2856 = vmatprep.subr.bf16.mxu0 0
  %2857 = vmatpush1.bf16.msra.mxu0 %v1984
  %2858 = vmatprep.subr.bf16.mxu0 0
  %2859 = vmatpush1.bf16.msra.mxu0 %v1985
  %2860 = vmatprep.subr.bf16.mxu0 0
  %2861 = vmatpush1.bf16.msra.mxu0 %v1986
  %2862 = vmatprep.subr.bf16.mxu0 0
  %2863 = vmatpush1.bf16.msra.mxu0 %v1987
  %2864 = vmatprep.subr.bf16.mxu0 0
  %2865 = vmatpush1.bf16.msra.mxu0 %v1988
  %2866 = vmatprep.subr.bf16.mxu0 0
  %2867 = vmatpush1.bf16.msra.mxu0 %v1989
  %2868 = vmatprep.mubr.bf16.mxu0 %v691
  %2869 = vmatmul.mubr.bf16.gmra.mrb[0].mxu0 %v690
  %v2870 = vpop.f32.mrb[0].mxu0
  %v2871 = vadd.f32 %v2830, %v2870
  %v2872 = vpop.f32.mrb[0].mxu0
  %v2873 = vpop.f32.mrb[0].mxu0
  %v2874 = vadd.f32 %v2833, %v2873
  %v2875 = vpop.f32.mrb[0].mxu0
  %2876 = vdwg.mxu0
  %2877 = vmatprep.subr.bf16.mxu0 0
  %2878 = vmatpush1.bf16.msra.mxu0 %v1990
  %2879 = vmatprep.subr.bf16.mxu0 0
  %2880 = vmatpush1.bf16.msra.mxu0 %v1991
  %2881 = vmatprep.subr.bf16.mxu0 0
  %2882 = vmatpush1.bf16.msra.mxu0 %v1992
  %2883 = vmatprep.subr.bf16.mxu0 0
  %2884 = vmatpush1.bf16.msra.mxu0 %v1993
  %2885 = vmatprep.subr.bf16.mxu0 0
  %2886 = vmatpush1.bf16.msra.mxu0 %v1994
  %2887 = vmatprep.subr.bf16.mxu0 0
  %2888 = vmatpush1.bf16.msra.mxu0 %v1995
  %2889 = vmatprep.subr.bf16.mxu0 0
  %2890 = vmatpush1.bf16.msra.mxu0 %v1996
  %2891 = vmatprep.subr.bf16.mxu0 0
  %2892 = vmatpush1.bf16.msra.mxu0 %v1997
  %2893 = vmatprep.subr.bf16.mxu0 0
  %2894 = vmatpush1.bf16.msra.mxu0 %v1998
  %2895 = vmatprep.subr.bf16.mxu0 0
  %2896 = vmatpush1.bf16.msra.mxu0 %v1999
  %2897 = vmatprep.subr.bf16.mxu0 0
  %2898 = vmatpush1.bf16.msra.mxu0 %v2000
  %2899 = vmatprep.subr.bf16.mxu0 0
  %2900 = vmatpush1.bf16.msra.mxu0 %v2001
  %2901 = vmatprep.subr.bf16.mxu0 0
  %2902 = vmatpush1.bf16.msra.mxu0 %v2002
  %2903 = vmatprep.subr.bf16.mxu0 0
  %2904 = vmatpush1.bf16.msra.mxu0 %v2003
  %2905 = vmatprep.subr.bf16.mxu0 0
  %2906 = vmatpush1.bf16.msra.mxu0 %v2004
  %2907 = vmatprep.subr.bf16.mxu0 0
  %2908 = vmatpush1.bf16.msra.mxu0 %v2005
  %2909 = vmatprep.mubr.bf16.mxu0 %v693
  %2910 = vmatmul.mubr.bf16.gmra.mrb[0].mxu0 %v692
  %v2911 = vpop.f32.mrb[0].mxu0
  %v2912 = vadd.f32 %v2871, %v2911
  %v2913 = vpop.f32.mrb[0].mxu0
  %v2914 = vpop.f32.mrb[0].mxu0
  %v2915 = vadd.f32 %v2874, %v2914
  %v2916 = vpop.f32.mrb[0].mxu0
  %2917 = vdwg.mxu0
  %v2918 = vxor.u32 %v2912, 2147483648
  %v2919 = vxor.u32 %v2915, 2147483648
  %v2920 = vmul.f32 %v2918, 1.442695
  %v2921 = vpow.pop %v2920
  %v2922 = vmul.f32 %v2919, 1.442695
  %v2923 = vpow.pop %v2922
  %v2924 = vadd.f32 %v2921, 1.0
  %v2925 = vadd.f32 %v2923, 1.0
  %v2926 = vrcp.pop %v2924
  %v2927 = vmul.f32 1.0, %v2926
  %v2928 = vrcp.pop %v2925
  %v2929 = vmul.f32 1.0, %v2928
  %2930 = vst [vmem:[%s3] sm:$0xff] %v2927
  %2931 = vst [vmem:[%s3 + $0x8] sm:$0xff] %v2929
  // Predicated region
  $region14: #{discriminator_forward.15} parent=0 // pred_check
    _
  $region15: #{discriminator_forward.15} parent=0 // pred_check_branch
    %2933 = sbr.rel (0) target = $region17
  $region16: #{discriminator_forward.15} parent=0 // pred_region
    _
  $region17: #{discriminator_forward.15} parent=0 // pred_fallthru
    _
  // Predicated region
  $region18: #{discriminator_forward.15} parent=0 // pred_check
    _
  $region19: #{discriminator_forward.15} parent=0 // pred_check_branch
    %2935 = sbr.rel (0) target = $region21
  $region20: #{discriminator_forward.15} parent=0 // pred_region
    _
  $region21: #{discriminator_forward.15} parent=0 // pred_fallthru
    _

</llo_original>
